<compile_context>
chip_gen: v7x
topology: tpu7x:2x2x1
jax: 0.10.0
libtpu: 0.0.40
codegen_flags: <defaults>
</compile_context>

<pallas_src>
import numpy as np
import jax
import jax.numpy as jnp
from jax import lax
from jax.experimental import pallas as pl
from jax.experimental.pallas import tpu as pltpu


def _round_up(x, m):
    return ((x + m - 1) // m) * m


# ----------------------------------------------------------------------------
# Fused decoder kernel: grid = (T,), hidden state carried in VMEM scratch.
# ----------------------------------------------------------------------------
def _make_fused_kernel(num_layers, Hp, use_mxu_attention):
    """Kernel args:
      emb  (1, Bp, Wdp) bf16       -- current-step caption embedding block
      keys (Bp, Np, Ap) bf16       -- hoisted key projection (time-invariant)
      img  (Bp, Np, Cp) bf16       -- image code (attention values)
      pmask (1, Np) f32            -- additive pixel mask (0 valid / -1e30 pad)
      h0   (L, Bp, Hp) f32         -- initial hidden state
      qW (Hp, Ap) bf16, qb (1, Ap) f32   (both pre-scaled by 1/sqrt(key_dim))
      layer 0: w_ctx (Cp,3Hp), w_emb (Wdp,3Hp), whh (Hp,3Hp) bf16; bih,bhh (1,3Hp) f32
      layer l>=1: wih (Hp,3Hp), whh (Hp,3Hp) bf16; bih,bhh (1,3Hp) f32
    outputs: x_out (1, Bp, Hp) f32 (top-layer hidden), alpha (1, Bp, Np) f32
    scratch: h_scr (L, Bp, Hp) f32 VMEM
    """

    def kernel(emb_ref, keys_ref, img_ref, pmask_ref, h0_ref,
               qW_ref, qb_ref, *rest):
        n_gru = 5 + 4 * (num_layers - 1)
        gru = rest[:n_gru]
        x_out_ref = rest[n_gru]
        alpha_out_ref = rest[n_gru + 1]
        h_scr = rest[n_gru + 2]

        t = pl.program_id(0)

        @pl.when(t == 0)
        def _():
            h_scr[...] = h0_ref[...]

        emb = emb_ref[0]                        # (Bp, Wdp) bf16
        h_top = h_scr[num_layers - 1]           # (Bp, Hp) f32

        # ---- ProductAttention (value_proj unused in the PyTorch forward) ----
        # 1/sqrt(key_dim) is pre-folded into qW/qb outside the kernel.
        q = jnp.dot(h_top.astype(jnp.bfloat16), qW_ref[...],
                    preferred_element_type=jnp.float32) + qb_ref[...]   # (Bp, Ap)

        if use_mxu_attention:
            # batched MXU mat-vec: scores[b,n] = sum_a q[b,a] * keys[b,n,a]
            scores = lax.dot_general(
                q.astype(jnp.bfloat16), keys_ref[...],
                dimension_numbers=(((1,), (2,)), ((0,), (0,))),
                preferred_element_type=jnp.float32)                     # (Bp, Np)
        else:
            # fallback: broadcast + lane reduce (VPU/XLU)
            scores = jnp.sum(keys_ref[...].astype(jnp.float32) * q[:, None, :],
                             axis=-1)

        scores = scores + pmask_ref[...]        # additive padded-pixel mask
        m = jnp.max(scores, axis=-1, keepdims=True)
        e = jnp.exp(scores - m)
        attn = e * (1.0 / jnp.sum(e, axis=-1, keepdims=True))   # exact reciprocal

        if use_mxu_attention:
            # context[b,c] = sum_n attn[b,n] * img[b,n,c]
            context = lax.dot_general(
                attn.astype(jnp.bfloat16), img_ref[...],
                dimension_numbers=(((1,), (1,)), ((0,), (0,))),
                preferred_element_type=jnp.float32)                     # (Bp, Cp)
        else:
            context = jnp.sum(attn[:, :, None] * img_ref[...].astype(jnp.float32),
                              axis=1)

        # ---- stacked GRU cell, fused (in, 3*Hp) gate matmuls, no concat ----
        # TODO(synk): with hidden_size << 128 the gate stride Hp carries zero
        # padding columns per gate; production hidden/attention dims should be
        # 128-aligned (or gates repacked contiguously) to avoid wasted MXU N.
        def gru_cell(gi, gh, h_prev):
            r = jax.nn.sigmoid(gi[:, 0:Hp] + gh[:, 0:Hp])
            z = jax.nn.sigmoid(gi[:, Hp:2 * Hp] + gh[:, Hp:2 * Hp])
            n = jnp.tanh(gi[:, 2 * Hp:3 * Hp] + r * gh[:, 2 * Hp:3 * Hp])
            return (1.0 - z) * n + z * h_prev

        w0c_ref, w0e_ref, w0h_ref, b0i_ref, b0h_ref = gru[:5]
        h_prev = h_scr[0]
        gi = (jnp.dot(context.astype(jnp.bfloat16), w0c_ref[...],
                      preferred_element_type=jnp.float32)
              + jnp.dot(emb, w0e_ref[...], preferred_element_type=jnp.float32)
              + b0i_ref[...])
        gh = jnp.dot(h_prev.astype(jnp.bfloat16), w0h_ref[...],
                     preferred_element_type=jnp.float32) + b0h_ref[...]
        x = gru_cell(gi, gh, h_prev)
        h_scr[0] = x
        for l in range(1, num_layers):
            wih_ref, whh_ref, bih_ref, bhh_ref = gru[5 + 4 * (l - 1): 5 + 4 * l]
            h_prev = h_scr[l]
            gi = jnp.dot(x.astype(jnp.bfloat16), wih_ref[...],
                         preferred_element_type=jnp.float32) + bih_ref[...]
            gh = jnp.dot(h_prev.astype(jnp.bfloat16), whh_ref[...],
                         preferred_element_type=jnp.float32) + bhh_ref[...]
            x = gru_cell(gi, gh, h_prev)
            h_scr[l] = x

        # TODO(synk): nn.Dropout(p=0.5) before fc is identity in eval mode; the
        # fc projection itself is hoisted outside the rollout kernel.
        x_out_ref[0] = x
        alpha_out_ref[0] = attn

    return kernel


def decoder_rollout(emb_seq, keys, img, pixmask, h0, pp, num_layers, Hp,
                    use_mxu_attention, single_buffer_consts, vmem_limit_bytes):
    T, Bp, Wdp = emb_seq.shape
    _, Np, _ = img.shape

    kernel = _make_fused_kernel(num_layers, Hp, use_mxu_attention)

    weight_inputs = [pp['q_W'], pp['q_b'],
                     pp['w0_ctx'], pp['w0_emb'], pp['whh_0'], pp['bih_0'], pp['bhh_0']]
    for l in range(1, num_layers):
        weight_inputs += [pp[f'wih_{l}'], pp[f'whh_{l}'],
                          pp[f'bih_{l}'], pp[f'bhh_{l}']]

    def const_spec(a):
        nd = a.ndim
        if single_buffer_consts:
            # never re-DMA'd across steps -> single VMEM buffer.
            return pl.BlockSpec(a.shape, lambda *_args, _nd=nd: (0,) * _nd,
                                pipeline_mode=pl.Buffered(1))
        return pl.BlockSpec(a.shape, lambda *_args, _nd=nd: (0,) * _nd)

    in_specs = [pl.BlockSpec((1, Bp, Wdp), lambda t: (t, 0, 0)),   # embeddings
                const_spec(keys), const_spec(img), const_spec(pixmask),
                const_spec(h0)]
    in_specs += [const_spec(w) for w in weight_inputs]

    out_specs = (pl.BlockSpec((1, Bp, Hp), lambda t: (t, 0, 0)),
                 pl.BlockSpec((1, Bp, Np), lambda t: (t, 0, 0)))
    out_shape = (jax.ShapeDtypeStruct((T, Bp, Hp), jnp.float32),
                 jax.ShapeDtypeStruct((T, Bp, Np), jnp.float32))

    grid_spec = pltpu.PrefetchScalarGridSpec(
        num_scalar_prefetch=0,
        grid=(T,),
        in_specs=in_specs,
        out_specs=out_specs,
        scratch_shapes=[pltpu.VMEM((num_layers, Bp, Hp), jnp.float32)])

    # T axis is a carry (hidden state in scratch) -> "arbitrary".
    # TODO(synk): on v7x, add a leading 'parallel' batch grid axis (2 TCs) and
    # fold k_W into the query side instead of keeping keys resident (64 MiB VMEM).
    return pl.pallas_call(
        kernel,
        out_shape=out_shape,
        grid_spec=grid_spec,
        compiler_params=pltpu.CompilerParams(
            dimension_semantics=("arbitrary",),
            vmem_limit_bytes=vmem_limit_bytes),
    )(emb_seq, keys, img, pixmask, h0, *weight_inputs)


# ----------------------------------------------------------------------------
# One-time weight padding / GRU-gate fusion / bf16 cast (outside the kernel).
# ----------------------------------------------------------------------------
def prepare_padded_params(params, image_code_dim, word_dim, attention_dim,
                          hidden_size, num_layers):
    C, Wd, A, H = image_code_dim, word_dim, attention_dim, hidden_size
    Cp, Wdp, Ap, Hp = (_round_up(C, 128), _round_up(Wd, 128),
                       _round_up(A, 128), _round_up(H, 128))
    G = 3 * Hp
    inv_sqrt_key_dim = np.float32(1.0 / np.sqrt(C))   # PyTorch scales by sqrt(key_dim)=sqrt(C)

    def pad2(w, r, c, dtype=jnp.float32):
        out = jnp.zeros((r, c), jnp.float32).at[:w.shape[0], :w.shape[1]].set(w)
        return out.astype(dtype)

    def fuse_gates(w3, in_pad):
        # (3, in, H) -> (in_pad, 3*Hp) bf16; gate g occupies cols [g*Hp, g*Hp+H)
        out = jnp.zeros((in_pad, G), jnp.float32)
        for g in range(3):
            out = out.at[:w3.shape[1], g * Hp:g * Hp + H].set(w3[g])
        return out.astype(jnp.bfloat16)

    def fuse_bias(b3):
        out = jnp.zeros((1, G), jnp.float32)
        for g in range(3):
            out = out.at[:, g * Hp:g * Hp + H].set(b3[g])
        return out

    pp = {
        # 1/sqrt(key_dim) folded into the query projection.
        'q_W': pad2(params['q_W'] * inv_sqrt_key_dim, Hp, Ap, jnp.bfloat16),
        'q_b': pad2(params['q_b'] * inv_sqrt_key_dim, 1, Ap, jnp.float32),
        'k_W': pad2(params['k_W'], Cp, Ap, jnp.float32),   # used only for key hoist
        'k_b': pad2(params['k_b'], 1, Ap, jnp.float32),
    }
    wih0 = params['gru_wih_0']              # (3, C+Wd, H); rows: [context | embed]
    pp['w0_ctx'] = fuse_gates(wih0[:, :C, :], Cp)
    pp['w0_emb'] = fuse_gates(wih0[:, C:, :], Wdp)
    pp['whh_0'] = fuse_gates(params['gru_whh_0'], Hp)
    pp['bih_0'] = fuse_bias(params['gru_bih_0'])
    pp['bhh_0'] = fuse_bias(params['gru_bhh_0'])
    for l in range(1, num_layers):
        pp[f'wih_{l}'] = fuse_gates(params[f'gru_wih_{l}'], Hp)
        pp[f'whh_{l}'] = fuse_gates(params[f'gru_whh_{l}'], Hp)
        pp[f'bih_{l}'] = fuse_bias(params[f'gru_bih_{l}'])
        pp[f'bhh_{l}'] = fuse_bias(params[f'gru_bhh_{l}'])
    dims = dict(Cp=Cp, Wdp=Wdp, Ap=Ap, Hp=Hp)
    return pp, dims


# ----------------------------------------------------------------------------
# Forward pass (mirrors AttentionDecoder.forward, eval mode).
# ----------------------------------------------------------------------------
def attention_decoder_forward(params, image_code_nchw, captions, cap_lens,
                              image_code_dim, vocab_size, word_dim,
                              attention_dim, hidden_size, num_layers):
    cap_lens_np = np.asarray(cap_lens)
    sorted_idx = np.argsort(-cap_lens_np, kind='stable')      # descending sort
    sorted_cap_lens = cap_lens_np[sorted_idx]
    captions = jnp.asarray(captions)[jnp.asarray(sorted_idx)]

    B, C, Hg, Wg = image_code_nchw.shape
    N = Hg * Wg
    image_code = jnp.transpose(image_code_nchw, (0, 2, 3, 1)).reshape(B, N, C)
    image_code = image_code[jnp.asarray(sorted_idx)]

    # init_hidden_state: Linear(image_code_dim, L*H) on the mean over pixels
    mean_code = jnp.mean(image_code, axis=1)
    h0 = mean_code @ params['init_W'] + params['init_b'][0]
    hidden0 = jnp.transpose(h0.reshape(B, num_layers, hidden_size), (1, 0, 2))

    cap_embeds = params['embed'][captions]                     # (B, Tmax, word_dim)

    lengths = sorted_cap_lens - 1
    T = int(lengths[0])

    # ---- pad once to lane-dense 128-multiples, fuse GRU gates, bf16 weights ----
    pp, dims = prepare_padded_params(params, C, word_dim, attention_dim,
                                     hidden_size, num_layers)
    Cp, Wdp, Hp = dims['Cp'], dims['Wdp'], dims['Hp']
    Bp = _round_up(B, 8)
    Np = _round_up(N, 128)

    img_f32 = jnp.zeros((Bp, Np, Cp), jnp.float32).at[:B, :N, :C].set(image_code)
    # hoisted time-invariant key projection (computed once, f32, stored bf16)
    keys_p = (jnp.einsum('bnc,ca->bna', img_f32, pp['k_W'])
              + pp['k_b']).astype(jnp.bfloat16)
    img_p = img_f32.astype(jnp.bfloat16)
    h0_p = jnp.zeros((num_layers, Bp, Hp), jnp.float32).at[:, :B, :hidden_size].set(hidden0)
    emb_seq = jnp.zeros((T, Bp, Wdp), jnp.float32).at[:, :B, :word_dim].set(
        jnp.transpose(cap_embeds[:, :T, :], (1, 0, 2))).astype(jnp.bfloat16)
    # additive pixel mask (0 for real pixels, -1e30 for padded ones)
    pixmask = jnp.where(jnp.arange(Np)[None, :] < N, 0.0, -1e30).astype(jnp.float32)

    vmem_limit = 48 * 1024 * 1024
    # (use_mxu_attention, single_buffer_consts); later entries are safe fallbacks.
    configs = [(True, True), (True, False), (False, False)]
    result, err = None, None
    for use_mxu, single_buf in configs:
        try:
            result = decoder_rollout(emb_seq, keys_p, img_p, pixmask, h0_p, pp,
                                     num_layers, Hp, use_mxu, single_buf, vmem_limit)
            result = jax.block_until_ready(result)
            break
        except Exception as e:      # fall back to the proven formulation
            err, result = e, None
    if result is None:
        raise err
    x_seq, alphas_p = result        # (T, Bp, Hp) f32, (T, Bp, Np) f32

    # ---- vocab projection hoisted out of the sequential rollout ----
    X = jnp.transpose(x_seq, (1, 0, 2))[:B, :, :hidden_size]       # (B, T, H)
    A_ = jnp.transpose(alphas_p, (1, 0, 2))[:B, :, :N]             # (B, T, N)
    lengths_j = jnp.asarray(lengths, dtype=jnp.int32)
    # row b valid at step t iff t < lengths[b]  (== b < real_batch_size(t))
    tmask = (jnp.arange(T, dtype=jnp.int32)[None, :] < lengths_j[:, None])[..., None]
    preds = jnp.einsum('bth,hv->btv', X, params['fc_W']) + params['fc_b'][0]
    predictions = jnp.where(tmask, preds, 0.0)                      # (B, T, V)
    alphas = jnp.where(tmask, A_, 0.0)                              # (B, T, N)
    return predictions, alphas, captions, lengths, sorted_idx


# ----------------------------------------------------------------------------
# Parameter initialization (PyTorch conventions, transposed weights).
# ----------------------------------------------------------------------------
def init_params(key, image_code_dim, vocab_size, word_dim, attention_dim,
                hidden_size, num_layers):
    keys = jax.random.split(key, 9 + 4 * num_layers)
    ki = iter(keys)

    def u(shape, scale):
        return jax.random.uniform(next(ki), shape, jnp.float32, -scale, scale)

    H = hidden_size
    sq_h = 1.0 / np.sqrt(hidden_size)
    sq_c = 1.0 / np.sqrt(image_code_dim)
    params = {
        'embed': u((vocab_size, word_dim), 0.1),            # embed.weight ~ U(-0.1, 0.1)
        'q_W': u((hidden_size, attention_dim), sq_h),       # query_proj (transposed)
        'q_b': u((1, attention_dim), sq_h),
        'k_W': u((image_code_dim, attention_dim), sq_c),    # key_proj (transposed)
        'k_b': u((1, attention_dim), sq_c),
        'init_W': u((image_code_dim, num_layers * H), sq_c),
        'init_b': u((1, num_layers * H), sq_c),
        'fc_W': u((H, vocab_size), 0.1),                    # fc.weight ~ U(-0.1, 0.1)
        'fc_b': jnp.zeros((1, vocab_size), jnp.float32),    # fc.bias = 0
    }
    in_dim = word_dim + image_code_dim
    s = 1.0 / np.sqrt(H)
    for l in range(num_layers):
        d = in_dim if l == 0 else H
        params[f'gru_wih_{l}'] = u((3, d, H), s)   # gates stacked [r, z, n], transposed
        params[f'gru_whh_{l}'] = u((3, H, H), s)
        params[f'gru_bih_{l}'] = u((3, 1, H), s)
        params[f'gru_bhh_{l}'] = u((3, 1, H), s)
    return params


if __name__ == "__main__":
    image_code_dim = 16
    vocab_size = 20
    word_dim = 16
    attention_dim = 16
    hidden_size = 32
    num_layers = 2
    B, Hg, Wg = 4, 4, 4
    Tcap = 6

    key = jax.random.PRNGKey(0)
    kp, kimg, kcap = jax.random.split(key, 3)

    params = init_params(kp, image_code_dim, vocab_size, word_dim,
                         attention_dim, hidden_size, num_layers)

    image_code = jax.random.normal(kimg, (B, image_code_dim, Hg, Wg), jnp.float32)
    captions = jax.random.randint(kcap, (B, Tcap), 0, vocab_size)
    cap_lens = np.array([4, 6, 3, 5], dtype=np.int32)

    predictions, alphas, sorted_caps, lengths, sorted_idx = attention_decoder_forward(
        params, image_code, captions, cap_lens,
        image_code_dim, vocab_size, word_dim, attention_dim, hidden_size, num_layers)

    jax.block_until_ready((predictions, alphas))
    T = int(lengths[0])
    assert predictions.shape == (B, T, vocab_size)
    assert alphas.shape == (B, T, Hg * Wg)
    assert bool(jnp.all(jnp.isfinite(predictions)))
    assert bool(jnp.all(jnp.isfinite(alphas)))
    print("KERNEL_OK")
</pallas_src>

<mosaic_0001>
module attributes {stable_mosaic.version = 11 : i64} {
  func.func @kernel(%arg0: i32, %arg1: memref<1x8x128xbf16, #tpu.memory_space<vmem>>, %arg2: memref<8x128x128xbf16, #tpu.memory_space<vmem>>, %arg3: memref<8x128x128xbf16, #tpu.memory_space<vmem>>, %arg4: memref<1x128xf32, #tpu.memory_space<vmem>>, %arg5: memref<2x8x128xf32, #tpu.memory_space<vmem>>, %arg6: memref<128x128xbf16, #tpu.memory_space<vmem>>, %arg7: memref<1x128xf32, #tpu.memory_space<vmem>>, %arg8: memref<128x384xbf16, #tpu.memory_space<vmem>>, %arg9: memref<128x384xbf16, #tpu.memory_space<vmem>>, %arg10: memref<128x384xbf16, #tpu.memory_space<vmem>>, %arg11: memref<1x384xf32, #tpu.memory_space<vmem>>, %arg12: memref<1x384xf32, #tpu.memory_space<vmem>>, %arg13: memref<128x384xbf16, #tpu.memory_space<vmem>>, %arg14: memref<128x384xbf16, #tpu.memory_space<vmem>>, %arg15: memref<1x384xf32, #tpu.memory_space<vmem>>, %arg16: memref<1x384xf32, #tpu.memory_space<vmem>>, %arg17: memref<1x8x128xf32, #tpu.memory_space<vmem>>, %arg18: memref<1x8x128xf32, #tpu.memory_space<vmem>>, %arg19: memref<2x8x128xf32, #tpu.memory_space<vmem>>) attributes {dimension_semantics = [#tpu.dimension_semantics<arbitrary>], iteration_bounds = array<i64: 5>, scalar_prefetch = 0 : i64, scratch_operands = 1 : i64, tpu.core_type = #tpu.core_type<tc>, window_params = [{transform_indices = @transform_0, window_bounds = array<i64: 1, 8, 128>}, {pipeline_mode = #tpu.pipeline_mode<synchronous>, transform_indices = @transform_1, window_bounds = array<i64: 8, 128, 128>}, {pipeline_mode = #tpu.pipeline_mode<synchronous>, transform_indices = @transform_2, window_bounds = array<i64: 8, 128, 128>}, {pipeline_mode = #tpu.pipeline_mode<synchronous>, transform_indices = @transform_3, window_bounds = array<i64: 1, 128>}, {pipeline_mode = #tpu.pipeline_mode<synchronous>, transform_indices = @transform_4, window_bounds = array<i64: 2, 8, 128>}, {pipeline_mode = #tpu.pipeline_mode<synchronous>, transform_indices = @transform_5, window_bounds = array<i64: 128, 128>}, {pipeline_mode = #tpu.pipeline_mode<synchronous>, transform_indices = @transform_6, window_bounds = array<i64: 1, 128>}, {pipeline_mode = #tpu.pipeline_mode<synchronous>, transform_indices = @transform_7, window_bounds = array<i64: 128, 384>}, {pipeline_mode = #tpu.pipeline_mode<synchronous>, transform_indices = @transform_8, window_bounds = array<i64: 128, 384>}, {pipeline_mode = #tpu.pipeline_mode<synchronous>, transform_indices = @transform_9, window_bounds = array<i64: 128, 384>}, {pipeline_mode = #tpu.pipeline_mode<synchronous>, transform_indices = @transform_10, window_bounds = array<i64: 1, 384>}, {pipeline_mode = #tpu.pipeline_mode<synchronous>, transform_indices = @transform_11, window_bounds = array<i64: 1, 384>}, {pipeline_mode = #tpu.pipeline_mode<synchronous>, transform_indices = @transform_12, window_bounds = array<i64: 128, 384>}, {pipeline_mode = #tpu.pipeline_mode<synchronous>, transform_indices = @transform_13, window_bounds = array<i64: 128, 384>}, {pipeline_mode = #tpu.pipeline_mode<synchronous>, transform_indices = @transform_14, window_bounds = array<i64: 1, 384>}, {pipeline_mode = #tpu.pipeline_mode<synchronous>, transform_indices = @transform_15, window_bounds = array<i64: 1, 384>}, {transform_indices = @transform_16, window_bounds = array<i64: 1, 8, 128>}, {transform_indices = @transform_17, window_bounds = array<i64: 1, 8, 128>}]} {
    %c0_i32 = arith.constant 0 : i32
    %0 = arith.cmpi eq, %arg0, %c0_i32 : i32
    %1 = arith.extui %0 : i1 to i32
    %c0_i32_0 = arith.constant 0 : i32
    %2 = arith.cmpi ne, %1, %c0_i32_0 : i32
    scf.if %2 {
      %c0_69 = arith.constant 0 : index
      %c0_70 = arith.constant 0 : index
      %c0_71 = arith.constant 0 : index
      %134 = vector.load %arg5[%c0_69, %c0_70, %c0_71] : memref<2x8x128xf32, #tpu.memory_space<vmem>>, vector<2x8x128xf32>
      %c0_72 = arith.constant 0 : index
      %c0_73 = arith.constant 0 : index
      %c0_74 = arith.constant 0 : index
      %135 = vector.load %arg19[%c0_72, %c0_73, %c0_74] : memref<2x8x128xf32, #tpu.memory_space<vmem>>, vector<2x8x128xf32>
      tpu.vector_store %arg19[%c0_72, %c0_73, %c0_74], %134 {strides = array<i32>} : memref<2x8x128xf32, #tpu.memory_space<vmem>>, vector<2x8x128xf32>,
    } else {
    }
    %c0 = arith.constant 0 : index
    %c0_1 = arith.constant 0 : index
    %c0_2 = arith.constant 0 : index
    %3 = vector.load %arg1[%c0, %c0_1, %c0_2] : memref<1x8x128xbf16, #tpu.memory_space<vmem>>, vector<1x8x128xbf16>
    %4 = vector.shape_cast %3 : vector<1x8x128xbf16> to vector<8x128xbf16>
    %c1 = arith.constant 1 : index
    %c0_3 = arith.constant 0 : index
    %c0_4 = arith.constant 0 : index
    %5 = vector.load %arg19[%c1, %c0_3, %c0_4] : memref<2x8x128xf32, #tpu.memory_space<vmem>>, vector<1x8x128xf32>
    %6 = vector.shape_cast %5 : vector<1x8x128xf32> to vector<8x128xf32>
    %7 = arith.truncf %6 : vector<8x128xf32> to vector<8x128xbf16>
    %c0_5 = arith.constant 0 : index
    %c0_6 = arith.constant 0 : index
    %8 = vector.load %arg6[%c0_5, %c0_6] : memref<128x128xbf16, #tpu.memory_space<vmem>>, vector<128x128xbf16>
    %cst = arith.constant dense<0.000000e+00> : vector<8x128xf32>
    %9 = tpu.matmul %7, %8, %cst {dimension_numbers = #tpu.dot_dimension_numbers<[1], [0], [0], [1], [0, 0, 1, 1], [], []>} : vector<8x128xbf16>, vector<128x128xbf16>, vector<8x128xf32> -> vector<8x128xf32>
    %c0_7 = arith.constant 0 : index
    %c0_8 = arith.constant 0 : index
    %10 = vector.load %arg7[%c0_7, %c0_8] : memref<1x128xf32, #tpu.memory_space<vmem>>, vector<1x128xf32>
    %11 = vector.broadcast %10 : vector<1x128xf32> to vector<8x128xf32>
    %12 = arith.addf %9, %11 : vector<8x128xf32>
    %c0_9 = arith.constant 0 : index
    %c0_10 = arith.constant 0 : index
    %c0_11 = arith.constant 0 : index
    %13 = vector.load %arg2[%c0_9, %c0_10, %c0_11] : memref<8x128x128xbf16, #tpu.memory_space<vmem>>, vector<8x128x128xbf16>
    %14 = arith.extf %13 : vector<8x128x128xbf16> to vector<8x128x128xf32>
    %15 = vector.shape_cast %12 : vector<8x128xf32> to vector<8x1x128xf32>
    %16 = vector.broadcast %15 : vector<8x1x128xf32> to vector<8x128x128xf32>
    %17 = arith.mulf %14, %16 : vector<8x128x128xf32>
    %cst_12 = arith.constant dense<0.000000e+00> : vector<8x128xf32>
    %18 = vector.multi_reduction <add>, %17, %cst_12 [2] : vector<8x128x128xf32> to vector<8x128xf32>
    %c0_13 = arith.constant 0 : index
    %c0_14 = arith.constant 0 : index
    %19 = vector.load %arg4[%c0_13, %c0_14] : memref<1x128xf32, #tpu.memory_space<vmem>>, vector<1x128xf32>
    %20 = vector.broadcast %19 : vector<1x128xf32> to vector<8x128xf32>
    %21 = arith.addf %18, %20 : vector<8x128xf32>
    %cst_15 = arith.constant dense<0xFF800000> : vector<8xf32>
    %22 = vector.multi_reduction <maximumf>, %21, %cst_15 [1] : vector<8x128xf32> to vector<8xf32>
    %23 = vector.shape_cast %22 : vector<8xf32> to vector<8x1xf32>
    %24 = vector.broadcast %23 : vector<8x1xf32> to vector<8x128xf32>
    %25 = arith.subf %21, %24 : vector<8x128xf32>
    %26 = math.exp %25 : vector<8x128xf32>
    %cst_16 = arith.constant dense<0.000000e+00> : vector<8xf32>
    %27 = vector.multi_reduction <add>, %26, %cst_16 [1] : vector<8x128xf32> to vector<8xf32>
    %28 = vector.shape_cast %27 : vector<8xf32> to vector<8x1xf32>
    %cst_17 = arith.constant 1.000000e+00 : f32
    %29 = vector.broadcast %cst_17 : f32 to vector<8x1xf32>
    %30 = arith.divf %29, %28 : vector<8x1xf32>
    %31 = vector.broadcast %30 : vector<8x1xf32> to vector<8x128xf32>
    %32 = arith.mulf %26, %31 : vector<8x128xf32>
    %33 = vector.shape_cast %32 : vector<8x128xf32> to vector<8x128x1xf32>
    %c0_18 = arith.constant 0 : index
    %c0_19 = arith.constant 0 : index
    %c0_20 = arith.constant 0 : index
    %34 = vector.load %arg3[%c0_18, %c0_19, %c0_20] : memref<8x128x128xbf16, #tpu.memory_space<vmem>>, vector<8x128x128xbf16>
    %35 = arith.extf %34 : vector<8x128x128xbf16> to vector<8x128x128xf32>
    %36 = vector.broadcast %33 : vector<8x128x1xf32> to vector<8x128x128xf32>
    %37 = arith.mulf %36, %35 : vector<8x128x128xf32>
    %cst_21 = arith.constant dense<0.000000e+00> : vector<8x128xf32>
    %38 = vector.multi_reduction <add>, %37, %cst_21 [1] : vector<8x128x128xf32> to vector<8x128xf32>
    %c0_22 = arith.constant 0 : index
    %c0_23 = arith.constant 0 : index
    %c0_24 = arith.constant 0 : index
    %39 = vector.load %arg19[%c0_22, %c0_23, %c0_24] : memref<2x8x128xf32, #tpu.memory_space<vmem>>, vector<1x8x128xf32>
    %40 = vector.shape_cast %39 : vector<1x8x128xf32> to vector<8x128xf32>
    %41 = arith.truncf %38 : vector<8x128xf32> to vector<8x128xbf16>
    %c0_25 = arith.constant 0 : index
    %c0_26 = arith.constant 0 : index
    %42 = vector.load %arg8[%c0_25, %c0_26] : memref<128x384xbf16, #tpu.memory_space<vmem>>, vector<128x384xbf16>
    %cst_27 = arith.constant dense<0.000000e+00> : vector<8x384xf32>
    %43 = tpu.matmul %41, %42, %cst_27 {dimension_numbers = #tpu.dot_dimension_numbers<[1], [0], [0], [1], [0, 0, 1, 1], [], []>} : vector<8x128xbf16>, vector<128x384xbf16>, vector<8x384xf32> -> vector<8x384xf32>
    %c0_28 = arith.constant 0 : index
    %c0_29 = arith.constant 0 : index
    %44 = vector.load %arg9[%c0_28, %c0_29] : memref<128x384xbf16, #tpu.memory_space<vmem>>, vector<128x384xbf16>
    %cst_30 = arith.constant dense<0.000000e+00> : vector<8x384xf32>
    %45 = tpu.matmul %4, %44, %cst_30 {dimension_numbers = #tpu.dot_dimension_numbers<[1], [0], [0], [1], [0, 0, 1, 1], [], []>} : vector<8x128xbf16>, vector<128x384xbf16>, vector<8x384xf32> -> vector<8x384xf32>
    %46 = arith.addf %43, %45 : vector<8x384xf32>
    %c0_31 = arith.constant 0 : index
    %c0_32 = arith.constant 0 : index
    %47 = vector.load %arg11[%c0_31, %c0_32] : memref<1x384xf32, #tpu.memory_space<vmem>>, vector<1x384xf32>
    %48 = vector.broadcast %47 : vector<1x384xf32> to vector<8x384xf32>
    %49 = arith.addf %46, %48 : vector<8x384xf32>
    %50 = arith.truncf %40 : vector<8x128xf32> to vector<8x128xbf16>
    %c0_33 = arith.constant 0 : index
    %c0_34 = arith.constant 0 : index
    %51 = vector.load %arg10[%c0_33, %c0_34] : memref<128x384xbf16, #tpu.memory_space<vmem>>, vector<128x384xbf16>
    %cst_35 = arith.constant dense<0.000000e+00> : vector<8x384xf32>
    %52 = tpu.matmul %50, %51, %cst_35 {dimension_numbers = #tpu.dot_dimension_numbers<[1], [0], [0], [1], [0, 0, 1, 1], [], []>} : vector<8x128xbf16>, vector<128x384xbf16>, vector<8x384xf32> -> vector<8x384xf32>
    %c0_36 = arith.constant 0 : index
    %c0_37 = arith.constant 0 : index
    %53 = vector.load %arg12[%c0_36, %c0_37] : memref<1x384xf32, #tpu.memory_space<vmem>>, vector<1x384xf32>
    %54 = vector.broadcast %53 : vector<1x384xf32> to vector<8x384xf32>
    %55 = arith.addf %52, %54 : vector<8x384xf32>
    %56 = vector.extract_strided_slice %49 {offsets = [0, 0], sizes = [8, 128], strides = [1, 1]} : vector<8x384xf32> to vector<8x128xf32>
    %57 = vector.extract_strided_slice %55 {offsets = [0, 0], sizes = [8, 128], strides = [1, 1]} : vector<8x384xf32> to vector<8x128xf32>
    %58 = arith.addf %56, %57 : vector<8x128xf32>
    %59 = arith.negf %58 : vector<8x128xf32>
    %60 = math.exp %59 : vector<8x128xf32>
    %cst_38 = arith.constant 1.000000e+00 : f32
    %61 = vector.broadcast %cst_38 : f32 to vector<8x128xf32>
    %62 = arith.addf %61, %60 : vector<8x128xf32>
    %63 = arith.divf %61, %62 : vector<8x128xf32>
    %64 = vector.extract_strided_slice %49 {offsets = [0, 128], sizes = [8, 128], strides = [1, 1]} : vector<8x384xf32> to vector<8x128xf32>
    %65 = vector.extract_strided_slice %55 {offsets = [0, 128], sizes = [8, 128], strides = [1, 1]} : vector<8x384xf32> to vector<8x128xf32>
    %66 = arith.addf %64, %65 : vector<8x128xf32>
    %67 = arith.negf %66 : vector<8x128xf32>
    %68 = math.exp %67 : vector<8x128xf32>
    %cst_39 = arith.constant 1.000000e+00 : f32
    %69 = vector.broadcast %cst_39 : f32 to vector<8x128xf32>
    %70 = arith.addf %69, %68 : vector<8x128xf32>
    %71 = arith.divf %69, %70 : vector<8x128xf32>
    %72 = vector.extract_strided_slice %49 {offsets = [0, 256], sizes = [8, 128], strides = [1, 1]} : vector<8x384xf32> to vector<8x128xf32>
    %73 = vector.extract_strided_slice %55 {offsets = [0, 256], sizes = [8, 128], strides = [1, 1]} : vector<8x384xf32> to vector<8x128xf32>
    %74 = arith.mulf %63, %73 : vector<8x128xf32>
    %75 = arith.addf %72, %74 : vector<8x128xf32>
    %76 = math.tanh %75 : vector<8x128xf32>
    %cst_40 = arith.constant 1.000000e+00 : f32
    %77 = vector.broadcast %cst_40 : f32 to vector<8x128xf32>
    %78 = arith.subf %77, %71 : vector<8x128xf32>
    %79 = arith.mulf %78, %76 : vector<8x128xf32>
    %80 = arith.mulf %71, %40 : vector<8x128xf32>
    %81 = arith.addf %79, %80 : vector<8x128xf32>
    %c0_41 = arith.constant 0 : index
    %c0_42 = arith.constant 0 : index
    %c0_43 = arith.constant 0 : index
    %82 = vector.load %arg19[%c0_41, %c0_42, %c0_43] : memref<2x8x128xf32, #tpu.memory_space<vmem>>, vector<1x8x128xf32>
    %83 = vector.shape_cast %82 : vector<1x8x128xf32> to vector<8x128xf32>
    %84 = vector.shape_cast %81 : vector<8x128xf32> to vector<1x8x128xf32>
    tpu.vector_store %arg19[%c0_41, %c0_42, %c0_43], %84 {strides = array<i32>} : memref<2x8x128xf32, #tpu.memory_space<vmem>>, vector<1x8x128xf32>,
    %c1_44 = arith.constant 1 : index
    %c0_45 = arith.constant 0 : index
    %c0_46 = arith.constant 0 : index
    %85 = vector.load %arg19[%c1_44, %c0_45, %c0_46] : memref<2x8x128xf32, #tpu.memory_space<vmem>>, vector<1x8x128xf32>
    %86 = vector.shape_cast %85 : vector<1x8x128xf32> to vector<8x128xf32>
    %87 = arith.truncf %81 : vector<8x128xf32> to vector<8x128xbf16>
    %c0_47 = arith.constant 0 : index
    %c0_48 = arith.constant 0 : index
    %88 = vector.load %arg13[%c0_47, %c0_48] : memref<128x384xbf16, #tpu.memory_space<vmem>>, vector<128x384xbf16>
    %cst_49 = arith.constant dense<0.000000e+00> : vector<8x384xf32>
    %89 = tpu.matmul %87, %88, %cst_49 {dimension_numbers = #tpu.dot_dimension_numbers<[1], [0], [0], [1], [0, 0, 1, 1], [], []>} : vector<8x128xbf16>, vector<128x384xbf16>, vector<8x384xf32> -> vector<8x384xf32>
    %c0_50 = arith.constant 0 : index
    %c0_51 = arith.constant 0 : index
    %90 = vector.load %arg15[%c0_50, %c0_51] : memref<1x384xf32, #tpu.memory_space<vmem>>, vector<1x384xf32>
    %91 = vector.broadcast %90 : vector<1x384xf32> to vector<8x384xf32>
    %92 = arith.addf %89, %91 : vector<8x384xf32>
    %93 = arith.truncf %86 : vector<8x128xf32> to vector<8x128xbf16>
    %c0_52 = arith.constant 0 : index
    %c0_53 = arith.constant 0 : index
    %94 = vector.load %arg14[%c0_52, %c0_53] : memref<128x384xbf16, #tpu.memory_space<vmem>>, vector<128x384xbf16>
    %cst_54 = arith.constant dense<0.000000e+00> : vector<8x384xf32>
    %95 = tpu.matmul %93, %94, %cst_54 {dimension_numbers = #tpu.dot_dimension_numbers<[1], [0], [0], [1], [0, 0, 1, 1], [], []>} : vector<8x128xbf16>, vector<128x384xbf16>, vector<8x384xf32> -> vector<8x384xf32>
    %c0_55 = arith.constant 0 : index
    %c0_56 = arith.constant 0 : index
    %96 = vector.load %arg16[%c0_55, %c0_56] : memref<1x384xf32, #tpu.memory_space<vmem>>, vector<1x384xf32>
    %97 = vector.broadcast %96 : vector<1x384xf32> to vector<8x384xf32>
    %98 = arith.addf %95, %97 : vector<8x384xf32>
    %99 = vector.extract_strided_slice %92 {offsets = [0, 0], sizes = [8, 128], strides = [1, 1]} : vector<8x384xf32> to vector<8x128xf32>
    %100 = vector.extract_strided_slice %98 {offsets = [0, 0], sizes = [8, 128], strides = [1, 1]} : vector<8x384xf32> to vector<8x128xf32>
    %101 = arith.addf %99, %100 : vector<8x128xf32>
    %102 = arith.negf %101 : vector<8x128xf32>
    %103 = math.exp %102 : vector<8x128xf32>
    %cst_57 = arith.constant 1.000000e+00 : f32
    %104 = vector.broadcast %cst_57 : f32 to vector<8x128xf32>
    %105 = arith.addf %104, %103 : vector<8x128xf32>
    %106 = arith.divf %104, %105 : vector<8x128xf32>
    %107 = vector.extract_strided_slice %92 {offsets = [0, 128], sizes = [8, 128], strides = [1, 1]} : vector<8x384xf32> to vector<8x128xf32>
    %108 = vector.extract_strided_slice %98 {offsets = [0, 128], sizes = [8, 128], strides = [1, 1]} : vector<8x384xf32> to vector<8x128xf32>
    %109 = arith.addf %107, %108 : vector<8x128xf32>
    %110 = arith.negf %109 : vector<8x128xf32>
    %111 = math.exp %110 : vector<8x128xf32>
    %cst_58 = arith.constant 1.000000e+00 : f32
    %112 = vector.broadcast %cst_58 : f32 to vector<8x128xf32>
    %113 = arith.addf %112, %111 : vector<8x128xf32>
    %114 = arith.divf %112, %113 : vector<8x128xf32>
    %115 = vector.extract_strided_slice %92 {offsets = [0, 256], sizes = [8, 128], strides = [1, 1]} : vector<8x384xf32> to vector<8x128xf32>
    %116 = vector.extract_strided_slice %98 {offsets = [0, 256], sizes = [8, 128], strides = [1, 1]} : vector<8x384xf32> to vector<8x128xf32>
    %117 = arith.mulf %106, %116 : vector<8x128xf32>
    %118 = arith.addf %115, %117 : vector<8x128xf32>
    %119 = math.tanh %118 : vector<8x128xf32>
    %cst_59 = arith.constant 1.000000e+00 : f32
    %120 = vector.broadcast %cst_59 : f32 to vector<8x128xf32>
    %121 = arith.subf %120, %114 : vector<8x128xf32>
    %122 = arith.mulf %121, %119 : vector<8x128xf32>
    %123 = arith.mulf %114, %86 : vector<8x128xf32>
    %124 = arith.addf %122, %123 : vector<8x128xf32>
    %c1_60 = arith.constant 1 : index
    %c0_61 = arith.constant 0 : index
    %c0_62 = arith.constant 0 : index
    %125 = vector.load %arg19[%c1_60, %c0_61, %c0_62] : memref<2x8x128xf32, #tpu.memory_space<vmem>>, vector<1x8x128xf32>
    %126 = vector.shape_cast %125 : vector<1x8x128xf32> to vector<8x128xf32>
    %127 = vector.shape_cast %124 : vector<8x128xf32> to vector<1x8x128xf32>
    tpu.vector_store %arg19[%c1_60, %c0_61, %c0_62], %127 {strides = array<i32>} : memref<2x8x128xf32, #tpu.memory_space<vmem>>, vector<1x8x128xf32>,
    %c0_63 = arith.constant 0 : index
    %c0_64 = arith.constant 0 : index
    %c0_65 = arith.constant 0 : index
    %128 = vector.load %arg17[%c0_63, %c0_64, %c0_65] : memref<1x8x128xf32, #tpu.memory_space<vmem>>, vector<1x8x128xf32>
    %129 = vector.shape_cast %128 : vector<1x8x128xf32> to vector<8x128xf32>
    %130 = vector.shape_cast %124 : vector<8x128xf32> to vector<1x8x128xf32>
    tpu.vector_store %arg17[%c0_63, %c0_64, %c0_65], %130 {strides = array<i32>} : memref<1x8x128xf32, #tpu.memory_space<vmem>>, vector<1x8x128xf32>,
    %c0_66 = arith.constant 0 : index
    %c0_67 = arith.constant 0 : index
    %c0_68 = arith.constant 0 : index
    %131 = vector.load %arg18[%c0_66, %c0_67, %c0_68] : memref<1x8x128xf32, #tpu.memory_space<vmem>>, vector<1x8x128xf32>
    %132 = vector.shape_cast %131 : vector<1x8x128xf32> to vector<8x128xf32>
    %133 = vector.shape_cast %32 : vector<8x128xf32> to vector<1x8x128xf32>
    tpu.vector_store %arg18[%c0_66, %c0_67, %c0_68], %133 {strides = array<i32>} : memref<1x8x128xf32, #tpu.memory_space<vmem>>, vector<1x8x128xf32>,
    return
  }
  func.func @transform_0(%arg0: i32) -> (i32, i32, i32) {
    %c0_i32 = arith.constant 0 : i32
    %c0_i32_0 = arith.constant 0 : i32
    %c0_i32_1 = arith.constant 0 : i32
    return %arg0, %c0_i32, %c0_i32_0 : i32, i32, i32
  }
  func.func @transform_1(%arg0: i32) -> (i32, i32, i32) {
    %c0_i32 = arith.constant 0 : i32
    %c0_i32_0 = arith.constant 0 : i32
    %c0_i32_1 = arith.constant 0 : i32
    %c0_i32_2 = arith.constant 0 : i32
    return %c0_i32, %c0_i32_0, %c0_i32_1 : i32, i32, i32
  }
  func.func @transform_2(%arg0: i32) -> (i32, i32, i32) {
    %c0_i32 = arith.constant 0 : i32
    %c0_i32_0 = arith.constant 0 : i32
    %c0_i32_1 = arith.constant 0 : i32
    %c0_i32_2 = arith.constant 0 : i32
    return %c0_i32, %c0_i32_0, %c0_i32_1 : i32, i32, i32
  }
  func.func @transform_3(%arg0: i32) -> (i32, i32) {
    %c0_i32 = arith.constant 0 : i32
    %c0_i32_0 = arith.constant 0 : i32
    %c0_i32_1 = arith.constant 0 : i32
    return %c0_i32, %c0_i32_0 : i32, i32
  }
  func.func @transform_4(%arg0: i32) -> (i32, i32, i32) {
    %c0_i32 = arith.constant 0 : i32
    %c0_i32_0 = arith.constant 0 : i32
    %c0_i32_1 = arith.constant 0 : i32
    %c0_i32_2 = arith.constant 0 : i32
    return %c0_i32, %c0_i32_0, %c0_i32_1 : i32, i32, i32
  }
  func.func @transform_5(%arg0: i32) -> (i32, i32) {
    %c0_i32 = arith.constant 0 : i32
    %c0_i32_0 = arith.constant 0 : i32
    %c0_i32_1 = arith.constant 0 : i32
    return %c0_i32, %c0_i32_0 : i32, i32
  }
  func.func @transform_6(%arg0: i32) -> (i32, i32) {
    %c0_i32 = arith.constant 0 : i32
    %c0_i32_0 = arith.constant 0 : i32
    %c0_i32_1 = arith.constant 0 : i32
    return %c0_i32, %c0_i32_0 : i32, i32
  }
  func.func @transform_7(%arg0: i32) -> (i32, i32) {
    %c0_i32 = arith.constant 0 : i32
    %c0_i32_0 = arith.constant 0 : i32
    %c0_i32_1 = arith.constant 0 : i32
    return %c0_i32, %c0_i32_0 : i32, i32
  }
  func.func @transform_8(%arg0: i32) -> (i32, i32) {
    %c0_i32 = arith.constant 0 : i32
    %c0_i32_0 = arith.constant 0 : i32
    %c0_i32_1 = arith.constant 0 : i32
    return %c0_i32, %c0_i32_0 : i32, i32
  }
  func.func @transform_9(%arg0: i32) -> (i32, i32) {
    %c0_i32 = arith.constant 0 : i32
    %c0_i32_0 = arith.constant 0 : i32
    %c0_i32_1 = arith.constant 0 : i32
    return %c0_i32, %c0_i32_0 : i32, i32
  }
  func.func @transform_10(%arg0: i32) -> (i32, i32) {
    %c0_i32 = arith.constant 0 : i32
    %c0_i32_0 = arith.constant 0 : i32
    %c0_i32_1 = arith.constant 0 : i32
    return %c0_i32, %c0_i32_0 : i32, i32
  }
  func.func @transform_11(%arg0: i32) -> (i32, i32) {
    %c0_i32 = arith.constant 0 : i32
    %c0_i32_0 = arith.constant 0 : i32
    %c0_i32_1 = arith.constant 0 : i32
    return %c0_i32, %c0_i32_0 : i32, i32
  }
  func.func @transform_12(%arg0: i32) -> (i32, i32) {
    %c0_i32 = arith.constant 0 : i32
    %c0_i32_0 = arith.constant 0 : i32
    %c0_i32_1 = arith.constant 0 : i32
    return %c0_i32, %c0_i32_0 : i32, i32
  }
  func.func @transform_13(%arg0: i32) -> (i32, i32) {
    %c0_i32 = arith.constant 0 : i32
    %c0_i32_0 = arith.constant 0 : i32
    %c0_i32_1 = arith.constant 0 : i32
    return %c0_i32, %c0_i32_0 : i32, i32
  }
  func.func @transform_14(%arg0: i32) -> (i32, i32) {
    %c0_i32 = arith.constant 0 : i32
    %c0_i32_0 = arith.constant 0 : i32
    %c0_i32_1 = arith.constant 0 : i32
    return %c0_i32, %c0_i32_0 : i32, i32
  }
  func.func @transform_15(%arg0: i32) -> (i32, i32) {
    %c0_i32 = arith.constant 0 : i32
    %c0_i32_0 = arith.constant 0 : i32
    %c0_i32_1 = arith.constant 0 : i32
    return %c0_i32, %c0_i32_0 : i32, i32
  }
  func.func @transform_16(%arg0: i32) -> (i32, i32, i32) {
    %c0_i32 = arith.constant 0 : i32
    %c0_i32_0 = arith.constant 0 : i32
    %c0_i32_1 = arith.constant 0 : i32
    return %arg0, %c0_i32, %c0_i32_0 : i32, i32, i32
  }
  func.func @transform_17(%arg0: i32) -> (i32, i32, i32) {
    %c0_i32 = arith.constant 0 : i32
    %c0_i32_0 = arith.constant 0 : i32
    %c0_i32_1 = arith.constant 0 : i32
    return %arg0, %c0_i32, %c0_i32_0 : i32, i32, i32
  }
}

</mosaic_0001>

<llo_original>
// kernel: tpu_custom_call.1
$region0: #{tpu_custom_call.1}
  #allocation0 [shape = 'u32[]', space=smem, size = 0x4, offset = 0x4, fixed_abs, tag = 'smem constant byte address 0x4 - core index']
  #allocation1 [shape = 'u32[144,128]{1,0:T(1,128)}', space=vmem, size = 0x12000, scoped, tag = 'internal scratch']
  #allocation2 [shape = 'f32[2,8,128]{2,1,0:T(8,128)}', space=vmem, size = 0x2000, scoped, tag = 'scratch operand']
  %s0 = inlined_call_operand.hbm [shape: bf16[5,8,128], index: 0, kind: input, shape index: {}]
  %s1 = inlined_call_operand.hbm [shape: bf16[8,128,128], index: 1, kind: input, shape index: {}]
  %s2 = inlined_call_operand.hbm [shape: bf16[8,128,128], index: 2, kind: input, shape index: {}]
  %s3 = inlined_call_operand.vmem [shape: f32[1,128], index: 3, kind: input, shape index: {}]
  %s4 = inlined_call_operand.hbm [shape: f32[2,8,128], index: 4, kind: input, shape index: {}]
  %s5 = inlined_call_operand.hbm [shape: bf16[128,128], index: 5, kind: input, shape index: {}]
  %s6 = inlined_call_operand.vmem [shape: f32[1,128], index: 6, kind: input, shape index: {}]
  %s7 = inlined_call_operand.hbm [shape: bf16[128,384], index: 7, kind: input, shape index: {}]
  %s8 = inlined_call_operand.hbm [shape: bf16[128,384], index: 8, kind: input, shape index: {}]
  %s9 = inlined_call_operand.hbm [shape: bf16[128,384], index: 9, kind: input, shape index: {}]
  %s10 = inlined_call_operand.vmem [shape: f32[1,384], index: 10, kind: input, shape index: {}]
  %s11 = inlined_call_operand.vmem [shape: f32[1,384], index: 11, kind: input, shape index: {}]
  %s12 = inlined_call_operand.hbm [shape: bf16[128,384], index: 12, kind: input, shape index: {}]
  %s13 = inlined_call_operand.hbm [shape: bf16[128,384], index: 13, kind: input, shape index: {}]
  %s14 = inlined_call_operand.vmem [shape: f32[1,384], index: 14, kind: input, shape index: {}]
  %s15 = inlined_call_operand.vmem [shape: f32[1,384], index: 15, kind: input, shape index: {}]
  %s16 = inlined_call_operand.hbm [shape: f32[5,8,128], index: 16, kind: output, shape index: {0}]
  %s17 = inlined_call_operand.hbm [shape: f32[5,8,128], index: 17, kind: output, shape index: {1}]
  %18 = xla_tuple %s16, %s17
  %s19 = sld [smem:[#allocation0]]
  $region149: #{tpu_custom_call.1} parent=0
    _
  %s21 = ssub.s32 1, %s19
  %s22 = scalar_select 0, %s21, %s19
  $region1: #{tpu_custom_call.1} parent=0
    #allocation3 [shape = 'u8[4096]{0}', space=vmem, size = 0x1000, scoped, tag = 'input window, operand 0']
    #allocation4 [shape = 's32[2]{0}', space=sflag, size = 0x8, scoped, tag = 'scoped memory for tpu_custom_call.1']
    #allocation5 [shape = 's32[2]{0}', space=sflag, size = 0x8, scoped, tag = 'scoped memory for tpu_custom_call.1']
    #allocation6 [shape = 'u8[262144]{0}', space=vmem, size = 0x40000, scoped, tag = 'input window, operand 1, single buffered']
    #allocation7 [shape = 's32[1]{0}', space=sflag, size = 0x4, scoped, tag = 'scoped memory for tpu_custom_call.1']
    #allocation8 [shape = 'u8[262144]{0}', space=vmem, size = 0x40000, scoped, tag = 'input window, operand 2, single buffered']
    #allocation9 [shape = 'u8[8192]{0}', space=vmem, size = 0x2000, scoped, tag = 'input window, operand 4, single buffered']
    #allocation10 [shape = 's32[1]{0}', space=sflag, size = 0x4, scoped, tag = 'scoped memory for tpu_custom_call.1']
    #allocation11 [shape = 'u8[32768]{0}', space=vmem, size = 0x8000, scoped, tag = 'input window, operand 5, single buffered']
    #allocation12 [shape = 'u8[98304]{0}', space=vmem, size = 0x18000, scoped, tag = 'input window, operand 7, single buffered']
    #allocation13 [shape = 's32[1]{0}', space=sflag, size = 0x4, scoped, tag = 'scoped memory for tpu_custom_call.1']
    #allocation14 [shape = 'u8[98304]{0}', space=vmem, size = 0x18000, scoped, tag = 'input window, operand 8, single buffered']
    #allocation15 [shape = 'u8[98304]{0}', space=vmem, size = 0x18000, scoped, tag = 'input window, operand 9, single buffered']
    #allocation16 [shape = 's32[1]{0}', space=sflag, size = 0x4, scoped, tag = 'scoped memory for tpu_custom_call.1']
    #allocation17 [shape = 'u8[98304]{0}', space=vmem, size = 0x18000, scoped, tag = 'input window, operand 12, single buffered']
    #allocation18 [shape = 'u8[98304]{0}', space=vmem, size = 0x18000, scoped, tag = 'input window, operand 13, single buffered']
    #allocation19 [shape = 's32[1]{0}', space=sflag, size = 0x4, scoped, tag = 'scoped memory for tpu_custom_call.1']
    #allocation20 [shape = 'u8[8192]{0}', space=vmem, size = 0x2000, scoped, tag = 'output window, operand 0']
    #allocation21 [shape = 'u8[8192]{0}', space=vmem, size = 0x2000, scoped, tag = 'output window, operand 1']
    #allocation22 [shape = 's32[2]{0}', space=sflag, size = 0x8, scoped, tag = 'scoped memory for tpu_custom_call.1']
    %23 = vsyncpa [#allocation4], 0
    %s24 = scalar_lea.sflag [#allocation4], 1
    %25 = vsyncpa %s24, 0
    %26 = vsyncpa [#allocation7], 0
    %27 = vsyncpa [#allocation10], 0
    %28 = vsyncpa [#allocation13], 0
    %29 = vsyncpa [#allocation16], 0
    %30 = vsyncpa [#allocation19], 0
    %31 = vsyncpa [#allocation5], 0
    %s32 = scalar_lea.sflag [#allocation5], 1
    %33 = vsyncpa %s32, 0
    %34 = vsyncpa [#allocation22], 0
    %s35 = scalar_lea.sflag [#allocation22], 1
    %36 = vsyncpa %s35, 0
    loop: start=0, step=1, limit=7
    $region2: #{tpu_custom_call.1} parent=1 // loop_pre_header
      _
    $region3: #{tpu_custom_call.1} parent=1 // loop_header
      %s38 = sphi 0, %s42
      %p39 = scmp.ge.s32.totalorder %s38, 7
      %s48 = sphi 0, %s50
      %s51 = sphi 0, %s48
      %s52 = sphi 0, %s51
      %s68 = sphi 0, %s52
      %s72 = sphi 0, %s72
      %s74 = sphi 0, %s72
      %s75 = sphi 0, %s74
      %s89 = sphi 0, %s75
      %s93 = sphi 0, %s93
      %s95 = sphi 0, %s93
      %s96 = sphi 0, %s95
      %s110 = sphi 0, %s96
      %s114 = sphi 0, %s114
      %s116 = sphi 0, %s114
      %s117 = sphi 0, %s116
      %s131 = sphi 0, %s117
      %s135 = sphi 0, %s135
      %s137 = sphi 0, %s135
      %s138 = sphi 0, %s137
      %s152 = sphi 0, %s138
      %s156 = sphi 0, %s156
      %s158 = sphi 0, %s156
      %s159 = sphi 0, %s158
      %s173 = sphi 0, %s159
      %s177 = sphi 0, %s177
      %s179 = sphi 0, %s177
      %s180 = sphi 0, %s179
      %s194 = sphi 0, %s180
      %s198 = sphi 0, %s198
      %s200 = sphi 0, %s198
      %s201 = sphi 0, %s200
      %s215 = sphi 0, %s201
      %s219 = sphi 0, %s219
      %s221 = sphi 0, %s219
      %s222 = sphi 0, %s221
      %s236 = sphi 0, %s222
      %s240 = sphi 0, %s240
      %s242 = sphi 0, %s240
      %s243 = sphi 0, %s242
      %s257 = sphi 0, %s243
      %s261 = sphi 0, %s261
      %s263 = sphi 0, %s261
      %s264 = sphi 0, %s263
      %s278 = sphi 0, %s264
      %s282 = sphi 0, %s282
      %s284 = sphi 0, %s282
      %s285 = sphi 0, %s284
      %s299 = sphi 0, %s285
      %s303 = sphi 0, %s303
      %s305 = sphi 0, %s303
      %s306 = sphi 0, %s305
      %s320 = sphi 0, %s306
      %s324 = sphi 0, %s324
      %s326 = sphi 0, %s324
      %s327 = sphi 0, %s326
      %s341 = sphi 0, %s327
      %s345 = sphi 0, %s345
      %s347 = sphi 0, %s345
      %s348 = sphi 0, %s347
      %s362 = sphi 0, %s348
      %s366 = sphi 0, %s366
      %s368 = sphi 0, %s366
      %s369 = sphi 0, %s368
      %s383 = sphi 0, %s369
      %s389 = sphi 0, %s391
      %s392 = sphi 0, %s389
      %s393 = sphi 0, %s392
      %s409 = sphi 0, %s393
      %s415 = sphi 0, %s417
      %s418 = sphi 0, %s415
      %s419 = sphi 0, %s418
      %s435 = sphi 0, %s419
    $region4: #{tpu_custom_call.1} parent=1 // loop_header_branch
      %41 = sbr.rel (%p39) target = $region8
    $region5: #{tpu_custom_call.1} parent=1 // loop_body
      %s43 = ssub.s32 %s38, 1
      %s44 = ssub.s32 %s38, 2
      %s45 = sadd.s32 %s38, 1
      %s46 = ssub.s32 %s38, %s45
      %p47 = scmp.eq.s32.totalorder %s46, 0
      %s49 = sadd.s32 %s48, 1
      %s50 = scalar_select %p47, %s48, %s49
      %p53 = pneg %p47
      %p54 = scmp.eq.s32.totalorder %s38, 4
      %p55 = por %p53, %p54
      %p56 = scmp.ne.s32.totalorder %s48, %s51
      %p57 = scmp.eq.s32.totalorder %s38, 0
      %p58 = por %p56, %p57
      %p59 = scmp.ne.s32.totalorder %s48, %s51
      %p60 = scmp.eq.s32.totalorder %s43, 4
      %p61 = por %p59, %p60
      %p62 = scmp.ne.s32.totalorder %s51, %s52
      %p63 = scmp.eq.s32.totalorder %s43, 0
      %p64 = por %p62, %p63
      %p65 = scmp.ne.s32.totalorder %s51, %s52
      %p66 = scmp.eq.s32.totalorder %s44, 4
      %p67 = por %p65, %p66
      %p69 = scmp.ne.s32.totalorder %s52, %s68
      %p70 = scmp.eq.s32.totalorder %s44, 0
      %p71 = por %p69, %p70
      %s73 = sadd.s32 %s72, 1
      %p76 = scmp.eq.s32.totalorder %s38, 4
      %p77 = scmp.ne.s32.totalorder %s72, %s74
      %p78 = scmp.eq.s32.totalorder %s38, 0
      %p79 = por %p77, %p78
      %p80 = scmp.ne.s32.totalorder %s72, %s74
      %p81 = scmp.eq.s32.totalorder %s43, 4
      %p82 = por %p80, %p81
      %p83 = scmp.ne.s32.totalorder %s74, %s75
      %p84 = scmp.eq.s32.totalorder %s43, 0
      %p85 = por %p83, %p84
      %p86 = scmp.ne.s32.totalorder %s74, %s75
      %p87 = scmp.eq.s32.totalorder %s44, 4
      %p88 = por %p86, %p87
      %p90 = scmp.ne.s32.totalorder %s75, %s89
      %p91 = scmp.eq.s32.totalorder %s44, 0
      %p92 = por %p90, %p91
      %s94 = sadd.s32 %s93, 1
      %p97 = scmp.eq.s32.totalorder %s38, 4
      %p98 = scmp.ne.s32.totalorder %s93, %s95
      %p99 = scmp.eq.s32.totalorder %s38, 0
      %p100 = por %p98, %p99
      %p101 = scmp.ne.s32.totalorder %s93, %s95
      %p102 = scmp.eq.s32.totalorder %s43, 4
      %p103 = por %p101, %p102
      %p104 = scmp.ne.s32.totalorder %s95, %s96
      %p105 = scmp.eq.s32.totalorder %s43, 0
      %p106 = por %p104, %p105
      %p107 = scmp.ne.s32.totalorder %s95, %s96
      %p108 = scmp.eq.s32.totalorder %s44, 4
      %p109 = por %p107, %p108
      %p111 = scmp.ne.s32.totalorder %s96, %s110
      %p112 = scmp.eq.s32.totalorder %s44, 0
      %p113 = por %p111, %p112
      %s115 = sadd.s32 %s114, 1
      %p118 = scmp.eq.s32.totalorder %s38, 4
      %p119 = scmp.ne.s32.totalorder %s114, %s116
      %p120 = scmp.eq.s32.totalorder %s38, 0
      %p121 = por %p119, %p120
      %p122 = scmp.ne.s32.totalorder %s114, %s116
      %p123 = scmp.eq.s32.totalorder %s43, 4
      %p124 = por %p122, %p123
      %p125 = scmp.ne.s32.totalorder %s116, %s117
      %p126 = scmp.eq.s32.totalorder %s43, 0
      %p127 = por %p125, %p126
      %p128 = scmp.ne.s32.totalorder %s116, %s117
      %p129 = scmp.eq.s32.totalorder %s44, 4
      %p130 = por %p128, %p129
      %p132 = scmp.ne.s32.totalorder %s117, %s131
      %p133 = scmp.eq.s32.totalorder %s44, 0
      %p134 = por %p132, %p133
      %s136 = sadd.s32 %s135, 1
      %p139 = scmp.eq.s32.totalorder %s38, 4
      %p140 = scmp.ne.s32.totalorder %s135, %s137
      %p141 = scmp.eq.s32.totalorder %s38, 0
      %p142 = por %p140, %p141
      %p143 = scmp.ne.s32.totalorder %s135, %s137
      %p144 = scmp.eq.s32.totalorder %s43, 4
      %p145 = por %p143, %p144
      %p146 = scmp.ne.s32.totalorder %s137, %s138
      %p147 = scmp.eq.s32.totalorder %s43, 0
      %p148 = por %p146, %p147
      %p149 = scmp.ne.s32.totalorder %s137, %s138
      %p150 = scmp.eq.s32.totalorder %s44, 4
      %p151 = por %p149, %p150
      %p153 = scmp.ne.s32.totalorder %s138, %s152
      %p154 = scmp.eq.s32.totalorder %s44, 0
      %p155 = por %p153, %p154
      %s157 = sadd.s32 %s156, 1
      %p160 = scmp.eq.s32.totalorder %s38, 4
      %p161 = scmp.ne.s32.totalorder %s156, %s158
      %p162 = scmp.eq.s32.totalorder %s38, 0
      %p163 = por %p161, %p162
      %p164 = scmp.ne.s32.totalorder %s156, %s158
      %p165 = scmp.eq.s32.totalorder %s43, 4
      %p166 = por %p164, %p165
      %p167 = scmp.ne.s32.totalorder %s158, %s159
      %p168 = scmp.eq.s32.totalorder %s43, 0
      %p169 = por %p167, %p168
      %p170 = scmp.ne.s32.totalorder %s158, %s159
      %p171 = scmp.eq.s32.totalorder %s44, 4
      %p172 = por %p170, %p171
      %p174 = scmp.ne.s32.totalorder %s159, %s173
      %p175 = scmp.eq.s32.totalorder %s44, 0
      %p176 = por %p174, %p175
      %s178 = sadd.s32 %s177, 1
      %p181 = scmp.eq.s32.totalorder %s38, 4
      %p182 = scmp.ne.s32.totalorder %s177, %s179
      %p183 = scmp.eq.s32.totalorder %s38, 0
      %p184 = por %p182, %p183
      %p185 = scmp.ne.s32.totalorder %s177, %s179
      %p186 = scmp.eq.s32.totalorder %s43, 4
      %p187 = por %p185, %p186
      %p188 = scmp.ne.s32.totalorder %s179, %s180
      %p189 = scmp.eq.s32.totalorder %s43, 0
      %p190 = por %p188, %p189
      %p191 = scmp.ne.s32.totalorder %s179, %s180
      %p192 = scmp.eq.s32.totalorder %s44, 4
      %p193 = por %p191, %p192
      %p195 = scmp.ne.s32.totalorder %s180, %s194
      %p196 = scmp.eq.s32.totalorder %s44, 0
      %p197 = por %p195, %p196
      %s199 = sadd.s32 %s198, 1
      %p202 = scmp.eq.s32.totalorder %s38, 4
      %p203 = scmp.ne.s32.totalorder %s198, %s200
      %p204 = scmp.eq.s32.totalorder %s38, 0
      %p205 = por %p203, %p204
      %p206 = scmp.ne.s32.totalorder %s198, %s200
      %p207 = scmp.eq.s32.totalorder %s43, 4
      %p208 = por %p206, %p207
      %p209 = scmp.ne.s32.totalorder %s200, %s201
      %p210 = scmp.eq.s32.totalorder %s43, 0
      %p211 = por %p209, %p210
      %p212 = scmp.ne.s32.totalorder %s200, %s201
      %p213 = scmp.eq.s32.totalorder %s44, 4
      %p214 = por %p212, %p213
      %p216 = scmp.ne.s32.totalorder %s201, %s215
      %p217 = scmp.eq.s32.totalorder %s44, 0
      %p218 = por %p216, %p217
      %s220 = sadd.s32 %s219, 1
      %p223 = scmp.eq.s32.totalorder %s38, 4
      %p224 = scmp.ne.s32.totalorder %s219, %s221
      %p225 = scmp.eq.s32.totalorder %s38, 0
      %p226 = por %p224, %p225
      %p227 = scmp.ne.s32.totalorder %s219, %s221
      %p228 = scmp.eq.s32.totalorder %s43, 4
      %p229 = por %p227, %p228
      %p230 = scmp.ne.s32.totalorder %s221, %s222
      %p231 = scmp.eq.s32.totalorder %s43, 0
      %p232 = por %p230, %p231
      %p233 = scmp.ne.s32.totalorder %s221, %s222
      %p234 = scmp.eq.s32.totalorder %s44, 4
      %p235 = por %p233, %p234
      %p237 = scmp.ne.s32.totalorder %s222, %s236
      %p238 = scmp.eq.s32.totalorder %s44, 0
      %p239 = por %p237, %p238
      %s241 = sadd.s32 %s240, 1
      %p244 = scmp.eq.s32.totalorder %s38, 4
      %p245 = scmp.ne.s32.totalorder %s240, %s242
      %p246 = scmp.eq.s32.totalorder %s38, 0
      %p247 = por %p245, %p246
      %p248 = scmp.ne.s32.totalorder %s240, %s242
      %p249 = scmp.eq.s32.totalorder %s43, 4
      %p250 = por %p248, %p249
      %p251 = scmp.ne.s32.totalorder %s242, %s243
      %p252 = scmp.eq.s32.totalorder %s43, 0
      %p253 = por %p251, %p252
      %p254 = scmp.ne.s32.totalorder %s242, %s243
      %p255 = scmp.eq.s32.totalorder %s44, 4
      %p256 = por %p254, %p255
      %p258 = scmp.ne.s32.totalorder %s243, %s257
      %p259 = scmp.eq.s32.totalorder %s44, 0
      %p260 = por %p258, %p259
      %s262 = sadd.s32 %s261, 1
      %p265 = scmp.eq.s32.totalorder %s38, 4
      %p266 = scmp.ne.s32.totalorder %s261, %s263
      %p267 = scmp.eq.s32.totalorder %s38, 0
      %p268 = por %p266, %p267
      %p269 = scmp.ne.s32.totalorder %s261, %s263
      %p270 = scmp.eq.s32.totalorder %s43, 4
      %p271 = por %p269, %p270
      %p272 = scmp.ne.s32.totalorder %s263, %s264
      %p273 = scmp.eq.s32.totalorder %s43, 0
      %p274 = por %p272, %p273
      %p275 = scmp.ne.s32.totalorder %s263, %s264
      %p276 = scmp.eq.s32.totalorder %s44, 4
      %p277 = por %p275, %p276
      %p279 = scmp.ne.s32.totalorder %s264, %s278
      %p280 = scmp.eq.s32.totalorder %s44, 0
      %p281 = por %p279, %p280
      %s283 = sadd.s32 %s282, 1
      %p286 = scmp.eq.s32.totalorder %s38, 4
      %p287 = scmp.ne.s32.totalorder %s282, %s284
      %p288 = scmp.eq.s32.totalorder %s38, 0
      %p289 = por %p287, %p288
      %p290 = scmp.ne.s32.totalorder %s282, %s284
      %p291 = scmp.eq.s32.totalorder %s43, 4
      %p292 = por %p290, %p291
      %p293 = scmp.ne.s32.totalorder %s284, %s285
      %p294 = scmp.eq.s32.totalorder %s43, 0
      %p295 = por %p293, %p294
      %p296 = scmp.ne.s32.totalorder %s284, %s285
      %p297 = scmp.eq.s32.totalorder %s44, 4
      %p298 = por %p296, %p297
      %p300 = scmp.ne.s32.totalorder %s285, %s299
      %p301 = scmp.eq.s32.totalorder %s44, 0
      %p302 = por %p300, %p301
      %s304 = sadd.s32 %s303, 1
      %p307 = scmp.eq.s32.totalorder %s38, 4
      %p308 = scmp.ne.s32.totalorder %s303, %s305
      %p309 = scmp.eq.s32.totalorder %s38, 0
      %p310 = por %p308, %p309
      %p311 = scmp.ne.s32.totalorder %s303, %s305
      %p312 = scmp.eq.s32.totalorder %s43, 4
      %p313 = por %p311, %p312
      %p314 = scmp.ne.s32.totalorder %s305, %s306
      %p315 = scmp.eq.s32.totalorder %s43, 0
      %p316 = por %p314, %p315
      %p317 = scmp.ne.s32.totalorder %s305, %s306
      %p318 = scmp.eq.s32.totalorder %s44, 4
      %p319 = por %p317, %p318
      %p321 = scmp.ne.s32.totalorder %s306, %s320
      %p322 = scmp.eq.s32.totalorder %s44, 0
      %p323 = por %p321, %p322
      %s325 = sadd.s32 %s324, 1
      %p328 = scmp.eq.s32.totalorder %s38, 4
      %p329 = scmp.ne.s32.totalorder %s324, %s326
      %p330 = scmp.eq.s32.totalorder %s38, 0
      %p331 = por %p329, %p330
      %p332 = scmp.ne.s32.totalorder %s324, %s326
      %p333 = scmp.eq.s32.totalorder %s43, 4
      %p334 = por %p332, %p333
      %p335 = scmp.ne.s32.totalorder %s326, %s327
      %p336 = scmp.eq.s32.totalorder %s43, 0
      %p337 = por %p335, %p336
      %p338 = scmp.ne.s32.totalorder %s326, %s327
      %p339 = scmp.eq.s32.totalorder %s44, 4
      %p340 = por %p338, %p339
      %p342 = scmp.ne.s32.totalorder %s327, %s341
      %p343 = scmp.eq.s32.totalorder %s44, 0
      %p344 = por %p342, %p343
      %s346 = sadd.s32 %s345, 1
      %p349 = scmp.eq.s32.totalorder %s38, 4
      %p350 = scmp.ne.s32.totalorder %s345, %s347
      %p351 = scmp.eq.s32.totalorder %s38, 0
      %p352 = por %p350, %p351
      %p353 = scmp.ne.s32.totalorder %s345, %s347
      %p354 = scmp.eq.s32.totalorder %s43, 4
      %p355 = por %p353, %p354
      %p356 = scmp.ne.s32.totalorder %s347, %s348
      %p357 = scmp.eq.s32.totalorder %s43, 0
      %p358 = por %p356, %p357
      %p359 = scmp.ne.s32.totalorder %s347, %s348
      %p360 = scmp.eq.s32.totalorder %s44, 4
      %p361 = por %p359, %p360
      %p363 = scmp.ne.s32.totalorder %s348, %s362
      %p364 = scmp.eq.s32.totalorder %s44, 0
      %p365 = por %p363, %p364
      %s367 = sadd.s32 %s366, 1
      %p370 = scmp.eq.s32.totalorder %s38, 4
      %p371 = scmp.ne.s32.totalorder %s366, %s368
      %p372 = scmp.eq.s32.totalorder %s38, 0
      %p373 = por %p371, %p372
      %p374 = scmp.ne.s32.totalorder %s366, %s368
      %p375 = scmp.eq.s32.totalorder %s43, 4
      %p376 = por %p374, %p375
      %p377 = scmp.ne.s32.totalorder %s368, %s369
      %p378 = scmp.eq.s32.totalorder %s43, 0
      %p379 = por %p377, %p378
      %p380 = scmp.ne.s32.totalorder %s368, %s369
      %p381 = scmp.eq.s32.totalorder %s44, 4
      %p382 = por %p380, %p381
      %p384 = scmp.ne.s32.totalorder %s369, %s383
      %p385 = scmp.eq.s32.totalorder %s44, 0
      %p386 = por %p384, %p385
      %s387 = ssub.s32 %s38, %s45
      %p388 = scmp.eq.s32.totalorder %s387, 0
      %s390 = sadd.s32 %s389, 1
      %s391 = scalar_select %p388, %s389, %s390
      %p394 = pneg %p388
      %p395 = scmp.eq.s32.totalorder %s38, 4
      %p396 = por %p394, %p395
      %p397 = scmp.ne.s32.totalorder %s389, %s392
      %p398 = scmp.eq.s32.totalorder %s38, 0
      %p399 = por %p397, %p398
      %p400 = scmp.ne.s32.totalorder %s389, %s392
      %p401 = scmp.eq.s32.totalorder %s43, 4
      %p402 = por %p400, %p401
      %p403 = scmp.ne.s32.totalorder %s392, %s393
      %p404 = scmp.eq.s32.totalorder %s43, 0
      %p405 = por %p403, %p404
      %p406 = scmp.ne.s32.totalorder %s392, %s393
      %p407 = scmp.eq.s32.totalorder %s44, 4
      %p408 = por %p406, %p407
      %p410 = scmp.ne.s32.totalorder %s393, %s409
      %p411 = scmp.eq.s32.totalorder %s44, 0
      %p412 = por %p410, %p411
      %s413 = ssub.s32 %s38, %s45
      %p414 = scmp.eq.s32.totalorder %s413, 0
      %s416 = sadd.s32 %s415, 1
      %s417 = scalar_select %p414, %s415, %s416
      %p420 = pneg %p414
      %p421 = scmp.eq.s32.totalorder %s38, 4
      %p422 = por %p420, %p421
      %p423 = scmp.ne.s32.totalorder %s415, %s418
      %p424 = scmp.eq.s32.totalorder %s38, 0
      %p425 = por %p423, %p424
      %p426 = scmp.ne.s32.totalorder %s415, %s418
      %p427 = scmp.eq.s32.totalorder %s43, 4
      %p428 = por %p426, %p427
      %p429 = scmp.ne.s32.totalorder %s418, %s419
      %p430 = scmp.eq.s32.totalorder %s43, 0
      %p431 = por %p429, %p430
      %p432 = scmp.ne.s32.totalorder %s418, %s419
      %p433 = scmp.eq.s32.totalorder %s44, 4
      %p434 = por %p432, %p433
      %p436 = scmp.ne.s32.totalorder %s419, %s435
      %p437 = scmp.eq.s32.totalorder %s44, 0
      %p438 = por %p436, %p437
      %p439 = scmp.le.s32.totalorder 1, %s38
      %p440 = scmp.lt.s32.totalorder %s38, 6
      %p441 = pnand %p439, %p440
      %p442 = pneg %p441
      // Predicated region
      $region9: #{tpu_custom_call.1} parent=5 // pred_check
        _
      $region10: #{tpu_custom_call.1} parent=5 // pred_check_branch
        %444 = sbr.rel (%p441) target = $region12
      $region11: #{tpu_custom_call.1} parent=5 // pred_region
        %s445 = ssub.s32 %s38, 1
        // Predicated region
        $region13: #{tpu_custom_call.1} parent=11 // pred_check
          %p446 = pneg %p85
        $region14: #{tpu_custom_call.1} parent=11 // pred_check_branch
          %448 = sbr.rel (%p446) target = $region16
        $region15: #{tpu_custom_call.1} parent=11 // pred_region
          %s450 = ssub.s32 8192, 8192
          %451 = vsyncadd [#allocation7], %s450
          %s452 = sshll.u32 [#allocation6], 4
          %s453 = int_to_ptr.vmem [resolvable:$true] %s452
          %458 = dma.hbm_to_vmem [thread:$0]  %s1, 8192, %s453, [#allocation7], 64, 64, 4
        $region16: #{tpu_custom_call.1} parent=11 // pred_fallthru
          _
        // Predicated region
        $region17: #{tpu_custom_call.1} parent=11 // pred_check
          %p459 = pneg %p106
        $region18: #{tpu_custom_call.1} parent=11 // pred_check_branch
          %461 = sbr.rel (%p459) target = $region20
        $region19: #{tpu_custom_call.1} parent=11 // pred_region
          %s463 = ssub.s32 8192, 8192
          %464 = vsyncadd [#allocation7], %s463
          %s465 = sshll.u32 [#allocation8], 4
          %s466 = int_to_ptr.vmem [resolvable:$true] %s465
          %471 = dma.hbm_to_vmem [thread:$0]  %s2, 8192, %s466, [#allocation7], 64, 64, 4
        $region20: #{tpu_custom_call.1} parent=11 // pred_fallthru
          _
        // Predicated region
        $region21: #{tpu_custom_call.1} parent=11 // pred_check
          %p472 = pneg %p127
        $region22: #{tpu_custom_call.1} parent=11 // pred_check_branch
          %474 = sbr.rel (%p472) target = $region24
        $region23: #{tpu_custom_call.1} parent=11 // pred_region
          _
        $region24: #{tpu_custom_call.1} parent=11 // pred_fallthru
          _
        // Predicated region
        $region25: #{tpu_custom_call.1} parent=11 // pred_check
          %p475 = pneg %p148
        $region26: #{tpu_custom_call.1} parent=11 // pred_check_branch
          %477 = sbr.rel (%p475) target = $region28
        $region27: #{tpu_custom_call.1} parent=11 // pred_region
          %s479 = ssub.s32 256, 256
          %480 = vsyncadd [#allocation10], %s479
          %s481 = sshll.u32 [#allocation9], 4
          %s482 = int_to_ptr.vmem [resolvable:$true] %s481
          %487 = dma.hbm_to_vmem [thread:$0]  %s4, 256, %s482, [#allocation10], 128, 128, 8
        $region28: #{tpu_custom_call.1} parent=11 // pred_fallthru
          _
        // Predicated region
        $region29: #{tpu_custom_call.1} parent=11 // pred_check
          %p488 = pneg %p169
        $region30: #{tpu_custom_call.1} parent=11 // pred_check_branch
          %490 = sbr.rel (%p488) target = $region32
        $region31: #{tpu_custom_call.1} parent=11 // pred_region
          %s492 = ssub.s32 1024, 1024
          %493 = vsyncadd [#allocation10], %s492
          %s494 = sshll.u32 [#allocation11], 4
          %s495 = int_to_ptr.vmem [resolvable:$true] %s494
          %500 = dma.hbm_to_vmem [thread:$0]  %s5, 1024, %s495, [#allocation10], 64, 64, 4
        $region32: #{tpu_custom_call.1} parent=11 // pred_fallthru
          _
        // Predicated region
        $region33: #{tpu_custom_call.1} parent=11 // pred_check
          %p501 = pneg %p190
        $region34: #{tpu_custom_call.1} parent=11 // pred_check_branch
          %503 = sbr.rel (%p501) target = $region36
        $region35: #{tpu_custom_call.1} parent=11 // pred_region
          _
        $region36: #{tpu_custom_call.1} parent=11 // pred_fallthru
          _
        // Predicated region
        $region37: #{tpu_custom_call.1} parent=11 // pred_check
          %p504 = pneg %p211
        $region38: #{tpu_custom_call.1} parent=11 // pred_check_branch
          %506 = sbr.rel (%p504) target = $region40
        $region39: #{tpu_custom_call.1} parent=11 // pred_region
          %s508 = ssub.s32 3072, 3072
          %509 = vsyncadd [#allocation13], %s508
          %s510 = sshll.u32 [#allocation12], 4
          %s511 = int_to_ptr.vmem [resolvable:$true] %s510
          %516 = dma.hbm_to_vmem [thread:$0]  %s7, 3072, %s511, [#allocation13], 192, 192, 12
        $region40: #{tpu_custom_call.1} parent=11 // pred_fallthru
          _
        // Predicated region
        $region41: #{tpu_custom_call.1} parent=11 // pred_check
          %p517 = pneg %p232
        $region42: #{tpu_custom_call.1} parent=11 // pred_check_branch
          %519 = sbr.rel (%p517) target = $region44
        $region43: #{tpu_custom_call.1} parent=11 // pred_region
          %s521 = ssub.s32 3072, 3072
          %522 = vsyncadd [#allocation13], %s521
          %s523 = sshll.u32 [#allocation14], 4
          %s524 = int_to_ptr.vmem [resolvable:$true] %s523
          %529 = dma.hbm_to_vmem [thread:$0]  %s8, 3072, %s524, [#allocation13], 192, 192, 12
        $region44: #{tpu_custom_call.1} parent=11 // pred_fallthru
          _
        // Predicated region
        $region45: #{tpu_custom_call.1} parent=11 // pred_check
          %p530 = pneg %p253
        $region46: #{tpu_custom_call.1} parent=11 // pred_check_branch
          %532 = sbr.rel (%p530) target = $region48
        $region47: #{tpu_custom_call.1} parent=11 // pred_region
          %s534 = ssub.s32 3072, 3072
          %535 = vsyncadd [#allocation16], %s534
          %s536 = sshll.u32 [#allocation15], 4
          %s537 = int_to_ptr.vmem [resolvable:$true] %s536
          %542 = dma.hbm_to_vmem [thread:$0]  %s9, 3072, %s537, [#allocation16], 192, 192, 12
        $region48: #{tpu_custom_call.1} parent=11 // pred_fallthru
          _
        // Predicated region
        $region49: #{tpu_custom_call.1} parent=11 // pred_check
          %p543 = pneg %p274
        $region50: #{tpu_custom_call.1} parent=11 // pred_check_branch
          %545 = sbr.rel (%p543) target = $region52
        $region51: #{tpu_custom_call.1} parent=11 // pred_region
          _
        $region52: #{tpu_custom_call.1} parent=11 // pred_fallthru
          _
        // Predicated region
        $region53: #{tpu_custom_call.1} parent=11 // pred_check
          %p546 = pneg %p295
        $region54: #{tpu_custom_call.1} parent=11 // pred_check_branch
          %548 = sbr.rel (%p546) target = $region56
        $region55: #{tpu_custom_call.1} parent=11 // pred_region
          _
        $region56: #{tpu_custom_call.1} parent=11 // pred_fallthru
          _
        // Predicated region
        $region57: #{tpu_custom_call.1} parent=11 // pred_check
          %p549 = pneg %p316
        $region58: #{tpu_custom_call.1} parent=11 // pred_check_branch
          %551 = sbr.rel (%p549) target = $region60
        $region59: #{tpu_custom_call.1} parent=11 // pred_region
          %s553 = ssub.s32 3072, 3072
          %554 = vsyncadd [#allocation16], %s553
          %s555 = sshll.u32 [#allocation17], 4
          %s556 = int_to_ptr.vmem [resolvable:$true] %s555
          %561 = dma.hbm_to_vmem [thread:$0]  %s12, 3072, %s556, [#allocation16], 192, 192, 12
        $region60: #{tpu_custom_call.1} parent=11 // pred_fallthru
          _
        // Predicated region
        $region61: #{tpu_custom_call.1} parent=11 // pred_check
          %p562 = pneg %p337
        $region62: #{tpu_custom_call.1} parent=11 // pred_check_branch
          %564 = sbr.rel (%p562) target = $region64
        $region63: #{tpu_custom_call.1} parent=11 // pred_region
          %s566 = ssub.s32 3072, 3072
          %567 = vsyncadd [#allocation19], %s566
          %s568 = sshll.u32 [#allocation18], 4
          %s569 = int_to_ptr.vmem [resolvable:$true] %s568
          %574 = dma.hbm_to_vmem [thread:$0]  %s13, 3072, %s569, [#allocation19], 192, 192, 12
        $region64: #{tpu_custom_call.1} parent=11 // pred_fallthru
          _
        // Predicated region
        $region65: #{tpu_custom_call.1} parent=11 // pred_check
          %p575 = pneg %p358
        $region66: #{tpu_custom_call.1} parent=11 // pred_check_branch
          %577 = sbr.rel (%p575) target = $region68
        $region67: #{tpu_custom_call.1} parent=11 // pred_region
          _
        $region68: #{tpu_custom_call.1} parent=11 // pred_fallthru
          _
        // Predicated region
        $region69: #{tpu_custom_call.1} parent=11 // pred_check
          %p578 = pneg %p379
        $region70: #{tpu_custom_call.1} parent=11 // pred_check_branch
          %580 = sbr.rel (%p578) target = $region72
        $region71: #{tpu_custom_call.1} parent=11 // pred_region
          _
        $region72: #{tpu_custom_call.1} parent=11 // pred_fallthru
          _
      $region12: #{tpu_custom_call.1} parent=5 // pred_fallthru
        _
      %p581 = scmp.lt.s32.totalorder %s38, 5
      // Predicated region
      $region73: #{tpu_custom_call.1} parent=5 // pred_check
        %p582 = pneg %p581
      $region74: #{tpu_custom_call.1} parent=5 // pred_check_branch
        %584 = sbr.rel (%p582) target = $region76
      $region75: #{tpu_custom_call.1} parent=5 // pred_region
        // Predicated region
        $region77: #{tpu_custom_call.1} parent=75 // pred_check
          %p585 = pneg %p58
        $region78: #{tpu_custom_call.1} parent=75 // pred_check_branch
          %587 = sbr.rel (%p585) target = $region80
        $region79: #{tpu_custom_call.1} parent=75 // pred_region
          %s588 = sand.u32 %s48, 1
          %s589 = scalar_lea.sflag [#allocation4], %s588
          %s590 = sand.u32 %s48, 1
          %s591 = smul.addr %s590, 4
          %s592 = scalar_lea.vmem [#allocation3], %s591
          %s594 = ssub.s32 64, 64
          %595 = vsyncadd %s589, %s594
          %s596 = smul.addr %s38, 64
          %s597 = scalar_lea.hbm %s0, %s596
          %s599 = sshll.u32 %s592, 4
          %s600 = int_to_ptr.vmem [resolvable:$true] %s599
          %602 = dma.hbm_to_vmem [thread:$0]  %s597, 64, %s600, %s589
        $region80: #{tpu_custom_call.1} parent=75 // pred_fallthru
          _
      $region76: #{tpu_custom_call.1} parent=5 // pred_fallthru
        _
      %p603 = scmp.le.s32.totalorder 1, %s38
      %p604 = scmp.lt.s32.totalorder %s38, 6
      %p605 = pnand %p603, %p604
      %p606 = pneg %p605
      // Predicated region
      $region81: #{tpu_custom_call.1} parent=5 // pred_check
        _
      $region82: #{tpu_custom_call.1} parent=5 // pred_check_branch
        %608 = sbr.rel (%p605) target = $region84
      $region83: #{tpu_custom_call.1} parent=5 // pred_region
        %s609 = ssub.s32 %s38, 1
        %s610 = sand.u32 %s51, 1
        %s611 = scalar_lea.sflag [#allocation4], %s610
        %s612 = sand.u32 %s51, 1
        %s613 = smul.addr %s612, 4
        %s614 = scalar_lea.vmem [#allocation3], %s613
        // Predicated region
        $region85: #{tpu_custom_call.1} parent=83 // pred_check
          %p615 = pneg %p64
        $region86: #{tpu_custom_call.1} parent=83 // pred_check_branch
          %617 = sbr.rel (%p615) target = $region88
        $region87: #{tpu_custom_call.1} parent=83 // pred_region
          %618 = dma.done %s611, 64
        $region88: #{tpu_custom_call.1} parent=83 // pred_fallthru
          _
        // Predicated region
        $region89: #{tpu_custom_call.1} parent=83 // pred_check
          %p619 = pneg %p85
        $region90: #{tpu_custom_call.1} parent=83 // pred_check_branch
          %621 = sbr.rel (%p619) target = $region92
        $region91: #{tpu_custom_call.1} parent=83 // pred_region
          %622 = dma.done [#allocation7], 8192
        $region92: #{tpu_custom_call.1} parent=83 // pred_fallthru
          _
        // Predicated region
        $region93: #{tpu_custom_call.1} parent=83 // pred_check
          %p623 = pneg %p106
        $region94: #{tpu_custom_call.1} parent=83 // pred_check_branch
          %625 = sbr.rel (%p623) target = $region96
        $region95: #{tpu_custom_call.1} parent=83 // pred_region
          %626 = dma.done [#allocation7], 8192
        $region96: #{tpu_custom_call.1} parent=83 // pred_fallthru
          _
        // Predicated region
        $region97: #{tpu_custom_call.1} parent=83 // pred_check
          %p627 = pneg %p148
        $region98: #{tpu_custom_call.1} parent=83 // pred_check_branch
          %629 = sbr.rel (%p627) target = $region100
        $region99: #{tpu_custom_call.1} parent=83 // pred_region
          %630 = dma.done [#allocation10], 256
        $region100: #{tpu_custom_call.1} parent=83 // pred_fallthru
          _
        // Predicated region
        $region101: #{tpu_custom_call.1} parent=83 // pred_check
          %p631 = pneg %p169
        $region102: #{tpu_custom_call.1} parent=83 // pred_check_branch
          %633 = sbr.rel (%p631) target = $region104
        $region103: #{tpu_custom_call.1} parent=83 // pred_region
          %634 = dma.done [#allocation10], 1024
        $region104: #{tpu_custom_call.1} parent=83 // pred_fallthru
          _
        // Predicated region
        $region105: #{tpu_custom_call.1} parent=83 // pred_check
          %p635 = pneg %p211
        $region106: #{tpu_custom_call.1} parent=83 // pred_check_branch
          %637 = sbr.rel (%p635) target = $region108
        $region107: #{tpu_custom_call.1} parent=83 // pred_region
          %638 = dma.done [#allocation13], 3072
        $region108: #{tpu_custom_call.1} parent=83 // pred_fallthru
          _
        // Predicated region
        $region109: #{tpu_custom_call.1} parent=83 // pred_check
          %p639 = pneg %p232
        $region110: #{tpu_custom_call.1} parent=83 // pred_check_branch
          %641 = sbr.rel (%p639) target = $region112
        $region111: #{tpu_custom_call.1} parent=83 // pred_region
          %642 = dma.done [#allocation13], 3072
        $region112: #{tpu_custom_call.1} parent=83 // pred_fallthru
          _
        // Predicated region
        $region113: #{tpu_custom_call.1} parent=83 // pred_check
          %p643 = pneg %p253
        $region114: #{tpu_custom_call.1} parent=83 // pred_check_branch
          %645 = sbr.rel (%p643) target = $region116
        $region115: #{tpu_custom_call.1} parent=83 // pred_region
          %646 = dma.done [#allocation16], 3072
        $region116: #{tpu_custom_call.1} parent=83 // pred_fallthru
          _
        // Predicated region
        $region117: #{tpu_custom_call.1} parent=83 // pred_check
          %p647 = pneg %p316
        $region118: #{tpu_custom_call.1} parent=83 // pred_check_branch
          %649 = sbr.rel (%p647) target = $region120
        $region119: #{tpu_custom_call.1} parent=83 // pred_region
          %650 = dma.done [#allocation16], 3072
        $region120: #{tpu_custom_call.1} parent=83 // pred_fallthru
          _
        // Predicated region
        $region121: #{tpu_custom_call.1} parent=83 // pred_check
          %p651 = pneg %p337
        $region122: #{tpu_custom_call.1} parent=83 // pred_check_branch
          %653 = sbr.rel (%p651) target = $region124
        $region123: #{tpu_custom_call.1} parent=83 // pred_region
          %654 = dma.done [#allocation19], 3072
        $region124: #{tpu_custom_call.1} parent=83 // pred_fallthru
          _
        %s655 = sand.u32 %s51, 1
        %s656 = scalar_lea.sflag [#allocation4], %s655
        %s657 = sand.u32 %s51, 1
        %s658 = smul.addr %s657, 4
        %s659 = scalar_lea.vmem [#allocation3], %s658
        %p660 = pneg %p64
        %p661 = pneg %p61
        %p662 = pneg %p85
        %p663 = pneg %p82
        %p664 = pneg %p106
        %p665 = pneg %p103
        %p666 = pneg %p127
        %p667 = pneg %p124
        %p668 = pneg %p148
        %p669 = pneg %p145
        %p670 = pneg %p169
        %p671 = pneg %p166
        %p672 = pneg %p190
        %p673 = pneg %p187
        %p674 = pneg %p211
        %p675 = pneg %p208
        %p676 = pneg %p232
        %p677 = pneg %p229
        %p678 = pneg %p253
        %p679 = pneg %p250
        %p680 = pneg %p274
        %p681 = pneg %p271
        %p682 = pneg %p295
        %p683 = pneg %p292
        %p684 = pneg %p316
        %p685 = pneg %p313
        %p686 = pneg %p337
        %p687 = pneg %p334
        %p688 = pneg %p358
        %p689 = pneg %p355
        %p690 = pneg %p379
        %p691 = pneg %p376
        %p692 = pneg %p405
        %p693 = pneg %p402
        %s694 = sand.u32 %s392, 1
        %s695 = scalar_lea.sflag [#allocation5], %s694
        %s696 = sand.u32 %s392, 1
        %s697 = smul.addr %s696, 8
        %s698 = scalar_lea.vmem [#allocation20], %s697
        %p699 = pneg %p431
        %p700 = pneg %p428
        %s701 = sand.u32 %s418, 1
        %s702 = scalar_lea.sflag [#allocation22], %s701
        %s703 = sand.u32 %s418, 1
        %s704 = smul.addr %s703, 8
        %s705 = scalar_lea.vmem [#allocation21], %s704
        %p707 = scmp.eq.s32.totalorder %s43, 0
        // Predicated region
        $region125: #{tpu_custom_call.1} parent=83 // pred_check
          %p708 = pneg %p707
        $region126: #{tpu_custom_call.1} parent=83 // pred_check_branch
          %710 = sbr.rel (%p708) target = $region128
        $region127: #{tpu_custom_call.1} parent=83 // pred_region
          %v711 = vld [vmem:[#allocation9] sm:$0xff]
          %v712 = vld [vmem:[#allocation9 + $0x8] sm:$0xff]
          %713 = vst [vmem:[#allocation2] sm:$0xff] %v711
          %714 = vst [vmem:[#allocation2 + $0x8] sm:$0xff] %v712
        $region128: #{tpu_custom_call.1} parent=83 // pred_fallthru
          _
        %v715 = vld [vmem:[%s614] sm:$0xf]
        %s716 = scalar_lea.vmem [#allocation2], 8
        %v717 = vld [vmem:[%s716] sm:$0xff]
        %v718 = vpack.c.bf16 %v717, %v717
        %v719 = vld [vmem:[#allocation11] sm:$0xf]
        %v720 = vld [vmem:[#allocation11 + $0x4] sm:$0xf]
        %v721 = vld [vmem:[#allocation11 + $0x8] sm:$0xf]
        %v722 = vld [vmem:[#allocation11 + $0xc] sm:$0xf]
        %v723 = vld [vmem:[#allocation11 + $0x10] sm:$0xf]
        %v724 = vld [vmem:[#allocation11 + $0x14] sm:$0xf]
        %v725 = vld [vmem:[#allocation11 + $0x18] sm:$0xf]
        %v726 = vld [vmem:[#allocation11 + $0x1c] sm:$0xf]
        %v727 = vld [vmem:[#allocation11 + $0x20] sm:$0xf]
        %v728 = vld [vmem:[#allocation11 + $0x24] sm:$0xf]
        %v729 = vld [vmem:[#allocation11 + $0x28] sm:$0xf]
        %v730 = vld [vmem:[#allocation11 + $0x2c] sm:$0xf]
        %v731 = vld [vmem:[#allocation11 + $0x30] sm:$0xf]
        %v732 = vld [vmem:[#allocation11 + $0x34] sm:$0xf]
        %v733 = vld [vmem:[#allocation11 + $0x38] sm:$0xf]
        %v734 = vld [vmem:[#allocation11 + $0x3c] sm:$0xf]
        %v735 = vld [vmem:[%s6] sm:$0x1]
        %v737 = vlaneseq
        %v738 = vshrl.u32 %v737, 7
        %v739 = vsub.s32 0, %v738
        %v740 = vrot.slane %v735, %v739
        %v758 = vunpack.c.l.b16 %v719
        %v759 = vunpack.c.l.b16 %v720
        %v760 = vunpack.c.l.b16 %v721
        %v761 = vunpack.c.l.b16 %v722
        %v762 = vunpack.c.l.b16 %v723
        %v763 = vunpack.c.l.b16 %v724
        %v764 = vunpack.c.l.b16 %v725
        %v765 = vunpack.c.l.b16 %v726
        %v766 = vunpack.c.l.b16 %v727
        %v767 = vunpack.c.l.b16 %v728
        %v768 = vunpack.c.l.b16 %v729
        %v769 = vunpack.c.l.b16 %v730
        %v770 = vunpack.c.l.b16 %v731
        %v771 = vunpack.c.l.b16 %v732
        %v772 = vunpack.c.l.b16 %v733
        %v773 = vunpack.c.l.b16 %v734
        %v774 = vpack.c.b16 %v759, %v758
        %v775 = vpack.c.b16 %v761, %v760
        %v776 = vpack.c.b16 %v763, %v762
        %v777 = vpack.c.b16 %v765, %v764
        %v778 = vpack.c.b16 %v767, %v766
        %v779 = vpack.c.b16 %v769, %v768
        %v780 = vpack.c.b16 %v771, %v770
        %v781 = vpack.c.b16 %v773, %v772
        %790 = vmatprep.subr.bf16.mxu0 0
        %791 = vmatpush1.bf16.msra.mxu0 %v774
        %792 = vmatprep.subr.bf16.mxu0 0
        %793 = vmatpush1.bf16.msra.mxu0 %v775
        %794 = vmatprep.subr.bf16.mxu0 0
        %795 = vmatpush1.bf16.msra.mxu0 %v776
        %796 = vmatprep.subr.bf16.mxu0 0
        %797 = vmatpush1.bf16.msra.mxu0 %v777
        %798 = vmatprep.subr.bf16.mxu0 0
        %799 = vmatpush1.bf16.msra.mxu0 %v778
        %800 = vmatprep.subr.bf16.mxu0 0
        %801 = vmatpush1.bf16.msra.mxu0 %v779
        %802 = vmatprep.subr.bf16.mxu0 0
        %803 = vmatpush1.bf16.msra.mxu0 %v780
        %804 = vmatprep.subr.bf16.mxu0 0
        %805 = vmatpush1.bf16.msra.mxu0 %v781
        %806 = vmatprep.subr.bf16.mxu0 0
        %807 = vmatpush1.bf16.msra.mxu0 0
        %808 = vmatprep.subr.bf16.mxu0 0
        %809 = vmatpush1.bf16.msra.mxu0 0
        %810 = vmatprep.subr.bf16.mxu0 0
        %811 = vmatpush1.bf16.msra.mxu0 0
        %812 = vmatprep.subr.bf16.mxu0 0
        %813 = vmatpush1.bf16.msra.mxu0 0
        %814 = vmatprep.subr.bf16.mxu0 0
        %815 = vmatpush1.bf16.msra.mxu0 0
        %816 = vmatprep.subr.bf16.mxu0 0
        %817 = vmatpush1.bf16.msra.mxu0 0
        %818 = vmatprep.subr.bf16.mxu0 0
        %819 = vmatpush1.bf16.msra.mxu0 0
        %820 = vmatprep.subr.bf16.mxu0 0
        %821 = vmatpush1.bf16.msra.mxu0 0
        %822 = vmatprep.mubr.bf16.mxu0 0
        %823 = vmatmul.mubr.bf16.gmra.mrb[0].mxu0 %v718
        %v824 = vpop.f32.mrb[0].mxu0
        %v825 = vadd.f32 %v740, %v824
        %v826 = vpop.f32.mrb[0].mxu0
        %v827 = vpop.f32.mrb[0].mxu0
        %v828 = vpop.f32.mrb[0].mxu0
        %829 = vdwg.mxu0
        %v830 = vld [vmem:[#allocation6] sm:$0xf]
        %v831 = vld [vmem:[#allocation6 + $0x4] sm:$0xf]
        %v832 = vld [vmem:[#allocation6 + $0x8] sm:$0xf]
        %v833 = vld [vmem:[#allocation6 + $0xc] sm:$0xf]
        %v834 = vld [vmem:[#allocation6 + $0x10] sm:$0xf]
        %v835 = vld [vmem:[#allocation6 + $0x14] sm:$0xf]
        %v836 = vld [vmem:[#allocation6 + $0x18] sm:$0xf]
        %v837 = vld [vmem:[#allocation6 + $0x1c] sm:$0xf]
        %v838 = vld [vmem:[#allocation6 + $0x20] sm:$0xf]
        %v839 = vld [vmem:[#allocation6 + $0x24] sm:$0xf]
        %v840 = vld [vmem:[#allocation6 + $0x28] sm:$0xf]
        %v841 = vld [vmem:[#allocation6 + $0x2c] sm:$0xf]
        %v842 = vld [vmem:[#allocation6 + $0x30] sm:$0xf]
        %v843 = vld [vmem:[#allocation6 + $0x34] sm:$0xf]
        %v844 = vld [vmem:[#allocation6 + $0x38] sm:$0xf]
        %v845 = vld [vmem:[#allocation6 + $0x3c] sm:$0xf]
        %v846 = vld [vmem:[#allocation6 + $0x40] sm:$0xf]
        %v847 = vld [vmem:[#allocation6 + $0x44] sm:$0xf]
        %v848 = vld [vmem:[#allocation6 + $0x48] sm:$0xf]
        %v849 = vld [vmem:[#allocation6 + $0x4c] sm:$0xf]
        %v850 = vld [vmem:[#allocation6 + $0x50] sm:$0xf]
        %v851 = vld [vmem:[#allocation6 + $0x54] sm:$0xf]
        %v852 = vld [vmem:[#allocation6 + $0x58] sm:$0xf]
        %v853 = vld [vmem:[#allocation6 + $0x5c] sm:$0xf]
        %v854 = vld [vmem:[#allocation6 + $0x60] sm:$0xf]
        %v855 = vld [vmem:[#allocation6 + $0x64] sm:$0xf]
        %v856 = vld [vmem:[#allocation6 + $0x68] sm:$0xf]
        %v857 = vld [vmem:[#allocation6 + $0x6c] sm:$0xf]
        %v858 = vld [vmem:[#allocation6 + $0x70] sm:$0xf]
        %v859 = vld [vmem:[#allocation6 + $0x74] sm:$0xf]
        %v860 = vld [vmem:[#allocation6 + $0x78] sm:$0xf]
        %v861 = vld [vmem:[#allocation6 + $0x7c] sm:$0xf]
        %v862 = vld [vmem:[#allocation6 + $0x80] sm:$0xf]
        %v863 = vld [vmem:[#allocation6 + $0x84] sm:$0xf]
        %v864 = vld [vmem:[#allocation6 + $0x88] sm:$0xf]
        %v865 = vld [vmem:[#allocation6 + $0x8c] sm:$0xf]
        %v866 = vld [vmem:[#allocation6 + $0x90] sm:$0xf]
        %v867 = vld [vmem:[#allocation6 + $0x94] sm:$0xf]
        %v868 = vld [vmem:[#allocation6 + $0x98] sm:$0xf]
        %v869 = vld [vmem:[#allocation6 + $0x9c] sm:$0xf]
        %v870 = vld [vmem:[#allocation6 + $0xa0] sm:$0xf]
        %v871 = vld [vmem:[#allocation6 + $0xa4] sm:$0xf]
        %v872 = vld [vmem:[#allocation6 + $0xa8] sm:$0xf]
        %v873 = vld [vmem:[#allocation6 + $0xac] sm:$0xf]
        %v874 = vld [vmem:[#allocation6 + $0xb0] sm:$0xf]
        %v875 = vld [vmem:[#allocation6 + $0xb4] sm:$0xf]
        %v876 = vld [vmem:[#allocation6 + $0xb8] sm:$0xf]
        %v877 = vld [vmem:[#allocation6 + $0xbc] sm:$0xf]
        %v878 = vld [vmem:[#allocation6 + $0xc0] sm:$0xf]
        %v879 = vld [vmem:[#allocation6 + $0xc4] sm:$0xf]
        %v880 = vld [vmem:[#allocation6 + $0xc8] sm:$0xf]
        %v881 = vld [vmem:[#allocation6 + $0xcc] sm:$0xf]
        %v882 = vld [vmem:[#allocation6 + $0xd0] sm:$0xf]
        %v883 = vld [vmem:[#allocation6 + $0xd4] sm:$0xf]
        %v884 = vld [vmem:[#allocation6 + $0xd8] sm:$0xf]
        %v885 = vld [vmem:[#allocation6 + $0xdc] sm:$0xf]
        %v886 = vld [vmem:[#allocation6 + $0xe0] sm:$0xf]
        %v887 = vld [vmem:[#allocation6 + $0xe4] sm:$0xf]
        %v888 = vld [vmem:[#allocation6 + $0xe8] sm:$0xf]
        %v889 = vld [vmem:[#allocation6 + $0xec] sm:$0xf]
        %v890 = vld [vmem:[#allocation6 + $0xf0] sm:$0xf]
        %v891 = vld [vmem:[#allocation6 + $0xf4] sm:$0xf]
        %v892 = vld [vmem:[#allocation6 + $0xf8] sm:$0xf]
        %v893 = vld [vmem:[#allocation6 + $0xfc] sm:$0xf]
        %v894 = vld [vmem:[#allocation6 + $0x100] sm:$0xf]
        %v895 = vld [vmem:[#allocation6 + $0x104] sm:$0xf]
        %v896 = vld [vmem:[#allocation6 + $0x108] sm:$0xf]
        %v897 = vld [vmem:[#allocation6 + $0x10c] sm:$0xf]
        %v898 = vld [vmem:[#allocation6 + $0x110] sm:$0xf]
        %v899 = vld [vmem:[#allocation6 + $0x114] sm:$0xf]
        %v900 = vld [vmem:[#allocation6 + $0x118] sm:$0xf]
        %v901 = vld [vmem:[#allocation6 + $0x11c] sm:$0xf]
        %v902 = vld [vmem:[#allocation6 + $0x120] sm:$0xf]
        %v903 = vld [vmem:[#allocation6 + $0x124] sm:$0xf]
        %v904 = vld [vmem:[#allocation6 + $0x128] sm:$0xf]
        %v905 = vld [vmem:[#allocation6 + $0x12c] sm:$0xf]
        %v906 = vld [vmem:[#allocation6 + $0x130] sm:$0xf]
        %v907 = vld [vmem:[#allocation6 + $0x134] sm:$0xf]
        %v908 = vld [vmem:[#allocation6 + $0x138] sm:$0xf]
        %v909 = vld [vmem:[#allocation6 + $0x13c] sm:$0xf]
        %v910 = vld [vmem:[#allocation6 + $0x140] sm:$0xf]
        %v911 = vld [vmem:[#allocation6 + $0x144] sm:$0xf]
        %v912 = vld [vmem:[#allocation6 + $0x148] sm:$0xf]
        %v913 = vld [vmem:[#allocation6 + $0x14c] sm:$0xf]
        %v914 = vld [vmem:[#allocation6 + $0x150] sm:$0xf]
        %v915 = vld [vmem:[#allocation6 + $0x154] sm:$0xf]
        %v916 = vld [vmem:[#allocation6 + $0x158] sm:$0xf]
        %v917 = vld [vmem:[#allocation6 + $0x15c] sm:$0xf]
        %v918 = vld [vmem:[#allocation6 + $0x160] sm:$0xf]
        %v919 = vld [vmem:[#allocation6 + $0x164] sm:$0xf]
        %v920 = vld [vmem:[#allocation6 + $0x168] sm:$0xf]
        %v921 = vld [vmem:[#allocation6 + $0x16c] sm:$0xf]
        %v922 = vld [vmem:[#allocation6 + $0x170] sm:$0xf]
        %v923 = vld [vmem:[#allocation6 + $0x174] sm:$0xf]
        %v924 = vld [vmem:[#allocation6 + $0x178] sm:$0xf]
        %v925 = vld [vmem:[#allocation6 + $0x17c] sm:$0xf]
        %v926 = vld [vmem:[#allocation6 + $0x180] sm:$0xf]
        %v927 = vld [vmem:[#allocation6 + $0x184] sm:$0xf]
        %v928 = vld [vmem:[#allocation6 + $0x188] sm:$0xf]
        %v929 = vld [vmem:[#allocation6 + $0x18c] sm:$0xf]
        %v930 = vld [vmem:[#allocation6 + $0x190] sm:$0xf]
        %v931 = vld [vmem:[#allocation6 + $0x194] sm:$0xf]
        %v932 = vld [vmem:[#allocation6 + $0x198] sm:$0xf]
        %v933 = vld [vmem:[#allocation6 + $0x19c] sm:$0xf]
        %v934 = vld [vmem:[#allocation6 + $0x1a0] sm:$0xf]
        %v935 = vld [vmem:[#allocation6 + $0x1a4] sm:$0xf]
        %v936 = vld [vmem:[#allocation6 + $0x1a8] sm:$0xf]
        %v937 = vld [vmem:[#allocation6 + $0x1ac] sm:$0xf]
        %v938 = vld [vmem:[#allocation6 + $0x1b0] sm:$0xf]
        %v939 = vld [vmem:[#allocation6 + $0x1b4] sm:$0xf]
        %v940 = vld [vmem:[#allocation6 + $0x1b8] sm:$0xf]
        %v941 = vld [vmem:[#allocation6 + $0x1bc] sm:$0xf]
        %v942 = vld [vmem:[#allocation6 + $0x1c0] sm:$0xf]
        %v943 = vld [vmem:[#allocation6 + $0x1c4] sm:$0xf]
        %v944 = vld [vmem:[#allocation6 + $0x1c8] sm:$0xf]
        %v945 = vld [vmem:[#allocation6 + $0x1cc] sm:$0xf]
        %v946 = vld [vmem:[#allocation6 + $0x1d0] sm:$0xf]
        %v947 = vld [vmem:[#allocation6 + $0x1d4] sm:$0xf]
        %v948 = vld [vmem:[#allocation6 + $0x1d8] sm:$0xf]
        %v949 = vld [vmem:[#allocation6 + $0x1dc] sm:$0xf]
        %v950 = vld [vmem:[#allocation6 + $0x1e0] sm:$0xf]
        %v951 = vld [vmem:[#allocation6 + $0x1e4] sm:$0xf]
        %v952 = vld [vmem:[#allocation6 + $0x1e8] sm:$0xf]
        %v953 = vld [vmem:[#allocation6 + $0x1ec] sm:$0xf]
        %v954 = vld [vmem:[#allocation6 + $0x1f0] sm:$0xf]
        %v955 = vld [vmem:[#allocation6 + $0x1f4] sm:$0xf]
        %v956 = vld [vmem:[#allocation6 + $0x1f8] sm:$0xf]
        %v957 = vld [vmem:[#allocation6 + $0x1fc] sm:$0xf]
        %v958 = vunpack.c.l.bf16 %v830
        %v959 = vunpack.c.l.bf16 %v831
        %v960 = vunpack.c.l.bf16 %v832
        %v961 = vunpack.c.l.bf16 %v833
        %v962 = vunpack.c.l.bf16 %v834
        %v963 = vunpack.c.l.bf16 %v835
        %v964 = vunpack.c.l.bf16 %v836
        %v965 = vunpack.c.l.bf16 %v837
        %v966 = vunpack.c.l.bf16 %v838
        %v967 = vunpack.c.l.bf16 %v839
        %v968 = vunpack.c.l.bf16 %v840
        %v969 = vunpack.c.l.bf16 %v841
        %v970 = vunpack.c.l.bf16 %v842
        %v971 = vunpack.c.l.bf16 %v843
        %v972 = vunpack.c.l.bf16 %v844
        %v973 = vunpack.c.l.bf16 %v845
        %v974 = vunpack.c.l.bf16 %v846
        %v975 = vunpack.c.l.bf16 %v847
        %v976 = vunpack.c.l.bf16 %v848
        %v977 = vunpack.c.l.bf16 %v849
        %v978 = vunpack.c.l.bf16 %v850
        %v979 = vunpack.c.l.bf16 %v851
        %v980 = vunpack.c.l.bf16 %v852
        %v981 = vunpack.c.l.bf16 %v853
        %v982 = vunpack.c.l.bf16 %v854
        %v983 = vunpack.c.l.bf16 %v855
        %v984 = vunpack.c.l.bf16 %v856
        %v985 = vunpack.c.l.bf16 %v857
        %v986 = vunpack.c.l.bf16 %v858
        %v987 = vunpack.c.l.bf16 %v859
        %v988 = vunpack.c.l.bf16 %v860
        %v989 = vunpack.c.l.bf16 %v861
        %v990 = vunpack.c.l.bf16 %v862
        %v991 = vunpack.c.l.bf16 %v863
        %v992 = vunpack.c.l.bf16 %v864
        %v993 = vunpack.c.l.bf16 %v865
        %v994 = vunpack.c.l.bf16 %v866
        %v995 = vunpack.c.l.bf16 %v867
        %v996 = vunpack.c.l.bf16 %v868
        %v997 = vunpack.c.l.bf16 %v869
        %v998 = vunpack.c.l.bf16 %v870
        %v999 = vunpack.c.l.bf16 %v871
        %v1000 = vunpack.c.l.bf16 %v872
        %v1001 = vunpack.c.l.bf16 %v873
        %v1002 = vunpack.c.l.bf16 %v874
        %v1003 = vunpack.c.l.bf16 %v875
        %v1004 = vunpack.c.l.bf16 %v876
        %v1005 = vunpack.c.l.bf16 %v877
        %v1006 = vunpack.c.l.bf16 %v878
        %v1007 = vunpack.c.l.bf16 %v879
        %v1008 = vunpack.c.l.bf16 %v880
        %v1009 = vunpack.c.l.bf16 %v881
        %v1010 = vunpack.c.l.bf16 %v882
        %v1011 = vunpack.c.l.bf16 %v883
        %v1012 = vunpack.c.l.bf16 %v884
        %v1013 = vunpack.c.l.bf16 %v885
        %v1014 = vunpack.c.l.bf16 %v886
        %v1015 = vunpack.c.l.bf16 %v887
        %v1016 = vunpack.c.l.bf16 %v888
        %v1017 = vunpack.c.l.bf16 %v889
        %v1018 = vunpack.c.l.bf16 %v890
        %v1019 = vunpack.c.l.bf16 %v891
        %v1020 = vunpack.c.l.bf16 %v892
        %v1021 = vunpack.c.l.bf16 %v893
        %v1022 = vunpack.c.l.bf16 %v894
        %v1023 = vunpack.c.l.bf16 %v895
        %v1024 = vunpack.c.l.bf16 %v896
        %v1025 = vunpack.c.l.bf16 %v897
        %v1026 = vunpack.c.l.bf16 %v898
        %v1027 = vunpack.c.l.bf16 %v899
        %v1028 = vunpack.c.l.bf16 %v900
        %v1029 = vunpack.c.l.bf16 %v901
        %v1030 = vunpack.c.l.bf16 %v902
        %v1031 = vunpack.c.l.bf16 %v903
        %v1032 = vunpack.c.l.bf16 %v904
        %v1033 = vunpack.c.l.bf16 %v905
        %v1034 = vunpack.c.l.bf16 %v906
        %v1035 = vunpack.c.l.bf16 %v907
        %v1036 = vunpack.c.l.bf16 %v908
        %v1037 = vunpack.c.l.bf16 %v909
        %v1038 = vunpack.c.l.bf16 %v910
        %v1039 = vunpack.c.l.bf16 %v911
        %v1040 = vunpack.c.l.bf16 %v912
        %v1041 = vunpack.c.l.bf16 %v913
        %v1042 = vunpack.c.l.bf16 %v914
        %v1043 = vunpack.c.l.bf16 %v915
        %v1044 = vunpack.c.l.bf16 %v916
        %v1045 = vunpack.c.l.bf16 %v917
        %v1046 = vunpack.c.l.bf16 %v918
        %v1047 = vunpack.c.l.bf16 %v919
        %v1048 = vunpack.c.l.bf16 %v920
        %v1049 = vunpack.c.l.bf16 %v921
        %v1050 = vunpack.c.l.bf16 %v922
        %v1051 = vunpack.c.l.bf16 %v923
        %v1052 = vunpack.c.l.bf16 %v924
        %v1053 = vunpack.c.l.bf16 %v925
        %v1054 = vunpack.c.l.bf16 %v926
        %v1055 = vunpack.c.l.bf16 %v927
        %v1056 = vunpack.c.l.bf16 %v928
        %v1057 = vunpack.c.l.bf16 %v929
        %v1058 = vunpack.c.l.bf16 %v930
        %v1059 = vunpack.c.l.bf16 %v931
        %v1060 = vunpack.c.l.bf16 %v932
        %v1061 = vunpack.c.l.bf16 %v933
        %v1062 = vunpack.c.l.bf16 %v934
        %v1063 = vunpack.c.l.bf16 %v935
        %v1064 = vunpack.c.l.bf16 %v936
        %v1065 = vunpack.c.l.bf16 %v937
        %v1066 = vunpack.c.l.bf16 %v938
        %v1067 = vunpack.c.l.bf16 %v939
        %v1068 = vunpack.c.l.bf16 %v940
        %v1069 = vunpack.c.l.bf16 %v941
        %v1070 = vunpack.c.l.bf16 %v942
        %v1071 = vunpack.c.l.bf16 %v943
        %v1072 = vunpack.c.l.bf16 %v944
        %v1073 = vunpack.c.l.bf16 %v945
        %v1074 = vunpack.c.l.bf16 %v946
        %v1075 = vunpack.c.l.bf16 %v947
        %v1076 = vunpack.c.l.bf16 %v948
        %v1077 = vunpack.c.l.bf16 %v949
        %v1078 = vunpack.c.l.bf16 %v950
        %v1079 = vunpack.c.l.bf16 %v951
        %v1080 = vunpack.c.l.bf16 %v952
        %v1081 = vunpack.c.l.bf16 %v953
        %v1082 = vunpack.c.l.bf16 %v954
        %v1083 = vunpack.c.l.bf16 %v955
        %v1084 = vunpack.c.l.bf16 %v956
        %v1085 = vunpack.c.l.bf16 %v957
        %v1087 = vcombine.high %v825, %v825
        %v1089 = vunpack.c.l.s4 1966171168
        %v1090 = vunpack.c.0.s8 %v1089
        %v1091 = vlaneseq
        %v1092 = vshrl.u32 %v1091, 7
        %v1093 = vsub.s32 %v1090, %v1092
        %v1094 = vrot.slane %v825, %v1093
        %v1096 = vunpack.c.l.s4 1966171168
        %v1097 = vunpack.c.0.s8 %v1096
        %v1098 = vlaneseq
        %v1099 = vshrl.u32 %v1098, 7
        %v1100 = vsub.s32 %v1097, %v1099
        %v1101 = vrot.slane %v1087, %v1100
        %v1102 = vcombine.high %v1094, %v1094
        %v1103 = vcombine.high %v1101, %v1101
        %v1105 = vunpack.c.l.s4 1966171168
        %v1106 = vunpack.c.0.s8 %v1105
        %v1107 = vlaneseq
        %v1108 = vshrl.u32 %v1107, 7
        %v1109 = vsub.s32 %v1106, %v1108
        %v1110 = vrot.slane %v1094, %v1109
        %v1112 = vunpack.c.l.s4 1966171168
        %v1113 = vunpack.c.0.s8 %v1112
        %v1114 = vlaneseq
        %v1115 = vshrl.u32 %v1114, 7
        %v1116 = vsub.s32 %v1113, %v1115
        %v1117 = vrot.slane %v1101, %v1116
        %v1119 = vunpack.c.l.s4 1966171168
        %v1120 = vunpack.c.0.s8 %v1119
        %v1121 = vlaneseq
        %v1122 = vshrl.u32 %v1121, 7
        %v1123 = vsub.s32 %v1120, %v1122
        %v1124 = vrot.slane %v1102, %v1123
        %v1126 = vunpack.c.l.s4 1966171168
        %v1127 = vunpack.c.0.s8 %v1126
        %v1128 = vlaneseq
        %v1129 = vshrl.u32 %v1128, 7
        %v1130 = vsub.s32 %v1127, %v1129
        %v1131 = vrot.slane %v1103, %v1130
        %v1132 = vcombine.high %v1110, %v1110
        %v1133 = vcombine.high %v1117, %v1117
        %v1134 = vcombine.high %v1124, %v1124
        %v1135 = vcombine.high %v1131, %v1131
        %v1136 = vlaneseq
        %v1137 = vshrl.u32 %v1136, 7
        %v1138 = vsub.s32 0, %v1137
        %v1139 = vrot.slane %v1110, %v1138
        %v1140 = vlaneseq
        %v1141 = vshrl.u32 %v1140, 7
        %v1142 = vsub.s32 0, %v1141
        %v1143 = vrot.slane %v1124, %v1142
        %v1144 = vlaneseq
        %v1145 = vshrl.u32 %v1144, 7
        %v1146 = vsub.s32 0, %v1145
        %v1147 = vrot.slane %v1132, %v1146
        %v1148 = vlaneseq
        %v1149 = vshrl.u32 %v1148, 7
        %v1150 = vsub.s32 0, %v1149
        %v1151 = vrot.slane %v1134, %v1150
        %v1152 = vlaneseq
        %v1153 = vshrl.u32 %v1152, 7
        %v1154 = vsub.s32 0, %v1153
        %v1155 = vrot.slane %v1117, %v1154
        %v1156 = vlaneseq
        %v1157 = vshrl.u32 %v1156, 7
        %v1158 = vsub.s32 0, %v1157
        %v1159 = vrot.slane %v1131, %v1158
        %v1160 = vlaneseq
        %v1161 = vshrl.u32 %v1160, 7
        %v1162 = vsub.s32 0, %v1161
        %v1163 = vrot.slane %v1133, %v1162
        %v1164 = vlaneseq
        %v1165 = vshrl.u32 %v1164, 7
        %v1166 = vsub.s32 0, %v1165
        %v1167 = vrot.slane %v1135, %v1166
        %v1176 = vmul.f32 %v958, %v1139
        %v1177 = vmul.f32 %v959, %v1139
        %v1178 = vmul.f32 %v960, %v1139
        %v1179 = vmul.f32 %v961, %v1139
        %v1180 = vmul.f32 %v962, %v1139
        %v1181 = vmul.f32 %v963, %v1139
        %v1182 = vmul.f32 %v964, %v1139
        %v1183 = vmul.f32 %v965, %v1139
        %v1184 = vmul.f32 %v966, %v1139
        %v1185 = vmul.f32 %v967, %v1139
        %v1186 = vmul.f32 %v968, %v1139
        %v1187 = vmul.f32 %v969, %v1139
        %v1188 = vmul.f32 %v970, %v1139
        %v1189 = vmul.f32 %v971, %v1139
        %v1190 = vmul.f32 %v972, %v1139
        %v1191 = vmul.f32 %v973, %v1139
        %v1192 = vmul.f32 %v974, %v1143
        %v1193 = vmul.f32 %v975, %v1143
        %v1194 = vmul.f32 %v976, %v1143
        %v1195 = vmul.f32 %v977, %v1143
        %v1196 = vmul.f32 %v978, %v1143
        %v1197 = vmul.f32 %v979, %v1143
        %v1198 = vmul.f32 %v980, %v1143
        %v1199 = vmul.f32 %v981, %v1143
        %v1200 = vmul.f32 %v982, %v1143
        %v1201 = vmul.f32 %v983, %v1143
        %v1202 = vmul.f32 %v984, %v1143
        %v1203 = vmul.f32 %v985, %v1143
        %v1204 = vmul.f32 %v986, %v1143
        %v1205 = vmul.f32 %v987, %v1143
        %v1206 = vmul.f32 %v988, %v1143
        %v1207 = vmul.f32 %v989, %v1143
        %v1208 = vmul.f32 %v990, %v1147
        %v1209 = vmul.f32 %v991, %v1147
        %v1210 = vmul.f32 %v992, %v1147
        %v1211 = vmul.f32 %v993, %v1147
        %v1212 = vmul.f32 %v994, %v1147
        %v1213 = vmul.f32 %v995, %v1147
        %v1214 = vmul.f32 %v996, %v1147
        %v1215 = vmul.f32 %v997, %v1147
        %v1216 = vmul.f32 %v998, %v1147
        %v1217 = vmul.f32 %v999, %v1147
        %v1218 = vmul.f32 %v1000, %v1147
        %v1219 = vmul.f32 %v1001, %v1147
        %v1220 = vmul.f32 %v1002, %v1147
        %v1221 = vmul.f32 %v1003, %v1147
        %v1222 = vmul.f32 %v1004, %v1147
        %v1223 = vmul.f32 %v1005, %v1147
        %v1224 = vmul.f32 %v1006, %v1151
        %v1225 = vmul.f32 %v1007, %v1151
        %v1226 = vmul.f32 %v1008, %v1151
        %v1227 = vmul.f32 %v1009, %v1151
        %v1228 = vmul.f32 %v1010, %v1151
        %v1229 = vmul.f32 %v1011, %v1151
        %v1230 = vmul.f32 %v1012, %v1151
        %v1231 = vmul.f32 %v1013, %v1151
        %v1232 = vmul.f32 %v1014, %v1151
        %v1233 = vmul.f32 %v1015, %v1151
        %v1234 = vmul.f32 %v1016, %v1151
        %v1235 = vmul.f32 %v1017, %v1151
        %v1236 = vmul.f32 %v1018, %v1151
        %v1237 = vmul.f32 %v1019, %v1151
        %v1238 = vmul.f32 %v1020, %v1151
        %v1239 = vmul.f32 %v1021, %v1151
        %v1240 = vmul.f32 %v1022, %v1155
        %v1241 = vmul.f32 %v1023, %v1155
        %v1242 = vmul.f32 %v1024, %v1155
        %v1243 = vmul.f32 %v1025, %v1155
        %v1244 = vmul.f32 %v1026, %v1155
        %v1245 = vmul.f32 %v1027, %v1155
        %v1246 = vmul.f32 %v1028, %v1155
        %v1247 = vmul.f32 %v1029, %v1155
        %v1248 = vmul.f32 %v1030, %v1155
        %v1249 = vmul.f32 %v1031, %v1155
        %v1250 = vmul.f32 %v1032, %v1155
        %v1251 = vmul.f32 %v1033, %v1155
        %v1252 = vmul.f32 %v1034, %v1155
        %v1253 = vmul.f32 %v1035, %v1155
        %v1254 = vmul.f32 %v1036, %v1155
        %v1255 = vmul.f32 %v1037, %v1155
        %v1256 = vmul.f32 %v1038, %v1159
        %v1257 = vmul.f32 %v1039, %v1159
        %v1258 = vmul.f32 %v1040, %v1159
        %v1259 = vmul.f32 %v1041, %v1159
        %v1260 = vmul.f32 %v1042, %v1159
        %v1261 = vmul.f32 %v1043, %v1159
        %v1262 = vmul.f32 %v1044, %v1159
        %v1263 = vmul.f32 %v1045, %v1159
        %v1264 = vmul.f32 %v1046, %v1159
        %v1265 = vmul.f32 %v1047, %v1159
        %v1266 = vmul.f32 %v1048, %v1159
        %v1267 = vmul.f32 %v1049, %v1159
        %v1268 = vmul.f32 %v1050, %v1159
        %v1269 = vmul.f32 %v1051, %v1159
        %v1270 = vmul.f32 %v1052, %v1159
        %v1271 = vmul.f32 %v1053, %v1159
        %v1272 = vmul.f32 %v1054, %v1163
        %v1273 = vmul.f32 %v1055, %v1163
        %v1274 = vmul.f32 %v1056, %v1163
        %v1275 = vmul.f32 %v1057, %v1163
        %v1276 = vmul.f32 %v1058, %v1163
        %v1277 = vmul.f32 %v1059, %v1163
        %v1278 = vmul.f32 %v1060, %v1163
        %v1279 = vmul.f32 %v1061, %v1163
        %v1280 = vmul.f32 %v1062, %v1163
        %v1281 = vmul.f32 %v1063, %v1163
        %v1282 = vmul.f32 %v1064, %v1163
        %v1283 = vmul.f32 %v1065, %v1163
        %v1284 = vmul.f32 %v1066, %v1163
        %v1285 = vmul.f32 %v1067, %v1163
        %v1286 = vmul.f32 %v1068, %v1163
        %v1287 = vmul.f32 %v1069, %v1163
        %v1288 = vmul.f32 %v1070, %v1167
        %v1289 = vmul.f32 %v1071, %v1167
        %v1290 = vmul.f32 %v1072, %v1167
        %v1291 = vmul.f32 %v1073, %v1167
        %v1292 = vmul.f32 %v1074, %v1167
        %v1293 = vmul.f32 %v1075, %v1167
        %v1294 = vmul.f32 %v1076, %v1167
        %v1295 = vmul.f32 %v1077, %v1167
        %v1296 = vmul.f32 %v1078, %v1167
        %v1297 = vmul.f32 %v1079, %v1167
        %v1298 = vmul.f32 %v1080, %v1167
        %v1299 = vmul.f32 %v1081, %v1167
        %v1300 = vmul.f32 %v1082, %v1167
        %v1301 = vmul.f32 %v1083, %v1167
        %v1302 = vmul.f32 %v1084, %v1167
        %v1303 = vmul.f32 %v1085, %v1167
        %1304 = vadd.xlane.f32.xlu0 %v1176
        %v1305 = vpop.xlane.xlu0 %1304
        %1306 = vadd.xlane.f32.xlu0 %v1177
        %v1307 = vpop.xlane.xlu0 %1306
        %1308 = vadd.xlane.f32.xlu0 %v1178
        %v1309 = vpop.xlane.xlu0 %1308
        %1310 = vadd.xlane.f32.xlu0 %v1179
        %v1311 = vpop.xlane.xlu0 %1310
        %1312 = vadd.xlane.f32.xlu0 %v1180
        %v1313 = vpop.xlane.xlu0 %1312
        %1314 = vadd.xlane.f32.xlu0 %v1181
        %v1315 = vpop.xlane.xlu0 %1314
        %1316 = vadd.xlane.f32.xlu0 %v1182
        %v1317 = vpop.xlane.xlu0 %1316
        %1318 = vadd.xlane.f32.xlu0 %v1183
        %v1319 = vpop.xlane.xlu0 %1318
        %1320 = vadd.xlane.f32.xlu0 %v1184
        %v1321 = vpop.xlane.xlu0 %1320
        %1322 = vadd.xlane.f32.xlu0 %v1185
        %v1323 = vpop.xlane.xlu0 %1322
        %1324 = vadd.xlane.f32.xlu0 %v1186
        %v1325 = vpop.xlane.xlu0 %1324
        %1326 = vadd.xlane.f32.xlu0 %v1187
        %v1327 = vpop.xlane.xlu0 %1326
        %1328 = vadd.xlane.f32.xlu0 %v1188
        %v1329 = vpop.xlane.xlu0 %1328
        %1330 = vadd.xlane.f32.xlu0 %v1189
        %v1331 = vpop.xlane.xlu0 %1330
        %1332 = vadd.xlane.f32.xlu0 %v1190
        %v1333 = vpop.xlane.xlu0 %1332
        %1334 = vadd.xlane.f32.xlu0 %v1191
        %v1335 = vpop.xlane.xlu0 %1334
        %1336 = vadd.xlane.f32.xlu0 %v1192
        %v1337 = vpop.xlane.xlu0 %1336
        %1338 = vadd.xlane.f32.xlu0 %v1193
        %v1339 = vpop.xlane.xlu0 %1338
        %1340 = vadd.xlane.f32.xlu0 %v1194
        %v1341 = vpop.xlane.xlu0 %1340
        %1342 = vadd.xlane.f32.xlu0 %v1195
        %v1343 = vpop.xlane.xlu0 %1342
        %1344 = vadd.xlane.f32.xlu0 %v1196
        %v1345 = vpop.xlane.xlu0 %1344
        %1346 = vadd.xlane.f32.xlu0 %v1197
        %v1347 = vpop.xlane.xlu0 %1346
        %1348 = vadd.xlane.f32.xlu0 %v1198
        %v1349 = vpop.xlane.xlu0 %1348
        %1350 = vadd.xlane.f32.xlu0 %v1199
        %v1351 = vpop.xlane.xlu0 %1350
        %1352 = vadd.xlane.f32.xlu0 %v1200
        %v1353 = vpop.xlane.xlu0 %1352
        %1354 = vadd.xlane.f32.xlu0 %v1201
        %v1355 = vpop.xlane.xlu0 %1354
        %1356 = vadd.xlane.f32.xlu0 %v1202
        %v1357 = vpop.xlane.xlu0 %1356
        %1358 = vadd.xlane.f32.xlu0 %v1203
        %v1359 = vpop.xlane.xlu0 %1358
        %1360 = vadd.xlane.f32.xlu0 %v1204
        %v1361 = vpop.xlane.xlu0 %1360
        %1362 = vadd.xlane.f32.xlu0 %v1205
        %v1363 = vpop.xlane.xlu0 %1362
        %1364 = vadd.xlane.f32.xlu0 %v1206
        %v1365 = vpop.xlane.xlu0 %1364
        %1366 = vadd.xlane.f32.xlu0 %v1207
        %v1367 = vpop.xlane.xlu0 %1366
        %1368 = vadd.xlane.f32.xlu0 %v1208
        %v1369 = vpop.xlane.xlu0 %1368
        %1370 = vadd.xlane.f32.xlu0 %v1209
        %v1371 = vpop.xlane.xlu0 %1370
        %1372 = vadd.xlane.f32.xlu0 %v1210
        %v1373 = vpop.xlane.xlu0 %1372
        %1374 = vadd.xlane.f32.xlu0 %v1211
        %v1375 = vpop.xlane.xlu0 %1374
        %1376 = vadd.xlane.f32.xlu0 %v1212
        %v1377 = vpop.xlane.xlu0 %1376
        %1378 = vadd.xlane.f32.xlu0 %v1213
        %v1379 = vpop.xlane.xlu0 %1378
        %1380 = vadd.xlane.f32.xlu0 %v1214
        %v1381 = vpop.xlane.xlu0 %1380
        %1382 = vadd.xlane.f32.xlu0 %v1215
        %v1383 = vpop.xlane.xlu0 %1382
        %1384 = vadd.xlane.f32.xlu0 %v1216
        %v1385 = vpop.xlane.xlu0 %1384
        %1386 = vadd.xlane.f32.xlu0 %v1217
        %v1387 = vpop.xlane.xlu0 %1386
        %1388 = vadd.xlane.f32.xlu0 %v1218
        %v1389 = vpop.xlane.xlu0 %1388
        %1390 = vadd.xlane.f32.xlu0 %v1219
        %v1391 = vpop.xlane.xlu0 %1390
        %1392 = vadd.xlane.f32.xlu0 %v1220
        %v1393 = vpop.xlane.xlu0 %1392
        %1394 = vadd.xlane.f32.xlu0 %v1221
        %v1395 = vpop.xlane.xlu0 %1394
        %1396 = vadd.xlane.f32.xlu0 %v1222
        %v1397 = vpop.xlane.xlu0 %1396
        %1398 = vadd.xlane.f32.xlu0 %v1223
        %v1399 = vpop.xlane.xlu0 %1398
        %1400 = vadd.xlane.f32.xlu0 %v1224
        %v1401 = vpop.xlane.xlu0 %1400
        %1402 = vadd.xlane.f32.xlu0 %v1225
        %v1403 = vpop.xlane.xlu0 %1402
        %1404 = vadd.xlane.f32.xlu0 %v1226
        %v1405 = vpop.xlane.xlu0 %1404
        %1406 = vadd.xlane.f32.xlu0 %v1227
        %v1407 = vpop.xlane.xlu0 %1406
        %1408 = vadd.xlane.f32.xlu0 %v1228
        %v1409 = vpop.xlane.xlu0 %1408
        %1410 = vadd.xlane.f32.xlu0 %v1229
        %v1411 = vpop.xlane.xlu0 %1410
        %1412 = vadd.xlane.f32.xlu0 %v1230
        %v1413 = vpop.xlane.xlu0 %1412
        %1414 = vadd.xlane.f32.xlu0 %v1231
        %v1415 = vpop.xlane.xlu0 %1414
        %1416 = vadd.xlane.f32.xlu0 %v1232
        %v1417 = vpop.xlane.xlu0 %1416
        %1418 = vadd.xlane.f32.xlu0 %v1233
        %v1419 = vpop.xlane.xlu0 %1418
        %1420 = vadd.xlane.f32.xlu0 %v1234
        %v1421 = vpop.xlane.xlu0 %1420
        %1422 = vadd.xlane.f32.xlu0 %v1235
        %v1423 = vpop.xlane.xlu0 %1422
        %1424 = vadd.xlane.f32.xlu0 %v1236
        %v1425 = vpop.xlane.xlu0 %1424
        %1426 = vadd.xlane.f32.xlu0 %v1237
        %v1427 = vpop.xlane.xlu0 %1426
        %1428 = vadd.xlane.f32.xlu0 %v1238
        %v1429 = vpop.xlane.xlu0 %1428
        %1430 = vadd.xlane.f32.xlu0 %v1239
        %v1431 = vpop.xlane.xlu0 %1430
        %1432 = vadd.xlane.f32.xlu0 %v1240
        %v1433 = vpop.xlane.xlu0 %1432
        %1434 = vadd.xlane.f32.xlu0 %v1241
        %v1435 = vpop.xlane.xlu0 %1434
        %1436 = vadd.xlane.f32.xlu0 %v1242
        %v1437 = vpop.xlane.xlu0 %1436
        %1438 = vadd.xlane.f32.xlu0 %v1243
        %v1439 = vpop.xlane.xlu0 %1438
        %1440 = vadd.xlane.f32.xlu0 %v1244
        %v1441 = vpop.xlane.xlu0 %1440
        %1442 = vadd.xlane.f32.xlu0 %v1245
        %v1443 = vpop.xlane.xlu0 %1442
        %1444 = vadd.xlane.f32.xlu0 %v1246
        %v1445 = vpop.xlane.xlu0 %1444
        %1446 = vadd.xlane.f32.xlu0 %v1247
        %v1447 = vpop.xlane.xlu0 %1446
        %1448 = vadd.xlane.f32.xlu0 %v1248
        %v1449 = vpop.xlane.xlu0 %1448
        %1450 = vadd.xlane.f32.xlu0 %v1249
        %v1451 = vpop.xlane.xlu0 %1450
        %1452 = vadd.xlane.f32.xlu0 %v1250
        %v1453 = vpop.xlane.xlu0 %1452
        %1454 = vadd.xlane.f32.xlu0 %v1251
        %v1455 = vpop.xlane.xlu0 %1454
        %1456 = vadd.xlane.f32.xlu0 %v1252
        %v1457 = vpop.xlane.xlu0 %1456
        %1458 = vadd.xlane.f32.xlu0 %v1253
        %v1459 = vpop.xlane.xlu0 %1458
        %1460 = vadd.xlane.f32.xlu0 %v1254
        %v1461 = vpop.xlane.xlu0 %1460
        %1462 = vadd.xlane.f32.xlu0 %v1255
        %v1463 = vpop.xlane.xlu0 %1462
        %1464 = vadd.xlane.f32.xlu0 %v1256
        %v1465 = vpop.xlane.xlu0 %1464
        %1466 = vadd.xlane.f32.xlu0 %v1257
        %v1467 = vpop.xlane.xlu0 %1466
        %1468 = vadd.xlane.f32.xlu0 %v1258
        %v1469 = vpop.xlane.xlu0 %1468
        %1470 = vadd.xlane.f32.xlu0 %v1259
        %v1471 = vpop.xlane.xlu0 %1470
        %1472 = vadd.xlane.f32.xlu0 %v1260
        %v1473 = vpop.xlane.xlu0 %1472
        %1474 = vadd.xlane.f32.xlu0 %v1261
        %v1475 = vpop.xlane.xlu0 %1474
        %1476 = vadd.xlane.f32.xlu0 %v1262
        %v1477 = vpop.xlane.xlu0 %1476
        %1478 = vadd.xlane.f32.xlu0 %v1263
        %v1479 = vpop.xlane.xlu0 %1478
        %1480 = vadd.xlane.f32.xlu0 %v1264
        %v1481 = vpop.xlane.xlu0 %1480
        %1482 = vadd.xlane.f32.xlu0 %v1265
        %v1483 = vpop.xlane.xlu0 %1482
        %1484 = vadd.xlane.f32.xlu0 %v1266
        %v1485 = vpop.xlane.xlu0 %1484
        %1486 = vadd.xlane.f32.xlu0 %v1267
        %v1487 = vpop.xlane.xlu0 %1486
        %1488 = vadd.xlane.f32.xlu0 %v1268
        %v1489 = vpop.xlane.xlu0 %1488
        %1490 = vadd.xlane.f32.xlu0 %v1269
        %v1491 = vpop.xlane.xlu0 %1490
        %1492 = vadd.xlane.f32.xlu0 %v1270
        %v1493 = vpop.xlane.xlu0 %1492
        %1494 = vadd.xlane.f32.xlu0 %v1271
        %v1495 = vpop.xlane.xlu0 %1494
        %1496 = vadd.xlane.f32.xlu0 %v1272
        %v1497 = vpop.xlane.xlu0 %1496
        %1498 = vadd.xlane.f32.xlu0 %v1273
        %v1499 = vpop.xlane.xlu0 %1498
        %1500 = vadd.xlane.f32.xlu0 %v1274
        %v1501 = vpop.xlane.xlu0 %1500
        %1502 = vadd.xlane.f32.xlu0 %v1275
        %v1503 = vpop.xlane.xlu0 %1502
        %1504 = vadd.xlane.f32.xlu0 %v1276
        %v1505 = vpop.xlane.xlu0 %1504
        %1506 = vadd.xlane.f32.xlu0 %v1277
        %v1507 = vpop.xlane.xlu0 %1506
        %1508 = vadd.xlane.f32.xlu0 %v1278
        %v1509 = vpop.xlane.xlu0 %1508
        %1510 = vadd.xlane.f32.xlu0 %v1279
        %v1511 = vpop.xlane.xlu0 %1510
        %1512 = vadd.xlane.f32.xlu0 %v1280
        %v1513 = vpop.xlane.xlu0 %1512
        %1514 = vadd.xlane.f32.xlu0 %v1281
        %v1515 = vpop.xlane.xlu0 %1514
        %1516 = vadd.xlane.f32.xlu0 %v1282
        %v1517 = vpop.xlane.xlu0 %1516
        %1518 = vadd.xlane.f32.xlu0 %v1283
        %v1519 = vpop.xlane.xlu0 %1518
        %1520 = vadd.xlane.f32.xlu0 %v1284
        %v1521 = vpop.xlane.xlu0 %1520
        %1522 = vadd.xlane.f32.xlu0 %v1285
        %v1523 = vpop.xlane.xlu0 %1522
        %1524 = vadd.xlane.f32.xlu0 %v1286
        %v1525 = vpop.xlane.xlu0 %1524
        %1526 = vadd.xlane.f32.xlu0 %v1287
        %v1527 = vpop.xlane.xlu0 %1526
        %1528 = vadd.xlane.f32.xlu0 %v1288
        %v1529 = vpop.xlane.xlu0 %1528
        %1530 = vadd.xlane.f32.xlu0 %v1289
        %v1531 = vpop.xlane.xlu0 %1530
        %1532 = vadd.xlane.f32.xlu0 %v1290
        %v1533 = vpop.xlane.xlu0 %1532
        %1534 = vadd.xlane.f32.xlu0 %v1291
        %v1535 = vpop.xlane.xlu0 %1534
        %1536 = vadd.xlane.f32.xlu0 %v1292
        %v1537 = vpop.xlane.xlu0 %1536
        %1538 = vadd.xlane.f32.xlu0 %v1293
        %v1539 = vpop.xlane.xlu0 %1538
        %1540 = vadd.xlane.f32.xlu0 %v1294
        %v1541 = vpop.xlane.xlu0 %1540
        %1542 = vadd.xlane.f32.xlu0 %v1295
        %v1543 = vpop.xlane.xlu0 %1542
        %1544 = vadd.xlane.f32.xlu0 %v1296
        %v1545 = vpop.xlane.xlu0 %1544
        %1546 = vadd.xlane.f32.xlu0 %v1297
        %v1547 = vpop.xlane.xlu0 %1546
        %1548 = vadd.xlane.f32.xlu0 %v1298
        %v1549 = vpop.xlane.xlu0 %1548
        %1550 = vadd.xlane.f32.xlu0 %v1299
        %v1551 = vpop.xlane.xlu0 %1550
        %1552 = vadd.xlane.f32.xlu0 %v1300
        %v1553 = vpop.xlane.xlu0 %1552
        %1554 = vadd.xlane.f32.xlu0 %v1301
        %v1555 = vpop.xlane.xlu0 %1554
        %1556 = vadd.xlane.f32.xlu0 %v1302
        %v1557 = vpop.xlane.xlu0 %1556
        %1558 = vadd.xlane.f32.xlu0 %v1303
        %v1559 = vpop.xlane.xlu0 %1558
        %v1560 = vld [vmem:[%s3] sm:$0x1]
        %v1562 = vlaneseq
        %v1563 = vshrl.u32 %v1562, 7
        %v1564 = vsub.s32 0, %v1563
        %v1565 = vrot.slane %v1560, %v1564
        %1567 = vbcast.lane.b32.xlu0 %v1565, 256
        %v1568 = vpop.permute.xlu0 %1567
        %s1570 = sor.u32 256, 8
        %1571 = vbcast.lane.b32.xlu0 %v1565, %s1570
        %v1572 = vpop.permute.xlu0 %1571
        %s1574 = sor.u32 256, 16
        %1575 = vbcast.lane.b32.xlu0 %v1565, %s1574
        %v1576 = vpop.permute.xlu0 %1575
        %s1578 = sor.u32 256, 24
        %1579 = vbcast.lane.b32.xlu0 %v1565, %s1578
        %v1580 = vpop.permute.xlu0 %1579
        %s1582 = sor.u32 256, 32
        %1583 = vbcast.lane.b32.xlu0 %v1565, %s1582
        %v1584 = vpop.permute.xlu0 %1583
        %s1586 = sor.u32 256, 40
        %1587 = vbcast.lane.b32.xlu0 %v1565, %s1586
        %v1588 = vpop.permute.xlu0 %1587
        %s1590 = sor.u32 256, 48
        %1591 = vbcast.lane.b32.xlu0 %v1565, %s1590
        %v1592 = vpop.permute.xlu0 %1591
        %s1594 = sor.u32 256, 56
        %1595 = vbcast.lane.b32.xlu0 %v1565, %s1594
        %v1596 = vpop.permute.xlu0 %1595
        %s1598 = sor.u32 256, 64
        %1599 = vbcast.lane.b32.xlu0 %v1565, %s1598
        %v1600 = vpop.permute.xlu0 %1599
        %s1602 = sor.u32 256, 72
        %1603 = vbcast.lane.b32.xlu0 %v1565, %s1602
        %v1604 = vpop.permute.xlu0 %1603
        %s1606 = sor.u32 256, 80
        %1607 = vbcast.lane.b32.xlu0 %v1565, %s1606
        %v1608 = vpop.permute.xlu0 %1607
        %s1610 = sor.u32 256, 88
        %1611 = vbcast.lane.b32.xlu0 %v1565, %s1610
        %v1612 = vpop.permute.xlu0 %1611
        %s1614 = sor.u32 256, 96
        %1615 = vbcast.lane.b32.xlu0 %v1565, %s1614
        %v1616 = vpop.permute.xlu0 %1615
        %s1618 = sor.u32 256, 104
        %1619 = vbcast.lane.b32.xlu0 %v1565, %s1618
        %v1620 = vpop.permute.xlu0 %1619
        %s1622 = sor.u32 256, 112
        %1623 = vbcast.lane.b32.xlu0 %v1565, %s1622
        %v1624 = vpop.permute.xlu0 %1623
        %s1626 = sor.u32 256, 120
        %1627 = vbcast.lane.b32.xlu0 %v1565, %s1626
        %v1628 = vpop.permute.xlu0 %1627
        %v1645 = vadd.f32 %v1305, %v1568
        %v1646 = vadd.f32 %v1307, %v1572
        %v1647 = vadd.f32 %v1309, %v1576
        %v1648 = vadd.f32 %v1311, %v1580
        %v1649 = vadd.f32 %v1313, %v1584
        %v1650 = vadd.f32 %v1315, %v1588
        %v1651 = vadd.f32 %v1317, %v1592
        %v1652 = vadd.f32 %v1319, %v1596
        %v1653 = vadd.f32 %v1321, %v1600
        %v1654 = vadd.f32 %v1323, %v1604
        %v1655 = vadd.f32 %v1325, %v1608
        %v1656 = vadd.f32 %v1327, %v1612
        %v1657 = vadd.f32 %v1329, %v1616
        %v1658 = vadd.f32 %v1331, %v1620
        %v1659 = vadd.f32 %v1333, %v1624
        %v1660 = vadd.f32 %v1335, %v1628
        %v1661 = vadd.f32 %v1337, %v1568
        %v1662 = vadd.f32 %v1339, %v1572
        %v1663 = vadd.f32 %v1341, %v1576
        %v1664 = vadd.f32 %v1343, %v1580
        %v1665 = vadd.f32 %v1345, %v1584
        %v1666 = vadd.f32 %v1347, %v1588
        %v1667 = vadd.f32 %v1349, %v1592
        %v1668 = vadd.f32 %v1351, %v1596
        %v1669 = vadd.f32 %v1353, %v1600
        %v1670 = vadd.f32 %v1355, %v1604
        %v1671 = vadd.f32 %v1357, %v1608
        %v1672 = vadd.f32 %v1359, %v1612
        %v1673 = vadd.f32 %v1361, %v1616
        %v1674 = vadd.f32 %v1363, %v1620
        %v1675 = vadd.f32 %v1365, %v1624
        %v1676 = vadd.f32 %v1367, %v1628
        %v1677 = vadd.f32 %v1369, %v1568
        %v1678 = vadd.f32 %v1371, %v1572
        %v1679 = vadd.f32 %v1373, %v1576
        %v1680 = vadd.f32 %v1375, %v1580
        %v1681 = vadd.f32 %v1377, %v1584
        %v1682 = vadd.f32 %v1379, %v1588
        %v1683 = vadd.f32 %v1381, %v1592
        %v1684 = vadd.f32 %v1383, %v1596
        %v1685 = vadd.f32 %v1385, %v1600
        %v1686 = vadd.f32 %v1387, %v1604
        %v1687 = vadd.f32 %v1389, %v1608
        %v1688 = vadd.f32 %v1391, %v1612
        %v1689 = vadd.f32 %v1393, %v1616
        %v1690 = vadd.f32 %v1395, %v1620
        %v1691 = vadd.f32 %v1397, %v1624
        %v1692 = vadd.f32 %v1399, %v1628
        %v1693 = vadd.f32 %v1401, %v1568
        %v1694 = vadd.f32 %v1403, %v1572
        %v1695 = vadd.f32 %v1405, %v1576
        %v1696 = vadd.f32 %v1407, %v1580
        %v1697 = vadd.f32 %v1409, %v1584
        %v1698 = vadd.f32 %v1411, %v1588
        %v1699 = vadd.f32 %v1413, %v1592
        %v1700 = vadd.f32 %v1415, %v1596
        %v1701 = vadd.f32 %v1417, %v1600
        %v1702 = vadd.f32 %v1419, %v1604
        %v1703 = vadd.f32 %v1421, %v1608
        %v1704 = vadd.f32 %v1423, %v1612
        %v1705 = vadd.f32 %v1425, %v1616
        %v1706 = vadd.f32 %v1427, %v1620
        %v1707 = vadd.f32 %v1429, %v1624
        %v1708 = vadd.f32 %v1431, %v1628
        %v1709 = vadd.f32 %v1433, %v1568
        %v1710 = vadd.f32 %v1435, %v1572
        %v1711 = vadd.f32 %v1437, %v1576
        %v1712 = vadd.f32 %v1439, %v1580
        %v1713 = vadd.f32 %v1441, %v1584
        %v1714 = vadd.f32 %v1443, %v1588
        %v1715 = vadd.f32 %v1445, %v1592
        %v1716 = vadd.f32 %v1447, %v1596
        %v1717 = vadd.f32 %v1449, %v1600
        %v1718 = vadd.f32 %v1451, %v1604
        %v1719 = vadd.f32 %v1453, %v1608
        %v1720 = vadd.f32 %v1455, %v1612
        %v1721 = vadd.f32 %v1457, %v1616
        %v1722 = vadd.f32 %v1459, %v1620
        %v1723 = vadd.f32 %v1461, %v1624
        %v1724 = vadd.f32 %v1463, %v1628
        %v1725 = vadd.f32 %v1465, %v1568
        %v1726 = vadd.f32 %v1467, %v1572
        %v1727 = vadd.f32 %v1469, %v1576
        %v1728 = vadd.f32 %v1471, %v1580
        %v1729 = vadd.f32 %v1473, %v1584
        %v1730 = vadd.f32 %v1475, %v1588
        %v1731 = vadd.f32 %v1477, %v1592
        %v1732 = vadd.f32 %v1479, %v1596
        %v1733 = vadd.f32 %v1481, %v1600
        %v1734 = vadd.f32 %v1483, %v1604
        %v1735 = vadd.f32 %v1485, %v1608
        %v1736 = vadd.f32 %v1487, %v1612
        %v1737 = vadd.f32 %v1489, %v1616
        %v1738 = vadd.f32 %v1491, %v1620
        %v1739 = vadd.f32 %v1493, %v1624
        %v1740 = vadd.f32 %v1495, %v1628
        %v1741 = vadd.f32 %v1497, %v1568
        %v1742 = vadd.f32 %v1499, %v1572
        %v1743 = vadd.f32 %v1501, %v1576
        %v1744 = vadd.f32 %v1503, %v1580
        %v1745 = vadd.f32 %v1505, %v1584
        %v1746 = vadd.f32 %v1507, %v1588
        %v1747 = vadd.f32 %v1509, %v1592
        %v1748 = vadd.f32 %v1511, %v1596
        %v1749 = vadd.f32 %v1513, %v1600
        %v1750 = vadd.f32 %v1515, %v1604
        %v1751 = vadd.f32 %v1517, %v1608
        %v1752 = vadd.f32 %v1519, %v1612
        %v1753 = vadd.f32 %v1521, %v1616
        %v1754 = vadd.f32 %v1523, %v1620
        %v1755 = vadd.f32 %v1525, %v1624
        %v1756 = vadd.f32 %v1527, %v1628
        %v1757 = vadd.f32 %v1529, %v1568
        %v1758 = vadd.f32 %v1531, %v1572
        %v1759 = vadd.f32 %v1533, %v1576
        %v1760 = vadd.f32 %v1535, %v1580
        %v1761 = vadd.f32 %v1537, %v1584
        %v1762 = vadd.f32 %v1539, %v1588
        %v1763 = vadd.f32 %v1541, %v1592
        %v1764 = vadd.f32 %v1543, %v1596
        %v1765 = vadd.f32 %v1545, %v1600
        %v1766 = vadd.f32 %v1547, %v1604
        %v1767 = vadd.f32 %v1549, %v1608
        %v1768 = vadd.f32 %v1551, %v1612
        %v1769 = vadd.f32 %v1553, %v1616
        %v1770 = vadd.f32 %v1555, %v1620
        %v1771 = vadd.f32 %v1557, %v1624
        %v1772 = vadd.f32 %v1559, %v1628
        %1901 = vset.pattern.permute.xlu0 0
        %1902 = vperm.xlu0 %1901, %v1645
        %v1903 = vpop.permute.xlu0 %1902
        %1904 = vset.pattern.permute.xlu0 0
        %1905 = vperm.xlu0 %1904, %v1646
        %v1906 = vpop.permute.xlu0 %1905
        %1907 = vset.pattern.permute.xlu0 0
        %1908 = vperm.xlu0 %1907, %v1647
        %v1909 = vpop.permute.xlu0 %1908
        %1910 = vset.pattern.permute.xlu0 0
        %1911 = vperm.xlu0 %1910, %v1648
        %v1912 = vpop.permute.xlu0 %1911
        %1913 = vset.pattern.permute.xlu0 0
        %1914 = vperm.xlu0 %1913, %v1649
        %v1915 = vpop.permute.xlu0 %1914
        %1916 = vset.pattern.permute.xlu0 0
        %1917 = vperm.xlu0 %1916, %v1650
        %v1918 = vpop.permute.xlu0 %1917
        %1919 = vset.pattern.permute.xlu0 0
        %1920 = vperm.xlu0 %1919, %v1651
        %v1921 = vpop.permute.xlu0 %1920
        %1922 = vset.pattern.permute.xlu0 0
        %1923 = vperm.xlu0 %1922, %v1652
        %v1924 = vpop.permute.xlu0 %1923
        %1925 = vset.pattern.permute.xlu0 0
        %1926 = vperm.xlu0 %1925, %v1653
        %v1927 = vpop.permute.xlu0 %1926
        %1928 = vset.pattern.permute.xlu0 0
        %1929 = vperm.xlu0 %1928, %v1654
        %v1930 = vpop.permute.xlu0 %1929
        %1931 = vset.pattern.permute.xlu0 0
        %1932 = vperm.xlu0 %1931, %v1655
        %v1933 = vpop.permute.xlu0 %1932
        %1934 = vset.pattern.permute.xlu0 0
        %1935 = vperm.xlu0 %1934, %v1656
        %v1936 = vpop.permute.xlu0 %1935
        %1937 = vset.pattern.permute.xlu0 0
        %1938 = vperm.xlu0 %1937, %v1657
        %v1939 = vpop.permute.xlu0 %1938
        %1940 = vset.pattern.permute.xlu0 0
        %1941 = vperm.xlu0 %1940, %v1658
        %v1942 = vpop.permute.xlu0 %1941
        %1943 = vset.pattern.permute.xlu0 0
        %1944 = vperm.xlu0 %1943, %v1659
        %v1945 = vpop.permute.xlu0 %1944
        %1946 = vset.pattern.permute.xlu0 0
        %1947 = vperm.xlu0 %1946, %v1660
        %v1948 = vpop.permute.xlu0 %1947
        %1949 = vset.pattern.permute.xlu0 0
        %1950 = vperm.xlu0 %1949, %v1661
        %v1951 = vpop.permute.xlu0 %1950
        %1952 = vset.pattern.permute.xlu0 0
        %1953 = vperm.xlu0 %1952, %v1662
        %v1954 = vpop.permute.xlu0 %1953
        %1955 = vset.pattern.permute.xlu0 0
        %1956 = vperm.xlu0 %1955, %v1663
        %v1957 = vpop.permute.xlu0 %1956
        %1958 = vset.pattern.permute.xlu0 0
        %1959 = vperm.xlu0 %1958, %v1664
        %v1960 = vpop.permute.xlu0 %1959
        %1961 = vset.pattern.permute.xlu0 0
        %1962 = vperm.xlu0 %1961, %v1665
        %v1963 = vpop.permute.xlu0 %1962
        %1964 = vset.pattern.permute.xlu0 0
        %1965 = vperm.xlu0 %1964, %v1666
        %v1966 = vpop.permute.xlu0 %1965
        %1967 = vset.pattern.permute.xlu0 0
        %1968 = vperm.xlu0 %1967, %v1667
        %v1969 = vpop.permute.xlu0 %1968
        %1970 = vset.pattern.permute.xlu0 0
        %1971 = vperm.xlu0 %1970, %v1668
        %v1972 = vpop.permute.xlu0 %1971
        %1973 = vset.pattern.permute.xlu0 0
        %1974 = vperm.xlu0 %1973, %v1669
        %v1975 = vpop.permute.xlu0 %1974
        %1976 = vset.pattern.permute.xlu0 0
        %1977 = vperm.xlu0 %1976, %v1670
        %v1978 = vpop.permute.xlu0 %1977
        %1979 = vset.pattern.permute.xlu0 0
        %1980 = vperm.xlu0 %1979, %v1671
        %v1981 = vpop.permute.xlu0 %1980
        %1982 = vset.pattern.permute.xlu0 0
        %1983 = vperm.xlu0 %1982, %v1672
        %v1984 = vpop.permute.xlu0 %1983
        %1985 = vset.pattern.permute.xlu0 0
        %1986 = vperm.xlu0 %1985, %v1673
        %v1987 = vpop.permute.xlu0 %1986
        %1988 = vset.pattern.permute.xlu0 0
        %1989 = vperm.xlu0 %1988, %v1674
        %v1990 = vpop.permute.xlu0 %1989
        %1991 = vset.pattern.permute.xlu0 0
        %1992 = vperm.xlu0 %1991, %v1675
        %v1993 = vpop.permute.xlu0 %1992
        %1994 = vset.pattern.permute.xlu0 0
        %1995 = vperm.xlu0 %1994, %v1676
        %v1996 = vpop.permute.xlu0 %1995
        %1997 = vset.pattern.permute.xlu0 0
        %1998 = vperm.xlu0 %1997, %v1677
        %v1999 = vpop.permute.xlu0 %1998
        %2000 = vset.pattern.permute.xlu0 0
        %2001 = vperm.xlu0 %2000, %v1678
        %v2002 = vpop.permute.xlu0 %2001
        %2003 = vset.pattern.permute.xlu0 0
        %2004 = vperm.xlu0 %2003, %v1679
        %v2005 = vpop.permute.xlu0 %2004
        %2006 = vset.pattern.permute.xlu0 0
        %2007 = vperm.xlu0 %2006, %v1680
        %v2008 = vpop.permute.xlu0 %2007
        %2009 = vset.pattern.permute.xlu0 0
        %2010 = vperm.xlu0 %2009, %v1681
        %v2011 = vpop.permute.xlu0 %2010
        %2012 = vset.pattern.permute.xlu0 0
        %2013 = vperm.xlu0 %2012, %v1682
        %v2014 = vpop.permute.xlu0 %2013
        %2015 = vset.pattern.permute.xlu0 0
        %2016 = vperm.xlu0 %2015, %v1683
        %v2017 = vpop.permute.xlu0 %2016
        %2018 = vset.pattern.permute.xlu0 0
        %2019 = vperm.xlu0 %2018, %v1684
        %v2020 = vpop.permute.xlu0 %2019
        %2021 = vset.pattern.permute.xlu0 0
        %2022 = vperm.xlu0 %2021, %v1685
        %v2023 = vpop.permute.xlu0 %2022
        %2024 = vset.pattern.permute.xlu0 0
        %2025 = vperm.xlu0 %2024, %v1686
        %v2026 = vpop.permute.xlu0 %2025
        %2027 = vset.pattern.permute.xlu0 0
        %2028 = vperm.xlu0 %2027, %v1687
        %v2029 = vpop.permute.xlu0 %2028
        %2030 = vset.pattern.permute.xlu0 0
        %2031 = vperm.xlu0 %2030, %v1688
        %v2032 = vpop.permute.xlu0 %2031
        %2033 = vset.pattern.permute.xlu0 0
        %2034 = vperm.xlu0 %2033, %v1689
        %v2035 = vpop.permute.xlu0 %2034
        %2036 = vset.pattern.permute.xlu0 0
        %2037 = vperm.xlu0 %2036, %v1690
        %v2038 = vpop.permute.xlu0 %2037
        %2039 = vset.pattern.permute.xlu0 0
        %2040 = vperm.xlu0 %2039, %v1691
        %v2041 = vpop.permute.xlu0 %2040
        %2042 = vset.pattern.permute.xlu0 0
        %2043 = vperm.xlu0 %2042, %v1692
        %v2044 = vpop.permute.xlu0 %2043
        %2045 = vset.pattern.permute.xlu0 0
        %2046 = vperm.xlu0 %2045, %v1693
        %v2047 = vpop.permute.xlu0 %2046
        %2048 = vset.pattern.permute.xlu0 0
        %2049 = vperm.xlu0 %2048, %v1694
        %v2050 = vpop.permute.xlu0 %2049
        %2051 = vset.pattern.permute.xlu0 0
        %2052 = vperm.xlu0 %2051, %v1695
        %v2053 = vpop.permute.xlu0 %2052
        %2054 = vset.pattern.permute.xlu0 0
        %2055 = vperm.xlu0 %2054, %v1696
        %v2056 = vpop.permute.xlu0 %2055
        %2057 = vset.pattern.permute.xlu0 0
        %2058 = vperm.xlu0 %2057, %v1697
        %v2059 = vpop.permute.xlu0 %2058
        %2060 = vset.pattern.permute.xlu0 0
        %2061 = vperm.xlu0 %2060, %v1698
        %v2062 = vpop.permute.xlu0 %2061
        %2063 = vset.pattern.permute.xlu0 0
        %2064 = vperm.xlu0 %2063, %v1699
        %v2065 = vpop.permute.xlu0 %2064
        %2066 = vset.pattern.permute.xlu0 0
        %2067 = vperm.xlu0 %2066, %v1700
        %v2068 = vpop.permute.xlu0 %2067
        %2069 = vset.pattern.permute.xlu0 0
        %2070 = vperm.xlu0 %2069, %v1701
        %v2071 = vpop.permute.xlu0 %2070
        %2072 = vset.pattern.permute.xlu0 0
        %2073 = vperm.xlu0 %2072, %v1702
        %v2074 = vpop.permute.xlu0 %2073
        %2075 = vset.pattern.permute.xlu0 0
        %2076 = vperm.xlu0 %2075, %v1703
        %v2077 = vpop.permute.xlu0 %2076
        %2078 = vset.pattern.permute.xlu0 0
        %2079 = vperm.xlu0 %2078, %v1704
        %v2080 = vpop.permute.xlu0 %2079
        %2081 = vset.pattern.permute.xlu0 0
        %2082 = vperm.xlu0 %2081, %v1705
        %v2083 = vpop.permute.xlu0 %2082
        %2084 = vset.pattern.permute.xlu0 0
        %2085 = vperm.xlu0 %2084, %v1706
        %v2086 = vpop.permute.xlu0 %2085
        %2087 = vset.pattern.permute.xlu0 0
        %2088 = vperm.xlu0 %2087, %v1707
        %v2089 = vpop.permute.xlu0 %2088
        %2090 = vset.pattern.permute.xlu0 0
        %2091 = vperm.xlu0 %2090, %v1708
        %v2092 = vpop.permute.xlu0 %2091
        %2093 = vset.pattern.permute.xlu0 0
        %2094 = vperm.xlu0 %2093, %v1709
        %v2095 = vpop.permute.xlu0 %2094
        %2096 = vset.pattern.permute.xlu0 0
        %2097 = vperm.xlu0 %2096, %v1710
        %v2098 = vpop.permute.xlu0 %2097
        %2099 = vset.pattern.permute.xlu0 0
        %2100 = vperm.xlu0 %2099, %v1711
        %v2101 = vpop.permute.xlu0 %2100
        %2102 = vset.pattern.permute.xlu0 0
        %2103 = vperm.xlu0 %2102, %v1712
        %v2104 = vpop.permute.xlu0 %2103
        %2105 = vset.pattern.permute.xlu0 0
        %2106 = vperm.xlu0 %2105, %v1713
        %v2107 = vpop.permute.xlu0 %2106
        %2108 = vset.pattern.permute.xlu0 0
        %2109 = vperm.xlu0 %2108, %v1714
        %v2110 = vpop.permute.xlu0 %2109
        %2111 = vset.pattern.permute.xlu0 0
        %2112 = vperm.xlu0 %2111, %v1715
        %v2113 = vpop.permute.xlu0 %2112
        %2114 = vset.pattern.permute.xlu0 0
        %2115 = vperm.xlu0 %2114, %v1716
        %v2116 = vpop.permute.xlu0 %2115
        %2117 = vset.pattern.permute.xlu0 0
        %2118 = vperm.xlu0 %2117, %v1717
        %v2119 = vpop.permute.xlu0 %2118
        %2120 = vset.pattern.permute.xlu0 0
        %2121 = vperm.xlu0 %2120, %v1718
        %v2122 = vpop.permute.xlu0 %2121
        %2123 = vset.pattern.permute.xlu0 0
        %2124 = vperm.xlu0 %2123, %v1719
        %v2125 = vpop.permute.xlu0 %2124
        %2126 = vset.pattern.permute.xlu0 0
        %2127 = vperm.xlu0 %2126, %v1720
        %v2128 = vpop.permute.xlu0 %2127
        %2129 = vset.pattern.permute.xlu0 0
        %2130 = vperm.xlu0 %2129, %v1721
        %v2131 = vpop.permute.xlu0 %2130
        %2132 = vset.pattern.permute.xlu0 0
        %2133 = vperm.xlu0 %2132, %v1722
        %v2134 = vpop.permute.xlu0 %2133
        %2135 = vset.pattern.permute.xlu0 0
        %2136 = vperm.xlu0 %2135, %v1723
        %v2137 = vpop.permute.xlu0 %2136
        %2138 = vset.pattern.permute.xlu0 0
        %2139 = vperm.xlu0 %2138, %v1724
        %v2140 = vpop.permute.xlu0 %2139
        %2141 = vset.pattern.permute.xlu0 0
        %2142 = vperm.xlu0 %2141, %v1725
        %v2143 = vpop.permute.xlu0 %2142
        %2144 = vset.pattern.permute.xlu0 0
        %2145 = vperm.xlu0 %2144, %v1726
        %v2146 = vpop.permute.xlu0 %2145
        %2147 = vset.pattern.permute.xlu0 0
        %2148 = vperm.xlu0 %2147, %v1727
        %v2149 = vpop.permute.xlu0 %2148
        %2150 = vset.pattern.permute.xlu0 0
        %2151 = vperm.xlu0 %2150, %v1728
        %v2152 = vpop.permute.xlu0 %2151
        %2153 = vset.pattern.permute.xlu0 0
        %2154 = vperm.xlu0 %2153, %v1729
        %v2155 = vpop.permute.xlu0 %2154
        %2156 = vset.pattern.permute.xlu0 0
        %2157 = vperm.xlu0 %2156, %v1730
        %v2158 = vpop.permute.xlu0 %2157
        %2159 = vset.pattern.permute.xlu0 0
        %2160 = vperm.xlu0 %2159, %v1731
        %v2161 = vpop.permute.xlu0 %2160
        %2162 = vset.pattern.permute.xlu0 0
        %2163 = vperm.xlu0 %2162, %v1732
        %v2164 = vpop.permute.xlu0 %2163
        %2165 = vset.pattern.permute.xlu0 0
        %2166 = vperm.xlu0 %2165, %v1733
        %v2167 = vpop.permute.xlu0 %2166
        %2168 = vset.pattern.permute.xlu0 0
        %2169 = vperm.xlu0 %2168, %v1734
        %v2170 = vpop.permute.xlu0 %2169
        %2171 = vset.pattern.permute.xlu0 0
        %2172 = vperm.xlu0 %2171, %v1735
        %v2173 = vpop.permute.xlu0 %2172
        %2174 = vset.pattern.permute.xlu0 0
        %2175 = vperm.xlu0 %2174, %v1736
        %v2176 = vpop.permute.xlu0 %2175
        %2177 = vset.pattern.permute.xlu0 0
        %2178 = vperm.xlu0 %2177, %v1737
        %v2179 = vpop.permute.xlu0 %2178
        %2180 = vset.pattern.permute.xlu0 0
        %2181 = vperm.xlu0 %2180, %v1738
        %v2182 = vpop.permute.xlu0 %2181
        %2183 = vset.pattern.permute.xlu0 0
        %2184 = vperm.xlu0 %2183, %v1739
        %v2185 = vpop.permute.xlu0 %2184
        %2186 = vset.pattern.permute.xlu0 0
        %2187 = vperm.xlu0 %2186, %v1740
        %v2188 = vpop.permute.xlu0 %2187
        %2189 = vset.pattern.permute.xlu0 0
        %2190 = vperm.xlu0 %2189, %v1741
        %v2191 = vpop.permute.xlu0 %2190
        %2192 = vset.pattern.permute.xlu0 0
        %2193 = vperm.xlu0 %2192, %v1742
        %v2194 = vpop.permute.xlu0 %2193
        %2195 = vset.pattern.permute.xlu0 0
        %2196 = vperm.xlu0 %2195, %v1743
        %v2197 = vpop.permute.xlu0 %2196
        %2198 = vset.pattern.permute.xlu0 0
        %2199 = vperm.xlu0 %2198, %v1744
        %v2200 = vpop.permute.xlu0 %2199
        %2201 = vset.pattern.permute.xlu0 0
        %2202 = vperm.xlu0 %2201, %v1745
        %v2203 = vpop.permute.xlu0 %2202
        %2204 = vset.pattern.permute.xlu0 0
        %2205 = vperm.xlu0 %2204, %v1746
        %v2206 = vpop.permute.xlu0 %2205
        %2207 = vset.pattern.permute.xlu0 0
        %2208 = vperm.xlu0 %2207, %v1747
        %v2209 = vpop.permute.xlu0 %2208
        %2210 = vset.pattern.permute.xlu0 0
        %2211 = vperm.xlu0 %2210, %v1748
        %v2212 = vpop.permute.xlu0 %2211
        %2213 = vset.pattern.permute.xlu0 0
        %2214 = vperm.xlu0 %2213, %v1749
        %v2215 = vpop.permute.xlu0 %2214
        %2216 = vset.pattern.permute.xlu0 0
        %2217 = vperm.xlu0 %2216, %v1750
        %v2218 = vpop.permute.xlu0 %2217
        %2219 = vset.pattern.permute.xlu0 0
        %2220 = vperm.xlu0 %2219, %v1751
        %v2221 = vpop.permute.xlu0 %2220
        %2222 = vset.pattern.permute.xlu0 0
        %2223 = vperm.xlu0 %2222, %v1752
        %v2224 = vpop.permute.xlu0 %2223
        %2225 = vset.pattern.permute.xlu0 0
        %2226 = vperm.xlu0 %2225, %v1753
        %v2227 = vpop.permute.xlu0 %2226
        %2228 = vset.pattern.permute.xlu0 0
        %2229 = vperm.xlu0 %2228, %v1754
        %v2230 = vpop.permute.xlu0 %2229
        %2231 = vset.pattern.permute.xlu0 0
        %2232 = vperm.xlu0 %2231, %v1755
        %v2233 = vpop.permute.xlu0 %2232
        %2234 = vset.pattern.permute.xlu0 0
        %2235 = vperm.xlu0 %2234, %v1756
        %v2236 = vpop.permute.xlu0 %2235
        %2237 = vset.pattern.permute.xlu0 0
        %2238 = vperm.xlu0 %2237, %v1757
        %v2239 = vpop.permute.xlu0 %2238
        %2240 = vset.pattern.permute.xlu0 0
        %2241 = vperm.xlu0 %2240, %v1758
        %v2242 = vpop.permute.xlu0 %2241
        %2243 = vset.pattern.permute.xlu0 0
        %2244 = vperm.xlu0 %2243, %v1759
        %v2245 = vpop.permute.xlu0 %2244
        %2246 = vset.pattern.permute.xlu0 0
        %2247 = vperm.xlu0 %2246, %v1760
        %v2248 = vpop.permute.xlu0 %2247
        %2249 = vset.pattern.permute.xlu0 0
        %2250 = vperm.xlu0 %2249, %v1761
        %v2251 = vpop.permute.xlu0 %2250
        %2252 = vset.pattern.permute.xlu0 0
        %2253 = vperm.xlu0 %2252, %v1762
        %v2254 = vpop.permute.xlu0 %2253
        %2255 = vset.pattern.permute.xlu0 0
        %2256 = vperm.xlu0 %2255, %v1763
        %v2257 = vpop.permute.xlu0 %2256
        %2258 = vset.pattern.permute.xlu0 0
        %2259 = vperm.xlu0 %2258, %v1764
        %v2260 = vpop.permute.xlu0 %2259
        %2261 = vset.pattern.permute.xlu0 0
        %2262 = vperm.xlu0 %2261, %v1765
        %v2263 = vpop.permute.xlu0 %2262
        %2264 = vset.pattern.permute.xlu0 0
        %2265 = vperm.xlu0 %2264, %v1766
        %v2266 = vpop.permute.xlu0 %2265
        %2267 = vset.pattern.permute.xlu0 0
        %2268 = vperm.xlu0 %2267, %v1767
        %v2269 = vpop.permute.xlu0 %2268
        %2270 = vset.pattern.permute.xlu0 0
        %2271 = vperm.xlu0 %2270, %v1768
        %v2272 = vpop.permute.xlu0 %2271
        %2273 = vset.pattern.permute.xlu0 0
        %2274 = vperm.xlu0 %2273, %v1769
        %v2275 = vpop.permute.xlu0 %2274
        %2276 = vset.pattern.permute.xlu0 0
        %2277 = vperm.xlu0 %2276, %v1770
        %v2278 = vpop.permute.xlu0 %2277
        %2279 = vset.pattern.permute.xlu0 0
        %2280 = vperm.xlu0 %2279, %v1771
        %v2281 = vpop.permute.xlu0 %2280
        %2282 = vset.pattern.permute.xlu0 0
        %2283 = vperm.xlu0 %2282, %v1772
        %v2284 = vpop.permute.xlu0 %2283
        %v2285 = vlaneseq
        %v2286 = vand.u32 %v2285, 127
        %v2287 = vlaneseq
        %v2288 = vshrl.u32 %v2287, 7
        %v2289 = vsub.s32 %v2286, %v2288
        %v2290 = vrot.slane %v1903, %v2289
        %v2291 = vadd.s32 %v2286, 4294967288
        %v2292 = vlaneseq
        %v2293 = vshrl.u32 %v2292, 7
        %v2294 = vsub.s32 %v2291, %v2293
        %v2295 = vrot.slane %v1906, %v2294
        %vm2296 = vcmask 130112
        %v2297 = vsel %vm2296, %v2295, %v2290
        %v2298 = vadd.s32 %v2286, 4294967280
        %v2299 = vlaneseq
        %v2300 = vshrl.u32 %v2299, 7
        %v2301 = vsub.s32 %v2298, %v2300
        %v2302 = vrot.slane %v1909, %v2301
        %vm2303 = vcmask 195712
        %v2304 = vsel %vm2303, %v2302, %v2297
        %v2305 = vadd.s32 %v2286, 4294967272
        %v2306 = vlaneseq
        %v2307 = vshrl.u32 %v2306, 7
        %v2308 = vsub.s32 %v2305, %v2307
        %v2309 = vrot.slane %v1912, %v2308
        %vm2310 = vcmask 261312
        %v2311 = vsel %vm2310, %v2309, %v2304
        %v2312 = vadd.s32 %v2286, 4294967264
        %v2313 = vlaneseq
        %v2314 = vshrl.u32 %v2313, 7
        %v2315 = vsub.s32 %v2312, %v2314
        %v2316 = vrot.slane %v1915, %v2315
        %vm2317 = vcmask 326912
        %v2318 = vsel %vm2317, %v2316, %v2311
        %v2319 = vadd.s32 %v2286, 4294967256
        %v2320 = vlaneseq
        %v2321 = vshrl.u32 %v2320, 7
        %v2322 = vsub.s32 %v2319, %v2321
        %v2323 = vrot.slane %v1918, %v2322
        %vm2324 = vcmask 392512
        %v2325 = vsel %vm2324, %v2323, %v2318
        %v2326 = vadd.s32 %v2286, 4294967248
        %v2327 = vlaneseq
        %v2328 = vshrl.u32 %v2327, 7
        %v2329 = vsub.s32 %v2326, %v2328
        %v2330 = vrot.slane %v1921, %v2329
        %vm2331 = vcmask 458112
        %v2332 = vsel %vm2331, %v2330, %v2325
        %v2333 = vadd.s32 %v2286, 4294967240
        %v2334 = vlaneseq
        %v2335 = vshrl.u32 %v2334, 7
        %v2336 = vsub.s32 %v2333, %v2335
        %v2337 = vrot.slane %v1924, %v2336
        %vm2338 = vcmask 523712
        %v2339 = vsel %vm2338, %v2337, %v2332
        %v2340 = vadd.s32 %v2286, 4294967232
        %v2341 = vlaneseq
        %v2342 = vshrl.u32 %v2341, 7
        %v2343 = vsub.s32 %v2340, %v2342
        %v2344 = vrot.slane %v1927, %v2343
        %vm2345 = vcmask 589312
        %v2346 = vsel %vm2345, %v2344, %v2339
        %v2347 = vadd.s32 %v2286, 4294967224
        %v2348 = vlaneseq
        %v2349 = vshrl.u32 %v2348, 7
        %v2350 = vsub.s32 %v2347, %v2349
        %v2351 = vrot.slane %v1930, %v2350
        %vm2352 = vcmask 654912
        %v2353 = vsel %vm2352, %v2351, %v2346
        %v2354 = vadd.s32 %v2286, 4294967216
        %v2355 = vlaneseq
        %v2356 = vshrl.u32 %v2355, 7
        %v2357 = vsub.s32 %v2354, %v2356
        %v2358 = vrot.slane %v1933, %v2357
        %vm2359 = vcmask 720512
        %v2360 = vsel %vm2359, %v2358, %v2353
        %v2361 = vadd.s32 %v2286, 4294967208
        %v2362 = vlaneseq
        %v2363 = vshrl.u32 %v2362, 7
        %v2364 = vsub.s32 %v2361, %v2363
        %v2365 = vrot.slane %v1936, %v2364
        %vm2366 = vcmask 786112
        %v2367 = vsel %vm2366, %v2365, %v2360
        %v2368 = vadd.s32 %v2286, 4294967200
        %v2369 = vlaneseq
        %v2370 = vshrl.u32 %v2369, 7
        %v2371 = vsub.s32 %v2368, %v2370
        %v2372 = vrot.slane %v1939, %v2371
        %vm2373 = vcmask 851712
        %v2374 = vsel %vm2373, %v2372, %v2367
        %v2375 = vadd.s32 %v2286, 4294967192
        %v2376 = vlaneseq
        %v2377 = vshrl.u32 %v2376, 7
        %v2378 = vsub.s32 %v2375, %v2377
        %v2379 = vrot.slane %v1942, %v2378
        %vm2380 = vcmask 917312
        %v2381 = vsel %vm2380, %v2379, %v2374
        %v2382 = vadd.s32 %v2286, 4294967184
        %v2383 = vlaneseq
        %v2384 = vshrl.u32 %v2383, 7
        %v2385 = vsub.s32 %v2382, %v2384
        %v2386 = vrot.slane %v1945, %v2385
        %vm2387 = vcmask 982912
        %v2388 = vsel %vm2387, %v2386, %v2381
        %v2389 = vadd.s32 %v2286, 4294967176
        %v2390 = vlaneseq
        %v2391 = vshrl.u32 %v2390, 7
        %v2392 = vsub.s32 %v2389, %v2391
        %v2393 = vrot.slane %v1948, %v2392
        %vm2394 = vcmask 1048512
        %v2395 = vsel %vm2394, %v2393, %v2388
        %v2396 = vlaneseq
        %v2397 = vshrl.u32 %v2396, 7
        %v2398 = vsub.s32 %v2286, %v2397
        %v2399 = vrot.slane %v1951, %v2398
        %v2400 = vlaneseq
        %v2401 = vshrl.u32 %v2400, 7
        %v2402 = vsub.s32 %v2291, %v2401
        %v2403 = vrot.slane %v1954, %v2402
        %v2404 = vsel %vm2296, %v2403, %v2399
        %v2405 = vlaneseq
        %v2406 = vshrl.u32 %v2405, 7
        %v2407 = vsub.s32 %v2298, %v2406
        %v2408 = vrot.slane %v1957, %v2407
        %v2409 = vsel %vm2303, %v2408, %v2404
        %v2410 = vlaneseq
        %v2411 = vshrl.u32 %v2410, 7
        %v2412 = vsub.s32 %v2305, %v2411
        %v2413 = vrot.slane %v1960, %v2412
        %v2414 = vsel %vm2310, %v2413, %v2409
        %v2415 = vlaneseq
        %v2416 = vshrl.u32 %v2415, 7
        %v2417 = vsub.s32 %v2312, %v2416
        %v2418 = vrot.slane %v1963, %v2417
        %v2419 = vsel %vm2317, %v2418, %v2414
        %v2420 = vlaneseq
        %v2421 = vshrl.u32 %v2420, 7
        %v2422 = vsub.s32 %v2319, %v2421
        %v2423 = vrot.slane %v1966, %v2422
        %v2424 = vsel %vm2324, %v2423, %v2419
        %v2425 = vlaneseq
        %v2426 = vshrl.u32 %v2425, 7
        %v2427 = vsub.s32 %v2326, %v2426
        %v2428 = vrot.slane %v1969, %v2427
        %v2429 = vsel %vm2331, %v2428, %v2424
        %v2430 = vlaneseq
        %v2431 = vshrl.u32 %v2430, 7
        %v2432 = vsub.s32 %v2333, %v2431
        %v2433 = vrot.slane %v1972, %v2432
        %v2434 = vsel %vm2338, %v2433, %v2429
        %v2435 = vlaneseq
        %v2436 = vshrl.u32 %v2435, 7
        %v2437 = vsub.s32 %v2340, %v2436
        %v2438 = vrot.slane %v1975, %v2437
        %v2439 = vsel %vm2345, %v2438, %v2434
        %v2440 = vlaneseq
        %v2441 = vshrl.u32 %v2440, 7
        %v2442 = vsub.s32 %v2347, %v2441
        %v2443 = vrot.slane %v1978, %v2442
        %v2444 = vsel %vm2352, %v2443, %v2439
        %v2445 = vlaneseq
        %v2446 = vshrl.u32 %v2445, 7
        %v2447 = vsub.s32 %v2354, %v2446
        %v2448 = vrot.slane %v1981, %v2447
        %v2449 = vsel %vm2359, %v2448, %v2444
        %v2450 = vlaneseq
        %v2451 = vshrl.u32 %v2450, 7
        %v2452 = vsub.s32 %v2361, %v2451
        %v2453 = vrot.slane %v1984, %v2452
        %v2454 = vsel %vm2366, %v2453, %v2449
        %v2455 = vlaneseq
        %v2456 = vshrl.u32 %v2455, 7
        %v2457 = vsub.s32 %v2368, %v2456
        %v2458 = vrot.slane %v1987, %v2457
        %v2459 = vsel %vm2373, %v2458, %v2454
        %v2460 = vlaneseq
        %v2461 = vshrl.u32 %v2460, 7
        %v2462 = vsub.s32 %v2375, %v2461
        %v2463 = vrot.slane %v1990, %v2462
        %v2464 = vsel %vm2380, %v2463, %v2459
        %v2465 = vlaneseq
        %v2466 = vshrl.u32 %v2465, 7
        %v2467 = vsub.s32 %v2382, %v2466
        %v2468 = vrot.slane %v1993, %v2467
        %v2469 = vsel %vm2387, %v2468, %v2464
        %v2470 = vlaneseq
        %v2471 = vshrl.u32 %v2470, 7
        %v2472 = vsub.s32 %v2389, %v2471
        %v2473 = vrot.slane %v1996, %v2472
        %v2474 = vsel %vm2394, %v2473, %v2469
        %v2475 = vlaneseq
        %v2476 = vshrl.u32 %v2475, 7
        %v2477 = vsub.s32 %v2286, %v2476
        %v2478 = vrot.slane %v1999, %v2477
        %v2479 = vlaneseq
        %v2480 = vshrl.u32 %v2479, 7
        %v2481 = vsub.s32 %v2291, %v2480
        %v2482 = vrot.slane %v2002, %v2481
        %v2483 = vsel %vm2296, %v2482, %v2478
        %v2484 = vlaneseq
        %v2485 = vshrl.u32 %v2484, 7
        %v2486 = vsub.s32 %v2298, %v2485
        %v2487 = vrot.slane %v2005, %v2486
        %v2488 = vsel %vm2303, %v2487, %v2483
        %v2489 = vlaneseq
        %v2490 = vshrl.u32 %v2489, 7
        %v2491 = vsub.s32 %v2305, %v2490
        %v2492 = vrot.slane %v2008, %v2491
        %v2493 = vsel %vm2310, %v2492, %v2488
        %v2494 = vlaneseq
        %v2495 = vshrl.u32 %v2494, 7
        %v2496 = vsub.s32 %v2312, %v2495
        %v2497 = vrot.slane %v2011, %v2496
        %v2498 = vsel %vm2317, %v2497, %v2493
        %v2499 = vlaneseq
        %v2500 = vshrl.u32 %v2499, 7
        %v2501 = vsub.s32 %v2319, %v2500
        %v2502 = vrot.slane %v2014, %v2501
        %v2503 = vsel %vm2324, %v2502, %v2498
        %v2504 = vlaneseq
        %v2505 = vshrl.u32 %v2504, 7
        %v2506 = vsub.s32 %v2326, %v2505
        %v2507 = vrot.slane %v2017, %v2506
        %v2508 = vsel %vm2331, %v2507, %v2503
        %v2509 = vlaneseq
        %v2510 = vshrl.u32 %v2509, 7
        %v2511 = vsub.s32 %v2333, %v2510
        %v2512 = vrot.slane %v2020, %v2511
        %v2513 = vsel %vm2338, %v2512, %v2508
        %v2514 = vlaneseq
        %v2515 = vshrl.u32 %v2514, 7
        %v2516 = vsub.s32 %v2340, %v2515
        %v2517 = vrot.slane %v2023, %v2516
        %v2518 = vsel %vm2345, %v2517, %v2513
        %v2519 = vlaneseq
        %v2520 = vshrl.u32 %v2519, 7
        %v2521 = vsub.s32 %v2347, %v2520
        %v2522 = vrot.slane %v2026, %v2521
        %v2523 = vsel %vm2352, %v2522, %v2518
        %v2524 = vlaneseq
        %v2525 = vshrl.u32 %v2524, 7
        %v2526 = vsub.s32 %v2354, %v2525
        %v2527 = vrot.slane %v2029, %v2526
        %v2528 = vsel %vm2359, %v2527, %v2523
        %v2529 = vlaneseq
        %v2530 = vshrl.u32 %v2529, 7
        %v2531 = vsub.s32 %v2361, %v2530
        %v2532 = vrot.slane %v2032, %v2531
        %v2533 = vsel %vm2366, %v2532, %v2528
        %v2534 = vlaneseq
        %v2535 = vshrl.u32 %v2534, 7
        %v2536 = vsub.s32 %v2368, %v2535
        %v2537 = vrot.slane %v2035, %v2536
        %v2538 = vsel %vm2373, %v2537, %v2533
        %v2539 = vlaneseq
        %v2540 = vshrl.u32 %v2539, 7
        %v2541 = vsub.s32 %v2375, %v2540
        %v2542 = vrot.slane %v2038, %v2541
        %v2543 = vsel %vm2380, %v2542, %v2538
        %v2544 = vlaneseq
        %v2545 = vshrl.u32 %v2544, 7
        %v2546 = vsub.s32 %v2382, %v2545
        %v2547 = vrot.slane %v2041, %v2546
        %v2548 = vsel %vm2387, %v2547, %v2543
        %v2549 = vlaneseq
        %v2550 = vshrl.u32 %v2549, 7
        %v2551 = vsub.s32 %v2389, %v2550
        %v2552 = vrot.slane %v2044, %v2551
        %v2553 = vsel %vm2394, %v2552, %v2548
        %v2554 = vlaneseq
        %v2555 = vshrl.u32 %v2554, 7
        %v2556 = vsub.s32 %v2286, %v2555
        %v2557 = vrot.slane %v2047, %v2556
        %v2558 = vlaneseq
        %v2559 = vshrl.u32 %v2558, 7
        %v2560 = vsub.s32 %v2291, %v2559
        %v2561 = vrot.slane %v2050, %v2560
        %v2562 = vsel %vm2296, %v2561, %v2557
        %v2563 = vlaneseq
        %v2564 = vshrl.u32 %v2563, 7
        %v2565 = vsub.s32 %v2298, %v2564
        %v2566 = vrot.slane %v2053, %v2565
        %v2567 = vsel %vm2303, %v2566, %v2562
        %v2568 = vlaneseq
        %v2569 = vshrl.u32 %v2568, 7
        %v2570 = vsub.s32 %v2305, %v2569
        %v2571 = vrot.slane %v2056, %v2570
        %v2572 = vsel %vm2310, %v2571, %v2567
        %v2573 = vlaneseq
        %v2574 = vshrl.u32 %v2573, 7
        %v2575 = vsub.s32 %v2312, %v2574
        %v2576 = vrot.slane %v2059, %v2575
        %v2577 = vsel %vm2317, %v2576, %v2572
        %v2578 = vlaneseq
        %v2579 = vshrl.u32 %v2578, 7
        %v2580 = vsub.s32 %v2319, %v2579
        %v2581 = vrot.slane %v2062, %v2580
        %v2582 = vsel %vm2324, %v2581, %v2577
        %v2583 = vlaneseq
        %v2584 = vshrl.u32 %v2583, 7
        %v2585 = vsub.s32 %v2326, %v2584
        %v2586 = vrot.slane %v2065, %v2585
        %v2587 = vsel %vm2331, %v2586, %v2582
        %v2588 = vlaneseq
        %v2589 = vshrl.u32 %v2588, 7
        %v2590 = vsub.s32 %v2333, %v2589
        %v2591 = vrot.slane %v2068, %v2590
        %v2592 = vsel %vm2338, %v2591, %v2587
        %v2593 = vlaneseq
        %v2594 = vshrl.u32 %v2593, 7
        %v2595 = vsub.s32 %v2340, %v2594
        %v2596 = vrot.slane %v2071, %v2595
        %v2597 = vsel %vm2345, %v2596, %v2592
        %v2598 = vlaneseq
        %v2599 = vshrl.u32 %v2598, 7
        %v2600 = vsub.s32 %v2347, %v2599
        %v2601 = vrot.slane %v2074, %v2600
        %v2602 = vsel %vm2352, %v2601, %v2597
        %v2603 = vlaneseq
        %v2604 = vshrl.u32 %v2603, 7
        %v2605 = vsub.s32 %v2354, %v2604
        %v2606 = vrot.slane %v2077, %v2605
        %v2607 = vsel %vm2359, %v2606, %v2602
        %v2608 = vlaneseq
        %v2609 = vshrl.u32 %v2608, 7
        %v2610 = vsub.s32 %v2361, %v2609
        %v2611 = vrot.slane %v2080, %v2610
        %v2612 = vsel %vm2366, %v2611, %v2607
        %v2613 = vlaneseq
        %v2614 = vshrl.u32 %v2613, 7
        %v2615 = vsub.s32 %v2368, %v2614
        %v2616 = vrot.slane %v2083, %v2615
        %v2617 = vsel %vm2373, %v2616, %v2612
        %v2618 = vlaneseq
        %v2619 = vshrl.u32 %v2618, 7
        %v2620 = vsub.s32 %v2375, %v2619
        %v2621 = vrot.slane %v2086, %v2620
        %v2622 = vsel %vm2380, %v2621, %v2617
        %v2623 = vlaneseq
        %v2624 = vshrl.u32 %v2623, 7
        %v2625 = vsub.s32 %v2382, %v2624
        %v2626 = vrot.slane %v2089, %v2625
        %v2627 = vsel %vm2387, %v2626, %v2622
        %v2628 = vlaneseq
        %v2629 = vshrl.u32 %v2628, 7
        %v2630 = vsub.s32 %v2389, %v2629
        %v2631 = vrot.slane %v2092, %v2630
        %v2632 = vsel %vm2394, %v2631, %v2627
        %v2633 = vlaneseq
        %v2634 = vshrl.u32 %v2633, 7
        %v2635 = vsub.s32 %v2286, %v2634
        %v2636 = vrot.slane %v2095, %v2635
        %v2637 = vlaneseq
        %v2638 = vshrl.u32 %v2637, 7
        %v2639 = vsub.s32 %v2291, %v2638
        %v2640 = vrot.slane %v2098, %v2639
        %v2641 = vsel %vm2296, %v2640, %v2636
        %v2642 = vlaneseq
        %v2643 = vshrl.u32 %v2642, 7
        %v2644 = vsub.s32 %v2298, %v2643
        %v2645 = vrot.slane %v2101, %v2644
        %v2646 = vsel %vm2303, %v2645, %v2641
        %v2647 = vlaneseq
        %v2648 = vshrl.u32 %v2647, 7
        %v2649 = vsub.s32 %v2305, %v2648
        %v2650 = vrot.slane %v2104, %v2649
        %v2651 = vsel %vm2310, %v2650, %v2646
        %v2652 = vlaneseq
        %v2653 = vshrl.u32 %v2652, 7
        %v2654 = vsub.s32 %v2312, %v2653
        %v2655 = vrot.slane %v2107, %v2654
        %v2656 = vsel %vm2317, %v2655, %v2651
        %v2657 = vlaneseq
        %v2658 = vshrl.u32 %v2657, 7
        %v2659 = vsub.s32 %v2319, %v2658
        %v2660 = vrot.slane %v2110, %v2659
        %v2661 = vsel %vm2324, %v2660, %v2656
        %v2662 = vlaneseq
        %v2663 = vshrl.u32 %v2662, 7
        %v2664 = vsub.s32 %v2326, %v2663
        %v2665 = vrot.slane %v2113, %v2664
        %v2666 = vsel %vm2331, %v2665, %v2661
        %v2667 = vlaneseq
        %v2668 = vshrl.u32 %v2667, 7
        %v2669 = vsub.s32 %v2333, %v2668
        %v2670 = vrot.slane %v2116, %v2669
        %v2671 = vsel %vm2338, %v2670, %v2666
        %v2672 = vlaneseq
        %v2673 = vshrl.u32 %v2672, 7
        %v2674 = vsub.s32 %v2340, %v2673
        %v2675 = vrot.slane %v2119, %v2674
        %v2676 = vsel %vm2345, %v2675, %v2671
        %v2677 = vlaneseq
        %v2678 = vshrl.u32 %v2677, 7
        %v2679 = vsub.s32 %v2347, %v2678
        %v2680 = vrot.slane %v2122, %v2679
        %v2681 = vsel %vm2352, %v2680, %v2676
        %v2682 = vlaneseq
        %v2683 = vshrl.u32 %v2682, 7
        %v2684 = vsub.s32 %v2354, %v2683
        %v2685 = vrot.slane %v2125, %v2684
        %v2686 = vsel %vm2359, %v2685, %v2681
        %v2687 = vlaneseq
        %v2688 = vshrl.u32 %v2687, 7
        %v2689 = vsub.s32 %v2361, %v2688
        %v2690 = vrot.slane %v2128, %v2689
        %v2691 = vsel %vm2366, %v2690, %v2686
        %v2692 = vlaneseq
        %v2693 = vshrl.u32 %v2692, 7
        %v2694 = vsub.s32 %v2368, %v2693
        %v2695 = vrot.slane %v2131, %v2694
        %v2696 = vsel %vm2373, %v2695, %v2691
        %v2697 = vlaneseq
        %v2698 = vshrl.u32 %v2697, 7
        %v2699 = vsub.s32 %v2375, %v2698
        %v2700 = vrot.slane %v2134, %v2699
        %v2701 = vsel %vm2380, %v2700, %v2696
        %v2702 = vlaneseq
        %v2703 = vshrl.u32 %v2702, 7
        %v2704 = vsub.s32 %v2382, %v2703
        %v2705 = vrot.slane %v2137, %v2704
        %v2706 = vsel %vm2387, %v2705, %v2701
        %v2707 = vlaneseq
        %v2708 = vshrl.u32 %v2707, 7
        %v2709 = vsub.s32 %v2389, %v2708
        %v2710 = vrot.slane %v2140, %v2709
        %v2711 = vsel %vm2394, %v2710, %v2706
        %v2712 = vlaneseq
        %v2713 = vshrl.u32 %v2712, 7
        %v2714 = vsub.s32 %v2286, %v2713
        %v2715 = vrot.slane %v2143, %v2714
        %v2716 = vlaneseq
        %v2717 = vshrl.u32 %v2716, 7
        %v2718 = vsub.s32 %v2291, %v2717
        %v2719 = vrot.slane %v2146, %v2718
        %v2720 = vsel %vm2296, %v2719, %v2715
        %v2721 = vlaneseq
        %v2722 = vshrl.u32 %v2721, 7
        %v2723 = vsub.s32 %v2298, %v2722
        %v2724 = vrot.slane %v2149, %v2723
        %v2725 = vsel %vm2303, %v2724, %v2720
        %v2726 = vlaneseq
        %v2727 = vshrl.u32 %v2726, 7
        %v2728 = vsub.s32 %v2305, %v2727
        %v2729 = vrot.slane %v2152, %v2728
        %v2730 = vsel %vm2310, %v2729, %v2725
        %v2731 = vlaneseq
        %v2732 = vshrl.u32 %v2731, 7
        %v2733 = vsub.s32 %v2312, %v2732
        %v2734 = vrot.slane %v2155, %v2733
        %v2735 = vsel %vm2317, %v2734, %v2730
        %v2736 = vlaneseq
        %v2737 = vshrl.u32 %v2736, 7
        %v2738 = vsub.s32 %v2319, %v2737
        %v2739 = vrot.slane %v2158, %v2738
        %v2740 = vsel %vm2324, %v2739, %v2735
        %v2741 = vlaneseq
        %v2742 = vshrl.u32 %v2741, 7
        %v2743 = vsub.s32 %v2326, %v2742
        %v2744 = vrot.slane %v2161, %v2743
        %v2745 = vsel %vm2331, %v2744, %v2740
        %v2746 = vlaneseq
        %v2747 = vshrl.u32 %v2746, 7
        %v2748 = vsub.s32 %v2333, %v2747
        %v2749 = vrot.slane %v2164, %v2748
        %v2750 = vsel %vm2338, %v2749, %v2745
        %v2751 = vlaneseq
        %v2752 = vshrl.u32 %v2751, 7
        %v2753 = vsub.s32 %v2340, %v2752
        %v2754 = vrot.slane %v2167, %v2753
        %v2755 = vsel %vm2345, %v2754, %v2750
        %v2756 = vlaneseq
        %v2757 = vshrl.u32 %v2756, 7
        %v2758 = vsub.s32 %v2347, %v2757
        %v2759 = vrot.slane %v2170, %v2758
        %v2760 = vsel %vm2352, %v2759, %v2755
        %v2761 = vlaneseq
        %v2762 = vshrl.u32 %v2761, 7
        %v2763 = vsub.s32 %v2354, %v2762
        %v2764 = vrot.slane %v2173, %v2763
        %v2765 = vsel %vm2359, %v2764, %v2760
        %v2766 = vlaneseq
        %v2767 = vshrl.u32 %v2766, 7
        %v2768 = vsub.s32 %v2361, %v2767
        %v2769 = vrot.slane %v2176, %v2768
        %v2770 = vsel %vm2366, %v2769, %v2765
        %v2771 = vlaneseq
        %v2772 = vshrl.u32 %v2771, 7
        %v2773 = vsub.s32 %v2368, %v2772
        %v2774 = vrot.slane %v2179, %v2773
        %v2775 = vsel %vm2373, %v2774, %v2770
        %v2776 = vlaneseq
        %v2777 = vshrl.u32 %v2776, 7
        %v2778 = vsub.s32 %v2375, %v2777
        %v2779 = vrot.slane %v2182, %v2778
        %v2780 = vsel %vm2380, %v2779, %v2775
        %v2781 = vlaneseq
        %v2782 = vshrl.u32 %v2781, 7
        %v2783 = vsub.s32 %v2382, %v2782
        %v2784 = vrot.slane %v2185, %v2783
        %v2785 = vsel %vm2387, %v2784, %v2780
        %v2786 = vlaneseq
        %v2787 = vshrl.u32 %v2786, 7
        %v2788 = vsub.s32 %v2389, %v2787
        %v2789 = vrot.slane %v2188, %v2788
        %v2790 = vsel %vm2394, %v2789, %v2785
        %v2791 = vlaneseq
        %v2792 = vshrl.u32 %v2791, 7
        %v2793 = vsub.s32 %v2286, %v2792
        %v2794 = vrot.slane %v2191, %v2793
        %v2795 = vlaneseq
        %v2796 = vshrl.u32 %v2795, 7
        %v2797 = vsub.s32 %v2291, %v2796
        %v2798 = vrot.slane %v2194, %v2797
        %v2799 = vsel %vm2296, %v2798, %v2794
        %v2800 = vlaneseq
        %v2801 = vshrl.u32 %v2800, 7
        %v2802 = vsub.s32 %v2298, %v2801
        %v2803 = vrot.slane %v2197, %v2802
        %v2804 = vsel %vm2303, %v2803, %v2799
        %v2805 = vlaneseq
        %v2806 = vshrl.u32 %v2805, 7
        %v2807 = vsub.s32 %v2305, %v2806
        %v2808 = vrot.slane %v2200, %v2807
        %v2809 = vsel %vm2310, %v2808, %v2804
        %v2810 = vlaneseq
        %v2811 = vshrl.u32 %v2810, 7
        %v2812 = vsub.s32 %v2312, %v2811
        %v2813 = vrot.slane %v2203, %v2812
        %v2814 = vsel %vm2317, %v2813, %v2809
        %v2815 = vlaneseq
        %v2816 = vshrl.u32 %v2815, 7
        %v2817 = vsub.s32 %v2319, %v2816
        %v2818 = vrot.slane %v2206, %v2817
        %v2819 = vsel %vm2324, %v2818, %v2814
        %v2820 = vlaneseq
        %v2821 = vshrl.u32 %v2820, 7
        %v2822 = vsub.s32 %v2326, %v2821
        %v2823 = vrot.slane %v2209, %v2822
        %v2824 = vsel %vm2331, %v2823, %v2819
        %v2825 = vlaneseq
        %v2826 = vshrl.u32 %v2825, 7
        %v2827 = vsub.s32 %v2333, %v2826
        %v2828 = vrot.slane %v2212, %v2827
        %v2829 = vsel %vm2338, %v2828, %v2824
        %v2830 = vlaneseq
        %v2831 = vshrl.u32 %v2830, 7
        %v2832 = vsub.s32 %v2340, %v2831
        %v2833 = vrot.slane %v2215, %v2832
        %v2834 = vsel %vm2345, %v2833, %v2829
        %v2835 = vlaneseq
        %v2836 = vshrl.u32 %v2835, 7
        %v2837 = vsub.s32 %v2347, %v2836
        %v2838 = vrot.slane %v2218, %v2837
        %v2839 = vsel %vm2352, %v2838, %v2834
        %v2840 = vlaneseq
        %v2841 = vshrl.u32 %v2840, 7
        %v2842 = vsub.s32 %v2354, %v2841
        %v2843 = vrot.slane %v2221, %v2842
        %v2844 = vsel %vm2359, %v2843, %v2839
        %v2845 = vlaneseq
        %v2846 = vshrl.u32 %v2845, 7
        %v2847 = vsub.s32 %v2361, %v2846
        %v2848 = vrot.slane %v2224, %v2847
        %v2849 = vsel %vm2366, %v2848, %v2844
        %v2850 = vlaneseq
        %v2851 = vshrl.u32 %v2850, 7
        %v2852 = vsub.s32 %v2368, %v2851
        %v2853 = vrot.slane %v2227, %v2852
        %v2854 = vsel %vm2373, %v2853, %v2849
        %v2855 = vlaneseq
        %v2856 = vshrl.u32 %v2855, 7
        %v2857 = vsub.s32 %v2375, %v2856
        %v2858 = vrot.slane %v2230, %v2857
        %v2859 = vsel %vm2380, %v2858, %v2854
        %v2860 = vlaneseq
        %v2861 = vshrl.u32 %v2860, 7
        %v2862 = vsub.s32 %v2382, %v2861
        %v2863 = vrot.slane %v2233, %v2862
        %v2864 = vsel %vm2387, %v2863, %v2859
        %v2865 = vlaneseq
        %v2866 = vshrl.u32 %v2865, 7
        %v2867 = vsub.s32 %v2389, %v2866
        %v2868 = vrot.slane %v2236, %v2867
        %v2869 = vsel %vm2394, %v2868, %v2864
        %v2870 = vlaneseq
        %v2871 = vshrl.u32 %v2870, 7
        %v2872 = vsub.s32 %v2286, %v2871
        %v2873 = vrot.slane %v2239, %v2872
        %v2874 = vlaneseq
        %v2875 = vshrl.u32 %v2874, 7
        %v2876 = vsub.s32 %v2291, %v2875
        %v2877 = vrot.slane %v2242, %v2876
        %v2878 = vsel %vm2296, %v2877, %v2873
        %v2879 = vlaneseq
        %v2880 = vshrl.u32 %v2879, 7
        %v2881 = vsub.s32 %v2298, %v2880
        %v2882 = vrot.slane %v2245, %v2881
        %v2883 = vsel %vm2303, %v2882, %v2878
        %v2884 = vlaneseq
        %v2885 = vshrl.u32 %v2884, 7
        %v2886 = vsub.s32 %v2305, %v2885
        %v2887 = vrot.slane %v2248, %v2886
        %v2888 = vsel %vm2310, %v2887, %v2883
        %v2889 = vlaneseq
        %v2890 = vshrl.u32 %v2889, 7
        %v2891 = vsub.s32 %v2312, %v2890
        %v2892 = vrot.slane %v2251, %v2891
        %v2893 = vsel %vm2317, %v2892, %v2888
        %v2894 = vlaneseq
        %v2895 = vshrl.u32 %v2894, 7
        %v2896 = vsub.s32 %v2319, %v2895
        %v2897 = vrot.slane %v2254, %v2896
        %v2898 = vsel %vm2324, %v2897, %v2893
        %v2899 = vlaneseq
        %v2900 = vshrl.u32 %v2899, 7
        %v2901 = vsub.s32 %v2326, %v2900
        %v2902 = vrot.slane %v2257, %v2901
        %v2903 = vsel %vm2331, %v2902, %v2898
        %v2904 = vlaneseq
        %v2905 = vshrl.u32 %v2904, 7
        %v2906 = vsub.s32 %v2333, %v2905
        %v2907 = vrot.slane %v2260, %v2906
        %v2908 = vsel %vm2338, %v2907, %v2903
        %v2909 = vlaneseq
        %v2910 = vshrl.u32 %v2909, 7
        %v2911 = vsub.s32 %v2340, %v2910
        %v2912 = vrot.slane %v2263, %v2911
        %v2913 = vsel %vm2345, %v2912, %v2908
        %v2914 = vlaneseq
        %v2915 = vshrl.u32 %v2914, 7
        %v2916 = vsub.s32 %v2347, %v2915
        %v2917 = vrot.slane %v2266, %v2916
        %v2918 = vsel %vm2352, %v2917, %v2913
        %v2919 = vlaneseq
        %v2920 = vshrl.u32 %v2919, 7
        %v2921 = vsub.s32 %v2354, %v2920
        %v2922 = vrot.slane %v2269, %v2921
        %v2923 = vsel %vm2359, %v2922, %v2918
        %v2924 = vlaneseq
        %v2925 = vshrl.u32 %v2924, 7
        %v2926 = vsub.s32 %v2361, %v2925
        %v2927 = vrot.slane %v2272, %v2926
        %v2928 = vsel %vm2366, %v2927, %v2923
        %v2929 = vlaneseq
        %v2930 = vshrl.u32 %v2929, 7
        %v2931 = vsub.s32 %v2368, %v2930
        %v2932 = vrot.slane %v2275, %v2931
        %v2933 = vsel %vm2373, %v2932, %v2928
        %v2934 = vlaneseq
        %v2935 = vshrl.u32 %v2934, 7
        %v2936 = vsub.s32 %v2375, %v2935
        %v2937 = vrot.slane %v2278, %v2936
        %v2938 = vsel %vm2380, %v2937, %v2933
        %v2939 = vlaneseq
        %v2940 = vshrl.u32 %v2939, 7
        %v2941 = vsub.s32 %v2382, %v2940
        %v2942 = vrot.slane %v2281, %v2941
        %v2943 = vsel %vm2387, %v2942, %v2938
        %v2944 = vlaneseq
        %v2945 = vshrl.u32 %v2944, 7
        %v2946 = vsub.s32 %v2389, %v2945
        %v2947 = vrot.slane %v2284, %v2946
        %v2948 = vsel %vm2394, %v2947, %v2943
        %vm2949 = vcmask 1041409
        %v2950 = vsel %vm2949, %v2474, %v2395
        %vm2951 = vcmask 1042434
        %v2952 = vsel %vm2951, %v2553, %v2950
        %vm2953 = vcmask 1043459
        %v2954 = vsel %vm2953, %v2632, %v2952
        %vm2955 = vcmask 1044484
        %v2956 = vsel %vm2955, %v2711, %v2954
        %vm2957 = vcmask 1045509
        %v2958 = vsel %vm2957, %v2790, %v2956
        %vm2959 = vcmask 1046534
        %v2960 = vsel %vm2959, %v2869, %v2958
        %vm2961 = vcmask 1047559
        %v2962 = vsel %vm2961, %v2948, %v2960
        %2964 = vmax.xlane.f32.xlu0 %v2962
        %v2965 = vpop.xlane.xlu0 %2964
        %v2967 = vlaneseq
        %v2968 = vshrl.u32 %v2967, 7
        %v2969 = vsub.s32 0, %v2968
        %v2970 = vrot.slane %v2965, %v2969
        %v2971 = vlaneseq
        %v2972 = vshrl.u32 %v2971, 7
        %v2973 = vsub.s32 1, %v2972
        %v2974 = vrot.slane %v2965, %v2973
        %v2975 = vlaneseq
        %v2976 = vshrl.u32 %v2975, 7
        %v2977 = vsub.s32 2, %v2976
        %v2978 = vrot.slane %v2965, %v2977
        %v2979 = vlaneseq
        %v2980 = vshrl.u32 %v2979, 7
        %v2981 = vsub.s32 3, %v2980
        %v2982 = vrot.slane %v2965, %v2981
        %v2983 = vlaneseq
        %v2984 = vshrl.u32 %v2983, 7
        %v2985 = vsub.s32 4, %v2984
        %v2986 = vrot.slane %v2965, %v2985
        %v2987 = vlaneseq
        %v2988 = vshrl.u32 %v2987, 7
        %v2989 = vsub.s32 5, %v2988
        %v2990 = vrot.slane %v2965, %v2989
        %v2991 = vlaneseq
        %v2992 = vshrl.u32 %v2991, 7
        %v2993 = vsub.s32 6, %v2992
        %v2994 = vrot.slane %v2965, %v2993
        %v2995 = vlaneseq
        %v2996 = vshrl.u32 %v2995, 7
        %v2997 = vsub.s32 7, %v2996
        %v2998 = vrot.slane %v2965, %v2997
        %v3007 = vsub.f32 %v1645, %v2970
        %v3008 = vsub.f32 %v1646, %v2970
        %v3009 = vsub.f32 %v1647, %v2970
        %v3010 = vsub.f32 %v1648, %v2970
        %v3011 = vsub.f32 %v1649, %v2970
        %v3012 = vsub.f32 %v1650, %v2970
        %v3013 = vsub.f32 %v1651, %v2970
        %v3014 = vsub.f32 %v1652, %v2970
        %v3015 = vsub.f32 %v1653, %v2970
        %v3016 = vsub.f32 %v1654, %v2970
        %v3017 = vsub.f32 %v1655, %v2970
        %v3018 = vsub.f32 %v1656, %v2970
        %v3019 = vsub.f32 %v1657, %v2970
        %v3020 = vsub.f32 %v1658, %v2970
        %v3021 = vsub.f32 %v1659, %v2970
        %v3022 = vsub.f32 %v1660, %v2970
        %v3023 = vsub.f32 %v1661, %v2974
        %v3024 = vsub.f32 %v1662, %v2974
        %v3025 = vsub.f32 %v1663, %v2974
        %v3026 = vsub.f32 %v1664, %v2974
        %v3027 = vsub.f32 %v1665, %v2974
        %v3028 = vsub.f32 %v1666, %v2974
        %v3029 = vsub.f32 %v1667, %v2974
        %v3030 = vsub.f32 %v1668, %v2974
        %v3031 = vsub.f32 %v1669, %v2974
        %v3032 = vsub.f32 %v1670, %v2974
        %v3033 = vsub.f32 %v1671, %v2974
        %v3034 = vsub.f32 %v1672, %v2974
        %v3035 = vsub.f32 %v1673, %v2974
        %v3036 = vsub.f32 %v1674, %v2974
        %v3037 = vsub.f32 %v1675, %v2974
        %v3038 = vsub.f32 %v1676, %v2974
        %v3039 = vsub.f32 %v1677, %v2978
        %v3040 = vsub.f32 %v1678, %v2978
        %v3041 = vsub.f32 %v1679, %v2978
        %v3042 = vsub.f32 %v1680, %v2978
        %v3043 = vsub.f32 %v1681, %v2978
        %v3044 = vsub.f32 %v1682, %v2978
        %v3045 = vsub.f32 %v1683, %v2978
        %v3046 = vsub.f32 %v1684, %v2978
        %v3047 = vsub.f32 %v1685, %v2978
        %v3048 = vsub.f32 %v1686, %v2978
        %v3049 = vsub.f32 %v1687, %v2978
        %v3050 = vsub.f32 %v1688, %v2978
        %v3051 = vsub.f32 %v1689, %v2978
        %v3052 = vsub.f32 %v1690, %v2978
        %v3053 = vsub.f32 %v1691, %v2978
        %v3054 = vsub.f32 %v1692, %v2978
        %v3055 = vsub.f32 %v1693, %v2982
        %v3056 = vsub.f32 %v1694, %v2982
        %v3057 = vsub.f32 %v1695, %v2982
        %v3058 = vsub.f32 %v1696, %v2982
        %v3059 = vsub.f32 %v1697, %v2982
        %v3060 = vsub.f32 %v1698, %v2982
        %v3061 = vsub.f32 %v1699, %v2982
        %v3062 = vsub.f32 %v1700, %v2982
        %v3063 = vsub.f32 %v1701, %v2982
        %v3064 = vsub.f32 %v1702, %v2982
        %v3065 = vsub.f32 %v1703, %v2982
        %v3066 = vsub.f32 %v1704, %v2982
        %v3067 = vsub.f32 %v1705, %v2982
        %v3068 = vsub.f32 %v1706, %v2982
        %v3069 = vsub.f32 %v1707, %v2982
        %v3070 = vsub.f32 %v1708, %v2982
        %v3071 = vsub.f32 %v1709, %v2986
        %v3072 = vsub.f32 %v1710, %v2986
        %v3073 = vsub.f32 %v1711, %v2986
        %v3074 = vsub.f32 %v1712, %v2986
        %v3075 = vsub.f32 %v1713, %v2986
        %v3076 = vsub.f32 %v1714, %v2986
        %v3077 = vsub.f32 %v1715, %v2986
        %v3078 = vsub.f32 %v1716, %v2986
        %v3079 = vsub.f32 %v1717, %v2986
        %v3080 = vsub.f32 %v1718, %v2986
        %v3081 = vsub.f32 %v1719, %v2986
        %v3082 = vsub.f32 %v1720, %v2986
        %v3083 = vsub.f32 %v1721, %v2986
        %v3084 = vsub.f32 %v1722, %v2986
        %v3085 = vsub.f32 %v1723, %v2986
        %v3086 = vsub.f32 %v1724, %v2986
        %v3087 = vsub.f32 %v1725, %v2990
        %v3088 = vsub.f32 %v1726, %v2990
        %v3089 = vsub.f32 %v1727, %v2990
        %v3090 = vsub.f32 %v1728, %v2990
        %v3091 = vsub.f32 %v1729, %v2990
        %v3092 = vsub.f32 %v1730, %v2990
        %v3093 = vsub.f32 %v1731, %v2990
        %v3094 = vsub.f32 %v1732, %v2990
        %v3095 = vsub.f32 %v1733, %v2990
        %v3096 = vsub.f32 %v1734, %v2990
        %v3097 = vsub.f32 %v1735, %v2990
        %v3098 = vsub.f32 %v1736, %v2990
        %v3099 = vsub.f32 %v1737, %v2990
        %v3100 = vsub.f32 %v1738, %v2990
        %v3101 = vsub.f32 %v1739, %v2990
        %v3102 = vsub.f32 %v1740, %v2990
        %v3103 = vsub.f32 %v1741, %v2994
        %v3104 = vsub.f32 %v1742, %v2994
        %v3105 = vsub.f32 %v1743, %v2994
        %v3106 = vsub.f32 %v1744, %v2994
        %v3107 = vsub.f32 %v1745, %v2994
        %v3108 = vsub.f32 %v1746, %v2994
        %v3109 = vsub.f32 %v1747, %v2994
        %v3110 = vsub.f32 %v1748, %v2994
        %v3111 = vsub.f32 %v1749, %v2994
        %v3112 = vsub.f32 %v1750, %v2994
        %v3113 = vsub.f32 %v1751, %v2994
        %v3114 = vsub.f32 %v1752, %v2994
        %v3115 = vsub.f32 %v1753, %v2994
        %v3116 = vsub.f32 %v1754, %v2994
        %v3117 = vsub.f32 %v1755, %v2994
        %v3118 = vsub.f32 %v1756, %v2994
        %v3119 = vsub.f32 %v1757, %v2998
        %v3120 = vsub.f32 %v1758, %v2998
        %v3121 = vsub.f32 %v1759, %v2998
        %v3122 = vsub.f32 %v1760, %v2998
        %v3123 = vsub.f32 %v1761, %v2998
        %v3124 = vsub.f32 %v1762, %v2998
        %v3125 = vsub.f32 %v1763, %v2998
        %v3126 = vsub.f32 %v1764, %v2998
        %v3127 = vsub.f32 %v1765, %v2998
        %v3128 = vsub.f32 %v1766, %v2998
        %v3129 = vsub.f32 %v1767, %v2998
        %v3130 = vsub.f32 %v1768, %v2998
        %v3131 = vsub.f32 %v1769, %v2998
        %v3132 = vsub.f32 %v1770, %v2998
        %v3133 = vsub.f32 %v1771, %v2998
        %v3134 = vsub.f32 %v1772, %v2998
        %v3135 = vmul.f32 %v3007, 1.442695
        %v3136 = vpow.pop %v3135
        %v3137 = vmul.f32 %v3008, 1.442695
        %v3138 = vpow.pop %v3137
        %v3139 = vmul.f32 %v3009, 1.442695
        %v3140 = vpow.pop %v3139
        %v3141 = vmul.f32 %v3010, 1.442695
        %v3142 = vpow.pop %v3141
        %v3143 = vmul.f32 %v3011, 1.442695
        %v3144 = vpow.pop %v3143
        %v3145 = vmul.f32 %v3012, 1.442695
        %v3146 = vpow.pop %v3145
        %v3147 = vmul.f32 %v3013, 1.442695
        %v3148 = vpow.pop %v3147
        %v3149 = vmul.f32 %v3014, 1.442695
        %v3150 = vpow.pop %v3149
        %v3151 = vmul.f32 %v3015, 1.442695
        %v3152 = vpow.pop %v3151
        %v3153 = vmul.f32 %v3016, 1.442695
        %v3154 = vpow.pop %v3153
        %v3155 = vmul.f32 %v3017, 1.442695
        %v3156 = vpow.pop %v3155
        %v3157 = vmul.f32 %v3018, 1.442695
        %v3158 = vpow.pop %v3157
        %v3159 = vmul.f32 %v3019, 1.442695
        %v3160 = vpow.pop %v3159
        %v3161 = vmul.f32 %v3020, 1.442695
        %v3162 = vpow.pop %v3161
        %v3163 = vmul.f32 %v3021, 1.442695
        %v3164 = vpow.pop %v3163
        %v3165 = vmul.f32 %v3022, 1.442695
        %v3166 = vpow.pop %v3165
        %v3167 = vmul.f32 %v3023, 1.442695
        %v3168 = vpow.pop %v3167
        %v3169 = vmul.f32 %v3024, 1.442695
        %v3170 = vpow.pop %v3169
        %v3171 = vmul.f32 %v3025, 1.442695
        %v3172 = vpow.pop %v3171
        %v3173 = vmul.f32 %v3026, 1.442695
        %v3174 = vpow.pop %v3173
        %v3175 = vmul.f32 %v3027, 1.442695
        %v3176 = vpow.pop %v3175
        %v3177 = vmul.f32 %v3028, 1.442695
        %v3178 = vpow.pop %v3177
        %v3179 = vmul.f32 %v3029, 1.442695
        %v3180 = vpow.pop %v3179
        %v3181 = vmul.f32 %v3030, 1.442695
        %v3182 = vpow.pop %v3181
        %v3183 = vmul.f32 %v3031, 1.442695
        %v3184 = vpow.pop %v3183
        %v3185 = vmul.f32 %v3032, 1.442695
        %v3186 = vpow.pop %v3185
        %v3187 = vmul.f32 %v3033, 1.442695
        %v3188 = vpow.pop %v3187
        %v3189 = vmul.f32 %v3034, 1.442695
        %v3190 = vpow.pop %v3189
        %v3191 = vmul.f32 %v3035, 1.442695
        %v3192 = vpow.pop %v3191
        %v3193 = vmul.f32 %v3036, 1.442695
        %v3194 = vpow.pop %v3193
        %v3195 = vmul.f32 %v3037, 1.442695
        %v3196 = vpow.pop %v3195
        %v3197 = vmul.f32 %v3038, 1.442695
        %v3198 = vpow.pop %v3197
        %v3199 = vmul.f32 %v3039, 1.442695
        %v3200 = vpow.pop %v3199
        %v3201 = vmul.f32 %v3040, 1.442695
        %v3202 = vpow.pop %v3201
        %v3203 = vmul.f32 %v3041, 1.442695
        %v3204 = vpow.pop %v3203
        %v3205 = vmul.f32 %v3042, 1.442695
        %v3206 = vpow.pop %v3205
        %v3207 = vmul.f32 %v3043, 1.442695
        %v3208 = vpow.pop %v3207
        %v3209 = vmul.f32 %v3044, 1.442695
        %v3210 = vpow.pop %v3209
        %v3211 = vmul.f32 %v3045, 1.442695
        %v3212 = vpow.pop %v3211
        %v3213 = vmul.f32 %v3046, 1.442695
        %v3214 = vpow.pop %v3213
        %v3215 = vmul.f32 %v3047, 1.442695
        %v3216 = vpow.pop %v3215
        %v3217 = vmul.f32 %v3048, 1.442695
        %v3218 = vpow.pop %v3217
        %v3219 = vmul.f32 %v3049, 1.442695
        %v3220 = vpow.pop %v3219
        %v3221 = vmul.f32 %v3050, 1.442695
        %v3222 = vpow.pop %v3221
        %v3223 = vmul.f32 %v3051, 1.442695
        %v3224 = vpow.pop %v3223
        %v3225 = vmul.f32 %v3052, 1.442695
        %v3226 = vpow.pop %v3225
        %v3227 = vmul.f32 %v3053, 1.442695
        %v3228 = vpow.pop %v3227
        %v3229 = vmul.f32 %v3054, 1.442695
        %v3230 = vpow.pop %v3229
        %v3231 = vmul.f32 %v3055, 1.442695
        %v3232 = vpow.pop %v3231
        %v3233 = vmul.f32 %v3056, 1.442695
        %v3234 = vpow.pop %v3233
        %v3235 = vmul.f32 %v3057, 1.442695
        %v3236 = vpow.pop %v3235
        %v3237 = vmul.f32 %v3058, 1.442695
        %v3238 = vpow.pop %v3237
        %v3239 = vmul.f32 %v3059, 1.442695
        %v3240 = vpow.pop %v3239
        %v3241 = vmul.f32 %v3060, 1.442695
        %v3242 = vpow.pop %v3241
        %v3243 = vmul.f32 %v3061, 1.442695
        %v3244 = vpow.pop %v3243
        %v3245 = vmul.f32 %v3062, 1.442695
        %v3246 = vpow.pop %v3245
        %v3247 = vmul.f32 %v3063, 1.442695
        %v3248 = vpow.pop %v3247
        %v3249 = vmul.f32 %v3064, 1.442695
        %v3250 = vpow.pop %v3249
        %v3251 = vmul.f32 %v3065, 1.442695
        %v3252 = vpow.pop %v3251
        %v3253 = vmul.f32 %v3066, 1.442695
        %v3254 = vpow.pop %v3253
        %v3255 = vmul.f32 %v3067, 1.442695
        %v3256 = vpow.pop %v3255
        %v3257 = vmul.f32 %v3068, 1.442695
        %v3258 = vpow.pop %v3257
        %v3259 = vmul.f32 %v3069, 1.442695
        %v3260 = vpow.pop %v3259
        %v3261 = vmul.f32 %v3070, 1.442695
        %v3262 = vpow.pop %v3261
        %v3263 = vmul.f32 %v3071, 1.442695
        %v3264 = vpow.pop %v3263
        %v3265 = vmul.f32 %v3072, 1.442695
        %v3266 = vpow.pop %v3265
        %v3267 = vmul.f32 %v3073, 1.442695
        %v3268 = vpow.pop %v3267
        %v3269 = vmul.f32 %v3074, 1.442695
        %v3270 = vpow.pop %v3269
        %v3271 = vmul.f32 %v3075, 1.442695
        %v3272 = vpow.pop %v3271
        %v3273 = vmul.f32 %v3076, 1.442695
        %v3274 = vpow.pop %v3273
        %v3275 = vmul.f32 %v3077, 1.442695
        %v3276 = vpow.pop %v3275
        %v3277 = vmul.f32 %v3078, 1.442695
        %v3278 = vpow.pop %v3277
        %v3279 = vmul.f32 %v3079, 1.442695
        %v3280 = vpow.pop %v3279
        %v3281 = vmul.f32 %v3080, 1.442695
        %v3282 = vpow.pop %v3281
        %v3283 = vmul.f32 %v3081, 1.442695
        %v3284 = vpow.pop %v3283
        %v3285 = vmul.f32 %v3082, 1.442695
        %v3286 = vpow.pop %v3285
        %v3287 = vmul.f32 %v3083, 1.442695
        %v3288 = vpow.pop %v3287
        %v3289 = vmul.f32 %v3084, 1.442695
        %v3290 = vpow.pop %v3289
        %v3291 = vmul.f32 %v3085, 1.442695
        %v3292 = vpow.pop %v3291
        %v3293 = vmul.f32 %v3086, 1.442695
        %v3294 = vpow.pop %v3293
        %v3295 = vmul.f32 %v3087, 1.442695
        %v3296 = vpow.pop %v3295
        %v3297 = vmul.f32 %v3088, 1.442695
        %v3298 = vpow.pop %v3297
        %v3299 = vmul.f32 %v3089, 1.442695
        %v3300 = vpow.pop %v3299
        %v3301 = vmul.f32 %v3090, 1.442695
        %v3302 = vpow.pop %v3301
        %v3303 = vmul.f32 %v3091, 1.442695
        %v3304 = vpow.pop %v3303
        %v3305 = vmul.f32 %v3092, 1.442695
        %v3306 = vpow.pop %v3305
        %v3307 = vmul.f32 %v3093, 1.442695
        %v3308 = vpow.pop %v3307
        %v3309 = vmul.f32 %v3094, 1.442695
        %v3310 = vpow.pop %v3309
        %v3311 = vmul.f32 %v3095, 1.442695
        %v3312 = vpow.pop %v3311
        %v3313 = vmul.f32 %v3096, 1.442695
        %v3314 = vpow.pop %v3313
        %v3315 = vmul.f32 %v3097, 1.442695
        %v3316 = vpow.pop %v3315
        %v3317 = vmul.f32 %v3098, 1.442695
        %v3318 = vpow.pop %v3317
        %v3319 = vmul.f32 %v3099, 1.442695
        %v3320 = vpow.pop %v3319
        %v3321 = vmul.f32 %v3100, 1.442695
        %v3322 = vpow.pop %v3321
        %v3323 = vmul.f32 %v3101, 1.442695
        %v3324 = vpow.pop %v3323
        %v3325 = vmul.f32 %v3102, 1.442695
        %v3326 = vpow.pop %v3325
        %v3327 = vmul.f32 %v3103, 1.442695
        %v3328 = vpow.pop %v3327
        %v3329 = vmul.f32 %v3104, 1.442695
        %v3330 = vpow.pop %v3329
        %v3331 = vmul.f32 %v3105, 1.442695
        %v3332 = vpow.pop %v3331
        %v3333 = vmul.f32 %v3106, 1.442695
        %v3334 = vpow.pop %v3333
        %v3335 = vmul.f32 %v3107, 1.442695
        %v3336 = vpow.pop %v3335
        %v3337 = vmul.f32 %v3108, 1.442695
        %v3338 = vpow.pop %v3337
        %v3339 = vmul.f32 %v3109, 1.442695
        %v3340 = vpow.pop %v3339
        %v3341 = vmul.f32 %v3110, 1.442695
        %v3342 = vpow.pop %v3341
        %v3343 = vmul.f32 %v3111, 1.442695
        %v3344 = vpow.pop %v3343
        %v3345 = vmul.f32 %v3112, 1.442695
        %v3346 = vpow.pop %v3345
        %v3347 = vmul.f32 %v3113, 1.442695
        %v3348 = vpow.pop %v3347
        %v3349 = vmul.f32 %v3114, 1.442695
        %v3350 = vpow.pop %v3349
        %v3351 = vmul.f32 %v3115, 1.442695
        %v3352 = vpow.pop %v3351
        %v3353 = vmul.f32 %v3116, 1.442695
        %v3354 = vpow.pop %v3353
        %v3355 = vmul.f32 %v3117, 1.442695
        %v3356 = vpow.pop %v3355
        %v3357 = vmul.f32 %v3118, 1.442695
        %v3358 = vpow.pop %v3357
        %v3359 = vmul.f32 %v3119, 1.442695
        %v3360 = vpow.pop %v3359
        %v3361 = vmul.f32 %v3120, 1.442695
        %v3362 = vpow.pop %v3361
        %v3363 = vmul.f32 %v3121, 1.442695
        %v3364 = vpow.pop %v3363
        %v3365 = vmul.f32 %v3122, 1.442695
        %v3366 = vpow.pop %v3365
        %v3367 = vmul.f32 %v3123, 1.442695
        %v3368 = vpow.pop %v3367
        %v3369 = vmul.f32 %v3124, 1.442695
        %v3370 = vpow.pop %v3369
        %v3371 = vmul.f32 %v3125, 1.442695
        %v3372 = vpow.pop %v3371
        %v3373 = vmul.f32 %v3126, 1.442695
        %v3374 = vpow.pop %v3373
        %v3375 = vmul.f32 %v3127, 1.442695
        %v3376 = vpow.pop %v3375
        %v3377 = vmul.f32 %v3128, 1.442695
        %v3378 = vpow.pop %v3377
        %v3379 = vmul.f32 %v3129, 1.442695
        %v3380 = vpow.pop %v3379
        %v3381 = vmul.f32 %v3130, 1.442695
        %v3382 = vpow.pop %v3381
        %v3383 = vmul.f32 %v3131, 1.442695
        %v3384 = vpow.pop %v3383
        %v3385 = vmul.f32 %v3132, 1.442695
        %v3386 = vpow.pop %v3385
        %v3387 = vmul.f32 %v3133, 1.442695
        %v3388 = vpow.pop %v3387
        %v3389 = vmul.f32 %v3134, 1.442695
        %v3390 = vpow.pop %v3389
        %3519 = vset.pattern.permute.xlu0 0
        %3520 = vperm.xlu0 %3519, %v3136
        %v3521 = vpop.permute.xlu0 %3520
        %3522 = vset.pattern.permute.xlu0 0
        %3523 = vperm.xlu0 %3522, %v3138
        %v3524 = vpop.permute.xlu0 %3523
        %3525 = vset.pattern.permute.xlu0 0
        %3526 = vperm.xlu0 %3525, %v3140
        %v3527 = vpop.permute.xlu0 %3526
        %3528 = vset.pattern.permute.xlu0 0
        %3529 = vperm.xlu0 %3528, %v3142
        %v3530 = vpop.permute.xlu0 %3529
        %3531 = vset.pattern.permute.xlu0 0
        %3532 = vperm.xlu0 %3531, %v3144
        %v3533 = vpop.permute.xlu0 %3532
        %3534 = vset.pattern.permute.xlu0 0
        %3535 = vperm.xlu0 %3534, %v3146
        %v3536 = vpop.permute.xlu0 %3535
        %3537 = vset.pattern.permute.xlu0 0
        %3538 = vperm.xlu0 %3537, %v3148
        %v3539 = vpop.permute.xlu0 %3538
        %3540 = vset.pattern.permute.xlu0 0
        %3541 = vperm.xlu0 %3540, %v3150
        %v3542 = vpop.permute.xlu0 %3541
        %3543 = vset.pattern.permute.xlu0 0
        %3544 = vperm.xlu0 %3543, %v3152
        %v3545 = vpop.permute.xlu0 %3544
        %3546 = vset.pattern.permute.xlu0 0
        %3547 = vperm.xlu0 %3546, %v3154
        %v3548 = vpop.permute.xlu0 %3547
        %3549 = vset.pattern.permute.xlu0 0
        %3550 = vperm.xlu0 %3549, %v3156
        %v3551 = vpop.permute.xlu0 %3550
        %3552 = vset.pattern.permute.xlu0 0
        %3553 = vperm.xlu0 %3552, %v3158
        %v3554 = vpop.permute.xlu0 %3553
        %3555 = vset.pattern.permute.xlu0 0
        %3556 = vperm.xlu0 %3555, %v3160
        %v3557 = vpop.permute.xlu0 %3556
        %3558 = vset.pattern.permute.xlu0 0
        %3559 = vperm.xlu0 %3558, %v3162
        %v3560 = vpop.permute.xlu0 %3559
        %3561 = vset.pattern.permute.xlu0 0
        %3562 = vperm.xlu0 %3561, %v3164
        %v3563 = vpop.permute.xlu0 %3562
        %3564 = vset.pattern.permute.xlu0 0
        %3565 = vperm.xlu0 %3564, %v3166
        %v3566 = vpop.permute.xlu0 %3565
        %3567 = vset.pattern.permute.xlu0 0
        %3568 = vperm.xlu0 %3567, %v3168
        %v3569 = vpop.permute.xlu0 %3568
        %3570 = vset.pattern.permute.xlu0 0
        %3571 = vperm.xlu0 %3570, %v3170
        %v3572 = vpop.permute.xlu0 %3571
        %3573 = vset.pattern.permute.xlu0 0
        %3574 = vperm.xlu0 %3573, %v3172
        %v3575 = vpop.permute.xlu0 %3574
        %3576 = vset.pattern.permute.xlu0 0
        %3577 = vperm.xlu0 %3576, %v3174
        %v3578 = vpop.permute.xlu0 %3577
        %3579 = vset.pattern.permute.xlu0 0
        %3580 = vperm.xlu0 %3579, %v3176
        %v3581 = vpop.permute.xlu0 %3580
        %3582 = vset.pattern.permute.xlu0 0
        %3583 = vperm.xlu0 %3582, %v3178
        %v3584 = vpop.permute.xlu0 %3583
        %3585 = vset.pattern.permute.xlu0 0
        %3586 = vperm.xlu0 %3585, %v3180
        %v3587 = vpop.permute.xlu0 %3586
        %3588 = vset.pattern.permute.xlu0 0
        %3589 = vperm.xlu0 %3588, %v3182
        %v3590 = vpop.permute.xlu0 %3589
        %3591 = vset.pattern.permute.xlu0 0
        %3592 = vperm.xlu0 %3591, %v3184
        %v3593 = vpop.permute.xlu0 %3592
        %3594 = vset.pattern.permute.xlu0 0
        %3595 = vperm.xlu0 %3594, %v3186
        %v3596 = vpop.permute.xlu0 %3595
        %3597 = vset.pattern.permute.xlu0 0
        %3598 = vperm.xlu0 %3597, %v3188
        %v3599 = vpop.permute.xlu0 %3598
        %3600 = vset.pattern.permute.xlu0 0
        %3601 = vperm.xlu0 %3600, %v3190
        %v3602 = vpop.permute.xlu0 %3601
        %3603 = vset.pattern.permute.xlu0 0
        %3604 = vperm.xlu0 %3603, %v3192
        %v3605 = vpop.permute.xlu0 %3604
        %3606 = vset.pattern.permute.xlu0 0
        %3607 = vperm.xlu0 %3606, %v3194
        %v3608 = vpop.permute.xlu0 %3607
        %3609 = vset.pattern.permute.xlu0 0
        %3610 = vperm.xlu0 %3609, %v3196
        %v3611 = vpop.permute.xlu0 %3610
        %3612 = vset.pattern.permute.xlu0 0
        %3613 = vperm.xlu0 %3612, %v3198
        %v3614 = vpop.permute.xlu0 %3613
        %3615 = vset.pattern.permute.xlu0 0
        %3616 = vperm.xlu0 %3615, %v3200
        %v3617 = vpop.permute.xlu0 %3616
        %3618 = vset.pattern.permute.xlu0 0
        %3619 = vperm.xlu0 %3618, %v3202
        %v3620 = vpop.permute.xlu0 %3619
        %3621 = vset.pattern.permute.xlu0 0
        %3622 = vperm.xlu0 %3621, %v3204
        %v3623 = vpop.permute.xlu0 %3622
        %3624 = vset.pattern.permute.xlu0 0
        %3625 = vperm.xlu0 %3624, %v3206
        %v3626 = vpop.permute.xlu0 %3625
        %3627 = vset.pattern.permute.xlu0 0
        %3628 = vperm.xlu0 %3627, %v3208
        %v3629 = vpop.permute.xlu0 %3628
        %3630 = vset.pattern.permute.xlu0 0
        %3631 = vperm.xlu0 %3630, %v3210
        %v3632 = vpop.permute.xlu0 %3631
        %3633 = vset.pattern.permute.xlu0 0
        %3634 = vperm.xlu0 %3633, %v3212
        %v3635 = vpop.permute.xlu0 %3634
        %3636 = vset.pattern.permute.xlu0 0
        %3637 = vperm.xlu0 %3636, %v3214
        %v3638 = vpop.permute.xlu0 %3637
        %3639 = vset.pattern.permute.xlu0 0
        %3640 = vperm.xlu0 %3639, %v3216
        %v3641 = vpop.permute.xlu0 %3640
        %3642 = vset.pattern.permute.xlu0 0
        %3643 = vperm.xlu0 %3642, %v3218
        %v3644 = vpop.permute.xlu0 %3643
        %3645 = vset.pattern.permute.xlu0 0
        %3646 = vperm.xlu0 %3645, %v3220
        %v3647 = vpop.permute.xlu0 %3646
        %3648 = vset.pattern.permute.xlu0 0
        %3649 = vperm.xlu0 %3648, %v3222
        %v3650 = vpop.permute.xlu0 %3649
        %3651 = vset.pattern.permute.xlu0 0
        %3652 = vperm.xlu0 %3651, %v3224
        %v3653 = vpop.permute.xlu0 %3652
        %3654 = vset.pattern.permute.xlu0 0
        %3655 = vperm.xlu0 %3654, %v3226
        %v3656 = vpop.permute.xlu0 %3655
        %3657 = vset.pattern.permute.xlu0 0
        %3658 = vperm.xlu0 %3657, %v3228
        %v3659 = vpop.permute.xlu0 %3658
        %3660 = vset.pattern.permute.xlu0 0
        %3661 = vperm.xlu0 %3660, %v3230
        %v3662 = vpop.permute.xlu0 %3661
        %3663 = vset.pattern.permute.xlu0 0
        %3664 = vperm.xlu0 %3663, %v3232
        %v3665 = vpop.permute.xlu0 %3664
        %3666 = vset.pattern.permute.xlu0 0
        %3667 = vperm.xlu0 %3666, %v3234
        %v3668 = vpop.permute.xlu0 %3667
        %3669 = vset.pattern.permute.xlu0 0
        %3670 = vperm.xlu0 %3669, %v3236
        %v3671 = vpop.permute.xlu0 %3670
        %3672 = vset.pattern.permute.xlu0 0
        %3673 = vperm.xlu0 %3672, %v3238
        %v3674 = vpop.permute.xlu0 %3673
        %3675 = vset.pattern.permute.xlu0 0
        %3676 = vperm.xlu0 %3675, %v3240
        %v3677 = vpop.permute.xlu0 %3676
        %3678 = vset.pattern.permute.xlu0 0
        %3679 = vperm.xlu0 %3678, %v3242
        %v3680 = vpop.permute.xlu0 %3679
        %3681 = vset.pattern.permute.xlu0 0
        %3682 = vperm.xlu0 %3681, %v3244
        %v3683 = vpop.permute.xlu0 %3682
        %3684 = vset.pattern.permute.xlu0 0
        %3685 = vperm.xlu0 %3684, %v3246
        %v3686 = vpop.permute.xlu0 %3685
        %3687 = vset.pattern.permute.xlu0 0
        %3688 = vperm.xlu0 %3687, %v3248
        %v3689 = vpop.permute.xlu0 %3688
        %3690 = vset.pattern.permute.xlu0 0
        %3691 = vperm.xlu0 %3690, %v3250
        %v3692 = vpop.permute.xlu0 %3691
        %3693 = vset.pattern.permute.xlu0 0
        %3694 = vperm.xlu0 %3693, %v3252
        %v3695 = vpop.permute.xlu0 %3694
        %3696 = vset.pattern.permute.xlu0 0
        %3697 = vperm.xlu0 %3696, %v3254
        %v3698 = vpop.permute.xlu0 %3697
        %3699 = vset.pattern.permute.xlu0 0
        %3700 = vperm.xlu0 %3699, %v3256
        %v3701 = vpop.permute.xlu0 %3700
        %3702 = vset.pattern.permute.xlu0 0
        %3703 = vperm.xlu0 %3702, %v3258
        %v3704 = vpop.permute.xlu0 %3703
        %3705 = vset.pattern.permute.xlu0 0
        %3706 = vperm.xlu0 %3705, %v3260
        %v3707 = vpop.permute.xlu0 %3706
        %3708 = vset.pattern.permute.xlu0 0
        %3709 = vperm.xlu0 %3708, %v3262
        %v3710 = vpop.permute.xlu0 %3709
        %3711 = vset.pattern.permute.xlu0 0
        %3712 = vperm.xlu0 %3711, %v3264
        %v3713 = vpop.permute.xlu0 %3712
        %3714 = vset.pattern.permute.xlu0 0
        %3715 = vperm.xlu0 %3714, %v3266
        %v3716 = vpop.permute.xlu0 %3715
        %3717 = vset.pattern.permute.xlu0 0
        %3718 = vperm.xlu0 %3717, %v3268
        %v3719 = vpop.permute.xlu0 %3718
        %3720 = vset.pattern.permute.xlu0 0
        %3721 = vperm.xlu0 %3720, %v3270
        %v3722 = vpop.permute.xlu0 %3721
        %3723 = vset.pattern.permute.xlu0 0
        %3724 = vperm.xlu0 %3723, %v3272
        %v3725 = vpop.permute.xlu0 %3724
        %3726 = vset.pattern.permute.xlu0 0
        %3727 = vperm.xlu0 %3726, %v3274
        %v3728 = vpop.permute.xlu0 %3727
        %3729 = vset.pattern.permute.xlu0 0
        %3730 = vperm.xlu0 %3729, %v3276
        %v3731 = vpop.permute.xlu0 %3730
        %3732 = vset.pattern.permute.xlu0 0
        %3733 = vperm.xlu0 %3732, %v3278
        %v3734 = vpop.permute.xlu0 %3733
        %3735 = vset.pattern.permute.xlu0 0
        %3736 = vperm.xlu0 %3735, %v3280
        %v3737 = vpop.permute.xlu0 %3736
        %3738 = vset.pattern.permute.xlu0 0
        %3739 = vperm.xlu0 %3738, %v3282
        %v3740 = vpop.permute.xlu0 %3739
        %3741 = vset.pattern.permute.xlu0 0
        %3742 = vperm.xlu0 %3741, %v3284
        %v3743 = vpop.permute.xlu0 %3742
        %3744 = vset.pattern.permute.xlu0 0
        %3745 = vperm.xlu0 %3744, %v3286
        %v3746 = vpop.permute.xlu0 %3745
        %3747 = vset.pattern.permute.xlu0 0
        %3748 = vperm.xlu0 %3747, %v3288
        %v3749 = vpop.permute.xlu0 %3748
        %3750 = vset.pattern.permute.xlu0 0
        %3751 = vperm.xlu0 %3750, %v3290
        %v3752 = vpop.permute.xlu0 %3751
        %3753 = vset.pattern.permute.xlu0 0
        %3754 = vperm.xlu0 %3753, %v3292
        %v3755 = vpop.permute.xlu0 %3754
        %3756 = vset.pattern.permute.xlu0 0
        %3757 = vperm.xlu0 %3756, %v3294
        %v3758 = vpop.permute.xlu0 %3757
        %3759 = vset.pattern.permute.xlu0 0
        %3760 = vperm.xlu0 %3759, %v3296
        %v3761 = vpop.permute.xlu0 %3760
        %3762 = vset.pattern.permute.xlu0 0
        %3763 = vperm.xlu0 %3762, %v3298
        %v3764 = vpop.permute.xlu0 %3763
        %3765 = vset.pattern.permute.xlu0 0
        %3766 = vperm.xlu0 %3765, %v3300
        %v3767 = vpop.permute.xlu0 %3766
        %3768 = vset.pattern.permute.xlu0 0
        %3769 = vperm.xlu0 %3768, %v3302
        %v3770 = vpop.permute.xlu0 %3769
        %3771 = vset.pattern.permute.xlu0 0
        %3772 = vperm.xlu0 %3771, %v3304
        %v3773 = vpop.permute.xlu0 %3772
        %3774 = vset.pattern.permute.xlu0 0
        %3775 = vperm.xlu0 %3774, %v3306
        %v3776 = vpop.permute.xlu0 %3775
        %3777 = vset.pattern.permute.xlu0 0
        %3778 = vperm.xlu0 %3777, %v3308
        %v3779 = vpop.permute.xlu0 %3778
        %3780 = vset.pattern.permute.xlu0 0
        %3781 = vperm.xlu0 %3780, %v3310
        %v3782 = vpop.permute.xlu0 %3781
        %3783 = vset.pattern.permute.xlu0 0
        %3784 = vperm.xlu0 %3783, %v3312
        %v3785 = vpop.permute.xlu0 %3784
        %3786 = vset.pattern.permute.xlu0 0
        %3787 = vperm.xlu0 %3786, %v3314
        %v3788 = vpop.permute.xlu0 %3787
        %3789 = vset.pattern.permute.xlu0 0
        %3790 = vperm.xlu0 %3789, %v3316
        %v3791 = vpop.permute.xlu0 %3790
        %3792 = vset.pattern.permute.xlu0 0
        %3793 = vperm.xlu0 %3792, %v3318
        %v3794 = vpop.permute.xlu0 %3793
        %3795 = vset.pattern.permute.xlu0 0
        %3796 = vperm.xlu0 %3795, %v3320
        %v3797 = vpop.permute.xlu0 %3796
        %3798 = vset.pattern.permute.xlu0 0
        %3799 = vperm.xlu0 %3798, %v3322
        %v3800 = vpop.permute.xlu0 %3799
        %3801 = vset.pattern.permute.xlu0 0
        %3802 = vperm.xlu0 %3801, %v3324
        %v3803 = vpop.permute.xlu0 %3802
        %3804 = vset.pattern.permute.xlu0 0
        %3805 = vperm.xlu0 %3804, %v3326
        %v3806 = vpop.permute.xlu0 %3805
        %3807 = vset.pattern.permute.xlu0 0
        %3808 = vperm.xlu0 %3807, %v3328
        %v3809 = vpop.permute.xlu0 %3808
        %3810 = vset.pattern.permute.xlu0 0
        %3811 = vperm.xlu0 %3810, %v3330
        %v3812 = vpop.permute.xlu0 %3811
        %3813 = vset.pattern.permute.xlu0 0
        %3814 = vperm.xlu0 %3813, %v3332
        %v3815 = vpop.permute.xlu0 %3814
        %3816 = vset.pattern.permute.xlu0 0
        %3817 = vperm.xlu0 %3816, %v3334
        %v3818 = vpop.permute.xlu0 %3817
        %3819 = vset.pattern.permute.xlu0 0
        %3820 = vperm.xlu0 %3819, %v3336
        %v3821 = vpop.permute.xlu0 %3820
        %3822 = vset.pattern.permute.xlu0 0
        %3823 = vperm.xlu0 %3822, %v3338
        %v3824 = vpop.permute.xlu0 %3823
        %3825 = vset.pattern.permute.xlu0 0
        %3826 = vperm.xlu0 %3825, %v3340
        %v3827 = vpop.permute.xlu0 %3826
        %3828 = vset.pattern.permute.xlu0 0
        %3829 = vperm.xlu0 %3828, %v3342
        %v3830 = vpop.permute.xlu0 %3829
        %3831 = vset.pattern.permute.xlu0 0
        %3832 = vperm.xlu0 %3831, %v3344
        %v3833 = vpop.permute.xlu0 %3832
        %3834 = vset.pattern.permute.xlu0 0
        %3835 = vperm.xlu0 %3834, %v3346
        %v3836 = vpop.permute.xlu0 %3835
        %3837 = vset.pattern.permute.xlu0 0
        %3838 = vperm.xlu0 %3837, %v3348
        %v3839 = vpop.permute.xlu0 %3838
        %3840 = vset.pattern.permute.xlu0 0
        %3841 = vperm.xlu0 %3840, %v3350
        %v3842 = vpop.permute.xlu0 %3841
        %3843 = vset.pattern.permute.xlu0 0
        %3844 = vperm.xlu0 %3843, %v3352
        %v3845 = vpop.permute.xlu0 %3844
        %3846 = vset.pattern.permute.xlu0 0
        %3847 = vperm.xlu0 %3846, %v3354
        %v3848 = vpop.permute.xlu0 %3847
        %3849 = vset.pattern.permute.xlu0 0
        %3850 = vperm.xlu0 %3849, %v3356
        %v3851 = vpop.permute.xlu0 %3850
        %3852 = vset.pattern.permute.xlu0 0
        %3853 = vperm.xlu0 %3852, %v3358
        %v3854 = vpop.permute.xlu0 %3853
        %3855 = vset.pattern.permute.xlu0 0
        %3856 = vperm.xlu0 %3855, %v3360
        %v3857 = vpop.permute.xlu0 %3856
        %3858 = vset.pattern.permute.xlu0 0
        %3859 = vperm.xlu0 %3858, %v3362
        %v3860 = vpop.permute.xlu0 %3859
        %3861 = vset.pattern.permute.xlu0 0
        %3862 = vperm.xlu0 %3861, %v3364
        %v3863 = vpop.permute.xlu0 %3862
        %3864 = vset.pattern.permute.xlu0 0
        %3865 = vperm.xlu0 %3864, %v3366
        %v3866 = vpop.permute.xlu0 %3865
        %3867 = vset.pattern.permute.xlu0 0
        %3868 = vperm.xlu0 %3867, %v3368
        %v3869 = vpop.permute.xlu0 %3868
        %3870 = vset.pattern.permute.xlu0 0
        %3871 = vperm.xlu0 %3870, %v3370
        %v3872 = vpop.permute.xlu0 %3871
        %3873 = vset.pattern.permute.xlu0 0
        %3874 = vperm.xlu0 %3873, %v3372
        %v3875 = vpop.permute.xlu0 %3874
        %3876 = vset.pattern.permute.xlu0 0
        %3877 = vperm.xlu0 %3876, %v3374
        %v3878 = vpop.permute.xlu0 %3877
        %3879 = vset.pattern.permute.xlu0 0
        %3880 = vperm.xlu0 %3879, %v3376
        %v3881 = vpop.permute.xlu0 %3880
        %3882 = vset.pattern.permute.xlu0 0
        %3883 = vperm.xlu0 %3882, %v3378
        %v3884 = vpop.permute.xlu0 %3883
        %3885 = vset.pattern.permute.xlu0 0
        %3886 = vperm.xlu0 %3885, %v3380
        %v3887 = vpop.permute.xlu0 %3886
        %3888 = vset.pattern.permute.xlu0 0
        %3889 = vperm.xlu0 %3888, %v3382
        %v3890 = vpop.permute.xlu0 %3889
        %3891 = vset.pattern.permute.xlu0 0
        %3892 = vperm.xlu0 %3891, %v3384
        %v3893 = vpop.permute.xlu0 %3892
        %3894 = vset.pattern.permute.xlu0 0
        %3895 = vperm.xlu0 %3894, %v3386
        %v3896 = vpop.permute.xlu0 %3895
        %3897 = vset.pattern.permute.xlu0 0
        %3898 = vperm.xlu0 %3897, %v3388
        %v3899 = vpop.permute.xlu0 %3898
        %3900 = vset.pattern.permute.xlu0 0
        %3901 = vperm.xlu0 %3900, %v3390
        %v3902 = vpop.permute.xlu0 %3901
        %v3903 = vlaneseq
        %v3904 = vshrl.u32 %v3903, 7
        %v3905 = vsub.s32 %v2286, %v3904
        %v3906 = vrot.slane %v3521, %v3905
        %v3907 = vlaneseq
        %v3908 = vshrl.u32 %v3907, 7
        %v3909 = vsub.s32 %v2291, %v3908
        %v3910 = vrot.slane %v3524, %v3909
        %v3911 = vsel %vm2296, %v3910, %v3906
        %v3912 = vlaneseq
        %v3913 = vshrl.u32 %v3912, 7
        %v3914 = vsub.s32 %v2298, %v3913
        %v3915 = vrot.slane %v3527, %v3914
        %v3916 = vsel %vm2303, %v3915, %v3911
        %v3917 = vlaneseq
        %v3918 = vshrl.u32 %v3917, 7
        %v3919 = vsub.s32 %v2305, %v3918
        %v3920 = vrot.slane %v3530, %v3919
        %v3921 = vsel %vm2310, %v3920, %v3916
        %v3922 = vlaneseq
        %v3923 = vshrl.u32 %v3922, 7
        %v3924 = vsub.s32 %v2312, %v3923
        %v3925 = vrot.slane %v3533, %v3924
        %v3926 = vsel %vm2317, %v3925, %v3921
        %v3927 = vlaneseq
        %v3928 = vshrl.u32 %v3927, 7
        %v3929 = vsub.s32 %v2319, %v3928
        %v3930 = vrot.slane %v3536, %v3929
        %v3931 = vsel %vm2324, %v3930, %v3926
        %v3932 = vlaneseq
        %v3933 = vshrl.u32 %v3932, 7
        %v3934 = vsub.s32 %v2326, %v3933
        %v3935 = vrot.slane %v3539, %v3934
        %v3936 = vsel %vm2331, %v3935, %v3931
        %v3937 = vlaneseq
        %v3938 = vshrl.u32 %v3937, 7
        %v3939 = vsub.s32 %v2333, %v3938
        %v3940 = vrot.slane %v3542, %v3939
        %v3941 = vsel %vm2338, %v3940, %v3936
        %v3942 = vlaneseq
        %v3943 = vshrl.u32 %v3942, 7
        %v3944 = vsub.s32 %v2340, %v3943
        %v3945 = vrot.slane %v3545, %v3944
        %v3946 = vsel %vm2345, %v3945, %v3941
        %v3947 = vlaneseq
        %v3948 = vshrl.u32 %v3947, 7
        %v3949 = vsub.s32 %v2347, %v3948
        %v3950 = vrot.slane %v3548, %v3949
        %v3951 = vsel %vm2352, %v3950, %v3946
        %v3952 = vlaneseq
        %v3953 = vshrl.u32 %v3952, 7
        %v3954 = vsub.s32 %v2354, %v3953
        %v3955 = vrot.slane %v3551, %v3954
        %v3956 = vsel %vm2359, %v3955, %v3951
        %v3957 = vlaneseq
        %v3958 = vshrl.u32 %v3957, 7
        %v3959 = vsub.s32 %v2361, %v3958
        %v3960 = vrot.slane %v3554, %v3959
        %v3961 = vsel %vm2366, %v3960, %v3956
        %v3962 = vlaneseq
        %v3963 = vshrl.u32 %v3962, 7
        %v3964 = vsub.s32 %v2368, %v3963
        %v3965 = vrot.slane %v3557, %v3964
        %v3966 = vsel %vm2373, %v3965, %v3961
        %v3967 = vlaneseq
        %v3968 = vshrl.u32 %v3967, 7
        %v3969 = vsub.s32 %v2375, %v3968
        %v3970 = vrot.slane %v3560, %v3969
        %v3971 = vsel %vm2380, %v3970, %v3966
        %v3972 = vlaneseq
        %v3973 = vshrl.u32 %v3972, 7
        %v3974 = vsub.s32 %v2382, %v3973
        %v3975 = vrot.slane %v3563, %v3974
        %v3976 = vsel %vm2387, %v3975, %v3971
        %v3977 = vlaneseq
        %v3978 = vshrl.u32 %v3977, 7
        %v3979 = vsub.s32 %v2389, %v3978
        %v3980 = vrot.slane %v3566, %v3979
        %v3981 = vsel %vm2394, %v3980, %v3976
        %v3982 = vlaneseq
        %v3983 = vshrl.u32 %v3982, 7
        %v3984 = vsub.s32 %v2286, %v3983
        %v3985 = vrot.slane %v3569, %v3984
        %v3986 = vlaneseq
        %v3987 = vshrl.u32 %v3986, 7
        %v3988 = vsub.s32 %v2291, %v3987
        %v3989 = vrot.slane %v3572, %v3988
        %v3990 = vsel %vm2296, %v3989, %v3985
        %v3991 = vlaneseq
        %v3992 = vshrl.u32 %v3991, 7
        %v3993 = vsub.s32 %v2298, %v3992
        %v3994 = vrot.slane %v3575, %v3993
        %v3995 = vsel %vm2303, %v3994, %v3990
        %v3996 = vlaneseq
        %v3997 = vshrl.u32 %v3996, 7
        %v3998 = vsub.s32 %v2305, %v3997
        %v3999 = vrot.slane %v3578, %v3998
        %v4000 = vsel %vm2310, %v3999, %v3995
        %v4001 = vlaneseq
        %v4002 = vshrl.u32 %v4001, 7
        %v4003 = vsub.s32 %v2312, %v4002
        %v4004 = vrot.slane %v3581, %v4003
        %v4005 = vsel %vm2317, %v4004, %v4000
        %v4006 = vlaneseq
        %v4007 = vshrl.u32 %v4006, 7
        %v4008 = vsub.s32 %v2319, %v4007
        %v4009 = vrot.slane %v3584, %v4008
        %v4010 = vsel %vm2324, %v4009, %v4005
        %v4011 = vlaneseq
        %v4012 = vshrl.u32 %v4011, 7
        %v4013 = vsub.s32 %v2326, %v4012
        %v4014 = vrot.slane %v3587, %v4013
        %v4015 = vsel %vm2331, %v4014, %v4010
        %v4016 = vlaneseq
        %v4017 = vshrl.u32 %v4016, 7
        %v4018 = vsub.s32 %v2333, %v4017
        %v4019 = vrot.slane %v3590, %v4018
        %v4020 = vsel %vm2338, %v4019, %v4015
        %v4021 = vlaneseq
        %v4022 = vshrl.u32 %v4021, 7
        %v4023 = vsub.s32 %v2340, %v4022
        %v4024 = vrot.slane %v3593, %v4023
        %v4025 = vsel %vm2345, %v4024, %v4020
        %v4026 = vlaneseq
        %v4027 = vshrl.u32 %v4026, 7
        %v4028 = vsub.s32 %v2347, %v4027
        %v4029 = vrot.slane %v3596, %v4028
        %v4030 = vsel %vm2352, %v4029, %v4025
        %v4031 = vlaneseq
        %v4032 = vshrl.u32 %v4031, 7
        %v4033 = vsub.s32 %v2354, %v4032
        %v4034 = vrot.slane %v3599, %v4033
        %v4035 = vsel %vm2359, %v4034, %v4030
        %v4036 = vlaneseq
        %v4037 = vshrl.u32 %v4036, 7
        %v4038 = vsub.s32 %v2361, %v4037
        %v4039 = vrot.slane %v3602, %v4038
        %v4040 = vsel %vm2366, %v4039, %v4035
        %v4041 = vlaneseq
        %v4042 = vshrl.u32 %v4041, 7
        %v4043 = vsub.s32 %v2368, %v4042
        %v4044 = vrot.slane %v3605, %v4043
        %v4045 = vsel %vm2373, %v4044, %v4040
        %v4046 = vlaneseq
        %v4047 = vshrl.u32 %v4046, 7
        %v4048 = vsub.s32 %v2375, %v4047
        %v4049 = vrot.slane %v3608, %v4048
        %v4050 = vsel %vm2380, %v4049, %v4045
        %v4051 = vlaneseq
        %v4052 = vshrl.u32 %v4051, 7
        %v4053 = vsub.s32 %v2382, %v4052
        %v4054 = vrot.slane %v3611, %v4053
        %v4055 = vsel %vm2387, %v4054, %v4050
        %v4056 = vlaneseq
        %v4057 = vshrl.u32 %v4056, 7
        %v4058 = vsub.s32 %v2389, %v4057
        %v4059 = vrot.slane %v3614, %v4058
        %v4060 = vsel %vm2394, %v4059, %v4055
        %v4061 = vlaneseq
        %v4062 = vshrl.u32 %v4061, 7
        %v4063 = vsub.s32 %v2286, %v4062
        %v4064 = vrot.slane %v3617, %v4063
        %v4065 = vlaneseq
        %v4066 = vshrl.u32 %v4065, 7
        %v4067 = vsub.s32 %v2291, %v4066
        %v4068 = vrot.slane %v3620, %v4067
        %v4069 = vsel %vm2296, %v4068, %v4064
        %v4070 = vlaneseq
        %v4071 = vshrl.u32 %v4070, 7
        %v4072 = vsub.s32 %v2298, %v4071
        %v4073 = vrot.slane %v3623, %v4072
        %v4074 = vsel %vm2303, %v4073, %v4069
        %v4075 = vlaneseq
        %v4076 = vshrl.u32 %v4075, 7
        %v4077 = vsub.s32 %v2305, %v4076
        %v4078 = vrot.slane %v3626, %v4077
        %v4079 = vsel %vm2310, %v4078, %v4074
        %v4080 = vlaneseq
        %v4081 = vshrl.u32 %v4080, 7
        %v4082 = vsub.s32 %v2312, %v4081
        %v4083 = vrot.slane %v3629, %v4082
        %v4084 = vsel %vm2317, %v4083, %v4079
        %v4085 = vlaneseq
        %v4086 = vshrl.u32 %v4085, 7
        %v4087 = vsub.s32 %v2319, %v4086
        %v4088 = vrot.slane %v3632, %v4087
        %v4089 = vsel %vm2324, %v4088, %v4084
        %v4090 = vlaneseq
        %v4091 = vshrl.u32 %v4090, 7
        %v4092 = vsub.s32 %v2326, %v4091
        %v4093 = vrot.slane %v3635, %v4092
        %v4094 = vsel %vm2331, %v4093, %v4089
        %v4095 = vlaneseq
        %v4096 = vshrl.u32 %v4095, 7
        %v4097 = vsub.s32 %v2333, %v4096
        %v4098 = vrot.slane %v3638, %v4097
        %v4099 = vsel %vm2338, %v4098, %v4094
        %v4100 = vlaneseq
        %v4101 = vshrl.u32 %v4100, 7
        %v4102 = vsub.s32 %v2340, %v4101
        %v4103 = vrot.slane %v3641, %v4102
        %v4104 = vsel %vm2345, %v4103, %v4099
        %v4105 = vlaneseq
        %v4106 = vshrl.u32 %v4105, 7
        %v4107 = vsub.s32 %v2347, %v4106
        %v4108 = vrot.slane %v3644, %v4107
        %v4109 = vsel %vm2352, %v4108, %v4104
        %v4110 = vlaneseq
        %v4111 = vshrl.u32 %v4110, 7
        %v4112 = vsub.s32 %v2354, %v4111
        %v4113 = vrot.slane %v3647, %v4112
        %v4114 = vsel %vm2359, %v4113, %v4109
        %v4115 = vlaneseq
        %v4116 = vshrl.u32 %v4115, 7
        %v4117 = vsub.s32 %v2361, %v4116
        %v4118 = vrot.slane %v3650, %v4117
        %v4119 = vsel %vm2366, %v4118, %v4114
        %v4120 = vlaneseq
        %v4121 = vshrl.u32 %v4120, 7
        %v4122 = vsub.s32 %v2368, %v4121
        %v4123 = vrot.slane %v3653, %v4122
        %v4124 = vsel %vm2373, %v4123, %v4119
        %v4125 = vlaneseq
        %v4126 = vshrl.u32 %v4125, 7
        %v4127 = vsub.s32 %v2375, %v4126
        %v4128 = vrot.slane %v3656, %v4127
        %v4129 = vsel %vm2380, %v4128, %v4124
        %v4130 = vlaneseq
        %v4131 = vshrl.u32 %v4130, 7
        %v4132 = vsub.s32 %v2382, %v4131
        %v4133 = vrot.slane %v3659, %v4132
        %v4134 = vsel %vm2387, %v4133, %v4129
        %v4135 = vlaneseq
        %v4136 = vshrl.u32 %v4135, 7
        %v4137 = vsub.s32 %v2389, %v4136
        %v4138 = vrot.slane %v3662, %v4137
        %v4139 = vsel %vm2394, %v4138, %v4134
        %v4140 = vlaneseq
        %v4141 = vshrl.u32 %v4140, 7
        %v4142 = vsub.s32 %v2286, %v4141
        %v4143 = vrot.slane %v3665, %v4142
        %v4144 = vlaneseq
        %v4145 = vshrl.u32 %v4144, 7
        %v4146 = vsub.s32 %v2291, %v4145
        %v4147 = vrot.slane %v3668, %v4146
        %v4148 = vsel %vm2296, %v4147, %v4143
        %v4149 = vlaneseq
        %v4150 = vshrl.u32 %v4149, 7
        %v4151 = vsub.s32 %v2298, %v4150
        %v4152 = vrot.slane %v3671, %v4151
        %v4153 = vsel %vm2303, %v4152, %v4148
        %v4154 = vlaneseq
        %v4155 = vshrl.u32 %v4154, 7
        %v4156 = vsub.s32 %v2305, %v4155
        %v4157 = vrot.slane %v3674, %v4156
        %v4158 = vsel %vm2310, %v4157, %v4153
        %v4159 = vlaneseq
        %v4160 = vshrl.u32 %v4159, 7
        %v4161 = vsub.s32 %v2312, %v4160
        %v4162 = vrot.slane %v3677, %v4161
        %v4163 = vsel %vm2317, %v4162, %v4158
        %v4164 = vlaneseq
        %v4165 = vshrl.u32 %v4164, 7
        %v4166 = vsub.s32 %v2319, %v4165
        %v4167 = vrot.slane %v3680, %v4166
        %v4168 = vsel %vm2324, %v4167, %v4163
        %v4169 = vlaneseq
        %v4170 = vshrl.u32 %v4169, 7
        %v4171 = vsub.s32 %v2326, %v4170
        %v4172 = vrot.slane %v3683, %v4171
        %v4173 = vsel %vm2331, %v4172, %v4168
        %v4174 = vlaneseq
        %v4175 = vshrl.u32 %v4174, 7
        %v4176 = vsub.s32 %v2333, %v4175
        %v4177 = vrot.slane %v3686, %v4176
        %v4178 = vsel %vm2338, %v4177, %v4173
        %v4179 = vlaneseq
        %v4180 = vshrl.u32 %v4179, 7
        %v4181 = vsub.s32 %v2340, %v4180
        %v4182 = vrot.slane %v3689, %v4181
        %v4183 = vsel %vm2345, %v4182, %v4178
        %v4184 = vlaneseq
        %v4185 = vshrl.u32 %v4184, 7
        %v4186 = vsub.s32 %v2347, %v4185
        %v4187 = vrot.slane %v3692, %v4186
        %v4188 = vsel %vm2352, %v4187, %v4183
        %v4189 = vlaneseq
        %v4190 = vshrl.u32 %v4189, 7
        %v4191 = vsub.s32 %v2354, %v4190
        %v4192 = vrot.slane %v3695, %v4191
        %v4193 = vsel %vm2359, %v4192, %v4188
        %v4194 = vlaneseq
        %v4195 = vshrl.u32 %v4194, 7
        %v4196 = vsub.s32 %v2361, %v4195
        %v4197 = vrot.slane %v3698, %v4196
        %v4198 = vsel %vm2366, %v4197, %v4193
        %v4199 = vlaneseq
        %v4200 = vshrl.u32 %v4199, 7
        %v4201 = vsub.s32 %v2368, %v4200
        %v4202 = vrot.slane %v3701, %v4201
        %v4203 = vsel %vm2373, %v4202, %v4198
        %v4204 = vlaneseq
        %v4205 = vshrl.u32 %v4204, 7
        %v4206 = vsub.s32 %v2375, %v4205
        %v4207 = vrot.slane %v3704, %v4206
        %v4208 = vsel %vm2380, %v4207, %v4203
        %v4209 = vlaneseq
        %v4210 = vshrl.u32 %v4209, 7
        %v4211 = vsub.s32 %v2382, %v4210
        %v4212 = vrot.slane %v3707, %v4211
        %v4213 = vsel %vm2387, %v4212, %v4208
        %v4214 = vlaneseq
        %v4215 = vshrl.u32 %v4214, 7
        %v4216 = vsub.s32 %v2389, %v4215
        %v4217 = vrot.slane %v3710, %v4216
        %v4218 = vsel %vm2394, %v4217, %v4213
        %v4219 = vlaneseq
        %v4220 = vshrl.u32 %v4219, 7
        %v4221 = vsub.s32 %v2286, %v4220
        %v4222 = vrot.slane %v3713, %v4221
        %v4223 = vlaneseq
        %v4224 = vshrl.u32 %v4223, 7
        %v4225 = vsub.s32 %v2291, %v4224
        %v4226 = vrot.slane %v3716, %v4225
        %v4227 = vsel %vm2296, %v4226, %v4222
        %v4228 = vlaneseq
        %v4229 = vshrl.u32 %v4228, 7
        %v4230 = vsub.s32 %v2298, %v4229
        %v4231 = vrot.slane %v3719, %v4230
        %v4232 = vsel %vm2303, %v4231, %v4227
        %v4233 = vlaneseq
        %v4234 = vshrl.u32 %v4233, 7
        %v4235 = vsub.s32 %v2305, %v4234
        %v4236 = vrot.slane %v3722, %v4235
        %v4237 = vsel %vm2310, %v4236, %v4232
        %v4238 = vlaneseq
        %v4239 = vshrl.u32 %v4238, 7
        %v4240 = vsub.s32 %v2312, %v4239
        %v4241 = vrot.slane %v3725, %v4240
        %v4242 = vsel %vm2317, %v4241, %v4237
        %v4243 = vlaneseq
        %v4244 = vshrl.u32 %v4243, 7
        %v4245 = vsub.s32 %v2319, %v4244
        %v4246 = vrot.slane %v3728, %v4245
        %v4247 = vsel %vm2324, %v4246, %v4242
        %v4248 = vlaneseq
        %v4249 = vshrl.u32 %v4248, 7
        %v4250 = vsub.s32 %v2326, %v4249
        %v4251 = vrot.slane %v3731, %v4250
        %v4252 = vsel %vm2331, %v4251, %v4247
        %v4253 = vlaneseq
        %v4254 = vshrl.u32 %v4253, 7
        %v4255 = vsub.s32 %v2333, %v4254
        %v4256 = vrot.slane %v3734, %v4255
        %v4257 = vsel %vm2338, %v4256, %v4252
        %v4258 = vlaneseq
        %v4259 = vshrl.u32 %v4258, 7
        %v4260 = vsub.s32 %v2340, %v4259
        %v4261 = vrot.slane %v3737, %v4260
        %v4262 = vsel %vm2345, %v4261, %v4257
        %v4263 = vlaneseq
        %v4264 = vshrl.u32 %v4263, 7
        %v4265 = vsub.s32 %v2347, %v4264
        %v4266 = vrot.slane %v3740, %v4265
        %v4267 = vsel %vm2352, %v4266, %v4262
        %v4268 = vlaneseq
        %v4269 = vshrl.u32 %v4268, 7
        %v4270 = vsub.s32 %v2354, %v4269
        %v4271 = vrot.slane %v3743, %v4270
        %v4272 = vsel %vm2359, %v4271, %v4267
        %v4273 = vlaneseq
        %v4274 = vshrl.u32 %v4273, 7
        %v4275 = vsub.s32 %v2361, %v4274
        %v4276 = vrot.slane %v3746, %v4275
        %v4277 = vsel %vm2366, %v4276, %v4272
        %v4278 = vlaneseq
        %v4279 = vshrl.u32 %v4278, 7
        %v4280 = vsub.s32 %v2368, %v4279
        %v4281 = vrot.slane %v3749, %v4280
        %v4282 = vsel %vm2373, %v4281, %v4277
        %v4283 = vlaneseq
        %v4284 = vshrl.u32 %v4283, 7
        %v4285 = vsub.s32 %v2375, %v4284
        %v4286 = vrot.slane %v3752, %v4285
        %v4287 = vsel %vm2380, %v4286, %v4282
        %v4288 = vlaneseq
        %v4289 = vshrl.u32 %v4288, 7
        %v4290 = vsub.s32 %v2382, %v4289
        %v4291 = vrot.slane %v3755, %v4290
        %v4292 = vsel %vm2387, %v4291, %v4287
        %v4293 = vlaneseq
        %v4294 = vshrl.u32 %v4293, 7
        %v4295 = vsub.s32 %v2389, %v4294
        %v4296 = vrot.slane %v3758, %v4295
        %v4297 = vsel %vm2394, %v4296, %v4292
        %v4298 = vlaneseq
        %v4299 = vshrl.u32 %v4298, 7
        %v4300 = vsub.s32 %v2286, %v4299
        %v4301 = vrot.slane %v3761, %v4300
        %v4302 = vlaneseq
        %v4303 = vshrl.u32 %v4302, 7
        %v4304 = vsub.s32 %v2291, %v4303
        %v4305 = vrot.slane %v3764, %v4304
        %v4306 = vsel %vm2296, %v4305, %v4301
        %v4307 = vlaneseq
        %v4308 = vshrl.u32 %v4307, 7
        %v4309 = vsub.s32 %v2298, %v4308
        %v4310 = vrot.slane %v3767, %v4309
        %v4311 = vsel %vm2303, %v4310, %v4306
        %v4312 = vlaneseq
        %v4313 = vshrl.u32 %v4312, 7
        %v4314 = vsub.s32 %v2305, %v4313
        %v4315 = vrot.slane %v3770, %v4314
        %v4316 = vsel %vm2310, %v4315, %v4311
        %v4317 = vlaneseq
        %v4318 = vshrl.u32 %v4317, 7
        %v4319 = vsub.s32 %v2312, %v4318
        %v4320 = vrot.slane %v3773, %v4319
        %v4321 = vsel %vm2317, %v4320, %v4316
        %v4322 = vlaneseq
        %v4323 = vshrl.u32 %v4322, 7
        %v4324 = vsub.s32 %v2319, %v4323
        %v4325 = vrot.slane %v3776, %v4324
        %v4326 = vsel %vm2324, %v4325, %v4321
        %v4327 = vlaneseq
        %v4328 = vshrl.u32 %v4327, 7
        %v4329 = vsub.s32 %v2326, %v4328
        %v4330 = vrot.slane %v3779, %v4329
        %v4331 = vsel %vm2331, %v4330, %v4326
        %v4332 = vlaneseq
        %v4333 = vshrl.u32 %v4332, 7
        %v4334 = vsub.s32 %v2333, %v4333
        %v4335 = vrot.slane %v3782, %v4334
        %v4336 = vsel %vm2338, %v4335, %v4331
        %v4337 = vlaneseq
        %v4338 = vshrl.u32 %v4337, 7
        %v4339 = vsub.s32 %v2340, %v4338
        %v4340 = vrot.slane %v3785, %v4339
        %v4341 = vsel %vm2345, %v4340, %v4336
        %v4342 = vlaneseq
        %v4343 = vshrl.u32 %v4342, 7
        %v4344 = vsub.s32 %v2347, %v4343
        %v4345 = vrot.slane %v3788, %v4344
        %v4346 = vsel %vm2352, %v4345, %v4341
        %v4347 = vlaneseq
        %v4348 = vshrl.u32 %v4347, 7
        %v4349 = vsub.s32 %v2354, %v4348
        %v4350 = vrot.slane %v3791, %v4349
        %v4351 = vsel %vm2359, %v4350, %v4346
        %v4352 = vlaneseq
        %v4353 = vshrl.u32 %v4352, 7
        %v4354 = vsub.s32 %v2361, %v4353
        %v4355 = vrot.slane %v3794, %v4354
        %v4356 = vsel %vm2366, %v4355, %v4351
        %v4357 = vlaneseq
        %v4358 = vshrl.u32 %v4357, 7
        %v4359 = vsub.s32 %v2368, %v4358
        %v4360 = vrot.slane %v3797, %v4359
        %v4361 = vsel %vm2373, %v4360, %v4356
        %v4362 = vlaneseq
        %v4363 = vshrl.u32 %v4362, 7
        %v4364 = vsub.s32 %v2375, %v4363
        %v4365 = vrot.slane %v3800, %v4364
        %v4366 = vsel %vm2380, %v4365, %v4361
        %v4367 = vlaneseq
        %v4368 = vshrl.u32 %v4367, 7
        %v4369 = vsub.s32 %v2382, %v4368
        %v4370 = vrot.slane %v3803, %v4369
        %v4371 = vsel %vm2387, %v4370, %v4366
        %v4372 = vlaneseq
        %v4373 = vshrl.u32 %v4372, 7
        %v4374 = vsub.s32 %v2389, %v4373
        %v4375 = vrot.slane %v3806, %v4374
        %v4376 = vsel %vm2394, %v4375, %v4371
        %v4377 = vlaneseq
        %v4378 = vshrl.u32 %v4377, 7
        %v4379 = vsub.s32 %v2286, %v4378
        %v4380 = vrot.slane %v3809, %v4379
        %v4381 = vlaneseq
        %v4382 = vshrl.u32 %v4381, 7
        %v4383 = vsub.s32 %v2291, %v4382
        %v4384 = vrot.slane %v3812, %v4383
        %v4385 = vsel %vm2296, %v4384, %v4380
        %v4386 = vlaneseq
        %v4387 = vshrl.u32 %v4386, 7
        %v4388 = vsub.s32 %v2298, %v4387
        %v4389 = vrot.slane %v3815, %v4388
        %v4390 = vsel %vm2303, %v4389, %v4385
        %v4391 = vlaneseq
        %v4392 = vshrl.u32 %v4391, 7
        %v4393 = vsub.s32 %v2305, %v4392
        %v4394 = vrot.slane %v3818, %v4393
        %v4395 = vsel %vm2310, %v4394, %v4390
        %v4396 = vlaneseq
        %v4397 = vshrl.u32 %v4396, 7
        %v4398 = vsub.s32 %v2312, %v4397
        %v4399 = vrot.slane %v3821, %v4398
        %v4400 = vsel %vm2317, %v4399, %v4395
        %v4401 = vlaneseq
        %v4402 = vshrl.u32 %v4401, 7
        %v4403 = vsub.s32 %v2319, %v4402
        %v4404 = vrot.slane %v3824, %v4403
        %v4405 = vsel %vm2324, %v4404, %v4400
        %v4406 = vlaneseq
        %v4407 = vshrl.u32 %v4406, 7
        %v4408 = vsub.s32 %v2326, %v4407
        %v4409 = vrot.slane %v3827, %v4408
        %v4410 = vsel %vm2331, %v4409, %v4405
        %v4411 = vlaneseq
        %v4412 = vshrl.u32 %v4411, 7
        %v4413 = vsub.s32 %v2333, %v4412
        %v4414 = vrot.slane %v3830, %v4413
        %v4415 = vsel %vm2338, %v4414, %v4410
        %v4416 = vlaneseq
        %v4417 = vshrl.u32 %v4416, 7
        %v4418 = vsub.s32 %v2340, %v4417
        %v4419 = vrot.slane %v3833, %v4418
        %v4420 = vsel %vm2345, %v4419, %v4415
        %v4421 = vlaneseq
        %v4422 = vshrl.u32 %v4421, 7
        %v4423 = vsub.s32 %v2347, %v4422
        %v4424 = vrot.slane %v3836, %v4423
        %v4425 = vsel %vm2352, %v4424, %v4420
        %v4426 = vlaneseq
        %v4427 = vshrl.u32 %v4426, 7
        %v4428 = vsub.s32 %v2354, %v4427
        %v4429 = vrot.slane %v3839, %v4428
        %v4430 = vsel %vm2359, %v4429, %v4425
        %v4431 = vlaneseq
        %v4432 = vshrl.u32 %v4431, 7
        %v4433 = vsub.s32 %v2361, %v4432
        %v4434 = vrot.slane %v3842, %v4433
        %v4435 = vsel %vm2366, %v4434, %v4430
        %v4436 = vlaneseq
        %v4437 = vshrl.u32 %v4436, 7
        %v4438 = vsub.s32 %v2368, %v4437
        %v4439 = vrot.slane %v3845, %v4438
        %v4440 = vsel %vm2373, %v4439, %v4435
        %v4441 = vlaneseq
        %v4442 = vshrl.u32 %v4441, 7
        %v4443 = vsub.s32 %v2375, %v4442
        %v4444 = vrot.slane %v3848, %v4443
        %v4445 = vsel %vm2380, %v4444, %v4440
        %v4446 = vlaneseq
        %v4447 = vshrl.u32 %v4446, 7
        %v4448 = vsub.s32 %v2382, %v4447
        %v4449 = vrot.slane %v3851, %v4448
        %v4450 = vsel %vm2387, %v4449, %v4445
        %v4451 = vlaneseq
        %v4452 = vshrl.u32 %v4451, 7
        %v4453 = vsub.s32 %v2389, %v4452
        %v4454 = vrot.slane %v3854, %v4453
        %v4455 = vsel %vm2394, %v4454, %v4450
        %v4456 = vlaneseq
        %v4457 = vshrl.u32 %v4456, 7
        %v4458 = vsub.s32 %v2286, %v4457
        %v4459 = vrot.slane %v3857, %v4458
        %v4460 = vlaneseq
        %v4461 = vshrl.u32 %v4460, 7
        %v4462 = vsub.s32 %v2291, %v4461
        %v4463 = vrot.slane %v3860, %v4462
        %v4464 = vsel %vm2296, %v4463, %v4459
        %v4465 = vlaneseq
        %v4466 = vshrl.u32 %v4465, 7
        %v4467 = vsub.s32 %v2298, %v4466
        %v4468 = vrot.slane %v3863, %v4467
        %v4469 = vsel %vm2303, %v4468, %v4464
        %v4470 = vlaneseq
        %v4471 = vshrl.u32 %v4470, 7
        %v4472 = vsub.s32 %v2305, %v4471
        %v4473 = vrot.slane %v3866, %v4472
        %v4474 = vsel %vm2310, %v4473, %v4469
        %v4475 = vlaneseq
        %v4476 = vshrl.u32 %v4475, 7
        %v4477 = vsub.s32 %v2312, %v4476
        %v4478 = vrot.slane %v3869, %v4477
        %v4479 = vsel %vm2317, %v4478, %v4474
        %v4480 = vlaneseq
        %v4481 = vshrl.u32 %v4480, 7
        %v4482 = vsub.s32 %v2319, %v4481
        %v4483 = vrot.slane %v3872, %v4482
        %v4484 = vsel %vm2324, %v4483, %v4479
        %v4485 = vlaneseq
        %v4486 = vshrl.u32 %v4485, 7
        %v4487 = vsub.s32 %v2326, %v4486
        %v4488 = vrot.slane %v3875, %v4487
        %v4489 = vsel %vm2331, %v4488, %v4484
        %v4490 = vlaneseq
        %v4491 = vshrl.u32 %v4490, 7
        %v4492 = vsub.s32 %v2333, %v4491
        %v4493 = vrot.slane %v3878, %v4492
        %v4494 = vsel %vm2338, %v4493, %v4489
        %v4495 = vlaneseq
        %v4496 = vshrl.u32 %v4495, 7
        %v4497 = vsub.s32 %v2340, %v4496
        %v4498 = vrot.slane %v3881, %v4497
        %v4499 = vsel %vm2345, %v4498, %v4494
        %v4500 = vlaneseq
        %v4501 = vshrl.u32 %v4500, 7
        %v4502 = vsub.s32 %v2347, %v4501
        %v4503 = vrot.slane %v3884, %v4502
        %v4504 = vsel %vm2352, %v4503, %v4499
        %v4505 = vlaneseq
        %v4506 = vshrl.u32 %v4505, 7
        %v4507 = vsub.s32 %v2354, %v4506
        %v4508 = vrot.slane %v3887, %v4507
        %v4509 = vsel %vm2359, %v4508, %v4504
        %v4510 = vlaneseq
        %v4511 = vshrl.u32 %v4510, 7
        %v4512 = vsub.s32 %v2361, %v4511
        %v4513 = vrot.slane %v3890, %v4512
        %v4514 = vsel %vm2366, %v4513, %v4509
        %v4515 = vlaneseq
        %v4516 = vshrl.u32 %v4515, 7
        %v4517 = vsub.s32 %v2368, %v4516
        %v4518 = vrot.slane %v3893, %v4517
        %v4519 = vsel %vm2373, %v4518, %v4514
        %v4520 = vlaneseq
        %v4521 = vshrl.u32 %v4520, 7
        %v4522 = vsub.s32 %v2375, %v4521
        %v4523 = vrot.slane %v3896, %v4522
        %v4524 = vsel %vm2380, %v4523, %v4519
        %v4525 = vlaneseq
        %v4526 = vshrl.u32 %v4525, 7
        %v4527 = vsub.s32 %v2382, %v4526
        %v4528 = vrot.slane %v3899, %v4527
        %v4529 = vsel %vm2387, %v4528, %v4524
        %v4530 = vlaneseq
        %v4531 = vshrl.u32 %v4530, 7
        %v4532 = vsub.s32 %v2389, %v4531
        %v4533 = vrot.slane %v3902, %v4532
        %v4534 = vsel %vm2394, %v4533, %v4529
        %v4535 = vsel %vm2949, %v4060, %v3981
        %v4536 = vsel %vm2951, %v4139, %v4535
        %v4537 = vsel %vm2953, %v4218, %v4536
        %v4538 = vsel %vm2955, %v4297, %v4537
        %v4539 = vsel %vm2957, %v4376, %v4538
        %v4540 = vsel %vm2959, %v4455, %v4539
        %v4541 = vsel %vm2961, %v4534, %v4540
        %4543 = vadd.xlane.f32.xlu0 %v4541
        %v4544 = vpop.xlane.xlu0 %4543
        %v4545 = vrcp.pop %v4544
        %v4546 = vmul.f32 1.0, %v4545
        %v4548 = vlaneseq
        %v4549 = vshrl.u32 %v4548, 7
        %v4550 = vsub.s32 0, %v4549
        %v4551 = vrot.slane %v4546, %v4550
        %v4552 = vlaneseq
        %v4553 = vshrl.u32 %v4552, 7
        %v4554 = vsub.s32 1, %v4553
        %v4555 = vrot.slane %v4546, %v4554
        %v4556 = vlaneseq
        %v4557 = vshrl.u32 %v4556, 7
        %v4558 = vsub.s32 2, %v4557
        %v4559 = vrot.slane %v4546, %v4558
        %v4560 = vlaneseq
        %v4561 = vshrl.u32 %v4560, 7
        %v4562 = vsub.s32 3, %v4561
        %v4563 = vrot.slane %v4546, %v4562
        %v4564 = vlaneseq
        %v4565 = vshrl.u32 %v4564, 7
        %v4566 = vsub.s32 4, %v4565
        %v4567 = vrot.slane %v4546, %v4566
        %v4568 = vlaneseq
        %v4569 = vshrl.u32 %v4568, 7
        %v4570 = vsub.s32 5, %v4569
        %v4571 = vrot.slane %v4546, %v4570
        %v4572 = vlaneseq
        %v4573 = vshrl.u32 %v4572, 7
        %v4574 = vsub.s32 6, %v4573
        %v4575 = vrot.slane %v4546, %v4574
        %v4576 = vlaneseq
        %v4577 = vshrl.u32 %v4576, 7
        %v4578 = vsub.s32 7, %v4577
        %v4579 = vrot.slane %v4546, %v4578
        %v4588 = vmul.f32 %v3136, %v4551
        %v4589 = vmul.f32 %v3138, %v4551
        %v4590 = vmul.f32 %v3140, %v4551
        %v4591 = vmul.f32 %v3142, %v4551
        %v4592 = vmul.f32 %v3144, %v4551
        %v4593 = vmul.f32 %v3146, %v4551
        %v4594 = vmul.f32 %v3148, %v4551
        %v4595 = vmul.f32 %v3150, %v4551
        %v4596 = vmul.f32 %v3152, %v4551
        %v4597 = vmul.f32 %v3154, %v4551
        %v4598 = vmul.f32 %v3156, %v4551
        %v4599 = vmul.f32 %v3158, %v4551
        %v4600 = vmul.f32 %v3160, %v4551
        %v4601 = vmul.f32 %v3162, %v4551
        %v4602 = vmul.f32 %v3164, %v4551
        %v4603 = vmul.f32 %v3166, %v4551
        %v4604 = vmul.f32 %v3168, %v4555
        %v4605 = vmul.f32 %v3170, %v4555
        %v4606 = vmul.f32 %v3172, %v4555
        %v4607 = vmul.f32 %v3174, %v4555
        %v4608 = vmul.f32 %v3176, %v4555
        %v4609 = vmul.f32 %v3178, %v4555
        %v4610 = vmul.f32 %v3180, %v4555
        %v4611 = vmul.f32 %v3182, %v4555
        %v4612 = vmul.f32 %v3184, %v4555
        %v4613 = vmul.f32 %v3186, %v4555
        %v4614 = vmul.f32 %v3188, %v4555
        %v4615 = vmul.f32 %v3190, %v4555
        %v4616 = vmul.f32 %v3192, %v4555
        %v4617 = vmul.f32 %v3194, %v4555
        %v4618 = vmul.f32 %v3196, %v4555
        %v4619 = vmul.f32 %v3198, %v4555
        %v4620 = vmul.f32 %v3200, %v4559
        %v4621 = vmul.f32 %v3202, %v4559
        %v4622 = vmul.f32 %v3204, %v4559
        %v4623 = vmul.f32 %v3206, %v4559
        %v4624 = vmul.f32 %v3208, %v4559
        %v4625 = vmul.f32 %v3210, %v4559
        %v4626 = vmul.f32 %v3212, %v4559
        %v4627 = vmul.f32 %v3214, %v4559
        %v4628 = vmul.f32 %v3216, %v4559
        %v4629 = vmul.f32 %v3218, %v4559
        %v4630 = vmul.f32 %v3220, %v4559
        %v4631 = vmul.f32 %v3222, %v4559
        %v4632 = vmul.f32 %v3224, %v4559
        %v4633 = vmul.f32 %v3226, %v4559
        %v4634 = vmul.f32 %v3228, %v4559
        %v4635 = vmul.f32 %v3230, %v4559
        %v4636 = vmul.f32 %v3232, %v4563
        %v4637 = vmul.f32 %v3234, %v4563
        %v4638 = vmul.f32 %v3236, %v4563
        %v4639 = vmul.f32 %v3238, %v4563
        %v4640 = vmul.f32 %v3240, %v4563
        %v4641 = vmul.f32 %v3242, %v4563
        %v4642 = vmul.f32 %v3244, %v4563
        %v4643 = vmul.f32 %v3246, %v4563
        %v4644 = vmul.f32 %v3248, %v4563
        %v4645 = vmul.f32 %v3250, %v4563
        %v4646 = vmul.f32 %v3252, %v4563
        %v4647 = vmul.f32 %v3254, %v4563
        %v4648 = vmul.f32 %v3256, %v4563
        %v4649 = vmul.f32 %v3258, %v4563
        %v4650 = vmul.f32 %v3260, %v4563
        %v4651 = vmul.f32 %v3262, %v4563
        %v4652 = vmul.f32 %v3264, %v4567
        %v4653 = vmul.f32 %v3266, %v4567
        %v4654 = vmul.f32 %v3268, %v4567
        %v4655 = vmul.f32 %v3270, %v4567
        %v4656 = vmul.f32 %v3272, %v4567
        %v4657 = vmul.f32 %v3274, %v4567
        %v4658 = vmul.f32 %v3276, %v4567
        %v4659 = vmul.f32 %v3278, %v4567
        %v4660 = vmul.f32 %v3280, %v4567
        %v4661 = vmul.f32 %v3282, %v4567
        %v4662 = vmul.f32 %v3284, %v4567
        %v4663 = vmul.f32 %v3286, %v4567
        %v4664 = vmul.f32 %v3288, %v4567
        %v4665 = vmul.f32 %v3290, %v4567
        %v4666 = vmul.f32 %v3292, %v4567
        %v4667 = vmul.f32 %v3294, %v4567
        %v4668 = vmul.f32 %v3296, %v4571
        %v4669 = vmul.f32 %v3298, %v4571
        %v4670 = vmul.f32 %v3300, %v4571
        %v4671 = vmul.f32 %v3302, %v4571
        %v4672 = vmul.f32 %v3304, %v4571
        %v4673 = vmul.f32 %v3306, %v4571
        %v4674 = vmul.f32 %v3308, %v4571
        %v4675 = vmul.f32 %v3310, %v4571
        %v4676 = vmul.f32 %v3312, %v4571
        %v4677 = vmul.f32 %v3314, %v4571
        %v4678 = vmul.f32 %v3316, %v4571
        %v4679 = vmul.f32 %v3318, %v4571
        %v4680 = vmul.f32 %v3320, %v4571
        %v4681 = vmul.f32 %v3322, %v4571
        %v4682 = vmul.f32 %v3324, %v4571
        %v4683 = vmul.f32 %v3326, %v4571
        %v4684 = vmul.f32 %v3328, %v4575
        %v4685 = vmul.f32 %v3330, %v4575
        %v4686 = vmul.f32 %v3332, %v4575
        %v4687 = vmul.f32 %v3334, %v4575
        %v4688 = vmul.f32 %v3336, %v4575
        %v4689 = vmul.f32 %v3338, %v4575
        %v4690 = vmul.f32 %v3340, %v4575
        %v4691 = vmul.f32 %v3342, %v4575
        %v4692 = vmul.f32 %v3344, %v4575
        %v4693 = vmul.f32 %v3346, %v4575
        %v4694 = vmul.f32 %v3348, %v4575
        %v4695 = vmul.f32 %v3350, %v4575
        %v4696 = vmul.f32 %v3352, %v4575
        %v4697 = vmul.f32 %v3354, %v4575
        %v4698 = vmul.f32 %v3356, %v4575
        %v4699 = vmul.f32 %v3358, %v4575
        %v4700 = vmul.f32 %v3360, %v4579
        %v4701 = vmul.f32 %v3362, %v4579
        %v4702 = vmul.f32 %v3364, %v4579
        %v4703 = vmul.f32 %v3366, %v4579
        %v4704 = vmul.f32 %v3368, %v4579
        %v4705 = vmul.f32 %v3370, %v4579
        %v4706 = vmul.f32 %v3372, %v4579
        %v4707 = vmul.f32 %v3374, %v4579
        %v4708 = vmul.f32 %v3376, %v4579
        %v4709 = vmul.f32 %v3378, %v4579
        %v4710 = vmul.f32 %v3380, %v4579
        %v4711 = vmul.f32 %v3382, %v4579
        %v4712 = vmul.f32 %v3384, %v4579
        %v4713 = vmul.f32 %v3386, %v4579
        %v4714 = vmul.f32 %v3388, %v4579
        %v4715 = vmul.f32 %v3390, %v4579
        %v4716 = vld [vmem:[#allocation8] sm:$0xf]
        %v4717 = vld [vmem:[#allocation8 + $0x4] sm:$0xf]
        %v4718 = vld [vmem:[#allocation8 + $0x8] sm:$0xf]
        %v4719 = vld [vmem:[#allocation8 + $0xc] sm:$0xf]
        %v4720 = vld [vmem:[#allocation8 + $0x10] sm:$0xf]
        %v4721 = vld [vmem:[#allocation8 + $0x14] sm:$0xf]
        %v4722 = vld [vmem:[#allocation8 + $0x18] sm:$0xf]
        %v4723 = vld [vmem:[#allocation8 + $0x1c] sm:$0xf]
        %v4724 = vld [vmem:[#allocation8 + $0x20] sm:$0xf]
        %v4725 = vld [vmem:[#allocation8 + $0x24] sm:$0xf]
        %v4726 = vld [vmem:[#allocation8 + $0x28] sm:$0xf]
        %v4727 = vld [vmem:[#allocation8 + $0x2c] sm:$0xf]
        %v4728 = vld [vmem:[#allocation8 + $0x30] sm:$0xf]
        %v4729 = vld [vmem:[#allocation8 + $0x34] sm:$0xf]
        %v4730 = vld [vmem:[#allocation8 + $0x38] sm:$0xf]
        %v4731 = vld [vmem:[#allocation8 + $0x3c] sm:$0xf]
        %v4732 = vld [vmem:[#allocation8 + $0x40] sm:$0xf]
        %v4733 = vld [vmem:[#allocation8 + $0x44] sm:$0xf]
        %v4734 = vld [vmem:[#allocation8 + $0x48] sm:$0xf]
        %v4735 = vld [vmem:[#allocation8 + $0x4c] sm:$0xf]
        %v4736 = vld [vmem:[#allocation8 + $0x50] sm:$0xf]
        %v4737 = vld [vmem:[#allocation8 + $0x54] sm:$0xf]
        %v4738 = vld [vmem:[#allocation8 + $0x58] sm:$0xf]
        %v4739 = vld [vmem:[#allocation8 + $0x5c] sm:$0xf]
        %v4740 = vld [vmem:[#allocation8 + $0x60] sm:$0xf]
        %v4741 = vld [vmem:[#allocation8 + $0x64] sm:$0xf]
        %v4742 = vld [vmem:[#allocation8 + $0x68] sm:$0xf]
        %v4743 = vld [vmem:[#allocation8 + $0x6c] sm:$0xf]
        %v4744 = vld [vmem:[#allocation8 + $0x70] sm:$0xf]
        %v4745 = vld [vmem:[#allocation8 + $0x74] sm:$0xf]
        %v4746 = vld [vmem:[#allocation8 + $0x78] sm:$0xf]
        %v4747 = vld [vmem:[#allocation8 + $0x7c] sm:$0xf]
        %v4748 = vld [vmem:[#allocation8 + $0x80] sm:$0xf]
        %v4749 = vld [vmem:[#allocation8 + $0x84] sm:$0xf]
        %v4750 = vld [vmem:[#allocation8 + $0x88] sm:$0xf]
        %v4751 = vld [vmem:[#allocation8 + $0x8c] sm:$0xf]
        %v4752 = vld [vmem:[#allocation8 + $0x90] sm:$0xf]
        %v4753 = vld [vmem:[#allocation8 + $0x94] sm:$0xf]
        %v4754 = vld [vmem:[#allocation8 + $0x98] sm:$0xf]
        %v4755 = vld [vmem:[#allocation8 + $0x9c] sm:$0xf]
        %v4756 = vld [vmem:[#allocation8 + $0xa0] sm:$0xf]
        %v4757 = vld [vmem:[#allocation8 + $0xa4] sm:$0xf]
        %v4758 = vld [vmem:[#allocation8 + $0xa8] sm:$0xf]
        %v4759 = vld [vmem:[#allocation8 + $0xac] sm:$0xf]
        %v4760 = vld [vmem:[#allocation8 + $0xb0] sm:$0xf]
        %v4761 = vld [vmem:[#allocation8 + $0xb4] sm:$0xf]
        %v4762 = vld [vmem:[#allocation8 + $0xb8] sm:$0xf]
        %v4763 = vld [vmem:[#allocation8 + $0xbc] sm:$0xf]
        %v4764 = vld [vmem:[#allocation8 + $0xc0] sm:$0xf]
        %v4765 = vld [vmem:[#allocation8 + $0xc4] sm:$0xf]
        %v4766 = vld [vmem:[#allocation8 + $0xc8] sm:$0xf]
        %v4767 = vld [vmem:[#allocation8 + $0xcc] sm:$0xf]
        %v4768 = vld [vmem:[#allocation8 + $0xd0] sm:$0xf]
        %v4769 = vld [vmem:[#allocation8 + $0xd4] sm:$0xf]
        %v4770 = vld [vmem:[#allocation8 + $0xd8] sm:$0xf]
        %v4771 = vld [vmem:[#allocation8 + $0xdc] sm:$0xf]
        %v4772 = vld [vmem:[#allocation8 + $0xe0] sm:$0xf]
        %v4773 = vld [vmem:[#allocation8 + $0xe4] sm:$0xf]
        %v4774 = vld [vmem:[#allocation8 + $0xe8] sm:$0xf]
        %v4775 = vld [vmem:[#allocation8 + $0xec] sm:$0xf]
        %v4776 = vld [vmem:[#allocation8 + $0xf0] sm:$0xf]
        %v4777 = vld [vmem:[#allocation8 + $0xf4] sm:$0xf]
        %v4778 = vld [vmem:[#allocation8 + $0xf8] sm:$0xf]
        %v4779 = vld [vmem:[#allocation8 + $0xfc] sm:$0xf]
        %v4780 = vld [vmem:[#allocation8 + $0x100] sm:$0xf]
        %v4781 = vld [vmem:[#allocation8 + $0x104] sm:$0xf]
        %v4782 = vld [vmem:[#allocation8 + $0x108] sm:$0xf]
        %v4783 = vld [vmem:[#allocation8 + $0x10c] sm:$0xf]
        %v4784 = vld [vmem:[#allocation8 + $0x110] sm:$0xf]
        %v4785 = vld [vmem:[#allocation8 + $0x114] sm:$0xf]
        %v4786 = vld [vmem:[#allocation8 + $0x118] sm:$0xf]
        %v4787 = vld [vmem:[#allocation8 + $0x11c] sm:$0xf]
        %v4788 = vld [vmem:[#allocation8 + $0x120] sm:$0xf]
        %v4789 = vld [vmem:[#allocation8 + $0x124] sm:$0xf]
        %v4790 = vld [vmem:[#allocation8 + $0x128] sm:$0xf]
        %v4791 = vld [vmem:[#allocation8 + $0x12c] sm:$0xf]
        %v4792 = vld [vmem:[#allocation8 + $0x130] sm:$0xf]
        %v4793 = vld [vmem:[#allocation8 + $0x134] sm:$0xf]
        %v4794 = vld [vmem:[#allocation8 + $0x138] sm:$0xf]
        %v4795 = vld [vmem:[#allocation8 + $0x13c] sm:$0xf]
        %v4796 = vld [vmem:[#allocation8 + $0x140] sm:$0xf]
        %v4797 = vld [vmem:[#allocation8 + $0x144] sm:$0xf]
        %v4798 = vld [vmem:[#allocation8 + $0x148] sm:$0xf]
        %v4799 = vld [vmem:[#allocation8 + $0x14c] sm:$0xf]
        %v4800 = vld [vmem:[#allocation8 + $0x150] sm:$0xf]
        %v4801 = vld [vmem:[#allocation8 + $0x154] sm:$0xf]
        %v4802 = vld [vmem:[#allocation8 + $0x158] sm:$0xf]
        %v4803 = vld [vmem:[#allocation8 + $0x15c] sm:$0xf]
        %v4804 = vld [vmem:[#allocation8 + $0x160] sm:$0xf]
        %v4805 = vld [vmem:[#allocation8 + $0x164] sm:$0xf]
        %v4806 = vld [vmem:[#allocation8 + $0x168] sm:$0xf]
        %v4807 = vld [vmem:[#allocation8 + $0x16c] sm:$0xf]
        %v4808 = vld [vmem:[#allocation8 + $0x170] sm:$0xf]
        %v4809 = vld [vmem:[#allocation8 + $0x174] sm:$0xf]
        %v4810 = vld [vmem:[#allocation8 + $0x178] sm:$0xf]
        %v4811 = vld [vmem:[#allocation8 + $0x17c] sm:$0xf]
        %v4812 = vld [vmem:[#allocation8 + $0x180] sm:$0xf]
        %v4813 = vld [vmem:[#allocation8 + $0x184] sm:$0xf]
        %v4814 = vld [vmem:[#allocation8 + $0x188] sm:$0xf]
        %v4815 = vld [vmem:[#allocation8 + $0x18c] sm:$0xf]
        %v4816 = vld [vmem:[#allocation8 + $0x190] sm:$0xf]
        %v4817 = vld [vmem:[#allocation8 + $0x194] sm:$0xf]
        %v4818 = vld [vmem:[#allocation8 + $0x198] sm:$0xf]
        %v4819 = vld [vmem:[#allocation8 + $0x19c] sm:$0xf]
        %v4820 = vld [vmem:[#allocation8 + $0x1a0] sm:$0xf]
        %v4821 = vld [vmem:[#allocation8 + $0x1a4] sm:$0xf]
        %v4822 = vld [vmem:[#allocation8 + $0x1a8] sm:$0xf]
        %v4823 = vld [vmem:[#allocation8 + $0x1ac] sm:$0xf]
        %v4824 = vld [vmem:[#allocation8 + $0x1b0] sm:$0xf]
        %v4825 = vld [vmem:[#allocation8 + $0x1b4] sm:$0xf]
        %v4826 = vld [vmem:[#allocation8 + $0x1b8] sm:$0xf]
        %v4827 = vld [vmem:[#allocation8 + $0x1bc] sm:$0xf]
        %v4828 = vld [vmem:[#allocation8 + $0x1c0] sm:$0xf]
        %v4829 = vld [vmem:[#allocation8 + $0x1c4] sm:$0xf]
        %v4830 = vld [vmem:[#allocation8 + $0x1c8] sm:$0xf]
        %v4831 = vld [vmem:[#allocation8 + $0x1cc] sm:$0xf]
        %v4832 = vld [vmem:[#allocation8 + $0x1d0] sm:$0xf]
        %v4833 = vld [vmem:[#allocation8 + $0x1d4] sm:$0xf]
        %v4834 = vld [vmem:[#allocation8 + $0x1d8] sm:$0xf]
        %v4835 = vld [vmem:[#allocation8 + $0x1dc] sm:$0xf]
        %v4836 = vld [vmem:[#allocation8 + $0x1e0] sm:$0xf]
        %v4837 = vld [vmem:[#allocation8 + $0x1e4] sm:$0xf]
        %v4838 = vld [vmem:[#allocation8 + $0x1e8] sm:$0xf]
        %v4839 = vld [vmem:[#allocation8 + $0x1ec] sm:$0xf]
        %v4840 = vld [vmem:[#allocation8 + $0x1f0] sm:$0xf]
        %v4841 = vld [vmem:[#allocation8 + $0x1f4] sm:$0xf]
        %v4842 = vld [vmem:[#allocation8 + $0x1f8] sm:$0xf]
        %v4843 = vld [vmem:[#allocation8 + $0x1fc] sm:$0xf]
        %v4844 = vunpack.c.l.bf16 %v4716
        %v4845 = vunpack.c.l.bf16 %v4717
        %v4846 = vunpack.c.l.bf16 %v4718
        %v4847 = vunpack.c.l.bf16 %v4719
        %v4848 = vunpack.c.l.bf16 %v4720
        %v4849 = vunpack.c.l.bf16 %v4721
        %v4850 = vunpack.c.l.bf16 %v4722
        %v4851 = vunpack.c.l.bf16 %v4723
        %v4852 = vunpack.c.l.bf16 %v4724
        %v4853 = vunpack.c.l.bf16 %v4725
        %v4854 = vunpack.c.l.bf16 %v4726
        %v4855 = vunpack.c.l.bf16 %v4727
        %v4856 = vunpack.c.l.bf16 %v4728
        %v4857 = vunpack.c.l.bf16 %v4729
        %v4858 = vunpack.c.l.bf16 %v4730
        %v4859 = vunpack.c.l.bf16 %v4731
        %v4860 = vunpack.c.l.bf16 %v4732
        %v4861 = vunpack.c.l.bf16 %v4733
        %v4862 = vunpack.c.l.bf16 %v4734
        %v4863 = vunpack.c.l.bf16 %v4735
        %v4864 = vunpack.c.l.bf16 %v4736
        %v4865 = vunpack.c.l.bf16 %v4737
        %v4866 = vunpack.c.l.bf16 %v4738
        %v4867 = vunpack.c.l.bf16 %v4739
        %v4868 = vunpack.c.l.bf16 %v4740
        %v4869 = vunpack.c.l.bf16 %v4741
        %v4870 = vunpack.c.l.bf16 %v4742
        %v4871 = vunpack.c.l.bf16 %v4743
        %v4872 = vunpack.c.l.bf16 %v4744
        %v4873 = vunpack.c.l.bf16 %v4745
        %v4874 = vunpack.c.l.bf16 %v4746
        %v4875 = vunpack.c.l.bf16 %v4747
        %v4876 = vunpack.c.l.bf16 %v4748
        %v4877 = vunpack.c.l.bf16 %v4749
        %v4878 = vunpack.c.l.bf16 %v4750
        %v4879 = vunpack.c.l.bf16 %v4751
        %v4880 = vunpack.c.l.bf16 %v4752
        %v4881 = vunpack.c.l.bf16 %v4753
        %v4882 = vunpack.c.l.bf16 %v4754
        %v4883 = vunpack.c.l.bf16 %v4755
        %v4884 = vunpack.c.l.bf16 %v4756
        %v4885 = vunpack.c.l.bf16 %v4757
        %v4886 = vunpack.c.l.bf16 %v4758
        %v4887 = vunpack.c.l.bf16 %v4759
        %v4888 = vunpack.c.l.bf16 %v4760
        %v4889 = vunpack.c.l.bf16 %v4761
        %v4890 = vunpack.c.l.bf16 %v4762
        %v4891 = vunpack.c.l.bf16 %v4763
        %v4892 = vunpack.c.l.bf16 %v4764
        %v4893 = vunpack.c.l.bf16 %v4765
        %v4894 = vunpack.c.l.bf16 %v4766
        %v4895 = vunpack.c.l.bf16 %v4767
        %v4896 = vunpack.c.l.bf16 %v4768
        %v4897 = vunpack.c.l.bf16 %v4769
        %v4898 = vunpack.c.l.bf16 %v4770
        %v4899 = vunpack.c.l.bf16 %v4771
        %v4900 = vunpack.c.l.bf16 %v4772
        %v4901 = vunpack.c.l.bf16 %v4773
        %v4902 = vunpack.c.l.bf16 %v4774
        %v4903 = vunpack.c.l.bf16 %v4775
        %v4904 = vunpack.c.l.bf16 %v4776
        %v4905 = vunpack.c.l.bf16 %v4777
        %v4906 = vunpack.c.l.bf16 %v4778
        %v4907 = vunpack.c.l.bf16 %v4779
        %v4908 = vunpack.c.l.bf16 %v4780
        %v4909 = vunpack.c.l.bf16 %v4781
        %v4910 = vunpack.c.l.bf16 %v4782
        %v4911 = vunpack.c.l.bf16 %v4783
        %v4912 = vunpack.c.l.bf16 %v4784
        %v4913 = vunpack.c.l.bf16 %v4785
        %v4914 = vunpack.c.l.bf16 %v4786
        %v4915 = vunpack.c.l.bf16 %v4787
        %v4916 = vunpack.c.l.bf16 %v4788
        %v4917 = vunpack.c.l.bf16 %v4789
        %v4918 = vunpack.c.l.bf16 %v4790
        %v4919 = vunpack.c.l.bf16 %v4791
        %v4920 = vunpack.c.l.bf16 %v4792
        %v4921 = vunpack.c.l.bf16 %v4793
        %v4922 = vunpack.c.l.bf16 %v4794
        %v4923 = vunpack.c.l.bf16 %v4795
        %v4924 = vunpack.c.l.bf16 %v4796
        %v4925 = vunpack.c.l.bf16 %v4797
        %v4926 = vunpack.c.l.bf16 %v4798
        %v4927 = vunpack.c.l.bf16 %v4799
        %v4928 = vunpack.c.l.bf16 %v4800
        %v4929 = vunpack.c.l.bf16 %v4801
        %v4930 = vunpack.c.l.bf16 %v4802
        %v4931 = vunpack.c.l.bf16 %v4803
        %v4932 = vunpack.c.l.bf16 %v4804
        %v4933 = vunpack.c.l.bf16 %v4805
        %v4934 = vunpack.c.l.bf16 %v4806
        %v4935 = vunpack.c.l.bf16 %v4807
        %v4936 = vunpack.c.l.bf16 %v4808
        %v4937 = vunpack.c.l.bf16 %v4809
        %v4938 = vunpack.c.l.bf16 %v4810
        %v4939 = vunpack.c.l.bf16 %v4811
        %v4940 = vunpack.c.l.bf16 %v4812
        %v4941 = vunpack.c.l.bf16 %v4813
        %v4942 = vunpack.c.l.bf16 %v4814
        %v4943 = vunpack.c.l.bf16 %v4815
        %v4944 = vunpack.c.l.bf16 %v4816
        %v4945 = vunpack.c.l.bf16 %v4817
        %v4946 = vunpack.c.l.bf16 %v4818
        %v4947 = vunpack.c.l.bf16 %v4819
        %v4948 = vunpack.c.l.bf16 %v4820
        %v4949 = vunpack.c.l.bf16 %v4821
        %v4950 = vunpack.c.l.bf16 %v4822
        %v4951 = vunpack.c.l.bf16 %v4823
        %v4952 = vunpack.c.l.bf16 %v4824
        %v4953 = vunpack.c.l.bf16 %v4825
        %v4954 = vunpack.c.l.bf16 %v4826
        %v4955 = vunpack.c.l.bf16 %v4827
        %v4956 = vunpack.c.l.bf16 %v4828
        %v4957 = vunpack.c.l.bf16 %v4829
        %v4958 = vunpack.c.l.bf16 %v4830
        %v4959 = vunpack.c.l.bf16 %v4831
        %v4960 = vunpack.c.l.bf16 %v4832
        %v4961 = vunpack.c.l.bf16 %v4833
        %v4962 = vunpack.c.l.bf16 %v4834
        %v4963 = vunpack.c.l.bf16 %v4835
        %v4964 = vunpack.c.l.bf16 %v4836
        %v4965 = vunpack.c.l.bf16 %v4837
        %v4966 = vunpack.c.l.bf16 %v4838
        %v4967 = vunpack.c.l.bf16 %v4839
        %v4968 = vunpack.c.l.bf16 %v4840
        %v4969 = vunpack.c.l.bf16 %v4841
        %v4970 = vunpack.c.l.bf16 %v4842
        %v4971 = vunpack.c.l.bf16 %v4843
        %4973 = vset.pattern.permute.xlu0 0
        %4974 = vperm.xlu0 %4973, %v4588
        %v4975 = vpop.permute.xlu0 %4974
        %4978 = vset.pattern.permute.xlu0 0
        %4979 = vperm.xlu0 %4978, %v4589
        %v4980 = vpop.permute.xlu0 %4979
        %4983 = vset.pattern.permute.xlu0 0
        %4984 = vperm.xlu0 %4983, %v4590
        %v4985 = vpop.permute.xlu0 %4984
        %4988 = vset.pattern.permute.xlu0 0
        %4989 = vperm.xlu0 %4988, %v4591
        %v4990 = vpop.permute.xlu0 %4989
        %4993 = vset.pattern.permute.xlu0 0
        %4994 = vperm.xlu0 %4993, %v4592
        %v4995 = vpop.permute.xlu0 %4994
        %4998 = vset.pattern.permute.xlu0 0
        %4999 = vperm.xlu0 %4998, %v4593
        %v5000 = vpop.permute.xlu0 %4999
        %5003 = vset.pattern.permute.xlu0 0
        %5004 = vperm.xlu0 %5003, %v4594
        %v5005 = vpop.permute.xlu0 %5004
        %5008 = vset.pattern.permute.xlu0 0
        %5009 = vperm.xlu0 %5008, %v4595
        %v5010 = vpop.permute.xlu0 %5009
        %5013 = vset.pattern.permute.xlu0 0
        %5014 = vperm.xlu0 %5013, %v4596
        %v5015 = vpop.permute.xlu0 %5014
        %5018 = vset.pattern.permute.xlu0 0
        %5019 = vperm.xlu0 %5018, %v4597
        %v5020 = vpop.permute.xlu0 %5019
        %5023 = vset.pattern.permute.xlu0 0
        %5024 = vperm.xlu0 %5023, %v4598
        %v5025 = vpop.permute.xlu0 %5024
        %5028 = vset.pattern.permute.xlu0 0
        %5029 = vperm.xlu0 %5028, %v4599
        %v5030 = vpop.permute.xlu0 %5029
        %5033 = vset.pattern.permute.xlu0 0
        %5034 = vperm.xlu0 %5033, %v4600
        %v5035 = vpop.permute.xlu0 %5034
        %5038 = vset.pattern.permute.xlu0 0
        %5039 = vperm.xlu0 %5038, %v4601
        %v5040 = vpop.permute.xlu0 %5039
        %5043 = vset.pattern.permute.xlu0 0
        %5044 = vperm.xlu0 %5043, %v4602
        %v5045 = vpop.permute.xlu0 %5044
        %5048 = vset.pattern.permute.xlu0 0
        %5049 = vperm.xlu0 %5048, %v4603
        %v5050 = vpop.permute.xlu0 %5049
        %5053 = vset.pattern.permute.xlu0 0
        %5054 = vperm.xlu0 %5053, %v4604
        %v5055 = vpop.permute.xlu0 %5054
        %5058 = vset.pattern.permute.xlu0 0
        %5059 = vperm.xlu0 %5058, %v4605
        %v5060 = vpop.permute.xlu0 %5059
        %5063 = vset.pattern.permute.xlu0 0
        %5064 = vperm.xlu0 %5063, %v4606
        %v5065 = vpop.permute.xlu0 %5064
        %5068 = vset.pattern.permute.xlu0 0
        %5069 = vperm.xlu0 %5068, %v4607
        %v5070 = vpop.permute.xlu0 %5069
        %5073 = vset.pattern.permute.xlu0 0
        %5074 = vperm.xlu0 %5073, %v4608
        %v5075 = vpop.permute.xlu0 %5074
        %5078 = vset.pattern.permute.xlu0 0
        %5079 = vperm.xlu0 %5078, %v4609
        %v5080 = vpop.permute.xlu0 %5079
        %5083 = vset.pattern.permute.xlu0 0
        %5084 = vperm.xlu0 %5083, %v4610
        %v5085 = vpop.permute.xlu0 %5084
        %5088 = vset.pattern.permute.xlu0 0
        %5089 = vperm.xlu0 %5088, %v4611
        %v5090 = vpop.permute.xlu0 %5089
        %5093 = vset.pattern.permute.xlu0 0
        %5094 = vperm.xlu0 %5093, %v4612
        %v5095 = vpop.permute.xlu0 %5094
        %5098 = vset.pattern.permute.xlu0 0
        %5099 = vperm.xlu0 %5098, %v4613
        %v5100 = vpop.permute.xlu0 %5099
        %5103 = vset.pattern.permute.xlu0 0
        %5104 = vperm.xlu0 %5103, %v4614
        %v5105 = vpop.permute.xlu0 %5104
        %5108 = vset.pattern.permute.xlu0 0
        %5109 = vperm.xlu0 %5108, %v4615
        %v5110 = vpop.permute.xlu0 %5109
        %5113 = vset.pattern.permute.xlu0 0
        %5114 = vperm.xlu0 %5113, %v4616
        %v5115 = vpop.permute.xlu0 %5114
        %5118 = vset.pattern.permute.xlu0 0
        %5119 = vperm.xlu0 %5118, %v4617
        %v5120 = vpop.permute.xlu0 %5119
        %5123 = vset.pattern.permute.xlu0 0
        %5124 = vperm.xlu0 %5123, %v4618
        %v5125 = vpop.permute.xlu0 %5124
        %5128 = vset.pattern.permute.xlu0 0
        %5129 = vperm.xlu0 %5128, %v4619
        %v5130 = vpop.permute.xlu0 %5129
        %5133 = vset.pattern.permute.xlu0 0
        %5134 = vperm.xlu0 %5133, %v4620
        %v5135 = vpop.permute.xlu0 %5134
        %5138 = vset.pattern.permute.xlu0 0
        %5139 = vperm.xlu0 %5138, %v4621
        %v5140 = vpop.permute.xlu0 %5139
        %5143 = vset.pattern.permute.xlu0 0
        %5144 = vperm.xlu0 %5143, %v4622
        %v5145 = vpop.permute.xlu0 %5144
        %5148 = vset.pattern.permute.xlu0 0
        %5149 = vperm.xlu0 %5148, %v4623
        %v5150 = vpop.permute.xlu0 %5149
        %5153 = vset.pattern.permute.xlu0 0
        %5154 = vperm.xlu0 %5153, %v4624
        %v5155 = vpop.permute.xlu0 %5154
        %5158 = vset.pattern.permute.xlu0 0
        %5159 = vperm.xlu0 %5158, %v4625
        %v5160 = vpop.permute.xlu0 %5159
        %5163 = vset.pattern.permute.xlu0 0
        %5164 = vperm.xlu0 %5163, %v4626
        %v5165 = vpop.permute.xlu0 %5164
        %5168 = vset.pattern.permute.xlu0 0
        %5169 = vperm.xlu0 %5168, %v4627
        %v5170 = vpop.permute.xlu0 %5169
        %5173 = vset.pattern.permute.xlu0 0
        %5174 = vperm.xlu0 %5173, %v4628
        %v5175 = vpop.permute.xlu0 %5174
        %5178 = vset.pattern.permute.xlu0 0
        %5179 = vperm.xlu0 %5178, %v4629
        %v5180 = vpop.permute.xlu0 %5179
        %5183 = vset.pattern.permute.xlu0 0
        %5184 = vperm.xlu0 %5183, %v4630
        %v5185 = vpop.permute.xlu0 %5184
        %5188 = vset.pattern.permute.xlu0 0
        %5189 = vperm.xlu0 %5188, %v4631
        %v5190 = vpop.permute.xlu0 %5189
        %5193 = vset.pattern.permute.xlu0 0
        %5194 = vperm.xlu0 %5193, %v4632
        %v5195 = vpop.permute.xlu0 %5194
        %5198 = vset.pattern.permute.xlu0 0
        %5199 = vperm.xlu0 %5198, %v4633
        %v5200 = vpop.permute.xlu0 %5199
        %5203 = vset.pattern.permute.xlu0 0
        %5204 = vperm.xlu0 %5203, %v4634
        %v5205 = vpop.permute.xlu0 %5204
        %5208 = vset.pattern.permute.xlu0 0
        %5209 = vperm.xlu0 %5208, %v4635
        %v5210 = vpop.permute.xlu0 %5209
        %5213 = vset.pattern.permute.xlu0 0
        %5214 = vperm.xlu0 %5213, %v4636
        %v5215 = vpop.permute.xlu0 %5214
        %5218 = vset.pattern.permute.xlu0 0
        %5219 = vperm.xlu0 %5218, %v4637
        %v5220 = vpop.permute.xlu0 %5219
        %5223 = vset.pattern.permute.xlu0 0
        %5224 = vperm.xlu0 %5223, %v4638
        %v5225 = vpop.permute.xlu0 %5224
        %5228 = vset.pattern.permute.xlu0 0
        %5229 = vperm.xlu0 %5228, %v4639
        %v5230 = vpop.permute.xlu0 %5229
        %5233 = vset.pattern.permute.xlu0 0
        %5234 = vperm.xlu0 %5233, %v4640
        %v5235 = vpop.permute.xlu0 %5234
        %5238 = vset.pattern.permute.xlu0 0
        %5239 = vperm.xlu0 %5238, %v4641
        %v5240 = vpop.permute.xlu0 %5239
        %5243 = vset.pattern.permute.xlu0 0
        %5244 = vperm.xlu0 %5243, %v4642
        %v5245 = vpop.permute.xlu0 %5244
        %5248 = vset.pattern.permute.xlu0 0
        %5249 = vperm.xlu0 %5248, %v4643
        %v5250 = vpop.permute.xlu0 %5249
        %5253 = vset.pattern.permute.xlu0 0
        %5254 = vperm.xlu0 %5253, %v4644
        %v5255 = vpop.permute.xlu0 %5254
        %5258 = vset.pattern.permute.xlu0 0
        %5259 = vperm.xlu0 %5258, %v4645
        %v5260 = vpop.permute.xlu0 %5259
        %5263 = vset.pattern.permute.xlu0 0
        %5264 = vperm.xlu0 %5263, %v4646
        %v5265 = vpop.permute.xlu0 %5264
        %5268 = vset.pattern.permute.xlu0 0
        %5269 = vperm.xlu0 %5268, %v4647
        %v5270 = vpop.permute.xlu0 %5269
        %5273 = vset.pattern.permute.xlu0 0
        %5274 = vperm.xlu0 %5273, %v4648
        %v5275 = vpop.permute.xlu0 %5274
        %5278 = vset.pattern.permute.xlu0 0
        %5279 = vperm.xlu0 %5278, %v4649
        %v5280 = vpop.permute.xlu0 %5279
        %5283 = vset.pattern.permute.xlu0 0
        %5284 = vperm.xlu0 %5283, %v4650
        %v5285 = vpop.permute.xlu0 %5284
        %5288 = vset.pattern.permute.xlu0 0
        %5289 = vperm.xlu0 %5288, %v4651
        %v5290 = vpop.permute.xlu0 %5289
        %5293 = vset.pattern.permute.xlu0 0
        %5294 = vperm.xlu0 %5293, %v4652
        %v5295 = vpop.permute.xlu0 %5294
        %5298 = vset.pattern.permute.xlu0 0
        %5299 = vperm.xlu0 %5298, %v4653
        %v5300 = vpop.permute.xlu0 %5299
        %5303 = vset.pattern.permute.xlu0 0
        %5304 = vperm.xlu0 %5303, %v4654
        %v5305 = vpop.permute.xlu0 %5304
        %5308 = vset.pattern.permute.xlu0 0
        %5309 = vperm.xlu0 %5308, %v4655
        %v5310 = vpop.permute.xlu0 %5309
        %5313 = vset.pattern.permute.xlu0 0
        %5314 = vperm.xlu0 %5313, %v4656
        %v5315 = vpop.permute.xlu0 %5314
        %5318 = vset.pattern.permute.xlu0 0
        %5319 = vperm.xlu0 %5318, %v4657
        %v5320 = vpop.permute.xlu0 %5319
        %5323 = vset.pattern.permute.xlu0 0
        %5324 = vperm.xlu0 %5323, %v4658
        %v5325 = vpop.permute.xlu0 %5324
        %5328 = vset.pattern.permute.xlu0 0
        %5329 = vperm.xlu0 %5328, %v4659
        %v5330 = vpop.permute.xlu0 %5329
        %5333 = vset.pattern.permute.xlu0 0
        %5334 = vperm.xlu0 %5333, %v4660
        %v5335 = vpop.permute.xlu0 %5334
        %5338 = vset.pattern.permute.xlu0 0
        %5339 = vperm.xlu0 %5338, %v4661
        %v5340 = vpop.permute.xlu0 %5339
        %5343 = vset.pattern.permute.xlu0 0
        %5344 = vperm.xlu0 %5343, %v4662
        %v5345 = vpop.permute.xlu0 %5344
        %5348 = vset.pattern.permute.xlu0 0
        %5349 = vperm.xlu0 %5348, %v4663
        %v5350 = vpop.permute.xlu0 %5349
        %5353 = vset.pattern.permute.xlu0 0
        %5354 = vperm.xlu0 %5353, %v4664
        %v5355 = vpop.permute.xlu0 %5354
        %5358 = vset.pattern.permute.xlu0 0
        %5359 = vperm.xlu0 %5358, %v4665
        %v5360 = vpop.permute.xlu0 %5359
        %5363 = vset.pattern.permute.xlu0 0
        %5364 = vperm.xlu0 %5363, %v4666
        %v5365 = vpop.permute.xlu0 %5364
        %5368 = vset.pattern.permute.xlu0 0
        %5369 = vperm.xlu0 %5368, %v4667
        %v5370 = vpop.permute.xlu0 %5369
        %5373 = vset.pattern.permute.xlu0 0
        %5374 = vperm.xlu0 %5373, %v4668
        %v5375 = vpop.permute.xlu0 %5374
        %5378 = vset.pattern.permute.xlu0 0
        %5379 = vperm.xlu0 %5378, %v4669
        %v5380 = vpop.permute.xlu0 %5379
        %5383 = vset.pattern.permute.xlu0 0
        %5384 = vperm.xlu0 %5383, %v4670
        %v5385 = vpop.permute.xlu0 %5384
        %5388 = vset.pattern.permute.xlu0 0
        %5389 = vperm.xlu0 %5388, %v4671
        %v5390 = vpop.permute.xlu0 %5389
        %5393 = vset.pattern.permute.xlu0 0
        %5394 = vperm.xlu0 %5393, %v4672
        %v5395 = vpop.permute.xlu0 %5394
        %5398 = vset.pattern.permute.xlu0 0
        %5399 = vperm.xlu0 %5398, %v4673
        %v5400 = vpop.permute.xlu0 %5399
        %5403 = vset.pattern.permute.xlu0 0
        %5404 = vperm.xlu0 %5403, %v4674
        %v5405 = vpop.permute.xlu0 %5404
        %5408 = vset.pattern.permute.xlu0 0
        %5409 = vperm.xlu0 %5408, %v4675
        %v5410 = vpop.permute.xlu0 %5409
        %5413 = vset.pattern.permute.xlu0 0
        %5414 = vperm.xlu0 %5413, %v4676
        %v5415 = vpop.permute.xlu0 %5414
        %5418 = vset.pattern.permute.xlu0 0
        %5419 = vperm.xlu0 %5418, %v4677
        %v5420 = vpop.permute.xlu0 %5419
        %5423 = vset.pattern.permute.xlu0 0
        %5424 = vperm.xlu0 %5423, %v4678
        %v5425 = vpop.permute.xlu0 %5424
        %5428 = vset.pattern.permute.xlu0 0
        %5429 = vperm.xlu0 %5428, %v4679
        %v5430 = vpop.permute.xlu0 %5429
        %5433 = vset.pattern.permute.xlu0 0
        %5434 = vperm.xlu0 %5433, %v4680
        %v5435 = vpop.permute.xlu0 %5434
        %5438 = vset.pattern.permute.xlu0 0
        %5439 = vperm.xlu0 %5438, %v4681
        %v5440 = vpop.permute.xlu0 %5439
        %5443 = vset.pattern.permute.xlu0 0
        %5444 = vperm.xlu0 %5443, %v4682
        %v5445 = vpop.permute.xlu0 %5444
        %5448 = vset.pattern.permute.xlu0 0
        %5449 = vperm.xlu0 %5448, %v4683
        %v5450 = vpop.permute.xlu0 %5449
        %5453 = vset.pattern.permute.xlu0 0
        %5454 = vperm.xlu0 %5453, %v4684
        %v5455 = vpop.permute.xlu0 %5454
        %5458 = vset.pattern.permute.xlu0 0
        %5459 = vperm.xlu0 %5458, %v4685
        %v5460 = vpop.permute.xlu0 %5459
        %5463 = vset.pattern.permute.xlu0 0
        %5464 = vperm.xlu0 %5463, %v4686
        %v5465 = vpop.permute.xlu0 %5464
        %5468 = vset.pattern.permute.xlu0 0
        %5469 = vperm.xlu0 %5468, %v4687
        %v5470 = vpop.permute.xlu0 %5469
        %5473 = vset.pattern.permute.xlu0 0
        %5474 = vperm.xlu0 %5473, %v4688
        %v5475 = vpop.permute.xlu0 %5474
        %5478 = vset.pattern.permute.xlu0 0
        %5479 = vperm.xlu0 %5478, %v4689
        %v5480 = vpop.permute.xlu0 %5479
        %5483 = vset.pattern.permute.xlu0 0
        %5484 = vperm.xlu0 %5483, %v4690
        %v5485 = vpop.permute.xlu0 %5484
        %5488 = vset.pattern.permute.xlu0 0
        %5489 = vperm.xlu0 %5488, %v4691
        %v5490 = vpop.permute.xlu0 %5489
        %5493 = vset.pattern.permute.xlu0 0
        %5494 = vperm.xlu0 %5493, %v4692
        %v5495 = vpop.permute.xlu0 %5494
        %5498 = vset.pattern.permute.xlu0 0
        %5499 = vperm.xlu0 %5498, %v4693
        %v5500 = vpop.permute.xlu0 %5499
        %5503 = vset.pattern.permute.xlu0 0
        %5504 = vperm.xlu0 %5503, %v4694
        %v5505 = vpop.permute.xlu0 %5504
        %5508 = vset.pattern.permute.xlu0 0
        %5509 = vperm.xlu0 %5508, %v4695
        %v5510 = vpop.permute.xlu0 %5509
        %5513 = vset.pattern.permute.xlu0 0
        %5514 = vperm.xlu0 %5513, %v4696
        %v5515 = vpop.permute.xlu0 %5514
        %5518 = vset.pattern.permute.xlu0 0
        %5519 = vperm.xlu0 %5518, %v4697
        %v5520 = vpop.permute.xlu0 %5519
        %5523 = vset.pattern.permute.xlu0 0
        %5524 = vperm.xlu0 %5523, %v4698
        %v5525 = vpop.permute.xlu0 %5524
        %5528 = vset.pattern.permute.xlu0 0
        %5529 = vperm.xlu0 %5528, %v4699
        %v5530 = vpop.permute.xlu0 %5529
        %5533 = vset.pattern.permute.xlu0 0
        %5534 = vperm.xlu0 %5533, %v4700
        %v5535 = vpop.permute.xlu0 %5534
        %5538 = vset.pattern.permute.xlu0 0
        %5539 = vperm.xlu0 %5538, %v4701
        %v5540 = vpop.permute.xlu0 %5539
        %5543 = vset.pattern.permute.xlu0 0
        %5544 = vperm.xlu0 %5543, %v4702
        %v5545 = vpop.permute.xlu0 %5544
        %5548 = vset.pattern.permute.xlu0 0
        %5549 = vperm.xlu0 %5548, %v4703
        %v5550 = vpop.permute.xlu0 %5549
        %5553 = vset.pattern.permute.xlu0 0
        %5554 = vperm.xlu0 %5553, %v4704
        %v5555 = vpop.permute.xlu0 %5554
        %5558 = vset.pattern.permute.xlu0 0
        %5559 = vperm.xlu0 %5558, %v4705
        %v5560 = vpop.permute.xlu0 %5559
        %5563 = vset.pattern.permute.xlu0 0
        %5564 = vperm.xlu0 %5563, %v4706
        %v5565 = vpop.permute.xlu0 %5564
        %5568 = vset.pattern.permute.xlu0 0
        %5569 = vperm.xlu0 %5568, %v4707
        %v5570 = vpop.permute.xlu0 %5569
        %5573 = vset.pattern.permute.xlu0 0
        %5574 = vperm.xlu0 %5573, %v4708
        %v5575 = vpop.permute.xlu0 %5574
        %5578 = vset.pattern.permute.xlu0 0
        %5579 = vperm.xlu0 %5578, %v4709
        %v5580 = vpop.permute.xlu0 %5579
        %5583 = vset.pattern.permute.xlu0 0
        %5584 = vperm.xlu0 %5583, %v4710
        %v5585 = vpop.permute.xlu0 %5584
        %5588 = vset.pattern.permute.xlu0 0
        %5589 = vperm.xlu0 %5588, %v4711
        %v5590 = vpop.permute.xlu0 %5589
        %5593 = vset.pattern.permute.xlu0 0
        %5594 = vperm.xlu0 %5593, %v4712
        %v5595 = vpop.permute.xlu0 %5594
        %5598 = vset.pattern.permute.xlu0 0
        %5599 = vperm.xlu0 %5598, %v4713
        %v5600 = vpop.permute.xlu0 %5599
        %5603 = vset.pattern.permute.xlu0 0
        %5604 = vperm.xlu0 %5603, %v4714
        %v5605 = vpop.permute.xlu0 %5604
        %5608 = vset.pattern.permute.xlu0 0
        %5609 = vperm.xlu0 %5608, %v4715
        %v5610 = vpop.permute.xlu0 %5609
        %v5612 = vmul.f32 %v4975, %v4844
        %v5613 = vmul.f32 %v4980, %v4845
        %v5614 = vmul.f32 %v4985, %v4846
        %v5615 = vmul.f32 %v4990, %v4847
        %v5616 = vmul.f32 %v4995, %v4848
        %v5617 = vmul.f32 %v5000, %v4849
        %v5618 = vmul.f32 %v5005, %v4850
        %v5619 = vmul.f32 %v5010, %v4851
        %v5620 = vmul.f32 %v5015, %v4852
        %v5621 = vmul.f32 %v5020, %v4853
        %v5622 = vmul.f32 %v5025, %v4854
        %v5623 = vmul.f32 %v5030, %v4855
        %v5624 = vmul.f32 %v5035, %v4856
        %v5625 = vmul.f32 %v5040, %v4857
        %v5626 = vmul.f32 %v5045, %v4858
        %v5627 = vmul.f32 %v5050, %v4859
        %v5628 = vmul.f32 %v5055, %v4860
        %v5629 = vmul.f32 %v5060, %v4861
        %v5630 = vmul.f32 %v5065, %v4862
        %v5631 = vmul.f32 %v5070, %v4863
        %v5632 = vmul.f32 %v5075, %v4864
        %v5633 = vmul.f32 %v5080, %v4865
        %v5634 = vmul.f32 %v5085, %v4866
        %v5635 = vmul.f32 %v5090, %v4867
        %v5636 = vmul.f32 %v5095, %v4868
        %v5637 = vmul.f32 %v5100, %v4869
        %v5638 = vmul.f32 %v5105, %v4870
        %v5639 = vmul.f32 %v5110, %v4871
        %v5640 = vmul.f32 %v5115, %v4872
        %v5641 = vmul.f32 %v5120, %v4873
        %v5642 = vmul.f32 %v5125, %v4874
        %v5643 = vmul.f32 %v5130, %v4875
        %v5644 = vmul.f32 %v5135, %v4876
        %v5645 = vmul.f32 %v5140, %v4877
        %v5646 = vmul.f32 %v5145, %v4878
        %v5647 = vmul.f32 %v5150, %v4879
        %v5648 = vmul.f32 %v5155, %v4880
        %v5649 = vmul.f32 %v5160, %v4881
        %v5650 = vmul.f32 %v5165, %v4882
        %v5651 = vmul.f32 %v5170, %v4883
        %v5652 = vmul.f32 %v5175, %v4884
        %v5653 = vmul.f32 %v5180, %v4885
        %v5654 = vmul.f32 %v5185, %v4886
        %v5655 = vmul.f32 %v5190, %v4887
        %v5656 = vmul.f32 %v5195, %v4888
        %v5657 = vmul.f32 %v5200, %v4889
        %v5658 = vmul.f32 %v5205, %v4890
        %v5659 = vmul.f32 %v5210, %v4891
        %v5660 = vmul.f32 %v5215, %v4892
        %v5661 = vmul.f32 %v5220, %v4893
        %v5662 = vmul.f32 %v5225, %v4894
        %v5663 = vmul.f32 %v5230, %v4895
        %v5664 = vmul.f32 %v5235, %v4896
        %v5665 = vmul.f32 %v5240, %v4897
        %v5666 = vmul.f32 %v5245, %v4898
        %v5667 = vmul.f32 %v5250, %v4899
        %v5668 = vmul.f32 %v5255, %v4900
        %v5669 = vmul.f32 %v5260, %v4901
        %v5670 = vmul.f32 %v5265, %v4902
        %v5671 = vmul.f32 %v5270, %v4903
        %v5672 = vmul.f32 %v5275, %v4904
        %v5673 = vmul.f32 %v5280, %v4905
        %v5674 = vmul.f32 %v5285, %v4906
        %v5675 = vmul.f32 %v5290, %v4907
        %v5676 = vmul.f32 %v5295, %v4908
        %v5677 = vmul.f32 %v5300, %v4909
        %v5678 = vmul.f32 %v5305, %v4910
        %v5679 = vmul.f32 %v5310, %v4911
        %v5680 = vmul.f32 %v5315, %v4912
        %v5681 = vmul.f32 %v5320, %v4913
        %v5682 = vmul.f32 %v5325, %v4914
        %v5683 = vmul.f32 %v5330, %v4915
        %v5684 = vmul.f32 %v5335, %v4916
        %v5685 = vmul.f32 %v5340, %v4917
        %v5686 = vmul.f32 %v5345, %v4918
        %v5687 = vmul.f32 %v5350, %v4919
        %v5688 = vmul.f32 %v5355, %v4920
        %v5689 = vmul.f32 %v5360, %v4921
        %v5690 = vmul.f32 %v5365, %v4922
        %v5691 = vmul.f32 %v5370, %v4923
        %v5692 = vmul.f32 %v5375, %v4924
        %v5693 = vmul.f32 %v5380, %v4925
        %v5694 = vmul.f32 %v5385, %v4926
        %v5695 = vmul.f32 %v5390, %v4927
        %v5696 = vmul.f32 %v5395, %v4928
        %v5697 = vmul.f32 %v5400, %v4929
        %v5698 = vmul.f32 %v5405, %v4930
        %v5699 = vmul.f32 %v5410, %v4931
        %v5700 = vmul.f32 %v5415, %v4932
        %v5701 = vmul.f32 %v5420, %v4933
        %v5702 = vmul.f32 %v5425, %v4934
        %v5703 = vmul.f32 %v5430, %v4935
        %v5704 = vmul.f32 %v5435, %v4936
        %v5705 = vmul.f32 %v5440, %v4937
        %v5706 = vmul.f32 %v5445, %v4938
        %v5707 = vmul.f32 %v5450, %v4939
        %v5708 = vmul.f32 %v5455, %v4940
        %v5709 = vmul.f32 %v5460, %v4941
        %v5710 = vmul.f32 %v5465, %v4942
        %v5711 = vmul.f32 %v5470, %v4943
        %v5712 = vmul.f32 %v5475, %v4944
        %v5713 = vmul.f32 %v5480, %v4945
        %v5714 = vmul.f32 %v5485, %v4946
        %v5715 = vmul.f32 %v5490, %v4947
        %v5716 = vmul.f32 %v5495, %v4948
        %v5717 = vmul.f32 %v5500, %v4949
        %v5718 = vmul.f32 %v5505, %v4950
        %v5719 = vmul.f32 %v5510, %v4951
        %v5720 = vmul.f32 %v5515, %v4952
        %v5721 = vmul.f32 %v5520, %v4953
        %v5722 = vmul.f32 %v5525, %v4954
        %v5723 = vmul.f32 %v5530, %v4955
        %v5724 = vmul.f32 %v5535, %v4956
        %v5725 = vmul.f32 %v5540, %v4957
        %v5726 = vmul.f32 %v5545, %v4958
        %v5727 = vmul.f32 %v5550, %v4959
        %v5728 = vmul.f32 %v5555, %v4960
        %v5729 = vmul.f32 %v5560, %v4961
        %v5730 = vmul.f32 %v5565, %v4962
        %v5731 = vmul.f32 %v5570, %v4963
        %v5732 = vmul.f32 %v5575, %v4964
        %v5733 = vmul.f32 %v5580, %v4965
        %v5734 = vmul.f32 %v5585, %v4966
        %v5735 = vmul.f32 %v5590, %v4967
        %v5736 = vmul.f32 %v5595, %v4968
        %v5737 = vmul.f32 %v5600, %v4969
        %v5738 = vmul.f32 %v5605, %v4970
        %v5739 = vmul.f32 %v5610, %v4971
        %v5740 = vadd.f32 %v5612, %v5613
        %v5741 = vadd.f32 %v5740, %v5614
        %v5742 = vadd.f32 %v5741, %v5615
        %v5743 = vadd.f32 %v5742, %v5616
        %v5744 = vadd.f32 %v5743, %v5617
        %v5745 = vadd.f32 %v5744, %v5618
        %v5746 = vadd.f32 %v5745, %v5619
        %v5747 = vadd.f32 %v5746, %v5620
        %v5748 = vadd.f32 %v5747, %v5621
        %v5749 = vadd.f32 %v5748, %v5622
        %v5750 = vadd.f32 %v5749, %v5623
        %v5751 = vadd.f32 %v5750, %v5624
        %v5752 = vadd.f32 %v5751, %v5625
        %v5753 = vadd.f32 %v5752, %v5626
        %v5754 = vadd.f32 %v5753, %v5627
        %v5755 = vrot.slane %v5754, 4
        %v5756 = vadd.f32 %v5754, %v5755
        %v5757 = vrot.slane %v5756, 2
        %v5758 = vadd.f32 %v5756, %v5757
        %v5759 = vrot.slane %v5758, 1
        %v5760 = vadd.f32 %v5758, %v5759
        %v5761 = vadd.f32 %v5628, %v5629
        %v5762 = vadd.f32 %v5761, %v5630
        %v5763 = vadd.f32 %v5762, %v5631
        %v5764 = vadd.f32 %v5763, %v5632
        %v5765 = vadd.f32 %v5764, %v5633
        %v5766 = vadd.f32 %v5765, %v5634
        %v5767 = vadd.f32 %v5766, %v5635
        %v5768 = vadd.f32 %v5767, %v5636
        %v5769 = vadd.f32 %v5768, %v5637
        %v5770 = vadd.f32 %v5769, %v5638
        %v5771 = vadd.f32 %v5770, %v5639
        %v5772 = vadd.f32 %v5771, %v5640
        %v5773 = vadd.f32 %v5772, %v5641
        %v5774 = vadd.f32 %v5773, %v5642
        %v5775 = vadd.f32 %v5774, %v5643
        %v5776 = vrot.slane %v5775, 4
        %v5777 = vadd.f32 %v5775, %v5776
        %v5778 = vrot.slane %v5777, 2
        %v5779 = vadd.f32 %v5777, %v5778
        %v5780 = vrot.slane %v5779, 1
        %v5781 = vadd.f32 %v5779, %v5780
        %v5782 = vadd.f32 %v5644, %v5645
        %v5783 = vadd.f32 %v5782, %v5646
        %v5784 = vadd.f32 %v5783, %v5647
        %v5785 = vadd.f32 %v5784, %v5648
        %v5786 = vadd.f32 %v5785, %v5649
        %v5787 = vadd.f32 %v5786, %v5650
        %v5788 = vadd.f32 %v5787, %v5651
        %v5789 = vadd.f32 %v5788, %v5652
        %v5790 = vadd.f32 %v5789, %v5653
        %v5791 = vadd.f32 %v5790, %v5654
        %v5792 = vadd.f32 %v5791, %v5655
        %v5793 = vadd.f32 %v5792, %v5656
        %v5794 = vadd.f32 %v5793, %v5657
        %v5795 = vadd.f32 %v5794, %v5658
        %v5796 = vadd.f32 %v5795, %v5659
        %v5797 = vrot.slane %v5796, 4
        %v5798 = vadd.f32 %v5796, %v5797
        %v5799 = vrot.slane %v5798, 2
        %v5800 = vadd.f32 %v5798, %v5799
        %v5801 = vrot.slane %v5800, 1
        %v5802 = vadd.f32 %v5800, %v5801
        %v5803 = vadd.f32 %v5660, %v5661
        %v5804 = vadd.f32 %v5803, %v5662
        %v5805 = vadd.f32 %v5804, %v5663
        %v5806 = vadd.f32 %v5805, %v5664
        %v5807 = vadd.f32 %v5806, %v5665
        %v5808 = vadd.f32 %v5807, %v5666
        %v5809 = vadd.f32 %v5808, %v5667
        %v5810 = vadd.f32 %v5809, %v5668
        %v5811 = vadd.f32 %v5810, %v5669
        %v5812 = vadd.f32 %v5811, %v5670
        %v5813 = vadd.f32 %v5812, %v5671
        %v5814 = vadd.f32 %v5813, %v5672
        %v5815 = vadd.f32 %v5814, %v5673
        %v5816 = vadd.f32 %v5815, %v5674
        %v5817 = vadd.f32 %v5816, %v5675
        %v5818 = vrot.slane %v5817, 4
        %v5819 = vadd.f32 %v5817, %v5818
        %v5820 = vrot.slane %v5819, 2
        %v5821 = vadd.f32 %v5819, %v5820
        %v5822 = vrot.slane %v5821, 1
        %v5823 = vadd.f32 %v5821, %v5822
        %v5824 = vadd.f32 %v5676, %v5677
        %v5825 = vadd.f32 %v5824, %v5678
        %v5826 = vadd.f32 %v5825, %v5679
        %v5827 = vadd.f32 %v5826, %v5680
        %v5828 = vadd.f32 %v5827, %v5681
        %v5829 = vadd.f32 %v5828, %v5682
        %v5830 = vadd.f32 %v5829, %v5683
        %v5831 = vadd.f32 %v5830, %v5684
        %v5832 = vadd.f32 %v5831, %v5685
        %v5833 = vadd.f32 %v5832, %v5686
        %v5834 = vadd.f32 %v5833, %v5687
        %v5835 = vadd.f32 %v5834, %v5688
        %v5836 = vadd.f32 %v5835, %v5689
        %v5837 = vadd.f32 %v5836, %v5690
        %v5838 = vadd.f32 %v5837, %v5691
        %v5839 = vrot.slane %v5838, 4
        %v5840 = vadd.f32 %v5838, %v5839
        %v5841 = vrot.slane %v5840, 2
        %v5842 = vadd.f32 %v5840, %v5841
        %v5843 = vrot.slane %v5842, 1
        %v5844 = vadd.f32 %v5842, %v5843
        %v5845 = vadd.f32 %v5692, %v5693
        %v5846 = vadd.f32 %v5845, %v5694
        %v5847 = vadd.f32 %v5846, %v5695
        %v5848 = vadd.f32 %v5847, %v5696
        %v5849 = vadd.f32 %v5848, %v5697
        %v5850 = vadd.f32 %v5849, %v5698
        %v5851 = vadd.f32 %v5850, %v5699
        %v5852 = vadd.f32 %v5851, %v5700
        %v5853 = vadd.f32 %v5852, %v5701
        %v5854 = vadd.f32 %v5853, %v5702
        %v5855 = vadd.f32 %v5854, %v5703
        %v5856 = vadd.f32 %v5855, %v5704
        %v5857 = vadd.f32 %v5856, %v5705
        %v5858 = vadd.f32 %v5857, %v5706
        %v5859 = vadd.f32 %v5858, %v5707
        %v5860 = vrot.slane %v5859, 4
        %v5861 = vadd.f32 %v5859, %v5860
        %v5862 = vrot.slane %v5861, 2
        %v5863 = vadd.f32 %v5861, %v5862
        %v5864 = vrot.slane %v5863, 1
        %v5865 = vadd.f32 %v5863, %v5864
        %v5866 = vadd.f32 %v5708, %v5709
        %v5867 = vadd.f32 %v5866, %v5710
        %v5868 = vadd.f32 %v5867, %v5711
        %v5869 = vadd.f32 %v5868, %v5712
        %v5870 = vadd.f32 %v5869, %v5713
        %v5871 = vadd.f32 %v5870, %v5714
        %v5872 = vadd.f32 %v5871, %v5715
        %v5873 = vadd.f32 %v5872, %v5716
        %v5874 = vadd.f32 %v5873, %v5717
        %v5875 = vadd.f32 %v5874, %v5718
        %v5876 = vadd.f32 %v5875, %v5719
        %v5877 = vadd.f32 %v5876, %v5720
        %v5878 = vadd.f32 %v5877, %v5721
        %v5879 = vadd.f32 %v5878, %v5722
        %v5880 = vadd.f32 %v5879, %v5723
        %v5881 = vrot.slane %v5880, 4
        %v5882 = vadd.f32 %v5880, %v5881
        %v5883 = vrot.slane %v5882, 2
        %v5884 = vadd.f32 %v5882, %v5883
        %v5885 = vrot.slane %v5884, 1
        %v5886 = vadd.f32 %v5884, %v5885
        %v5887 = vadd.f32 %v5724, %v5725
        %v5888 = vadd.f32 %v5887, %v5726
        %v5889 = vadd.f32 %v5888, %v5727
        %v5890 = vadd.f32 %v5889, %v5728
        %v5891 = vadd.f32 %v5890, %v5729
        %v5892 = vadd.f32 %v5891, %v5730
        %v5893 = vadd.f32 %v5892, %v5731
        %v5894 = vadd.f32 %v5893, %v5732
        %v5895 = vadd.f32 %v5894, %v5733
        %v5896 = vadd.f32 %v5895, %v5734
        %v5897 = vadd.f32 %v5896, %v5735
        %v5898 = vadd.f32 %v5897, %v5736
        %v5899 = vadd.f32 %v5898, %v5737
        %v5900 = vadd.f32 %v5899, %v5738
        %v5901 = vadd.f32 %v5900, %v5739
        %v5902 = vrot.slane %v5901, 4
        %v5903 = vadd.f32 %v5901, %v5902
        %v5904 = vrot.slane %v5903, 2
        %v5905 = vadd.f32 %v5903, %v5904
        %v5906 = vrot.slane %v5905, 1
        %v5907 = vadd.f32 %v5905, %v5906
        %v5908 = vld [vmem:[#allocation2] sm:$0xff]
        %v5909 = vpack.c.bf16 %v5760, %v5760
        %v5910 = vpack.c.bf16 %v5781, %v5781
        %v5911 = vpack.c.bf16 %v5802, %v5802
        %v5912 = vpack.c.bf16 %v5823, %v5823
        %v5913 = vpack.c.bf16 %v5844, %v5844
        %v5914 = vpack.c.bf16 %v5865, %v5865
        %v5915 = vpack.c.bf16 %v5886, %v5886
        %v5916 = vpack.c.bf16 %v5907, %v5907
        %v5917 = vld [vmem:[#allocation12] sm:$0xff]
        %v5918 = vld [vmem:[#allocation12 + $0x8] sm:$0xf]
        %v5919 = vld [vmem:[#allocation12 + $0xc] sm:$0xff]
        %v5920 = vld [vmem:[#allocation12 + $0x14] sm:$0xf]
        %v5921 = vld [vmem:[#allocation12 + $0x18] sm:$0xff]
        %v5922 = vld [vmem:[#allocation12 + $0x20] sm:$0xf]
        %v5923 = vld [vmem:[#allocation12 + $0x24] sm:$0xff]
        %v5924 = vld [vmem:[#allocation12 + $0x2c] sm:$0xf]
        %v5925 = vld [vmem:[#allocation12 + $0x30] sm:$0xff]
        %v5926 = vld [vmem:[#allocation12 + $0x38] sm:$0xf]
        %v5927 = vld [vmem:[#allocation12 + $0x3c] sm:$0xff]
        %v5928 = vld [vmem:[#allocation12 + $0x44] sm:$0xf]
        %v5929 = vld [vmem:[#allocation12 + $0x48] sm:$0xff]
        %v5930 = vld [vmem:[#allocation12 + $0x50] sm:$0xf]
        %v5931 = vld [vmem:[#allocation12 + $0x54] sm:$0xff]
        %v5932 = vld [vmem:[#allocation12 + $0x5c] sm:$0xf]
        %v5933 = vld [vmem:[#allocation12 + $0x60] sm:$0xff]
        %v5934 = vld [vmem:[#allocation12 + $0x68] sm:$0xf]
        %v5935 = vld [vmem:[#allocation12 + $0x6c] sm:$0xff]
        %v5936 = vld [vmem:[#allocation12 + $0x74] sm:$0xf]
        %v5937 = vld [vmem:[#allocation12 + $0x78] sm:$0xff]
        %v5938 = vld [vmem:[#allocation12 + $0x80] sm:$0xf]
        %v5939 = vld [vmem:[#allocation12 + $0x84] sm:$0xff]
        %v5940 = vld [vmem:[#allocation12 + $0x8c] sm:$0xf]
        %v5941 = vld [vmem:[#allocation12 + $0x90] sm:$0xff]
        %v5942 = vld [vmem:[#allocation12 + $0x98] sm:$0xf]
        %v5943 = vld [vmem:[#allocation12 + $0x9c] sm:$0xff]
        %v5944 = vld [vmem:[#allocation12 + $0xa4] sm:$0xf]
        %v5945 = vld [vmem:[#allocation12 + $0xa8] sm:$0xff]
        %v5946 = vld [vmem:[#allocation12 + $0xb0] sm:$0xf]
        %v5947 = vld [vmem:[#allocation12 + $0xb4] sm:$0xff]
        %v5948 = vld [vmem:[#allocation12 + $0xbc] sm:$0xf]
        %v5949 = vld [vmem:[#allocation14] sm:$0xff]
        %v5950 = vld [vmem:[#allocation14 + $0x8] sm:$0xf]
        %v5951 = vld [vmem:[#allocation14 + $0xc] sm:$0xff]
        %v5952 = vld [vmem:[#allocation14 + $0x14] sm:$0xf]
        %v5953 = vld [vmem:[#allocation14 + $0x18] sm:$0xff]
        %v5954 = vld [vmem:[#allocation14 + $0x20] sm:$0xf]
        %v5955 = vld [vmem:[#allocation14 + $0x24] sm:$0xff]
        %v5956 = vld [vmem:[#allocation14 + $0x2c] sm:$0xf]
        %v5957 = vld [vmem:[#allocation14 + $0x30] sm:$0xff]
        %v5958 = vld [vmem:[#allocation14 + $0x38] sm:$0xf]
        %v5959 = vld [vmem:[#allocation14 + $0x3c] sm:$0xff]
        %v5960 = vld [vmem:[#allocation14 + $0x44] sm:$0xf]
        %v5961 = vld [vmem:[#allocation14 + $0x48] sm:$0xff]
        %v5962 = vld [vmem:[#allocation14 + $0x50] sm:$0xf]
        %v5963 = vld [vmem:[#allocation14 + $0x54] sm:$0xff]
        %v5964 = vld [vmem:[#allocation14 + $0x5c] sm:$0xf]
        %v5965 = vld [vmem:[#allocation14 + $0x60] sm:$0xff]
        %v5966 = vld [vmem:[#allocation14 + $0x68] sm:$0xf]
        %v5967 = vld [vmem:[#allocation14 + $0x6c] sm:$0xff]
        %v5968 = vld [vmem:[#allocation14 + $0x74] sm:$0xf]
        %v5969 = vld [vmem:[#allocation14 + $0x78] sm:$0xff]
        %v5970 = vld [vmem:[#allocation14 + $0x80] sm:$0xf]
        %v5971 = vld [vmem:[#allocation14 + $0x84] sm:$0xff]
        %v5972 = vld [vmem:[#allocation14 + $0x8c] sm:$0xf]
        %v5973 = vld [vmem:[#allocation14 + $0x90] sm:$0xff]
        %v5974 = vld [vmem:[#allocation14 + $0x98] sm:$0xf]
        %v5975 = vld [vmem:[#allocation14 + $0x9c] sm:$0xff]
        %v5976 = vld [vmem:[#allocation14 + $0xa4] sm:$0xf]
        %v5977 = vld [vmem:[#allocation14 + $0xa8] sm:$0xff]
        %v5978 = vld [vmem:[#allocation14 + $0xb0] sm:$0xf]
        %v5979 = vld [vmem:[#allocation14 + $0xb4] sm:$0xff]
        %v5980 = vld [vmem:[#allocation14 + $0xbc] sm:$0xf]
        %v6013 = vunpack.c.l.b16 %v5949
        %v6014 = vunpack.c.h.b16 %v5949
        %v6015 = vunpack.c.l.b16 %v5950
        %v6016 = vunpack.c.l.b16 %v5951
        %v6017 = vunpack.c.h.b16 %v5951
        %v6018 = vunpack.c.l.b16 %v5952
        %v6019 = vunpack.c.l.b16 %v5953
        %v6020 = vunpack.c.h.b16 %v5953
        %v6021 = vunpack.c.l.b16 %v5954
        %v6022 = vunpack.c.l.b16 %v5955
        %v6023 = vunpack.c.h.b16 %v5955
        %v6024 = vunpack.c.l.b16 %v5956
        %v6025 = vunpack.c.l.b16 %v5957
        %v6026 = vunpack.c.h.b16 %v5957
        %v6027 = vunpack.c.l.b16 %v5958
        %v6028 = vunpack.c.l.b16 %v5959
        %v6029 = vunpack.c.h.b16 %v5959
        %v6030 = vunpack.c.l.b16 %v5960
        %v6031 = vunpack.c.l.b16 %v5961
        %v6032 = vunpack.c.h.b16 %v5961
        %v6033 = vunpack.c.l.b16 %v5962
        %v6034 = vunpack.c.l.b16 %v5963
        %v6035 = vunpack.c.h.b16 %v5963
        %v6036 = vunpack.c.l.b16 %v5964
        %v6037 = vunpack.c.l.b16 %v5965
        %v6038 = vunpack.c.h.b16 %v5965
        %v6039 = vunpack.c.l.b16 %v5966
        %v6040 = vunpack.c.l.b16 %v5967
        %v6041 = vunpack.c.h.b16 %v5967
        %v6042 = vunpack.c.l.b16 %v5968
        %v6043 = vunpack.c.l.b16 %v5969
        %v6044 = vunpack.c.h.b16 %v5969
        %v6045 = vunpack.c.l.b16 %v5970
        %v6046 = vunpack.c.l.b16 %v5971
        %v6047 = vunpack.c.h.b16 %v5971
        %v6048 = vunpack.c.l.b16 %v5972
        %v6049 = vunpack.c.l.b16 %v5973
        %v6050 = vunpack.c.h.b16 %v5973
        %v6051 = vunpack.c.l.b16 %v5974
        %v6052 = vunpack.c.l.b16 %v5975
        %v6053 = vunpack.c.h.b16 %v5975
        %v6054 = vunpack.c.l.b16 %v5976
        %v6055 = vunpack.c.l.b16 %v5977
        %v6056 = vunpack.c.h.b16 %v5977
        %v6057 = vunpack.c.l.b16 %v5978
        %v6058 = vunpack.c.l.b16 %v5979
        %v6059 = vunpack.c.h.b16 %v5979
        %v6060 = vunpack.c.l.b16 %v5980
        %v6061 = vpack.c.b16 %v6016, %v6013
        %v6062 = vpack.c.b16 %v6017, %v6014
        %v6063 = vpack.c.b16 %v6018, %v6015
        %v6064 = vpack.c.b16 %v6022, %v6019
        %v6065 = vpack.c.b16 %v6023, %v6020
        %v6066 = vpack.c.b16 %v6024, %v6021
        %v6067 = vpack.c.b16 %v6028, %v6025
        %v6068 = vpack.c.b16 %v6029, %v6026
        %v6069 = vpack.c.b16 %v6030, %v6027
        %v6070 = vpack.c.b16 %v6034, %v6031
        %v6071 = vpack.c.b16 %v6035, %v6032
        %v6072 = vpack.c.b16 %v6036, %v6033
        %v6073 = vpack.c.b16 %v6040, %v6037
        %v6074 = vpack.c.b16 %v6041, %v6038
        %v6075 = vpack.c.b16 %v6042, %v6039
        %v6076 = vpack.c.b16 %v6046, %v6043
        %v6077 = vpack.c.b16 %v6047, %v6044
        %v6078 = vpack.c.b16 %v6048, %v6045
        %v6079 = vpack.c.b16 %v6052, %v6049
        %v6080 = vpack.c.b16 %v6053, %v6050
        %v6081 = vpack.c.b16 %v6054, %v6051
        %v6082 = vpack.c.b16 %v6058, %v6055
        %v6083 = vpack.c.b16 %v6059, %v6056
        %v6084 = vpack.c.b16 %v6060, %v6057
        %6109 = vmatprep.subr.bf16.mxu0 %v6062
        %6110 = vmatpush1.bf16.msra.mxu0 %v6061
        %6111 = vmatprep.subr.bf16.mxu0 %v6065
        %6112 = vmatpush1.bf16.msra.mxu0 %v6064
        %6113 = vmatprep.subr.bf16.mxu0 %v6068
        %6114 = vmatpush1.bf16.msra.mxu0 %v6067
        %6115 = vmatprep.subr.bf16.mxu0 %v6071
        %6116 = vmatpush1.bf16.msra.mxu0 %v6070
        %6117 = vmatprep.subr.bf16.mxu0 %v6074
        %6118 = vmatpush1.bf16.msra.mxu0 %v6073
        %6119 = vmatprep.subr.bf16.mxu0 %v6077
        %6120 = vmatpush1.bf16.msra.mxu0 %v6076
        %6121 = vmatprep.subr.bf16.mxu0 %v6080
        %6122 = vmatpush1.bf16.msra.mxu0 %v6079
        %6123 = vmatprep.subr.bf16.mxu0 %v6083
        %6124 = vmatpush1.bf16.msra.mxu0 %v6082
        %6125 = vmatprep.subr.bf16.mxu0 0
        %6126 = vmatpush1.bf16.msra.mxu0 0
        %6127 = vmatprep.subr.bf16.mxu0 0
        %6128 = vmatpush1.bf16.msra.mxu0 0
        %6129 = vmatprep.subr.bf16.mxu0 0
        %6130 = vmatpush1.bf16.msra.mxu0 0
        %6131 = vmatprep.subr.bf16.mxu0 0
        %6132 = vmatpush1.bf16.msra.mxu0 0
        %6133 = vmatprep.subr.bf16.mxu0 0
        %6134 = vmatpush1.bf16.msra.mxu0 0
        %6135 = vmatprep.subr.bf16.mxu0 0
        %6136 = vmatpush1.bf16.msra.mxu0 0
        %6137 = vmatprep.subr.bf16.mxu0 0
        %6138 = vmatpush1.bf16.msra.mxu0 0
        %6139 = vmatprep.subr.bf16.mxu0 0
        %6140 = vmatpush1.bf16.msra.mxu0 0
        %6141 = vmatprep.mubr.bf16.mxu0 0
        %6142 = vmatmul.mubr.bf16.gmra.mrb[0].mxu0 %v715
        %v6143 = vpop.f32.mrb[0].mxu0
        %v6144 = vadd.f32 0.0, %v6143
        %v6145 = vpop.f32.mrb[0].mxu0
        %v6146 = vadd.f32 0.0, %v6145
        %v6147 = vpop.f32.mrb[0].mxu0
        %v6148 = vpop.f32.mrb[0].mxu0
        %6149 = vdwg.mxu0
        %6150 = vmatprep.subr.bf16.mxu0 0
        %6151 = vmatpush1.bf16.msra.mxu0 %v6063
        %6152 = vmatprep.subr.bf16.mxu0 0
        %6153 = vmatpush1.bf16.msra.mxu0 %v6066
        %6154 = vmatprep.subr.bf16.mxu0 0
        %6155 = vmatpush1.bf16.msra.mxu0 %v6069
        %6156 = vmatprep.subr.bf16.mxu0 0
        %6157 = vmatpush1.bf16.msra.mxu0 %v6072
        %6158 = vmatprep.subr.bf16.mxu0 0
        %6159 = vmatpush1.bf16.msra.mxu0 %v6075
        %6160 = vmatprep.subr.bf16.mxu0 0
        %6161 = vmatpush1.bf16.msra.mxu0 %v6078
        %6162 = vmatprep.subr.bf16.mxu0 0
        %6163 = vmatpush1.bf16.msra.mxu0 %v6081
        %6164 = vmatprep.subr.bf16.mxu0 0
        %6165 = vmatpush1.bf16.msra.mxu0 %v6084
        %6166 = vmatprep.subr.bf16.mxu0 0
        %6167 = vmatpush1.bf16.msra.mxu0 0
        %6168 = vmatprep.subr.bf16.mxu0 0
        %6169 = vmatpush1.bf16.msra.mxu0 0
        %6170 = vmatprep.subr.bf16.mxu0 0
        %6171 = vmatpush1.bf16.msra.mxu0 0
        %6172 = vmatprep.subr.bf16.mxu0 0
        %6173 = vmatpush1.bf16.msra.mxu0 0
        %6174 = vmatprep.subr.bf16.mxu0 0
        %6175 = vmatpush1.bf16.msra.mxu0 0
        %6176 = vmatprep.subr.bf16.mxu0 0
        %6177 = vmatpush1.bf16.msra.mxu0 0
        %6178 = vmatprep.subr.bf16.mxu0 0
        %6179 = vmatpush1.bf16.msra.mxu0 0
        %6180 = vmatprep.subr.bf16.mxu0 0
        %6181 = vmatpush1.bf16.msra.mxu0 0
        %6182 = vmatprep.mubr.bf16.mxu0 0
        %6183 = vmatmul.mubr.bf16.gmra.mrb[0].mxu0 %v715
        %v6184 = vpop.f32.mrb[0].mxu0
        %v6185 = vadd.f32 0.0, %v6184
        %v6186 = vpop.f32.mrb[0].mxu0
        %v6187 = vpop.f32.mrb[0].mxu0
        %v6188 = vpop.f32.mrb[0].mxu0
        %6189 = vdwg.mxu0
        %v6198 = vunpack.c.l.b16 %v5909
        %v6199 = vunpack.c.l.b16 %v5910
        %v6200 = vunpack.c.l.b16 %v5911
        %v6201 = vunpack.c.l.b16 %v5912
        %v6202 = vunpack.c.l.b16 %v5913
        %v6203 = vunpack.c.l.b16 %v5914
        %v6204 = vunpack.c.l.b16 %v5915
        %v6205 = vunpack.c.l.b16 %v5916
        %v6206 = vsel %vm2949, %v6199, %v6198
        %v6207 = vsel %vm2951, %v6200, %v6206
        %v6208 = vsel %vm2953, %v6201, %v6207
        %v6209 = vsel %vm2955, %v6202, %v6208
        %v6210 = vsel %vm2957, %v6203, %v6209
        %v6211 = vsel %vm2959, %v6204, %v6210
        %v6212 = vsel %vm2961, %v6205, %v6211
        %v6213 = vpack.c.b16 %v6212, %v6212
        %v6247 = vunpack.c.l.b16 %v5917
        %v6248 = vunpack.c.h.b16 %v5917
        %v6249 = vunpack.c.l.b16 %v5918
        %v6250 = vunpack.c.l.b16 %v5919
        %v6251 = vunpack.c.h.b16 %v5919
        %v6252 = vunpack.c.l.b16 %v5920
        %v6253 = vunpack.c.l.b16 %v5921
        %v6254 = vunpack.c.h.b16 %v5921
        %v6255 = vunpack.c.l.b16 %v5922
        %v6256 = vunpack.c.l.b16 %v5923
        %v6257 = vunpack.c.h.b16 %v5923
        %v6258 = vunpack.c.l.b16 %v5924
        %v6259 = vunpack.c.l.b16 %v5925
        %v6260 = vunpack.c.h.b16 %v5925
        %v6261 = vunpack.c.l.b16 %v5926
        %v6262 = vunpack.c.l.b16 %v5927
        %v6263 = vunpack.c.h.b16 %v5927
        %v6264 = vunpack.c.l.b16 %v5928
        %v6265 = vunpack.c.l.b16 %v5929
        %v6266 = vunpack.c.h.b16 %v5929
        %v6267 = vunpack.c.l.b16 %v5930
        %v6268 = vunpack.c.l.b16 %v5931
        %v6269 = vunpack.c.h.b16 %v5931
        %v6270 = vunpack.c.l.b16 %v5932
        %v6271 = vunpack.c.l.b16 %v5933
        %v6272 = vunpack.c.h.b16 %v5933
        %v6273 = vunpack.c.l.b16 %v5934
        %v6274 = vunpack.c.l.b16 %v5935
        %v6275 = vunpack.c.h.b16 %v5935
        %v6276 = vunpack.c.l.b16 %v5936
        %v6277 = vunpack.c.l.b16 %v5937
        %v6278 = vunpack.c.h.b16 %v5937
        %v6279 = vunpack.c.l.b16 %v5938
        %v6280 = vunpack.c.l.b16 %v5939
        %v6281 = vunpack.c.h.b16 %v5939
        %v6282 = vunpack.c.l.b16 %v5940
        %v6283 = vunpack.c.l.b16 %v5941
        %v6284 = vunpack.c.h.b16 %v5941
        %v6285 = vunpack.c.l.b16 %v5942
        %v6286 = vunpack.c.l.b16 %v5943
        %v6287 = vunpack.c.h.b16 %v5943
        %v6288 = vunpack.c.l.b16 %v5944
        %v6289 = vunpack.c.l.b16 %v5945
        %v6290 = vunpack.c.h.b16 %v5945
        %v6291 = vunpack.c.l.b16 %v5946
        %v6292 = vunpack.c.l.b16 %v5947
        %v6293 = vunpack.c.h.b16 %v5947
        %v6294 = vunpack.c.l.b16 %v5948
        %v6295 = vpack.c.b16 %v6250, %v6247
        %v6296 = vpack.c.b16 %v6251, %v6248
        %v6297 = vpack.c.b16 %v6252, %v6249
        %v6298 = vpack.c.b16 %v6256, %v6253
        %v6299 = vpack.c.b16 %v6257, %v6254
        %v6300 = vpack.c.b16 %v6258, %v6255
        %v6301 = vpack.c.b16 %v6262, %v6259
        %v6302 = vpack.c.b16 %v6263, %v6260
        %v6303 = vpack.c.b16 %v6264, %v6261
        %v6304 = vpack.c.b16 %v6268, %v6265
        %v6305 = vpack.c.b16 %v6269, %v6266
        %v6306 = vpack.c.b16 %v6270, %v6267
        %v6307 = vpack.c.b16 %v6274, %v6271
        %v6308 = vpack.c.b16 %v6275, %v6272
        %v6309 = vpack.c.b16 %v6276, %v6273
        %v6310 = vpack.c.b16 %v6280, %v6277
        %v6311 = vpack.c.b16 %v6281, %v6278
        %v6312 = vpack.c.b16 %v6282, %v6279
        %v6313 = vpack.c.b16 %v6286, %v6283
        %v6314 = vpack.c.b16 %v6287, %v6284
        %v6315 = vpack.c.b16 %v6288, %v6285
        %v6316 = vpack.c.b16 %v6292, %v6289
        %v6317 = vpack.c.b16 %v6293, %v6290
        %v6318 = vpack.c.b16 %v6294, %v6291
        %6343 = vmatprep.subr.bf16.mxu0 %v6296
        %6344 = vmatpush1.bf16.msra.mxu0 %v6295
        %6345 = vmatprep.subr.bf16.mxu0 %v6299
        %6346 = vmatpush1.bf16.msra.mxu0 %v6298
        %6347 = vmatprep.subr.bf16.mxu0 %v6302
        %6348 = vmatpush1.bf16.msra.mxu0 %v6301
        %6349 = vmatprep.subr.bf16.mxu0 %v6305
        %6350 = vmatpush1.bf16.msra.mxu0 %v6304
        %6351 = vmatprep.subr.bf16.mxu0 %v6308
        %6352 = vmatpush1.bf16.msra.mxu0 %v6307
        %6353 = vmatprep.subr.bf16.mxu0 %v6311
        %6354 = vmatpush1.bf16.msra.mxu0 %v6310
        %6355 = vmatprep.subr.bf16.mxu0 %v6314
        %6356 = vmatpush1.bf16.msra.mxu0 %v6313
        %6357 = vmatprep.subr.bf16.mxu0 %v6317
        %6358 = vmatpush1.bf16.msra.mxu0 %v6316
        %6359 = vmatprep.subr.bf16.mxu0 0
        %6360 = vmatpush1.bf16.msra.mxu0 0
        %6361 = vmatprep.subr.bf16.mxu0 0
        %6362 = vmatpush1.bf16.msra.mxu0 0
        %6363 = vmatprep.subr.bf16.mxu0 0
        %6364 = vmatpush1.bf16.msra.mxu0 0
        %6365 = vmatprep.subr.bf16.mxu0 0
        %6366 = vmatpush1.bf16.msra.mxu0 0
        %6367 = vmatprep.subr.bf16.mxu0 0
        %6368 = vmatpush1.bf16.msra.mxu0 0
        %6369 = vmatprep.subr.bf16.mxu0 0
        %6370 = vmatpush1.bf16.msra.mxu0 0
        %6371 = vmatprep.subr.bf16.mxu0 0
        %6372 = vmatpush1.bf16.msra.mxu0 0
        %6373 = vmatprep.subr.bf16.mxu0 0
        %6374 = vmatpush1.bf16.msra.mxu0 0
        %6375 = vmatprep.mubr.bf16.mxu0 0
        %6376 = vmatmul.mubr.bf16.gmra.mrb[0].mxu0 %v6213
        %v6377 = vpop.f32.mrb[0].mxu0
        %v6378 = vadd.f32 %v6144, %v6377
        %v6379 = vpop.f32.mrb[0].mxu0
        %v6380 = vadd.f32 %v6146, %v6379
        %v6381 = vpop.f32.mrb[0].mxu0
        %v6382 = vpop.f32.mrb[0].mxu0
        %6383 = vdwg.mxu0
        %6384 = vmatprep.subr.bf16.mxu0 0
        %6385 = vmatpush1.bf16.msra.mxu0 %v6297
        %6386 = vmatprep.subr.bf16.mxu0 0
        %6387 = vmatpush1.bf16.msra.mxu0 %v6300
        %6388 = vmatprep.subr.bf16.mxu0 0
        %6389 = vmatpush1.bf16.msra.mxu0 %v6303
        %6390 = vmatprep.subr.bf16.mxu0 0
        %6391 = vmatpush1.bf16.msra.mxu0 %v6306
        %6392 = vmatprep.subr.bf16.mxu0 0
        %6393 = vmatpush1.bf16.msra.mxu0 %v6309
        %6394 = vmatprep.subr.bf16.mxu0 0
        %6395 = vmatpush1.bf16.msra.mxu0 %v6312
        %6396 = vmatprep.subr.bf16.mxu0 0
        %6397 = vmatpush1.bf16.msra.mxu0 %v6315
        %6398 = vmatprep.subr.bf16.mxu0 0
        %6399 = vmatpush1.bf16.msra.mxu0 %v6318
        %6400 = vmatprep.subr.bf16.mxu0 0
        %6401 = vmatpush1.bf16.msra.mxu0 0
        %6402 = vmatprep.subr.bf16.mxu0 0
        %6403 = vmatpush1.bf16.msra.mxu0 0
        %6404 = vmatprep.subr.bf16.mxu0 0
        %6405 = vmatpush1.bf16.msra.mxu0 0
        %6406 = vmatprep.subr.bf16.mxu0 0
        %6407 = vmatpush1.bf16.msra.mxu0 0
        %6408 = vmatprep.subr.bf16.mxu0 0
        %6409 = vmatpush1.bf16.msra.mxu0 0
        %6410 = vmatprep.subr.bf16.mxu0 0
        %6411 = vmatpush1.bf16.msra.mxu0 0
        %6412 = vmatprep.subr.bf16.mxu0 0
        %6413 = vmatpush1.bf16.msra.mxu0 0
        %6414 = vmatprep.subr.bf16.mxu0 0
        %6415 = vmatpush1.bf16.msra.mxu0 0
        %6416 = vmatprep.mubr.bf16.mxu0 0
        %6417 = vmatmul.mubr.bf16.gmra.mrb[0].mxu0 %v6213
        %v6418 = vpop.f32.mrb[0].mxu0
        %v6419 = vadd.f32 %v6185, %v6418
        %v6420 = vpop.f32.mrb[0].mxu0
        %v6421 = vpop.f32.mrb[0].mxu0
        %v6422 = vpop.f32.mrb[0].mxu0
        %6423 = vdwg.mxu0
        %v6424 = vld [vmem:[%s10] sm:$0x7]
        %v6426 = vlaneseq
        %v6427 = vshrl.u32 %v6426, 7
        %v6428 = vsub.s32 0, %v6427
        %v6429 = vrot.slane %v6424, %v6428
        %v6430 = vlaneseq
        %v6431 = vshrl.u32 %v6430, 7
        %v6432 = vsub.s32 1, %v6431
        %v6433 = vrot.slane %v6424, %v6432
        %v6434 = vlaneseq
        %v6435 = vshrl.u32 %v6434, 7
        %v6436 = vsub.s32 2, %v6435
        %v6437 = vrot.slane %v6424, %v6436
        %v6441 = vadd.f32 %v6378, %v6429
        %v6442 = vadd.f32 %v6380, %v6433
        %v6443 = vadd.f32 %v6419, %v6437
        %v6444 = vpack.c.bf16 %v5908, %v5908
        %v6445 = vld [vmem:[#allocation15] sm:$0xff]
        %v6446 = vld [vmem:[#allocation15 + $0x8] sm:$0xf]
        %v6447 = vld [vmem:[#allocation15 + $0xc] sm:$0xff]
        %v6448 = vld [vmem:[#allocation15 + $0x14] sm:$0xf]
        %v6449 = vld [vmem:[#allocation15 + $0x18] sm:$0xff]
        %v6450 = vld [vmem:[#allocation15 + $0x20] sm:$0xf]
        %v6451 = vld [vmem:[#allocation15 + $0x24] sm:$0xff]
        %v6452 = vld [vmem:[#allocation15 + $0x2c] sm:$0xf]
        %v6453 = vld [vmem:[#allocation15 + $0x30] sm:$0xff]
        %v6454 = vld [vmem:[#allocation15 + $0x38] sm:$0xf]
        %v6455 = vld [vmem:[#allocation15 + $0x3c] sm:$0xff]
        %v6456 = vld [vmem:[#allocation15 + $0x44] sm:$0xf]
        %v6457 = vld [vmem:[#allocation15 + $0x48] sm:$0xff]
        %v6458 = vld [vmem:[#allocation15 + $0x50] sm:$0xf]
        %v6459 = vld [vmem:[#allocation15 + $0x54] sm:$0xff]
        %v6460 = vld [vmem:[#allocation15 + $0x5c] sm:$0xf]
        %v6461 = vld [vmem:[#allocation15 + $0x60] sm:$0xff]
        %v6462 = vld [vmem:[#allocation15 + $0x68] sm:$0xf]
        %v6463 = vld [vmem:[#allocation15 + $0x6c] sm:$0xff]
        %v6464 = vld [vmem:[#allocation15 + $0x74] sm:$0xf]
        %v6465 = vld [vmem:[#allocation15 + $0x78] sm:$0xff]
        %v6466 = vld [vmem:[#allocation15 + $0x80] sm:$0xf]
        %v6467 = vld [vmem:[#allocation15 + $0x84] sm:$0xff]
        %v6468 = vld [vmem:[#allocation15 + $0x8c] sm:$0xf]
        %v6469 = vld [vmem:[#allocation15 + $0x90] sm:$0xff]
        %v6470 = vld [vmem:[#allocation15 + $0x98] sm:$0xf]
        %v6471 = vld [vmem:[#allocation15 + $0x9c] sm:$0xff]
        %v6472 = vld [vmem:[#allocation15 + $0xa4] sm:$0xf]
        %v6473 = vld [vmem:[#allocation15 + $0xa8] sm:$0xff]
        %v6474 = vld [vmem:[#allocation15 + $0xb0] sm:$0xf]
        %v6475 = vld [vmem:[#allocation15 + $0xb4] sm:$0xff]
        %v6476 = vld [vmem:[#allocation15 + $0xbc] sm:$0xf]
        %v6477 = vld [vmem:[%s11] sm:$0x7]
        %v6479 = vlaneseq
        %v6480 = vshrl.u32 %v6479, 7
        %v6481 = vsub.s32 0, %v6480
        %v6482 = vrot.slane %v6477, %v6481
        %v6483 = vlaneseq
        %v6484 = vshrl.u32 %v6483, 7
        %v6485 = vsub.s32 1, %v6484
        %v6486 = vrot.slane %v6477, %v6485
        %v6487 = vlaneseq
        %v6488 = vshrl.u32 %v6487, 7
        %v6489 = vsub.s32 2, %v6488
        %v6490 = vrot.slane %v6477, %v6489
        %v6526 = vunpack.c.l.b16 %v6445
        %v6527 = vunpack.c.h.b16 %v6445
        %v6528 = vunpack.c.l.b16 %v6446
        %v6529 = vunpack.c.l.b16 %v6447
        %v6530 = vunpack.c.h.b16 %v6447
        %v6531 = vunpack.c.l.b16 %v6448
        %v6532 = vunpack.c.l.b16 %v6449
        %v6533 = vunpack.c.h.b16 %v6449
        %v6534 = vunpack.c.l.b16 %v6450
        %v6535 = vunpack.c.l.b16 %v6451
        %v6536 = vunpack.c.h.b16 %v6451
        %v6537 = vunpack.c.l.b16 %v6452
        %v6538 = vunpack.c.l.b16 %v6453
        %v6539 = vunpack.c.h.b16 %v6453
        %v6540 = vunpack.c.l.b16 %v6454
        %v6541 = vunpack.c.l.b16 %v6455
        %v6542 = vunpack.c.h.b16 %v6455
        %v6543 = vunpack.c.l.b16 %v6456
        %v6544 = vunpack.c.l.b16 %v6457
        %v6545 = vunpack.c.h.b16 %v6457
        %v6546 = vunpack.c.l.b16 %v6458
        %v6547 = vunpack.c.l.b16 %v6459
        %v6548 = vunpack.c.h.b16 %v6459
        %v6549 = vunpack.c.l.b16 %v6460
        %v6550 = vunpack.c.l.b16 %v6461
        %v6551 = vunpack.c.h.b16 %v6461
        %v6552 = vunpack.c.l.b16 %v6462
        %v6553 = vunpack.c.l.b16 %v6463
        %v6554 = vunpack.c.h.b16 %v6463
        %v6555 = vunpack.c.l.b16 %v6464
        %v6556 = vunpack.c.l.b16 %v6465
        %v6557 = vunpack.c.h.b16 %v6465
        %v6558 = vunpack.c.l.b16 %v6466
        %v6559 = vunpack.c.l.b16 %v6467
        %v6560 = vunpack.c.h.b16 %v6467
        %v6561 = vunpack.c.l.b16 %v6468
        %v6562 = vunpack.c.l.b16 %v6469
        %v6563 = vunpack.c.h.b16 %v6469
        %v6564 = vunpack.c.l.b16 %v6470
        %v6565 = vunpack.c.l.b16 %v6471
        %v6566 = vunpack.c.h.b16 %v6471
        %v6567 = vunpack.c.l.b16 %v6472
        %v6568 = vunpack.c.l.b16 %v6473
        %v6569 = vunpack.c.h.b16 %v6473
        %v6570 = vunpack.c.l.b16 %v6474
        %v6571 = vunpack.c.l.b16 %v6475
        %v6572 = vunpack.c.h.b16 %v6475
        %v6573 = vunpack.c.l.b16 %v6476
        %v6574 = vpack.c.b16 %v6529, %v6526
        %v6575 = vpack.c.b16 %v6530, %v6527
        %v6576 = vpack.c.b16 %v6531, %v6528
        %v6577 = vpack.c.b16 %v6535, %v6532
        %v6578 = vpack.c.b16 %v6536, %v6533
        %v6579 = vpack.c.b16 %v6537, %v6534
        %v6580 = vpack.c.b16 %v6541, %v6538
        %v6581 = vpack.c.b16 %v6542, %v6539
        %v6582 = vpack.c.b16 %v6543, %v6540
        %v6583 = vpack.c.b16 %v6547, %v6544
        %v6584 = vpack.c.b16 %v6548, %v6545
        %v6585 = vpack.c.b16 %v6549, %v6546
        %v6586 = vpack.c.b16 %v6553, %v6550
        %v6587 = vpack.c.b16 %v6554, %v6551
        %v6588 = vpack.c.b16 %v6555, %v6552
        %v6589 = vpack.c.b16 %v6559, %v6556
        %v6590 = vpack.c.b16 %v6560, %v6557
        %v6591 = vpack.c.b16 %v6561, %v6558
        %v6592 = vpack.c.b16 %v6565, %v6562
        %v6593 = vpack.c.b16 %v6566, %v6563
        %v6594 = vpack.c.b16 %v6567, %v6564
        %v6595 = vpack.c.b16 %v6571, %v6568
        %v6596 = vpack.c.b16 %v6572, %v6569
        %v6597 = vpack.c.b16 %v6573, %v6570
        %6622 = vmatprep.subr.bf16.mxu0 %v6575
        %6623 = vmatpush1.bf16.msra.mxu0 %v6574
        %6624 = vmatprep.subr.bf16.mxu0 %v6578
        %6625 = vmatpush1.bf16.msra.mxu0 %v6577
        %6626 = vmatprep.subr.bf16.mxu0 %v6581
        %6627 = vmatpush1.bf16.msra.mxu0 %v6580
        %6628 = vmatprep.subr.bf16.mxu0 %v6584
        %6629 = vmatpush1.bf16.msra.mxu0 %v6583
        %6630 = vmatprep.subr.bf16.mxu0 %v6587
        %6631 = vmatpush1.bf16.msra.mxu0 %v6586
        %6632 = vmatprep.subr.bf16.mxu0 %v6590
        %6633 = vmatpush1.bf16.msra.mxu0 %v6589
        %6634 = vmatprep.subr.bf16.mxu0 %v6593
        %6635 = vmatpush1.bf16.msra.mxu0 %v6592
        %6636 = vmatprep.subr.bf16.mxu0 %v6596
        %6637 = vmatpush1.bf16.msra.mxu0 %v6595
        %6638 = vmatprep.subr.bf16.mxu0 0
        %6639 = vmatpush1.bf16.msra.mxu0 0
        %6640 = vmatprep.subr.bf16.mxu0 0
        %6641 = vmatpush1.bf16.msra.mxu0 0
        %6642 = vmatprep.subr.bf16.mxu0 0
        %6643 = vmatpush1.bf16.msra.mxu0 0
        %6644 = vmatprep.subr.bf16.mxu0 0
        %6645 = vmatpush1.bf16.msra.mxu0 0
        %6646 = vmatprep.subr.bf16.mxu0 0
        %6647 = vmatpush1.bf16.msra.mxu0 0
        %6648 = vmatprep.subr.bf16.mxu0 0
        %6649 = vmatpush1.bf16.msra.mxu0 0
        %6650 = vmatprep.subr.bf16.mxu0 0
        %6651 = vmatpush1.bf16.msra.mxu0 0
        %6652 = vmatprep.subr.bf16.mxu0 0
        %6653 = vmatpush1.bf16.msra.mxu0 0
        %6654 = vmatprep.mubr.bf16.mxu0 0
        %6655 = vmatmul.mubr.bf16.gmra.mrb[0].mxu0 %v6444
        %v6656 = vpop.f32.mrb[0].mxu0
        %v6657 = vadd.f32 %v6482, %v6656
        %v6658 = vpop.f32.mrb[0].mxu0
        %v6659 = vadd.f32 %v6486, %v6658
        %v6660 = vpop.f32.mrb[0].mxu0
        %v6661 = vpop.f32.mrb[0].mxu0
        %6662 = vdwg.mxu0
        %6663 = vmatprep.subr.bf16.mxu0 0
        %6664 = vmatpush1.bf16.msra.mxu0 %v6576
        %6665 = vmatprep.subr.bf16.mxu0 0
        %6666 = vmatpush1.bf16.msra.mxu0 %v6579
        %6667 = vmatprep.subr.bf16.mxu0 0
        %6668 = vmatpush1.bf16.msra.mxu0 %v6582
        %6669 = vmatprep.subr.bf16.mxu0 0
        %6670 = vmatpush1.bf16.msra.mxu0 %v6585
        %6671 = vmatprep.subr.bf16.mxu0 0
        %6672 = vmatpush1.bf16.msra.mxu0 %v6588
        %6673 = vmatprep.subr.bf16.mxu0 0
        %6674 = vmatpush1.bf16.msra.mxu0 %v6591
        %6675 = vmatprep.subr.bf16.mxu0 0
        %6676 = vmatpush1.bf16.msra.mxu0 %v6594
        %6677 = vmatprep.subr.bf16.mxu0 0
        %6678 = vmatpush1.bf16.msra.mxu0 %v6597
        %6679 = vmatprep.subr.bf16.mxu0 0
        %6680 = vmatpush1.bf16.msra.mxu0 0
        %6681 = vmatprep.subr.bf16.mxu0 0
        %6682 = vmatpush1.bf16.msra.mxu0 0
        %6683 = vmatprep.subr.bf16.mxu0 0
        %6684 = vmatpush1.bf16.msra.mxu0 0
        %6685 = vmatprep.subr.bf16.mxu0 0
        %6686 = vmatpush1.bf16.msra.mxu0 0
        %6687 = vmatprep.subr.bf16.mxu0 0
        %6688 = vmatpush1.bf16.msra.mxu0 0
        %6689 = vmatprep.subr.bf16.mxu0 0
        %6690 = vmatpush1.bf16.msra.mxu0 0
        %6691 = vmatprep.subr.bf16.mxu0 0
        %6692 = vmatpush1.bf16.msra.mxu0 0
        %6693 = vmatprep.subr.bf16.mxu0 0
        %6694 = vmatpush1.bf16.msra.mxu0 0
        %6695 = vmatprep.mubr.bf16.mxu0 0
        %6696 = vmatmul.mubr.bf16.gmra.mrb[0].mxu0 %v6444
        %v6697 = vpop.f32.mrb[0].mxu0
        %v6698 = vadd.f32 %v6490, %v6697
        %v6699 = vpop.f32.mrb[0].mxu0
        %v6700 = vpop.f32.mrb[0].mxu0
        %v6701 = vpop.f32.mrb[0].mxu0
        %6702 = vdwg.mxu0
        %v6703 = vadd.f32 %v6441, %v6657
        %v6704 = vxor.u32 %v6703, 2147483648
        %v6705 = vmul.f32 %v6704, 1.442695
        %v6706 = vpow.pop %v6705
        %v6707 = vadd.f32 %v6706, 1.0
        %v6708 = vrcp.pop %v6707
        %v6709 = vmul.f32 1.0, %v6708
        %v6710 = vadd.f32 %v6442, %v6659
        %v6711 = vxor.u32 %v6710, 2147483648
        %v6712 = vmul.f32 %v6711, 1.442695
        %v6713 = vpow.pop %v6712
        %v6714 = vadd.f32 %v6713, 1.0
        %v6715 = vrcp.pop %v6714
        %v6716 = vmul.f32 1.0, %v6715
        %v6717 = vmul.f32 %v6709, %v6698
        %v6718 = vadd.f32 %v6443, %v6717
        %v6719 = vtanh.pop %v6718
        %v6720 = vsub.f32 1.0, %v6716
        %v6721 = vmul.f32 %v6720, %v6719
        %v6722 = vmul.f32 %v6716, %v5908
        %v6723 = vadd.f32 %v6721, %v6722
        %6724 = vst [vmem:[#allocation2] sm:$0xff] %v6723
        %v6725 = vld [vmem:[%s716] sm:$0xff]
        %v6726 = vpack.c.bf16 %v6723, %v6723
        %v6727 = vld [vmem:[#allocation17] sm:$0xff]
        %v6728 = vld [vmem:[#allocation17 + $0x8] sm:$0xf]
        %v6729 = vld [vmem:[#allocation17 + $0xc] sm:$0xff]
        %v6730 = vld [vmem:[#allocation17 + $0x14] sm:$0xf]
        %v6731 = vld [vmem:[#allocation17 + $0x18] sm:$0xff]
        %v6732 = vld [vmem:[#allocation17 + $0x20] sm:$0xf]
        %v6733 = vld [vmem:[#allocation17 + $0x24] sm:$0xff]
        %v6734 = vld [vmem:[#allocation17 + $0x2c] sm:$0xf]
        %v6735 = vld [vmem:[#allocation17 + $0x30] sm:$0xff]
        %v6736 = vld [vmem:[#allocation17 + $0x38] sm:$0xf]
        %v6737 = vld [vmem:[#allocation17 + $0x3c] sm:$0xff]
        %v6738 = vld [vmem:[#allocation17 + $0x44] sm:$0xf]
        %v6739 = vld [vmem:[#allocation17 + $0x48] sm:$0xff]
        %v6740 = vld [vmem:[#allocation17 + $0x50] sm:$0xf]
        %v6741 = vld [vmem:[#allocation17 + $0x54] sm:$0xff]
        %v6742 = vld [vmem:[#allocation17 + $0x5c] sm:$0xf]
        %v6743 = vld [vmem:[#allocation17 + $0x60] sm:$0xff]
        %v6744 = vld [vmem:[#allocation17 + $0x68] sm:$0xf]
        %v6745 = vld [vmem:[#allocation17 + $0x6c] sm:$0xff]
        %v6746 = vld [vmem:[#allocation17 + $0x74] sm:$0xf]
        %v6747 = vld [vmem:[#allocation17 + $0x78] sm:$0xff]
        %v6748 = vld [vmem:[#allocation17 + $0x80] sm:$0xf]
        %v6749 = vld [vmem:[#allocation17 + $0x84] sm:$0xff]
        %v6750 = vld [vmem:[#allocation17 + $0x8c] sm:$0xf]
        %v6751 = vld [vmem:[#allocation17 + $0x90] sm:$0xff]
        %v6752 = vld [vmem:[#allocation17 + $0x98] sm:$0xf]
        %v6753 = vld [vmem:[#allocation17 + $0x9c] sm:$0xff]
        %v6754 = vld [vmem:[#allocation17 + $0xa4] sm:$0xf]
        %v6755 = vld [vmem:[#allocation17 + $0xa8] sm:$0xff]
        %v6756 = vld [vmem:[#allocation17 + $0xb0] sm:$0xf]
        %v6757 = vld [vmem:[#allocation17 + $0xb4] sm:$0xff]
        %v6758 = vld [vmem:[#allocation17 + $0xbc] sm:$0xf]
        %v6759 = vld [vmem:[%s14] sm:$0x7]
        %v6761 = vlaneseq
        %v6762 = vshrl.u32 %v6761, 7
        %v6763 = vsub.s32 0, %v6762
        %v6764 = vrot.slane %v6759, %v6763
        %v6765 = vlaneseq
        %v6766 = vshrl.u32 %v6765, 7
        %v6767 = vsub.s32 1, %v6766
        %v6768 = vrot.slane %v6759, %v6767
        %v6769 = vlaneseq
        %v6770 = vshrl.u32 %v6769, 7
        %v6771 = vsub.s32 2, %v6770
        %v6772 = vrot.slane %v6759, %v6771
        %v6808 = vunpack.c.l.b16 %v6727
        %v6809 = vunpack.c.h.b16 %v6727
        %v6810 = vunpack.c.l.b16 %v6728
        %v6811 = vunpack.c.l.b16 %v6729
        %v6812 = vunpack.c.h.b16 %v6729
        %v6813 = vunpack.c.l.b16 %v6730
        %v6814 = vunpack.c.l.b16 %v6731
        %v6815 = vunpack.c.h.b16 %v6731
        %v6816 = vunpack.c.l.b16 %v6732
        %v6817 = vunpack.c.l.b16 %v6733
        %v6818 = vunpack.c.h.b16 %v6733
        %v6819 = vunpack.c.l.b16 %v6734
        %v6820 = vunpack.c.l.b16 %v6735
        %v6821 = vunpack.c.h.b16 %v6735
        %v6822 = vunpack.c.l.b16 %v6736
        %v6823 = vunpack.c.l.b16 %v6737
        %v6824 = vunpack.c.h.b16 %v6737
        %v6825 = vunpack.c.l.b16 %v6738
        %v6826 = vunpack.c.l.b16 %v6739
        %v6827 = vunpack.c.h.b16 %v6739
        %v6828 = vunpack.c.l.b16 %v6740
        %v6829 = vunpack.c.l.b16 %v6741
        %v6830 = vunpack.c.h.b16 %v6741
        %v6831 = vunpack.c.l.b16 %v6742
        %v6832 = vunpack.c.l.b16 %v6743
        %v6833 = vunpack.c.h.b16 %v6743
        %v6834 = vunpack.c.l.b16 %v6744
        %v6835 = vunpack.c.l.b16 %v6745
        %v6836 = vunpack.c.h.b16 %v6745
        %v6837 = vunpack.c.l.b16 %v6746
        %v6838 = vunpack.c.l.b16 %v6747
        %v6839 = vunpack.c.h.b16 %v6747
        %v6840 = vunpack.c.l.b16 %v6748
        %v6841 = vunpack.c.l.b16 %v6749
        %v6842 = vunpack.c.h.b16 %v6749
        %v6843 = vunpack.c.l.b16 %v6750
        %v6844 = vunpack.c.l.b16 %v6751
        %v6845 = vunpack.c.h.b16 %v6751
        %v6846 = vunpack.c.l.b16 %v6752
        %v6847 = vunpack.c.l.b16 %v6753
        %v6848 = vunpack.c.h.b16 %v6753
        %v6849 = vunpack.c.l.b16 %v6754
        %v6850 = vunpack.c.l.b16 %v6755
        %v6851 = vunpack.c.h.b16 %v6755
        %v6852 = vunpack.c.l.b16 %v6756
        %v6853 = vunpack.c.l.b16 %v6757
        %v6854 = vunpack.c.h.b16 %v6757
        %v6855 = vunpack.c.l.b16 %v6758
        %v6856 = vpack.c.b16 %v6811, %v6808
        %v6857 = vpack.c.b16 %v6812, %v6809
        %v6858 = vpack.c.b16 %v6813, %v6810
        %v6859 = vpack.c.b16 %v6817, %v6814
        %v6860 = vpack.c.b16 %v6818, %v6815
        %v6861 = vpack.c.b16 %v6819, %v6816
        %v6862 = vpack.c.b16 %v6823, %v6820
        %v6863 = vpack.c.b16 %v6824, %v6821
        %v6864 = vpack.c.b16 %v6825, %v6822
        %v6865 = vpack.c.b16 %v6829, %v6826
        %v6866 = vpack.c.b16 %v6830, %v6827
        %v6867 = vpack.c.b16 %v6831, %v6828
        %v6868 = vpack.c.b16 %v6835, %v6832
        %v6869 = vpack.c.b16 %v6836, %v6833
        %v6870 = vpack.c.b16 %v6837, %v6834
        %v6871 = vpack.c.b16 %v6841, %v6838
        %v6872 = vpack.c.b16 %v6842, %v6839
        %v6873 = vpack.c.b16 %v6843, %v6840
        %v6874 = vpack.c.b16 %v6847, %v6844
        %v6875 = vpack.c.b16 %v6848, %v6845
        %v6876 = vpack.c.b16 %v6849, %v6846
        %v6877 = vpack.c.b16 %v6853, %v6850
        %v6878 = vpack.c.b16 %v6854, %v6851
        %v6879 = vpack.c.b16 %v6855, %v6852
        %6904 = vmatprep.subr.bf16.mxu0 %v6857
        %6905 = vmatpush1.bf16.msra.mxu0 %v6856
        %6906 = vmatprep.subr.bf16.mxu0 %v6860
        %6907 = vmatpush1.bf16.msra.mxu0 %v6859
        %6908 = vmatprep.subr.bf16.mxu0 %v6863
        %6909 = vmatpush1.bf16.msra.mxu0 %v6862
        %6910 = vmatprep.subr.bf16.mxu0 %v6866
        %6911 = vmatpush1.bf16.msra.mxu0 %v6865
        %6912 = vmatprep.subr.bf16.mxu0 %v6869
        %6913 = vmatpush1.bf16.msra.mxu0 %v6868
        %6914 = vmatprep.subr.bf16.mxu0 %v6872
        %6915 = vmatpush1.bf16.msra.mxu0 %v6871
        %6916 = vmatprep.subr.bf16.mxu0 %v6875
        %6917 = vmatpush1.bf16.msra.mxu0 %v6874
        %6918 = vmatprep.subr.bf16.mxu0 %v6878
        %6919 = vmatpush1.bf16.msra.mxu0 %v6877
        %6920 = vmatprep.subr.bf16.mxu0 0
        %6921 = vmatpush1.bf16.msra.mxu0 0
        %6922 = vmatprep.subr.bf16.mxu0 0
        %6923 = vmatpush1.bf16.msra.mxu0 0
        %6924 = vmatprep.subr.bf16.mxu0 0
        %6925 = vmatpush1.bf16.msra.mxu0 0
        %6926 = vmatprep.subr.bf16.mxu0 0
        %6927 = vmatpush1.bf16.msra.mxu0 0
        %6928 = vmatprep.subr.bf16.mxu0 0
        %6929 = vmatpush1.bf16.msra.mxu0 0
        %6930 = vmatprep.subr.bf16.mxu0 0
        %6931 = vmatpush1.bf16.msra.mxu0 0
        %6932 = vmatprep.subr.bf16.mxu0 0
        %6933 = vmatpush1.bf16.msra.mxu0 0
        %6934 = vmatprep.subr.bf16.mxu0 0
        %6935 = vmatpush1.bf16.msra.mxu0 0
        %6936 = vmatprep.mubr.bf16.mxu0 0
        %6937 = vmatmul.mubr.bf16.gmra.mrb[0].mxu0 %v6726
        %v6938 = vpop.f32.mrb[0].mxu0
        %v6939 = vadd.f32 %v6764, %v6938
        %v6940 = vpop.f32.mrb[0].mxu0
        %v6941 = vadd.f32 %v6768, %v6940
        %v6942 = vpop.f32.mrb[0].mxu0
        %v6943 = vpop.f32.mrb[0].mxu0
        %6944 = vdwg.mxu0
        %6945 = vmatprep.subr.bf16.mxu0 0
        %6946 = vmatpush1.bf16.msra.mxu0 %v6858
        %6947 = vmatprep.subr.bf16.mxu0 0
        %6948 = vmatpush1.bf16.msra.mxu0 %v6861
        %6949 = vmatprep.subr.bf16.mxu0 0
        %6950 = vmatpush1.bf16.msra.mxu0 %v6864
        %6951 = vmatprep.subr.bf16.mxu0 0
        %6952 = vmatpush1.bf16.msra.mxu0 %v6867
        %6953 = vmatprep.subr.bf16.mxu0 0
        %6954 = vmatpush1.bf16.msra.mxu0 %v6870
        %6955 = vmatprep.subr.bf16.mxu0 0
        %6956 = vmatpush1.bf16.msra.mxu0 %v6873
        %6957 = vmatprep.subr.bf16.mxu0 0
        %6958 = vmatpush1.bf16.msra.mxu0 %v6876
        %6959 = vmatprep.subr.bf16.mxu0 0
        %6960 = vmatpush1.bf16.msra.mxu0 %v6879
        %6961 = vmatprep.subr.bf16.mxu0 0
        %6962 = vmatpush1.bf16.msra.mxu0 0
        %6963 = vmatprep.subr.bf16.mxu0 0
        %6964 = vmatpush1.bf16.msra.mxu0 0
        %6965 = vmatprep.subr.bf16.mxu0 0
        %6966 = vmatpush1.bf16.msra.mxu0 0
        %6967 = vmatprep.subr.bf16.mxu0 0
        %6968 = vmatpush1.bf16.msra.mxu0 0
        %6969 = vmatprep.subr.bf16.mxu0 0
        %6970 = vmatpush1.bf16.msra.mxu0 0
        %6971 = vmatprep.subr.bf16.mxu0 0
        %6972 = vmatpush1.bf16.msra.mxu0 0
        %6973 = vmatprep.subr.bf16.mxu0 0
        %6974 = vmatpush1.bf16.msra.mxu0 0
        %6975 = vmatprep.subr.bf16.mxu0 0
        %6976 = vmatpush1.bf16.msra.mxu0 0
        %6977 = vmatprep.mubr.bf16.mxu0 0
        %6978 = vmatmul.mubr.bf16.gmra.mrb[0].mxu0 %v6726
        %v6979 = vpop.f32.mrb[0].mxu0
        %v6980 = vadd.f32 %v6772, %v6979
        %v6981 = vpop.f32.mrb[0].mxu0
        %v6982 = vpop.f32.mrb[0].mxu0
        %v6983 = vpop.f32.mrb[0].mxu0
        %6984 = vdwg.mxu0
        %v6985 = vpack.c.bf16 %v6725, %v6725
        %v6986 = vld [vmem:[#allocation18] sm:$0xff]
        %v6987 = vld [vmem:[#allocation18 + $0x8] sm:$0xf]
        %v6988 = vld [vmem:[#allocation18 + $0xc] sm:$0xff]
        %v6989 = vld [vmem:[#allocation18 + $0x14] sm:$0xf]
        %v6990 = vld [vmem:[#allocation18 + $0x18] sm:$0xff]
        %v6991 = vld [vmem:[#allocation18 + $0x20] sm:$0xf]
        %v6992 = vld [vmem:[#allocation18 + $0x24] sm:$0xff]
        %v6993 = vld [vmem:[#allocation18 + $0x2c] sm:$0xf]
        %v6994 = vld [vmem:[#allocation18 + $0x30] sm:$0xff]
        %v6995 = vld [vmem:[#allocation18 + $0x38] sm:$0xf]
        %v6996 = vld [vmem:[#allocation18 + $0x3c] sm:$0xff]
        %v6997 = vld [vmem:[#allocation18 + $0x44] sm:$0xf]
        %v6998 = vld [vmem:[#allocation18 + $0x48] sm:$0xff]
        %v6999 = vld [vmem:[#allocation18 + $0x50] sm:$0xf]
        %v7000 = vld [vmem:[#allocation18 + $0x54] sm:$0xff]
        %v7001 = vld [vmem:[#allocation18 + $0x5c] sm:$0xf]
        %v7002 = vld [vmem:[#allocation18 + $0x60] sm:$0xff]
        %v7003 = vld [vmem:[#allocation18 + $0x68] sm:$0xf]
        %v7004 = vld [vmem:[#allocation18 + $0x6c] sm:$0xff]
        %v7005 = vld [vmem:[#allocation18 + $0x74] sm:$0xf]
        %v7006 = vld [vmem:[#allocation18 + $0x78] sm:$0xff]
        %v7007 = vld [vmem:[#allocation18 + $0x80] sm:$0xf]
        %v7008 = vld [vmem:[#allocation18 + $0x84] sm:$0xff]
        %v7009 = vld [vmem:[#allocation18 + $0x8c] sm:$0xf]
        %v7010 = vld [vmem:[#allocation18 + $0x90] sm:$0xff]
        %v7011 = vld [vmem:[#allocation18 + $0x98] sm:$0xf]
        %v7012 = vld [vmem:[#allocation18 + $0x9c] sm:$0xff]
        %v7013 = vld [vmem:[#allocation18 + $0xa4] sm:$0xf]
        %v7014 = vld [vmem:[#allocation18 + $0xa8] sm:$0xff]
        %v7015 = vld [vmem:[#allocation18 + $0xb0] sm:$0xf]
        %v7016 = vld [vmem:[#allocation18 + $0xb4] sm:$0xff]
        %v7017 = vld [vmem:[#allocation18 + $0xbc] sm:$0xf]
        %v7018 = vld [vmem:[%s15] sm:$0x7]
        %v7020 = vlaneseq
        %v7021 = vshrl.u32 %v7020, 7
        %v7022 = vsub.s32 0, %v7021
        %v7023 = vrot.slane %v7018, %v7022
        %v7024 = vlaneseq
        %v7025 = vshrl.u32 %v7024, 7
        %v7026 = vsub.s32 1, %v7025
        %v7027 = vrot.slane %v7018, %v7026
        %v7028 = vlaneseq
        %v7029 = vshrl.u32 %v7028, 7
        %v7030 = vsub.s32 2, %v7029
        %v7031 = vrot.slane %v7018, %v7030
        %v7067 = vunpack.c.l.b16 %v6986
        %v7068 = vunpack.c.h.b16 %v6986
        %v7069 = vunpack.c.l.b16 %v6987
        %v7070 = vunpack.c.l.b16 %v6988
        %v7071 = vunpack.c.h.b16 %v6988
        %v7072 = vunpack.c.l.b16 %v6989
        %v7073 = vunpack.c.l.b16 %v6990
        %v7074 = vunpack.c.h.b16 %v6990
        %v7075 = vunpack.c.l.b16 %v6991
        %v7076 = vunpack.c.l.b16 %v6992
        %v7077 = vunpack.c.h.b16 %v6992
        %v7078 = vunpack.c.l.b16 %v6993
        %v7079 = vunpack.c.l.b16 %v6994
        %v7080 = vunpack.c.h.b16 %v6994
        %v7081 = vunpack.c.l.b16 %v6995
        %v7082 = vunpack.c.l.b16 %v6996
        %v7083 = vunpack.c.h.b16 %v6996
        %v7084 = vunpack.c.l.b16 %v6997
        %v7085 = vunpack.c.l.b16 %v6998
        %v7086 = vunpack.c.h.b16 %v6998
        %v7087 = vunpack.c.l.b16 %v6999
        %v7088 = vunpack.c.l.b16 %v7000
        %v7089 = vunpack.c.h.b16 %v7000
        %v7090 = vunpack.c.l.b16 %v7001
        %v7091 = vunpack.c.l.b16 %v7002
        %v7092 = vunpack.c.h.b16 %v7002
        %v7093 = vunpack.c.l.b16 %v7003
        %v7094 = vunpack.c.l.b16 %v7004
        %v7095 = vunpack.c.h.b16 %v7004
        %v7096 = vunpack.c.l.b16 %v7005
        %v7097 = vunpack.c.l.b16 %v7006
        %v7098 = vunpack.c.h.b16 %v7006
        %v7099 = vunpack.c.l.b16 %v7007
        %v7100 = vunpack.c.l.b16 %v7008
        %v7101 = vunpack.c.h.b16 %v7008
        %v7102 = vunpack.c.l.b16 %v7009
        %v7103 = vunpack.c.l.b16 %v7010
        %v7104 = vunpack.c.h.b16 %v7010
        %v7105 = vunpack.c.l.b16 %v7011
        %v7106 = vunpack.c.l.b16 %v7012
        %v7107 = vunpack.c.h.b16 %v7012
        %v7108 = vunpack.c.l.b16 %v7013
        %v7109 = vunpack.c.l.b16 %v7014
        %v7110 = vunpack.c.h.b16 %v7014
        %v7111 = vunpack.c.l.b16 %v7015
        %v7112 = vunpack.c.l.b16 %v7016
        %v7113 = vunpack.c.h.b16 %v7016
        %v7114 = vunpack.c.l.b16 %v7017
        %v7115 = vpack.c.b16 %v7070, %v7067
        %v7116 = vpack.c.b16 %v7071, %v7068
        %v7117 = vpack.c.b16 %v7072, %v7069
        %v7118 = vpack.c.b16 %v7076, %v7073
        %v7119 = vpack.c.b16 %v7077, %v7074
        %v7120 = vpack.c.b16 %v7078, %v7075
        %v7121 = vpack.c.b16 %v7082, %v7079
        %v7122 = vpack.c.b16 %v7083, %v7080
        %v7123 = vpack.c.b16 %v7084, %v7081
        %v7124 = vpack.c.b16 %v7088, %v7085
        %v7125 = vpack.c.b16 %v7089, %v7086
        %v7126 = vpack.c.b16 %v7090, %v7087
        %v7127 = vpack.c.b16 %v7094, %v7091
        %v7128 = vpack.c.b16 %v7095, %v7092
        %v7129 = vpack.c.b16 %v7096, %v7093
        %v7130 = vpack.c.b16 %v7100, %v7097
        %v7131 = vpack.c.b16 %v7101, %v7098
        %v7132 = vpack.c.b16 %v7102, %v7099
        %v7133 = vpack.c.b16 %v7106, %v7103
        %v7134 = vpack.c.b16 %v7107, %v7104
        %v7135 = vpack.c.b16 %v7108, %v7105
        %v7136 = vpack.c.b16 %v7112, %v7109
        %v7137 = vpack.c.b16 %v7113, %v7110
        %v7138 = vpack.c.b16 %v7114, %v7111
        %7163 = vmatprep.subr.bf16.mxu0 %v7116
        %7164 = vmatpush1.bf16.msra.mxu0 %v7115
        %7165 = vmatprep.subr.bf16.mxu0 %v7119
        %7166 = vmatpush1.bf16.msra.mxu0 %v7118
        %7167 = vmatprep.subr.bf16.mxu0 %v7122
        %7168 = vmatpush1.bf16.msra.mxu0 %v7121
        %7169 = vmatprep.subr.bf16.mxu0 %v7125
        %7170 = vmatpush1.bf16.msra.mxu0 %v7124
        %7171 = vmatprep.subr.bf16.mxu0 %v7128
        %7172 = vmatpush1.bf16.msra.mxu0 %v7127
        %7173 = vmatprep.subr.bf16.mxu0 %v7131
        %7174 = vmatpush1.bf16.msra.mxu0 %v7130
        %7175 = vmatprep.subr.bf16.mxu0 %v7134
        %7176 = vmatpush1.bf16.msra.mxu0 %v7133
        %7177 = vmatprep.subr.bf16.mxu0 %v7137
        %7178 = vmatpush1.bf16.msra.mxu0 %v7136
        %7179 = vmatprep.subr.bf16.mxu0 0
        %7180 = vmatpush1.bf16.msra.mxu0 0
        %7181 = vmatprep.subr.bf16.mxu0 0
        %7182 = vmatpush1.bf16.msra.mxu0 0
        %7183 = vmatprep.subr.bf16.mxu0 0
        %7184 = vmatpush1.bf16.msra.mxu0 0
        %7185 = vmatprep.subr.bf16.mxu0 0
        %7186 = vmatpush1.bf16.msra.mxu0 0
        %7187 = vmatprep.subr.bf16.mxu0 0
        %7188 = vmatpush1.bf16.msra.mxu0 0
        %7189 = vmatprep.subr.bf16.mxu0 0
        %7190 = vmatpush1.bf16.msra.mxu0 0
        %7191 = vmatprep.subr.bf16.mxu0 0
        %7192 = vmatpush1.bf16.msra.mxu0 0
        %7193 = vmatprep.subr.bf16.mxu0 0
        %7194 = vmatpush1.bf16.msra.mxu0 0
        %7195 = vmatprep.mubr.bf16.mxu0 0
        %7196 = vmatmul.mubr.bf16.gmra.mrb[0].mxu0 %v6985
        %v7197 = vpop.f32.mrb[0].mxu0
        %v7198 = vadd.f32 %v7023, %v7197
        %v7199 = vpop.f32.mrb[0].mxu0
        %v7200 = vadd.f32 %v7027, %v7199
        %v7201 = vpop.f32.mrb[0].mxu0
        %v7202 = vpop.f32.mrb[0].mxu0
        %7203 = vdwg.mxu0
        %7204 = vmatprep.subr.bf16.mxu0 0
        %7205 = vmatpush1.bf16.msra.mxu0 %v7117
        %7206 = vmatprep.subr.bf16.mxu0 0
        %7207 = vmatpush1.bf16.msra.mxu0 %v7120
        %7208 = vmatprep.subr.bf16.mxu0 0
        %7209 = vmatpush1.bf16.msra.mxu0 %v7123
        %7210 = vmatprep.subr.bf16.mxu0 0
        %7211 = vmatpush1.bf16.msra.mxu0 %v7126
        %7212 = vmatprep.subr.bf16.mxu0 0
        %7213 = vmatpush1.bf16.msra.mxu0 %v7129
        %7214 = vmatprep.subr.bf16.mxu0 0
        %7215 = vmatpush1.bf16.msra.mxu0 %v7132
        %7216 = vmatprep.subr.bf16.mxu0 0
        %7217 = vmatpush1.bf16.msra.mxu0 %v7135
        %7218 = vmatprep.subr.bf16.mxu0 0
        %7219 = vmatpush1.bf16.msra.mxu0 %v7138
        %7220 = vmatprep.subr.bf16.mxu0 0
        %7221 = vmatpush1.bf16.msra.mxu0 0
        %7222 = vmatprep.subr.bf16.mxu0 0
        %7223 = vmatpush1.bf16.msra.mxu0 0
        %7224 = vmatprep.subr.bf16.mxu0 0
        %7225 = vmatpush1.bf16.msra.mxu0 0
        %7226 = vmatprep.subr.bf16.mxu0 0
        %7227 = vmatpush1.bf16.msra.mxu0 0
        %7228 = vmatprep.subr.bf16.mxu0 0
        %7229 = vmatpush1.bf16.msra.mxu0 0
        %7230 = vmatprep.subr.bf16.mxu0 0
        %7231 = vmatpush1.bf16.msra.mxu0 0
        %7232 = vmatprep.subr.bf16.mxu0 0
        %7233 = vmatpush1.bf16.msra.mxu0 0
        %7234 = vmatprep.subr.bf16.mxu0 0
        %7235 = vmatpush1.bf16.msra.mxu0 0
        %7236 = vmatprep.mubr.bf16.mxu0 0
        %7237 = vmatmul.mubr.bf16.gmra.mrb[0].mxu0 %v6985
        %v7238 = vpop.f32.mrb[0].mxu0
        %v7239 = vadd.f32 %v7031, %v7238
        %v7240 = vpop.f32.mrb[0].mxu0
        %v7241 = vpop.f32.mrb[0].mxu0
        %v7242 = vpop.f32.mrb[0].mxu0
        %7243 = vdwg.mxu0
        %v7244 = vadd.f32 %v6939, %v7198
        %v7245 = vxor.u32 %v7244, 2147483648
        %v7246 = vmul.f32 %v7245, 1.442695
        %v7247 = vpow.pop %v7246
        %v7248 = vadd.f32 %v7247, 1.0
        %v7249 = vrcp.pop %v7248
        %v7250 = vmul.f32 1.0, %v7249
        %v7251 = vadd.f32 %v6941, %v7200
        %v7252 = vxor.u32 %v7251, 2147483648
        %v7253 = vmul.f32 %v7252, 1.442695
        %v7254 = vpow.pop %v7253
        %v7255 = vadd.f32 %v7254, 1.0
        %v7256 = vrcp.pop %v7255
        %v7257 = vmul.f32 1.0, %v7256
        %v7258 = vmul.f32 %v7250, %v7239
        %v7259 = vadd.f32 %v6980, %v7258
        %v7260 = vtanh.pop %v7259
        %v7261 = vsub.f32 1.0, %v7257
        %v7262 = vmul.f32 %v7261, %v7260
        %v7263 = vmul.f32 %v7257, %v6725
        %v7264 = vadd.f32 %v7262, %v7263
        %7265 = vst [vmem:[%s716] sm:$0xff] %v7264
        %7266 = vst [vmem:[%s698] sm:$0xff] %v7264
        %v7267 = vlaneseq
        %v7268 = vshrl.u32 %v7267, 7
        %v7269 = vsub.s32 %v2286, %v7268
        %v7270 = vrot.slane %v4975, %v7269
        %v7271 = vlaneseq
        %v7272 = vshrl.u32 %v7271, 7
        %v7273 = vsub.s32 %v2291, %v7272
        %v7274 = vrot.slane %v4980, %v7273
        %v7275 = vsel %vm2296, %v7274, %v7270
        %v7276 = vlaneseq
        %v7277 = vshrl.u32 %v7276, 7
        %v7278 = vsub.s32 %v2298, %v7277
        %v7279 = vrot.slane %v4985, %v7278
        %v7280 = vsel %vm2303, %v7279, %v7275
        %v7281 = vlaneseq
        %v7282 = vshrl.u32 %v7281, 7
        %v7283 = vsub.s32 %v2305, %v7282
        %v7284 = vrot.slane %v4990, %v7283
        %v7285 = vsel %vm2310, %v7284, %v7280
        %v7286 = vlaneseq
        %v7287 = vshrl.u32 %v7286, 7
        %v7288 = vsub.s32 %v2312, %v7287
        %v7289 = vrot.slane %v4995, %v7288
        %v7290 = vsel %vm2317, %v7289, %v7285
        %v7291 = vlaneseq
        %v7292 = vshrl.u32 %v7291, 7
        %v7293 = vsub.s32 %v2319, %v7292
        %v7294 = vrot.slane %v5000, %v7293
        %v7295 = vsel %vm2324, %v7294, %v7290
        %v7296 = vlaneseq
        %v7297 = vshrl.u32 %v7296, 7
        %v7298 = vsub.s32 %v2326, %v7297
        %v7299 = vrot.slane %v5005, %v7298
        %v7300 = vsel %vm2331, %v7299, %v7295
        %v7301 = vlaneseq
        %v7302 = vshrl.u32 %v7301, 7
        %v7303 = vsub.s32 %v2333, %v7302
        %v7304 = vrot.slane %v5010, %v7303
        %v7305 = vsel %vm2338, %v7304, %v7300
        %v7306 = vlaneseq
        %v7307 = vshrl.u32 %v7306, 7
        %v7308 = vsub.s32 %v2340, %v7307
        %v7309 = vrot.slane %v5015, %v7308
        %v7310 = vsel %vm2345, %v7309, %v7305
        %v7311 = vlaneseq
        %v7312 = vshrl.u32 %v7311, 7
        %v7313 = vsub.s32 %v2347, %v7312
        %v7314 = vrot.slane %v5020, %v7313
        %v7315 = vsel %vm2352, %v7314, %v7310
        %v7316 = vlaneseq
        %v7317 = vshrl.u32 %v7316, 7
        %v7318 = vsub.s32 %v2354, %v7317
        %v7319 = vrot.slane %v5025, %v7318
        %v7320 = vsel %vm2359, %v7319, %v7315
        %v7321 = vlaneseq
        %v7322 = vshrl.u32 %v7321, 7
        %v7323 = vsub.s32 %v2361, %v7322
        %v7324 = vrot.slane %v5030, %v7323
        %v7325 = vsel %vm2366, %v7324, %v7320
        %v7326 = vlaneseq
        %v7327 = vshrl.u32 %v7326, 7
        %v7328 = vsub.s32 %v2368, %v7327
        %v7329 = vrot.slane %v5035, %v7328
        %v7330 = vsel %vm2373, %v7329, %v7325
        %v7331 = vlaneseq
        %v7332 = vshrl.u32 %v7331, 7
        %v7333 = vsub.s32 %v2375, %v7332
        %v7334 = vrot.slane %v5040, %v7333
        %v7335 = vsel %vm2380, %v7334, %v7330
        %v7336 = vlaneseq
        %v7337 = vshrl.u32 %v7336, 7
        %v7338 = vsub.s32 %v2382, %v7337
        %v7339 = vrot.slane %v5045, %v7338
        %v7340 = vsel %vm2387, %v7339, %v7335
        %v7341 = vlaneseq
        %v7342 = vshrl.u32 %v7341, 7
        %v7343 = vsub.s32 %v2389, %v7342
        %v7344 = vrot.slane %v5050, %v7343
        %v7345 = vsel %vm2394, %v7344, %v7340
        %v7346 = vlaneseq
        %v7347 = vshrl.u32 %v7346, 7
        %v7348 = vsub.s32 %v2286, %v7347
        %v7349 = vrot.slane %v5055, %v7348
        %v7350 = vlaneseq
        %v7351 = vshrl.u32 %v7350, 7
        %v7352 = vsub.s32 %v2291, %v7351
        %v7353 = vrot.slane %v5060, %v7352
        %v7354 = vsel %vm2296, %v7353, %v7349
        %v7355 = vlaneseq
        %v7356 = vshrl.u32 %v7355, 7
        %v7357 = vsub.s32 %v2298, %v7356
        %v7358 = vrot.slane %v5065, %v7357
        %v7359 = vsel %vm2303, %v7358, %v7354
        %v7360 = vlaneseq
        %v7361 = vshrl.u32 %v7360, 7
        %v7362 = vsub.s32 %v2305, %v7361
        %v7363 = vrot.slane %v5070, %v7362
        %v7364 = vsel %vm2310, %v7363, %v7359
        %v7365 = vlaneseq
        %v7366 = vshrl.u32 %v7365, 7
        %v7367 = vsub.s32 %v2312, %v7366
        %v7368 = vrot.slane %v5075, %v7367
        %v7369 = vsel %vm2317, %v7368, %v7364
        %v7370 = vlaneseq
        %v7371 = vshrl.u32 %v7370, 7
        %v7372 = vsub.s32 %v2319, %v7371
        %v7373 = vrot.slane %v5080, %v7372
        %v7374 = vsel %vm2324, %v7373, %v7369
        %v7375 = vlaneseq
        %v7376 = vshrl.u32 %v7375, 7
        %v7377 = vsub.s32 %v2326, %v7376
        %v7378 = vrot.slane %v5085, %v7377
        %v7379 = vsel %vm2331, %v7378, %v7374
        %v7380 = vlaneseq
        %v7381 = vshrl.u32 %v7380, 7
        %v7382 = vsub.s32 %v2333, %v7381
        %v7383 = vrot.slane %v5090, %v7382
        %v7384 = vsel %vm2338, %v7383, %v7379
        %v7385 = vlaneseq
        %v7386 = vshrl.u32 %v7385, 7
        %v7387 = vsub.s32 %v2340, %v7386
        %v7388 = vrot.slane %v5095, %v7387
        %v7389 = vsel %vm2345, %v7388, %v7384
        %v7390 = vlaneseq
        %v7391 = vshrl.u32 %v7390, 7
        %v7392 = vsub.s32 %v2347, %v7391
        %v7393 = vrot.slane %v5100, %v7392
        %v7394 = vsel %vm2352, %v7393, %v7389
        %v7395 = vlaneseq
        %v7396 = vshrl.u32 %v7395, 7
        %v7397 = vsub.s32 %v2354, %v7396
        %v7398 = vrot.slane %v5105, %v7397
        %v7399 = vsel %vm2359, %v7398, %v7394
        %v7400 = vlaneseq
        %v7401 = vshrl.u32 %v7400, 7
        %v7402 = vsub.s32 %v2361, %v7401
        %v7403 = vrot.slane %v5110, %v7402
        %v7404 = vsel %vm2366, %v7403, %v7399
        %v7405 = vlaneseq
        %v7406 = vshrl.u32 %v7405, 7
        %v7407 = vsub.s32 %v2368, %v7406
        %v7408 = vrot.slane %v5115, %v7407
        %v7409 = vsel %vm2373, %v7408, %v7404
        %v7410 = vlaneseq
        %v7411 = vshrl.u32 %v7410, 7
        %v7412 = vsub.s32 %v2375, %v7411
        %v7413 = vrot.slane %v5120, %v7412
        %v7414 = vsel %vm2380, %v7413, %v7409
        %v7415 = vlaneseq
        %v7416 = vshrl.u32 %v7415, 7
        %v7417 = vsub.s32 %v2382, %v7416
        %v7418 = vrot.slane %v5125, %v7417
        %v7419 = vsel %vm2387, %v7418, %v7414
        %v7420 = vlaneseq
        %v7421 = vshrl.u32 %v7420, 7
        %v7422 = vsub.s32 %v2389, %v7421
        %v7423 = vrot.slane %v5130, %v7422
        %v7424 = vsel %vm2394, %v7423, %v7419
        %v7425 = vlaneseq
        %v7426 = vshrl.u32 %v7425, 7
        %v7427 = vsub.s32 %v2286, %v7426
        %v7428 = vrot.slane %v5135, %v7427
        %v7429 = vlaneseq
        %v7430 = vshrl.u32 %v7429, 7
        %v7431 = vsub.s32 %v2291, %v7430
        %v7432 = vrot.slane %v5140, %v7431
        %v7433 = vsel %vm2296, %v7432, %v7428
        %v7434 = vlaneseq
        %v7435 = vshrl.u32 %v7434, 7
        %v7436 = vsub.s32 %v2298, %v7435
        %v7437 = vrot.slane %v5145, %v7436
        %v7438 = vsel %vm2303, %v7437, %v7433
        %v7439 = vlaneseq
        %v7440 = vshrl.u32 %v7439, 7
        %v7441 = vsub.s32 %v2305, %v7440
        %v7442 = vrot.slane %v5150, %v7441
        %v7443 = vsel %vm2310, %v7442, %v7438
        %v7444 = vlaneseq
        %v7445 = vshrl.u32 %v7444, 7
        %v7446 = vsub.s32 %v2312, %v7445
        %v7447 = vrot.slane %v5155, %v7446
        %v7448 = vsel %vm2317, %v7447, %v7443
        %v7449 = vlaneseq
        %v7450 = vshrl.u32 %v7449, 7
        %v7451 = vsub.s32 %v2319, %v7450
        %v7452 = vrot.slane %v5160, %v7451
        %v7453 = vsel %vm2324, %v7452, %v7448
        %v7454 = vlaneseq
        %v7455 = vshrl.u32 %v7454, 7
        %v7456 = vsub.s32 %v2326, %v7455
        %v7457 = vrot.slane %v5165, %v7456
        %v7458 = vsel %vm2331, %v7457, %v7453
        %v7459 = vlaneseq
        %v7460 = vshrl.u32 %v7459, 7
        %v7461 = vsub.s32 %v2333, %v7460
        %v7462 = vrot.slane %v5170, %v7461
        %v7463 = vsel %vm2338, %v7462, %v7458
        %v7464 = vlaneseq
        %v7465 = vshrl.u32 %v7464, 7
        %v7466 = vsub.s32 %v2340, %v7465
        %v7467 = vrot.slane %v5175, %v7466
        %v7468 = vsel %vm2345, %v7467, %v7463
        %v7469 = vlaneseq
        %v7470 = vshrl.u32 %v7469, 7
        %v7471 = vsub.s32 %v2347, %v7470
        %v7472 = vrot.slane %v5180, %v7471
        %v7473 = vsel %vm2352, %v7472, %v7468
        %v7474 = vlaneseq
        %v7475 = vshrl.u32 %v7474, 7
        %v7476 = vsub.s32 %v2354, %v7475
        %v7477 = vrot.slane %v5185, %v7476
        %v7478 = vsel %vm2359, %v7477, %v7473
        %v7479 = vlaneseq
        %v7480 = vshrl.u32 %v7479, 7
        %v7481 = vsub.s32 %v2361, %v7480
        %v7482 = vrot.slane %v5190, %v7481
        %v7483 = vsel %vm2366, %v7482, %v7478
        %v7484 = vlaneseq
        %v7485 = vshrl.u32 %v7484, 7
        %v7486 = vsub.s32 %v2368, %v7485
        %v7487 = vrot.slane %v5195, %v7486
        %v7488 = vsel %vm2373, %v7487, %v7483
        %v7489 = vlaneseq
        %v7490 = vshrl.u32 %v7489, 7
        %v7491 = vsub.s32 %v2375, %v7490
        %v7492 = vrot.slane %v5200, %v7491
        %v7493 = vsel %vm2380, %v7492, %v7488
        %v7494 = vlaneseq
        %v7495 = vshrl.u32 %v7494, 7
        %v7496 = vsub.s32 %v2382, %v7495
        %v7497 = vrot.slane %v5205, %v7496
        %v7498 = vsel %vm2387, %v7497, %v7493
        %v7499 = vlaneseq
        %v7500 = vshrl.u32 %v7499, 7
        %v7501 = vsub.s32 %v2389, %v7500
        %v7502 = vrot.slane %v5210, %v7501
        %v7503 = vsel %vm2394, %v7502, %v7498
        %v7504 = vlaneseq
        %v7505 = vshrl.u32 %v7504, 7
        %v7506 = vsub.s32 %v2286, %v7505
        %v7507 = vrot.slane %v5215, %v7506
        %v7508 = vlaneseq
        %v7509 = vshrl.u32 %v7508, 7
        %v7510 = vsub.s32 %v2291, %v7509
        %v7511 = vrot.slane %v5220, %v7510
        %v7512 = vsel %vm2296, %v7511, %v7507
        %v7513 = vlaneseq
        %v7514 = vshrl.u32 %v7513, 7
        %v7515 = vsub.s32 %v2298, %v7514
        %v7516 = vrot.slane %v5225, %v7515
        %v7517 = vsel %vm2303, %v7516, %v7512
        %v7518 = vlaneseq
        %v7519 = vshrl.u32 %v7518, 7
        %v7520 = vsub.s32 %v2305, %v7519
        %v7521 = vrot.slane %v5230, %v7520
        %v7522 = vsel %vm2310, %v7521, %v7517
        %v7523 = vlaneseq
        %v7524 = vshrl.u32 %v7523, 7
        %v7525 = vsub.s32 %v2312, %v7524
        %v7526 = vrot.slane %v5235, %v7525
        %v7527 = vsel %vm2317, %v7526, %v7522
        %v7528 = vlaneseq
        %v7529 = vshrl.u32 %v7528, 7
        %v7530 = vsub.s32 %v2319, %v7529
        %v7531 = vrot.slane %v5240, %v7530
        %v7532 = vsel %vm2324, %v7531, %v7527
        %v7533 = vlaneseq
        %v7534 = vshrl.u32 %v7533, 7
        %v7535 = vsub.s32 %v2326, %v7534
        %v7536 = vrot.slane %v5245, %v7535
        %v7537 = vsel %vm2331, %v7536, %v7532
        %v7538 = vlaneseq
        %v7539 = vshrl.u32 %v7538, 7
        %v7540 = vsub.s32 %v2333, %v7539
        %v7541 = vrot.slane %v5250, %v7540
        %v7542 = vsel %vm2338, %v7541, %v7537
        %v7543 = vlaneseq
        %v7544 = vshrl.u32 %v7543, 7
        %v7545 = vsub.s32 %v2340, %v7544
        %v7546 = vrot.slane %v5255, %v7545
        %v7547 = vsel %vm2345, %v7546, %v7542
        %v7548 = vlaneseq
        %v7549 = vshrl.u32 %v7548, 7
        %v7550 = vsub.s32 %v2347, %v7549
        %v7551 = vrot.slane %v5260, %v7550
        %v7552 = vsel %vm2352, %v7551, %v7547
        %v7553 = vlaneseq
        %v7554 = vshrl.u32 %v7553, 7
        %v7555 = vsub.s32 %v2354, %v7554
        %v7556 = vrot.slane %v5265, %v7555
        %v7557 = vsel %vm2359, %v7556, %v7552
        %v7558 = vlaneseq
        %v7559 = vshrl.u32 %v7558, 7
        %v7560 = vsub.s32 %v2361, %v7559
        %v7561 = vrot.slane %v5270, %v7560
        %v7562 = vsel %vm2366, %v7561, %v7557
        %v7563 = vlaneseq
        %v7564 = vshrl.u32 %v7563, 7
        %v7565 = vsub.s32 %v2368, %v7564
        %v7566 = vrot.slane %v5275, %v7565
        %v7567 = vsel %vm2373, %v7566, %v7562
        %v7568 = vlaneseq
        %v7569 = vshrl.u32 %v7568, 7
        %v7570 = vsub.s32 %v2375, %v7569
        %v7571 = vrot.slane %v5280, %v7570
        %v7572 = vsel %vm2380, %v7571, %v7567
        %v7573 = vlaneseq
        %v7574 = vshrl.u32 %v7573, 7
        %v7575 = vsub.s32 %v2382, %v7574
        %v7576 = vrot.slane %v5285, %v7575
        %v7577 = vsel %vm2387, %v7576, %v7572
        %v7578 = vlaneseq
        %v7579 = vshrl.u32 %v7578, 7
        %v7580 = vsub.s32 %v2389, %v7579
        %v7581 = vrot.slane %v5290, %v7580
        %v7582 = vsel %vm2394, %v7581, %v7577
        %v7583 = vlaneseq
        %v7584 = vshrl.u32 %v7583, 7
        %v7585 = vsub.s32 %v2286, %v7584
        %v7586 = vrot.slane %v5295, %v7585
        %v7587 = vlaneseq
        %v7588 = vshrl.u32 %v7587, 7
        %v7589 = vsub.s32 %v2291, %v7588
        %v7590 = vrot.slane %v5300, %v7589
        %v7591 = vsel %vm2296, %v7590, %v7586
        %v7592 = vlaneseq
        %v7593 = vshrl.u32 %v7592, 7
        %v7594 = vsub.s32 %v2298, %v7593
        %v7595 = vrot.slane %v5305, %v7594
        %v7596 = vsel %vm2303, %v7595, %v7591
        %v7597 = vlaneseq
        %v7598 = vshrl.u32 %v7597, 7
        %v7599 = vsub.s32 %v2305, %v7598
        %v7600 = vrot.slane %v5310, %v7599
        %v7601 = vsel %vm2310, %v7600, %v7596
        %v7602 = vlaneseq
        %v7603 = vshrl.u32 %v7602, 7
        %v7604 = vsub.s32 %v2312, %v7603
        %v7605 = vrot.slane %v5315, %v7604
        %v7606 = vsel %vm2317, %v7605, %v7601
        %v7607 = vlaneseq
        %v7608 = vshrl.u32 %v7607, 7
        %v7609 = vsub.s32 %v2319, %v7608
        %v7610 = vrot.slane %v5320, %v7609
        %v7611 = vsel %vm2324, %v7610, %v7606
        %v7612 = vlaneseq
        %v7613 = vshrl.u32 %v7612, 7
        %v7614 = vsub.s32 %v2326, %v7613
        %v7615 = vrot.slane %v5325, %v7614
        %v7616 = vsel %vm2331, %v7615, %v7611
        %v7617 = vlaneseq
        %v7618 = vshrl.u32 %v7617, 7
        %v7619 = vsub.s32 %v2333, %v7618
        %v7620 = vrot.slane %v5330, %v7619
        %v7621 = vsel %vm2338, %v7620, %v7616
        %v7622 = vlaneseq
        %v7623 = vshrl.u32 %v7622, 7
        %v7624 = vsub.s32 %v2340, %v7623
        %v7625 = vrot.slane %v5335, %v7624
        %v7626 = vsel %vm2345, %v7625, %v7621
        %v7627 = vlaneseq
        %v7628 = vshrl.u32 %v7627, 7
        %v7629 = vsub.s32 %v2347, %v7628
        %v7630 = vrot.slane %v5340, %v7629
        %v7631 = vsel %vm2352, %v7630, %v7626
        %v7632 = vlaneseq
        %v7633 = vshrl.u32 %v7632, 7
        %v7634 = vsub.s32 %v2354, %v7633
        %v7635 = vrot.slane %v5345, %v7634
        %v7636 = vsel %vm2359, %v7635, %v7631
        %v7637 = vlaneseq
        %v7638 = vshrl.u32 %v7637, 7
        %v7639 = vsub.s32 %v2361, %v7638
        %v7640 = vrot.slane %v5350, %v7639
        %v7641 = vsel %vm2366, %v7640, %v7636
        %v7642 = vlaneseq
        %v7643 = vshrl.u32 %v7642, 7
        %v7644 = vsub.s32 %v2368, %v7643
        %v7645 = vrot.slane %v5355, %v7644
        %v7646 = vsel %vm2373, %v7645, %v7641
        %v7647 = vlaneseq
        %v7648 = vshrl.u32 %v7647, 7
        %v7649 = vsub.s32 %v2375, %v7648
        %v7650 = vrot.slane %v5360, %v7649
        %v7651 = vsel %vm2380, %v7650, %v7646
        %v7652 = vlaneseq
        %v7653 = vshrl.u32 %v7652, 7
        %v7654 = vsub.s32 %v2382, %v7653
        %v7655 = vrot.slane %v5365, %v7654
        %v7656 = vsel %vm2387, %v7655, %v7651
        %v7657 = vlaneseq
        %v7658 = vshrl.u32 %v7657, 7
        %v7659 = vsub.s32 %v2389, %v7658
        %v7660 = vrot.slane %v5370, %v7659
        %v7661 = vsel %vm2394, %v7660, %v7656
        %v7662 = vlaneseq
        %v7663 = vshrl.u32 %v7662, 7
        %v7664 = vsub.s32 %v2286, %v7663
        %v7665 = vrot.slane %v5375, %v7664
        %v7666 = vlaneseq
        %v7667 = vshrl.u32 %v7666, 7
        %v7668 = vsub.s32 %v2291, %v7667
        %v7669 = vrot.slane %v5380, %v7668
        %v7670 = vsel %vm2296, %v7669, %v7665
        %v7671 = vlaneseq
        %v7672 = vshrl.u32 %v7671, 7
        %v7673 = vsub.s32 %v2298, %v7672
        %v7674 = vrot.slane %v5385, %v7673
        %v7675 = vsel %vm2303, %v7674, %v7670
        %v7676 = vlaneseq
        %v7677 = vshrl.u32 %v7676, 7
        %v7678 = vsub.s32 %v2305, %v7677
        %v7679 = vrot.slane %v5390, %v7678
        %v7680 = vsel %vm2310, %v7679, %v7675
        %v7681 = vlaneseq
        %v7682 = vshrl.u32 %v7681, 7
        %v7683 = vsub.s32 %v2312, %v7682
        %v7684 = vrot.slane %v5395, %v7683
        %v7685 = vsel %vm2317, %v7684, %v7680
        %v7686 = vlaneseq
        %v7687 = vshrl.u32 %v7686, 7
        %v7688 = vsub.s32 %v2319, %v7687
        %v7689 = vrot.slane %v5400, %v7688
        %v7690 = vsel %vm2324, %v7689, %v7685
        %v7691 = vlaneseq
        %v7692 = vshrl.u32 %v7691, 7
        %v7693 = vsub.s32 %v2326, %v7692
        %v7694 = vrot.slane %v5405, %v7693
        %v7695 = vsel %vm2331, %v7694, %v7690
        %v7696 = vlaneseq
        %v7697 = vshrl.u32 %v7696, 7
        %v7698 = vsub.s32 %v2333, %v7697
        %v7699 = vrot.slane %v5410, %v7698
        %v7700 = vsel %vm2338, %v7699, %v7695
        %v7701 = vlaneseq
        %v7702 = vshrl.u32 %v7701, 7
        %v7703 = vsub.s32 %v2340, %v7702
        %v7704 = vrot.slane %v5415, %v7703
        %v7705 = vsel %vm2345, %v7704, %v7700
        %v7706 = vlaneseq
        %v7707 = vshrl.u32 %v7706, 7
        %v7708 = vsub.s32 %v2347, %v7707
        %v7709 = vrot.slane %v5420, %v7708
        %v7710 = vsel %vm2352, %v7709, %v7705
        %v7711 = vlaneseq
        %v7712 = vshrl.u32 %v7711, 7
        %v7713 = vsub.s32 %v2354, %v7712
        %v7714 = vrot.slane %v5425, %v7713
        %v7715 = vsel %vm2359, %v7714, %v7710
        %v7716 = vlaneseq
        %v7717 = vshrl.u32 %v7716, 7
        %v7718 = vsub.s32 %v2361, %v7717
        %v7719 = vrot.slane %v5430, %v7718
        %v7720 = vsel %vm2366, %v7719, %v7715
        %v7721 = vlaneseq
        %v7722 = vshrl.u32 %v7721, 7
        %v7723 = vsub.s32 %v2368, %v7722
        %v7724 = vrot.slane %v5435, %v7723
        %v7725 = vsel %vm2373, %v7724, %v7720
        %v7726 = vlaneseq
        %v7727 = vshrl.u32 %v7726, 7
        %v7728 = vsub.s32 %v2375, %v7727
        %v7729 = vrot.slane %v5440, %v7728
        %v7730 = vsel %vm2380, %v7729, %v7725
        %v7731 = vlaneseq
        %v7732 = vshrl.u32 %v7731, 7
        %v7733 = vsub.s32 %v2382, %v7732
        %v7734 = vrot.slane %v5445, %v7733
        %v7735 = vsel %vm2387, %v7734, %v7730
        %v7736 = vlaneseq
        %v7737 = vshrl.u32 %v7736, 7
        %v7738 = vsub.s32 %v2389, %v7737
        %v7739 = vrot.slane %v5450, %v7738
        %v7740 = vsel %vm2394, %v7739, %v7735
        %v7741 = vlaneseq
        %v7742 = vshrl.u32 %v7741, 7
        %v7743 = vsub.s32 %v2286, %v7742
        %v7744 = vrot.slane %v5455, %v7743
        %v7745 = vlaneseq
        %v7746 = vshrl.u32 %v7745, 7
        %v7747 = vsub.s32 %v2291, %v7746
        %v7748 = vrot.slane %v5460, %v7747
        %v7749 = vsel %vm2296, %v7748, %v7744
        %v7750 = vlaneseq
        %v7751 = vshrl.u32 %v7750, 7
        %v7752 = vsub.s32 %v2298, %v7751
        %v7753 = vrot.slane %v5465, %v7752
        %v7754 = vsel %vm2303, %v7753, %v7749
        %v7755 = vlaneseq
        %v7756 = vshrl.u32 %v7755, 7
        %v7757 = vsub.s32 %v2305, %v7756
        %v7758 = vrot.slane %v5470, %v7757
        %v7759 = vsel %vm2310, %v7758, %v7754
        %v7760 = vlaneseq
        %v7761 = vshrl.u32 %v7760, 7
        %v7762 = vsub.s32 %v2312, %v7761
        %v7763 = vrot.slane %v5475, %v7762
        %v7764 = vsel %vm2317, %v7763, %v7759
        %v7765 = vlaneseq
        %v7766 = vshrl.u32 %v7765, 7
        %v7767 = vsub.s32 %v2319, %v7766
        %v7768 = vrot.slane %v5480, %v7767
        %v7769 = vsel %vm2324, %v7768, %v7764
        %v7770 = vlaneseq
        %v7771 = vshrl.u32 %v7770, 7
        %v7772 = vsub.s32 %v2326, %v7771
        %v7773 = vrot.slane %v5485, %v7772
        %v7774 = vsel %vm2331, %v7773, %v7769
        %v7775 = vlaneseq
        %v7776 = vshrl.u32 %v7775, 7
        %v7777 = vsub.s32 %v2333, %v7776
        %v7778 = vrot.slane %v5490, %v7777
        %v7779 = vsel %vm2338, %v7778, %v7774
        %v7780 = vlaneseq
        %v7781 = vshrl.u32 %v7780, 7
        %v7782 = vsub.s32 %v2340, %v7781
        %v7783 = vrot.slane %v5495, %v7782
        %v7784 = vsel %vm2345, %v7783, %v7779
        %v7785 = vlaneseq
        %v7786 = vshrl.u32 %v7785, 7
        %v7787 = vsub.s32 %v2347, %v7786
        %v7788 = vrot.slane %v5500, %v7787
        %v7789 = vsel %vm2352, %v7788, %v7784
        %v7790 = vlaneseq
        %v7791 = vshrl.u32 %v7790, 7
        %v7792 = vsub.s32 %v2354, %v7791
        %v7793 = vrot.slane %v5505, %v7792
        %v7794 = vsel %vm2359, %v7793, %v7789
        %v7795 = vlaneseq
        %v7796 = vshrl.u32 %v7795, 7
        %v7797 = vsub.s32 %v2361, %v7796
        %v7798 = vrot.slane %v5510, %v7797
        %v7799 = vsel %vm2366, %v7798, %v7794
        %v7800 = vlaneseq
        %v7801 = vshrl.u32 %v7800, 7
        %v7802 = vsub.s32 %v2368, %v7801
        %v7803 = vrot.slane %v5515, %v7802
        %v7804 = vsel %vm2373, %v7803, %v7799
        %v7805 = vlaneseq
        %v7806 = vshrl.u32 %v7805, 7
        %v7807 = vsub.s32 %v2375, %v7806
        %v7808 = vrot.slane %v5520, %v7807
        %v7809 = vsel %vm2380, %v7808, %v7804
        %v7810 = vlaneseq
        %v7811 = vshrl.u32 %v7810, 7
        %v7812 = vsub.s32 %v2382, %v7811
        %v7813 = vrot.slane %v5525, %v7812
        %v7814 = vsel %vm2387, %v7813, %v7809
        %v7815 = vlaneseq
        %v7816 = vshrl.u32 %v7815, 7
        %v7817 = vsub.s32 %v2389, %v7816
        %v7818 = vrot.slane %v5530, %v7817
        %v7819 = vsel %vm2394, %v7818, %v7814
        %v7820 = vlaneseq
        %v7821 = vshrl.u32 %v7820, 7
        %v7822 = vsub.s32 %v2286, %v7821
        %v7823 = vrot.slane %v5535, %v7822
        %v7824 = vlaneseq
        %v7825 = vshrl.u32 %v7824, 7
        %v7826 = vsub.s32 %v2291, %v7825
        %v7827 = vrot.slane %v5540, %v7826
        %v7828 = vsel %vm2296, %v7827, %v7823
        %v7829 = vlaneseq
        %v7830 = vshrl.u32 %v7829, 7
        %v7831 = vsub.s32 %v2298, %v7830
        %v7832 = vrot.slane %v5545, %v7831
        %v7833 = vsel %vm2303, %v7832, %v7828
        %v7834 = vlaneseq
        %v7835 = vshrl.u32 %v7834, 7
        %v7836 = vsub.s32 %v2305, %v7835
        %v7837 = vrot.slane %v5550, %v7836
        %v7838 = vsel %vm2310, %v7837, %v7833
        %v7839 = vlaneseq
        %v7840 = vshrl.u32 %v7839, 7
        %v7841 = vsub.s32 %v2312, %v7840
        %v7842 = vrot.slane %v5555, %v7841
        %v7843 = vsel %vm2317, %v7842, %v7838
        %v7844 = vlaneseq
        %v7845 = vshrl.u32 %v7844, 7
        %v7846 = vsub.s32 %v2319, %v7845
        %v7847 = vrot.slane %v5560, %v7846
        %v7848 = vsel %vm2324, %v7847, %v7843
        %v7849 = vlaneseq
        %v7850 = vshrl.u32 %v7849, 7
        %v7851 = vsub.s32 %v2326, %v7850
        %v7852 = vrot.slane %v5565, %v7851
        %v7853 = vsel %vm2331, %v7852, %v7848
        %v7854 = vlaneseq
        %v7855 = vshrl.u32 %v7854, 7
        %v7856 = vsub.s32 %v2333, %v7855
        %v7857 = vrot.slane %v5570, %v7856
        %v7858 = vsel %vm2338, %v7857, %v7853
        %v7859 = vlaneseq
        %v7860 = vshrl.u32 %v7859, 7
        %v7861 = vsub.s32 %v2340, %v7860
        %v7862 = vrot.slane %v5575, %v7861
        %v7863 = vsel %vm2345, %v7862, %v7858
        %v7864 = vlaneseq
        %v7865 = vshrl.u32 %v7864, 7
        %v7866 = vsub.s32 %v2347, %v7865
        %v7867 = vrot.slane %v5580, %v7866
        %v7868 = vsel %vm2352, %v7867, %v7863
        %v7869 = vlaneseq
        %v7870 = vshrl.u32 %v7869, 7
        %v7871 = vsub.s32 %v2354, %v7870
        %v7872 = vrot.slane %v5585, %v7871
        %v7873 = vsel %vm2359, %v7872, %v7868
        %v7874 = vlaneseq
        %v7875 = vshrl.u32 %v7874, 7
        %v7876 = vsub.s32 %v2361, %v7875
        %v7877 = vrot.slane %v5590, %v7876
        %v7878 = vsel %vm2366, %v7877, %v7873
        %v7879 = vlaneseq
        %v7880 = vshrl.u32 %v7879, 7
        %v7881 = vsub.s32 %v2368, %v7880
        %v7882 = vrot.slane %v5595, %v7881
        %v7883 = vsel %vm2373, %v7882, %v7878
        %v7884 = vlaneseq
        %v7885 = vshrl.u32 %v7884, 7
        %v7886 = vsub.s32 %v2375, %v7885
        %v7887 = vrot.slane %v5600, %v7886
        %v7888 = vsel %vm2380, %v7887, %v7883
        %v7889 = vlaneseq
        %v7890 = vshrl.u32 %v7889, 7
        %v7891 = vsub.s32 %v2382, %v7890
        %v7892 = vrot.slane %v5605, %v7891
        %v7893 = vsel %vm2387, %v7892, %v7888
        %v7894 = vlaneseq
        %v7895 = vshrl.u32 %v7894, 7
        %v7896 = vsub.s32 %v2389, %v7895
        %v7897 = vrot.slane %v5610, %v7896
        %v7898 = vsel %vm2394, %v7897, %v7893
        %v7899 = vsel %vm2949, %v7424, %v7345
        %v7900 = vsel %vm2951, %v7503, %v7899
        %v7901 = vsel %vm2953, %v7582, %v7900
        %v7902 = vsel %vm2955, %v7661, %v7901
        %v7903 = vsel %vm2957, %v7740, %v7902
        %v7904 = vsel %vm2959, %v7819, %v7903
        %v7905 = vsel %vm2961, %v7898, %v7904
        %7907 = vst [vmem:[%s705] sm:$0xff] %v7905
        %s7908 = sand.u32 %s392, 1
        %s7909 = scalar_lea.sflag [#allocation5], %s7908
        %s7910 = sand.u32 %s392, 1
        %s7911 = smul.addr %s7910, 8
        %s7912 = scalar_lea.vmem [#allocation20], %s7911
        %s7913 = sand.u32 %s418, 1
        %s7914 = scalar_lea.sflag [#allocation22], %s7913
        %s7915 = sand.u32 %s418, 1
        %s7916 = smul.addr %s7915, 8
        %s7917 = scalar_lea.vmem [#allocation21], %s7916
        // Predicated region
        $region129: #{tpu_custom_call.1} parent=83 // pred_check
          %p7918 = pneg %p402
        $region130: #{tpu_custom_call.1} parent=83 // pred_check_branch
          %7920 = sbr.rel (%p7918) target = $region132
        $region131: #{tpu_custom_call.1} parent=83 // pred_region
          %s7922 = ssub.s32 128, 128
          %7923 = vsyncadd %s7909, %s7922
          %s7924 = smul.addr %s43, 128
          %s7925 = scalar_lea.hbm %s16, %s7924
          %s7927 = sshll.u32 %s7912, 4
          %s7928 = int_to_ptr.vmem [resolvable:$true] %s7927
          %7930 = dma.vmem_to_hbm [thread:$0]  %s7928, 128, %s7925, %s7909
        $region132: #{tpu_custom_call.1} parent=83 // pred_fallthru
          _
        // Predicated region
        $region133: #{tpu_custom_call.1} parent=83 // pred_check
          %p7931 = pneg %p428
        $region134: #{tpu_custom_call.1} parent=83 // pred_check_branch
          %7933 = sbr.rel (%p7931) target = $region136
        $region135: #{tpu_custom_call.1} parent=83 // pred_region
          %s7935 = ssub.s32 128, 128
          %7936 = vsyncadd %s7914, %s7935
          %s7937 = smul.addr %s43, 128
          %s7938 = scalar_lea.hbm %s17, %s7937
          %s7940 = sshll.u32 %s7917, 4
          %s7941 = int_to_ptr.vmem [resolvable:$true] %s7940
          %7943 = dma.vmem_to_hbm [thread:$0]  %s7941, 128, %s7938, %s7914
        $region136: #{tpu_custom_call.1} parent=83 // pred_fallthru
          _
      $region84: #{tpu_custom_call.1} parent=5 // pred_fallthru
        _
      %p7944 = scmp.le.s32.totalorder 2, %s38
      // Predicated region
      $region137: #{tpu_custom_call.1} parent=5 // pred_check
        %p7945 = pneg %p7944
      $region138: #{tpu_custom_call.1} parent=5 // pred_check_branch
        %7947 = sbr.rel (%p7945) target = $region140
      $region139: #{tpu_custom_call.1} parent=5 // pred_region
        %s7948 = ssub.s32 %s38, 2
        // Predicated region
        $region141: #{tpu_custom_call.1} parent=139 // pred_check
          %p7949 = pneg %p408
        $region142: #{tpu_custom_call.1} parent=139 // pred_check_branch
          %7951 = sbr.rel (%p7949) target = $region144
        $region143: #{tpu_custom_call.1} parent=139 // pred_region
          %s7952 = sand.u32 %s393, 1
          %s7953 = scalar_lea.sflag [#allocation5], %s7952
          %s7954 = sand.u32 %s393, 1
          %s7955 = smul.addr %s7954, 8
          %s7956 = scalar_lea.vmem [#allocation20], %s7955
          %7957 = dma.done %s7953, 128
        $region144: #{tpu_custom_call.1} parent=139 // pred_fallthru
          _
        // Predicated region
        $region145: #{tpu_custom_call.1} parent=139 // pred_check
          %p7958 = pneg %p434
        $region146: #{tpu_custom_call.1} parent=139 // pred_check_branch
          %7960 = sbr.rel (%p7958) target = $region148
        $region147: #{tpu_custom_call.1} parent=139 // pred_region
          %s7961 = sand.u32 %s419, 1
          %s7962 = scalar_lea.sflag [#allocation22], %s7961
          %s7963 = sand.u32 %s419, 1
          %s7964 = smul.addr %s7963, 8
          %s7965 = scalar_lea.vmem [#allocation21], %s7964
          %7966 = dma.done %s7962, 128
        $region148: #{tpu_custom_call.1} parent=139 // pred_fallthru
          _
      $region140: #{tpu_custom_call.1} parent=5 // pred_fallthru
        _
    $region6: #{tpu_custom_call.1} parent=1 // loop_footer
      %s42 = sadd.s32 1, %s38
    $region7: #{tpu_custom_call.1} parent=1 // loop_footer_branch
      %37 = sbr.rel target = $region3
    $region8: #{tpu_custom_call.1} parent=1 // loop_exit
      _
    %7967 = vsyncpa [#allocation4], 1
    %s7968 = scalar_lea.sflag [#allocation4], 1
    %7969 = vsyncpa %s7968, 1
    %7970 = vsyncpa [#allocation7], 1
    %7971 = vsyncpa [#allocation10], 1
    %7972 = vsyncpa [#allocation13], 1
    %7973 = vsyncpa [#allocation16], 1
    %7974 = vsyncpa [#allocation19], 1
    %7975 = vsyncpa [#allocation5], 1
    %s7976 = scalar_lea.sflag [#allocation5], 1
    %7977 = vsyncpa %s7976, 1
    %7978 = vsyncpa [#allocation22], 1
    %s7979 = scalar_lea.sflag [#allocation22], 1
    %7980 = vsyncpa %s7979, 1

</llo_original>
